<compile_context>
chip_gen: v7x
topology: tpu7x:2x2x1
jax: 0.10.0
libtpu: 0.0.40
codegen_flags: <defaults>
</compile_context>

<pallas_src>
import functools

import jax
import jax.numpy as jnp
from jax import lax
from jax.experimental import pallas as pl
from jax.experimental.pallas import tpu as pltpu

# --- model hyper-parameters (from the PyTorch script) ---
N_EMBD = 128
N_HEAD = 4
N_LAYER = 4
BLOCK_SIZE = 256
VOCAB_SIZE = 65          # len(chars) is data dependent; pick a typical char vocab
VOCAB_PAD = 128          # lane-dense padded vocab (embedding rows / lm_head lanes)
HEAD_SIZE = N_EMBD // N_HEAD
EPS = 1e-5
NEG_INF = -1e30          # large finite negative for the additive causal mask


# ----------------------------------------------------------------------------
# Fused whole-forward kernel: one grid step per batch element.
# All weights enter with constant-index BlockSpecs and stay resident in VMEM.
# ----------------------------------------------------------------------------
def _fused_forward_kernel(
    idx_ref, tok_ref, pos_ref,
    ln1g_ref, ln1b_ref,
    wq_ref, bq_ref, wk_ref, bk_ref, wv_ref, bv_ref, wp_ref, bp_ref,
    ln2g_ref, ln2b_ref,
    fw1_ref, fb1_ref, fw2_ref, fb2_ref,
    tw1_ref, tb1_ref, tw2_ref, tb2_ref,
    lmw_ref, lmb_ref,
    o_ref, *, t_len):
  T = t_len

  # --- token embedding lookup as a one-hot MXU matmul (fused gather) ---
  idx_col = idx_ref[0]                                            # (T, 1) int32
  lane = lax.broadcasted_iota(jnp.int32, (T, VOCAB_PAD), 1)       # (T, VOCAB_PAD)
  onehot = jnp.where(lane == idx_col, 1.0, 0.0).astype(jnp.float32)
  x = jnp.dot(onehot, tok_ref[...], preferred_element_type=jnp.float32)
  x = x + pos_ref[...].astype(jnp.float32)                        # (T, C)

  # --- additive causal mask, built ONCE for the whole forward ---
  row = lax.broadcasted_iota(jnp.int32, (T, T), 0)
  col = lax.broadcasted_iota(jnp.int32, (T, T), 1)
  mask = jnp.where(col <= row, jnp.float32(0.0), jnp.float32(NEG_INF))  # (T, T)
  scale = float(N_EMBD) ** -0.5                                   # PyTorch uses C = n_embd

  def ln_time(v, g, b):
    # custom LayerNorm: mean/var over dim=1 (TIME axis), unbiased variance.
    mean = jnp.mean(v, axis=0, keepdims=True)                     # (1, C)
    var = jnp.sum((v - mean) ** 2, axis=0, keepdims=True) / (t_len - 1)
    return g * ((v - mean) * lax.rsqrt(var + EPS)) + b

  def ffn(v, w1, b1, w2, b2):
    h = jnp.dot(v, w1, preferred_element_type=jnp.float32) + b1
    h = jnp.maximum(h, 0.0)
    return jnp.dot(h, w2, preferred_element_type=jnp.float32) + b2

  for li in range(N_LAYER):
    # --- LN1 (time axis) fused in ---
    xln = ln_time(x, ln1g_ref[li], ln1b_ref[li])

    # --- multi-head causal self-attention (+ projection + residual) ---
    q = jnp.dot(xln, wq_ref[li], preferred_element_type=jnp.float32) + bq_ref[li]
    k = jnp.dot(xln, wk_ref[li], preferred_element_type=jnp.float32) + bk_ref[li]
    v = jnp.dot(xln, wv_ref[li], preferred_element_type=jnp.float32) + bv_ref[li]

    outs = []
    for h in range(N_HEAD):
      lo = h * HEAD_SIZE
      hi = lo + HEAD_SIZE
      s = jnp.dot(q[:, lo:hi], k[:, lo:hi].T,
                  preferred_element_type=jnp.float32) * scale + mask
      s = s - jnp.max(s, axis=-1, keepdims=True)
      p = jnp.exp(s)
      p = p * pl.reciprocal(jnp.sum(p, axis=-1, keepdims=True), approx=True)
      outs.append(jnp.dot(p, v[:, lo:hi], preferred_element_type=jnp.float32))
    att = jnp.concatenate(outs, axis=-1)                          # (T, C)

    x = x + jnp.dot(att, wp_ref[li], preferred_element_type=jnp.float32) + bp_ref[li]

    # --- LN2 (time axis) + FFN + residual, fused in ---
    xln2 = ln_time(x, ln2g_ref[li], ln2b_ref[li])
    x = x + ffn(xln2, fw1_ref[li], fb1_ref[li], fw2_ref[li], fb2_ref[li])

  # --- top-level FeedForward (NO residual in the reference forward) ---
  x = ffn(x, tw1_ref[...], tb1_ref[...], tw2_ref[...], tb2_ref[...])

  # --- lm_head, padded to 128 output lanes (lane-dense store) ---
  logits = jnp.dot(x, lmw_ref[...], preferred_element_type=jnp.float32) + lmb_ref[...]
  o_ref[0] = logits.astype(o_ref.dtype)


# ----------------------------------------------------------------------------
# Parameter init (deterministic, synthetic).  Per-layer weights are stacked
# along a leading layer axis so they can stay VMEM-resident across the grid.
# ----------------------------------------------------------------------------
def init_params(key):
  def nrm(key, shape, scale=0.02):
    return (scale * jax.random.normal(key, shape)).astype(jnp.float32)

  keys = jax.random.split(key, 16)
  L, C, H = N_LAYER, N_EMBD, 4 * N_EMBD

  tok = nrm(keys[0], (VOCAB_SIZE, C))
  tok_pad = jnp.pad(tok, ((0, VOCAB_PAD - VOCAB_SIZE), (0, 0)))   # zero rows never hit

  lm_w = nrm(keys[4], (C, VOCAB_SIZE))
  lm_w = jnp.pad(lm_w, ((0, 0), (0, VOCAB_PAD - VOCAB_SIZE)))     # zero-pad lanes
  lm_b = jnp.zeros((1, VOCAB_PAD), jnp.float32)

  params = {
      "tok_emb": tok_pad,                                         # (VOCAB_PAD, C)
      "pos_emb": nrm(keys[1], (BLOCK_SIZE, C)),
      # per-layer stacks
      "ln1_g": jnp.ones((L, 1, C), jnp.float32),
      "ln1_b": jnp.zeros((L, 1, C), jnp.float32),
      "ln2_g": jnp.ones((L, 1, C), jnp.float32),
      "ln2_b": jnp.zeros((L, 1, C), jnp.float32),
      "wq": nrm(keys[5], (L, C, C)), "bq": jnp.zeros((L, 1, C), jnp.float32),
      "wk": nrm(keys[6], (L, C, C)), "bk": jnp.zeros((L, 1, C), jnp.float32),
      "wv": nrm(keys[7], (L, C, C)), "bv": jnp.zeros((L, 1, C), jnp.float32),
      "wp": nrm(keys[8], (L, C, C)), "bp": jnp.zeros((L, 1, C), jnp.float32),
      "ffn_w1": nrm(keys[9], (L, C, H)), "ffn_b1": jnp.zeros((L, 1, H), jnp.float32),
      "ffn_w2": nrm(keys[10], (L, H, C)), "ffn_b2": jnp.zeros((L, 1, C), jnp.float32),
      # top-level FeedForward
      "top_w1": nrm(keys[2], (C, H)), "top_b1": jnp.zeros((1, H), jnp.float32),
      "top_w2": nrm(keys[3], (H, C)), "top_b2": jnp.zeros((1, C), jnp.float32),
      # lm_head (lane-padded)
      "lm_w": lm_w, "lm_b": lm_b,
  }
  return params


# ----------------------------------------------------------------------------
# Full forward pass.  The whole forward (embedding lookup included) is a single
# pallas_call; only a static pos-slice, an int reshape and the vocab-pad slice
# live outside the kernel.
# ----------------------------------------------------------------------------
def bigram_lm_forward(params, idx, targets=None):
  B, T = idx.shape
  C, H, L = N_EMBD, 4 * N_EMBD, N_LAYER

  idx3 = idx.astype(jnp.int32).reshape(B, T, 1)                   # (B, T, 1)
  pos = params["pos_emb"][:T]                                     # (T, C) static slice

  def full(shape):
    # constant-index BlockSpec -> loaded once, stays resident across the grid
    return pl.BlockSpec(shape, lambda b, _s=shape: (0,) * len(_s))

  kernel = functools.partial(_fused_forward_kernel, t_len=T)

  logits_pad = pl.pallas_call(
      kernel,
      out_shape=jax.ShapeDtypeStruct((B, T, VOCAB_PAD), jnp.float32),
      grid=(B,),
      in_specs=[
          pl.BlockSpec((1, T, 1), lambda b: (b, 0, 0)),            # idx
          full((VOCAB_PAD, C)),                                    # token embedding
          full((T, C)),                                            # pos embedding slice
          full((L, 1, C)), full((L, 1, C)),                        # ln1 g, b
          full((L, C, C)), full((L, 1, C)),                        # wq, bq
          full((L, C, C)), full((L, 1, C)),                        # wk, bk
          full((L, C, C)), full((L, 1, C)),                        # wv, bv
          full((L, C, C)), full((L, 1, C)),                        # wp, bp
          full((L, 1, C)), full((L, 1, C)),                        # ln2 g, b
          full((L, C, H)), full((L, 1, H)),                        # ffn w1, b1
          full((L, H, C)), full((L, 1, C)),                        # ffn w2, b2
          full((C, H)), full((1, H)),                              # top w1, b1
          full((H, C)), full((1, C)),                              # top w2, b2
          full((C, VOCAB_PAD)), full((1, VOCAB_PAD)),              # lm_w, lm_b
      ],
      out_specs=pl.BlockSpec((1, T, VOCAB_PAD), lambda b: (b, 0, 0)),
      compiler_params=pltpu.CompilerParams(
          dimension_semantics=("parallel",),
          vmem_limit_bytes=32 * 1024 * 1024),
  )(idx3,
    params["tok_emb"], pos,
    params["ln1_g"], params["ln1_b"],
    params["wq"], params["bq"], params["wk"], params["bk"],
    params["wv"], params["bv"], params["wp"], params["bp"],
    params["ln2_g"], params["ln2_b"],
    params["ffn_w1"], params["ffn_b1"], params["ffn_w2"], params["ffn_b2"],
    params["top_w1"], params["top_b1"], params["top_w2"], params["top_b2"],
    params["lm_w"], params["lm_b"])

  logits = logits_pad[..., :VOCAB_SIZE]                            # drop pad lanes (glue)
  loss = None  # targets is None -> loss None (matches reference)
  return logits, loss


if __name__ == "__main__":
  B, T = 2, 8   # small seq, T <= block_size (T >= 2 so unbiased var is defined)
  key = jax.random.PRNGKey(0)
  pkey, ikey = jax.random.split(key)
  params = init_params(pkey)
  idx = jax.random.randint(ikey, (B, T), 0, VOCAB_SIZE, dtype=jnp.int32)

  logits, loss = bigram_lm_forward(params, idx, targets=None)
  jax.block_until_ready(logits)

  assert logits.shape == (B, T, VOCAB_SIZE)
  assert loss is None
  assert bool(jnp.all(jnp.isfinite(logits)))
  print("KERNEL_OK")
</pallas_src>

<mosaic_0001>
module attributes {stable_mosaic.version = 11 : i64} {
  func.func @_fused_forward_kernel(%arg0: i32, %arg1: memref<1x8x1xi32, #tpu.memory_space<vmem>>, %arg2: memref<128x128xf32, #tpu.memory_space<vmem>>, %arg3: memref<8x128xf32, #tpu.memory_space<vmem>>, %arg4: memref<4x1x128xf32, #tpu.memory_space<vmem>>, %arg5: memref<4x1x128xf32, #tpu.memory_space<vmem>>, %arg6: memref<4x128x128xf32, #tpu.memory_space<vmem>>, %arg7: memref<4x1x128xf32, #tpu.memory_space<vmem>>, %arg8: memref<4x128x128xf32, #tpu.memory_space<vmem>>, %arg9: memref<4x1x128xf32, #tpu.memory_space<vmem>>, %arg10: memref<4x128x128xf32, #tpu.memory_space<vmem>>, %arg11: memref<4x1x128xf32, #tpu.memory_space<vmem>>, %arg12: memref<4x128x128xf32, #tpu.memory_space<vmem>>, %arg13: memref<4x1x128xf32, #tpu.memory_space<vmem>>, %arg14: memref<4x1x128xf32, #tpu.memory_space<vmem>>, %arg15: memref<4x1x128xf32, #tpu.memory_space<vmem>>, %arg16: memref<4x128x512xf32, #tpu.memory_space<vmem>>, %arg17: memref<4x1x512xf32, #tpu.memory_space<vmem>>, %arg18: memref<4x512x128xf32, #tpu.memory_space<vmem>>, %arg19: memref<4x1x128xf32, #tpu.memory_space<vmem>>, %arg20: memref<128x512xf32, #tpu.memory_space<vmem>>, %arg21: memref<1x512xf32, #tpu.memory_space<vmem>>, %arg22: memref<512x128xf32, #tpu.memory_space<vmem>>, %arg23: memref<1x128xf32, #tpu.memory_space<vmem>>, %arg24: memref<128x128xf32, #tpu.memory_space<vmem>>, %arg25: memref<1x128xf32, #tpu.memory_space<vmem>>, %arg26: memref<1x8x128xf32, #tpu.memory_space<vmem>>) attributes {dimension_semantics = [#tpu.dimension_semantics<parallel>], iteration_bounds = array<i64: 2>, scalar_prefetch = 0 : i64, scratch_operands = 0 : i64, tpu.core_type = #tpu.core_type<tc>, window_params = [{transform_indices = @transform_0, window_bounds = array<i64: 1, 8, 1>}, {pipeline_mode = #tpu.pipeline_mode<synchronous>, transform_indices = @transform_1, window_bounds = array<i64: 128, 128>}, {pipeline_mode = #tpu.pipeline_mode<synchronous>, transform_indices = @transform_2, window_bounds = array<i64: 8, 128>}, {pipeline_mode = #tpu.pipeline_mode<synchronous>, transform_indices = @transform_3, window_bounds = array<i64: 4, 1, 128>}, {pipeline_mode = #tpu.pipeline_mode<synchronous>, transform_indices = @transform_4, window_bounds = array<i64: 4, 1, 128>}, {pipeline_mode = #tpu.pipeline_mode<synchronous>, transform_indices = @transform_5, window_bounds = array<i64: 4, 128, 128>}, {pipeline_mode = #tpu.pipeline_mode<synchronous>, transform_indices = @transform_6, window_bounds = array<i64: 4, 1, 128>}, {pipeline_mode = #tpu.pipeline_mode<synchronous>, transform_indices = @transform_7, window_bounds = array<i64: 4, 128, 128>}, {pipeline_mode = #tpu.pipeline_mode<synchronous>, transform_indices = @transform_8, window_bounds = array<i64: 4, 1, 128>}, {pipeline_mode = #tpu.pipeline_mode<synchronous>, transform_indices = @transform_9, window_bounds = array<i64: 4, 128, 128>}, {pipeline_mode = #tpu.pipeline_mode<synchronous>, transform_indices = @transform_10, window_bounds = array<i64: 4, 1, 128>}, {pipeline_mode = #tpu.pipeline_mode<synchronous>, transform_indices = @transform_11, window_bounds = array<i64: 4, 128, 128>}, {pipeline_mode = #tpu.pipeline_mode<synchronous>, transform_indices = @transform_12, window_bounds = array<i64: 4, 1, 128>}, {pipeline_mode = #tpu.pipeline_mode<synchronous>, transform_indices = @transform_13, window_bounds = array<i64: 4, 1, 128>}, {pipeline_mode = #tpu.pipeline_mode<synchronous>, transform_indices = @transform_14, window_bounds = array<i64: 4, 1, 128>}, {pipeline_mode = #tpu.pipeline_mode<synchronous>, transform_indices = @transform_15, window_bounds = array<i64: 4, 128, 512>}, {pipeline_mode = #tpu.pipeline_mode<synchronous>, transform_indices = @transform_16, window_bounds = array<i64: 4, 1, 512>}, {pipeline_mode = #tpu.pipeline_mode<synchronous>, transform_indices = @transform_17, window_bounds = array<i64: 4, 512, 128>}, {pipeline_mode = #tpu.pipeline_mode<synchronous>, transform_indices = @transform_18, window_bounds = array<i64: 4, 1, 128>}, {pipeline_mode = #tpu.pipeline_mode<synchronous>, transform_indices = @transform_19, window_bounds = array<i64: 128, 512>}, {pipeline_mode = #tpu.pipeline_mode<synchronous>, transform_indices = @transform_20, window_bounds = array<i64: 1, 512>}, {pipeline_mode = #tpu.pipeline_mode<synchronous>, transform_indices = @transform_21, window_bounds = array<i64: 512, 128>}, {pipeline_mode = #tpu.pipeline_mode<synchronous>, transform_indices = @transform_22, window_bounds = array<i64: 1, 128>}, {pipeline_mode = #tpu.pipeline_mode<synchronous>, transform_indices = @transform_23, window_bounds = array<i64: 128, 128>}, {pipeline_mode = #tpu.pipeline_mode<synchronous>, transform_indices = @transform_24, window_bounds = array<i64: 1, 128>}, {transform_indices = @transform_25, window_bounds = array<i64: 1, 8, 128>}]} {
    %c0 = arith.constant 0 : index
    %c0_0 = arith.constant 0 : index
    %c0_1 = arith.constant 0 : index
    %0 = vector.load %arg1[%c0, %c0_0, %c0_1] : memref<1x8x1xi32, #tpu.memory_space<vmem>>, vector<1x8x1xi32>
    %1 = vector.shape_cast %0 : vector<1x8x1xi32> to vector<8x1xi32>
    %2 = tpu.iota {dimensions = array<i32: 1>} : vector<8x128xi32>
    %3 = vector.broadcast %1 : vector<8x1xi32> to vector<8x128xi32>
    %4 = arith.cmpi eq, %2, %3 : vector<8x128xi32>
    %cst = arith.constant 1.000000e+00 : f32
    %cst_2 = arith.constant 0.000000e+00 : f32
    %5 = vector.broadcast %cst : f32 to vector<8x128xf32>
    %6 = vector.broadcast %cst_2 : f32 to vector<8x128xf32>
    %7 = arith.select %4, %5, %6 : vector<8x128xi1>, vector<8x128xf32>
    %c0_3 = arith.constant 0 : index
    %c0_4 = arith.constant 0 : index
    %8 = vector.load %arg2[%c0_3, %c0_4] : memref<128x128xf32, #tpu.memory_space<vmem>>, vector<128x128xf32>
    %cst_5 = arith.constant dense<0.000000e+00> : vector<8x128xf32>
    %9 = tpu.matmul %7, %8, %cst_5 {dimension_numbers = #tpu.dot_dimension_numbers<[1], [0], [0], [1], [0, 0, 1, 1], [], []>} : vector<8x128xf32>, vector<128x128xf32>, vector<8x128xf32> -> vector<8x128xf32>
    %c0_6 = arith.constant 0 : index
    %c0_7 = arith.constant 0 : index
    %10 = vector.load %arg3[%c0_6, %c0_7] : memref<8x128xf32, #tpu.memory_space<vmem>>, vector<8x128xf32>
    %11 = arith.addf %9, %10 : vector<8x128xf32>
    %12 = tpu.iota {dimensions = array<i32: 0>} : vector<8x8xi32>
    %13 = tpu.iota {dimensions = array<i32: 1>} : vector<8x8xi32>
    %14 = arith.cmpi sle, %13, %12 : vector<8x8xi32>
    %cst_8 = arith.constant 0.000000e+00 : f32
    %cst_9 = arith.constant -1.000000e+30 : f32
    %15 = vector.broadcast %cst_8 : f32 to vector<8x8xf32>
    %16 = vector.broadcast %cst_9 : f32 to vector<8x8xf32>
    %17 = arith.select %14, %15, %16 : vector<8x8xi1>, vector<8x8xf32>
    %c0_10 = arith.constant 0 : index
    %c0_11 = arith.constant 0 : index
    %c0_12 = arith.constant 0 : index
    %18 = vector.load %arg4[%c0_10, %c0_11, %c0_12] : memref<4x1x128xf32, #tpu.memory_space<vmem>>, vector<1x1x128xf32>
    %19 = vector.shape_cast %18 : vector<1x1x128xf32> to vector<1x128xf32>
    %c0_13 = arith.constant 0 : index
    %c0_14 = arith.constant 0 : index
    %c0_15 = arith.constant 0 : index
    %20 = vector.load %arg5[%c0_13, %c0_14, %c0_15] : memref<4x1x128xf32, #tpu.memory_space<vmem>>, vector<1x1x128xf32>
    %21 = vector.shape_cast %20 : vector<1x1x128xf32> to vector<1x128xf32>
    %cst_16 = arith.constant dense<0.000000e+00> : vector<128xf32>
    %22 = vector.multi_reduction <add>, %11, %cst_16 [0] : vector<8x128xf32> to vector<128xf32>
    %23 = vector.shape_cast %22 : vector<128xf32> to vector<1x128xf32>
    %cst_17 = arith.constant 8.000000e+00 : f32
    %24 = vector.broadcast %cst_17 : f32 to vector<1x128xf32>
    %25 = arith.divf %23, %24 : vector<1x128xf32>
    %26 = vector.broadcast %25 : vector<1x128xf32> to vector<8x128xf32>
    %27 = arith.subf %11, %26 : vector<8x128xf32>
    %28 = arith.mulf %27, %27 : vector<8x128xf32>
    %cst_18 = arith.constant dense<0.000000e+00> : vector<128xf32>
    %29 = vector.multi_reduction <add>, %28, %cst_18 [0] : vector<8x128xf32> to vector<128xf32>
    %30 = vector.shape_cast %29 : vector<128xf32> to vector<1x128xf32>
    %cst_19 = arith.constant 7.000000e+00 : f32
    %31 = vector.broadcast %cst_19 : f32 to vector<1x128xf32>
    %32 = arith.divf %30, %31 : vector<1x128xf32>
    %33 = vector.broadcast %25 : vector<1x128xf32> to vector<8x128xf32>
    %34 = arith.subf %11, %33 : vector<8x128xf32>
    %cst_20 = arith.constant 9.99999974E-6 : f32
    %35 = vector.broadcast %cst_20 : f32 to vector<1x128xf32>
    %36 = arith.addf %32, %35 : vector<1x128xf32>
    %37 = math.rsqrt %36 : vector<1x128xf32>
    %38 = vector.broadcast %37 : vector<1x128xf32> to vector<8x128xf32>
    %39 = arith.mulf %34, %38 : vector<8x128xf32>
    %40 = vector.broadcast %19 : vector<1x128xf32> to vector<8x128xf32>
    %41 = arith.mulf %40, %39 : vector<8x128xf32>
    %42 = vector.broadcast %21 : vector<1x128xf32> to vector<8x128xf32>
    %43 = arith.addf %41, %42 : vector<8x128xf32>
    %c0_21 = arith.constant 0 : index
    %c0_22 = arith.constant 0 : index
    %c0_23 = arith.constant 0 : index
    %44 = vector.load %arg6[%c0_21, %c0_22, %c0_23] : memref<4x128x128xf32, #tpu.memory_space<vmem>>, vector<1x128x128xf32>
    %45 = vector.shape_cast %44 : vector<1x128x128xf32> to vector<128x128xf32>
    %cst_24 = arith.constant dense<0.000000e+00> : vector<8x128xf32>
    %46 = tpu.matmul %43, %45, %cst_24 {dimension_numbers = #tpu.dot_dimension_numbers<[1], [0], [0], [1], [0, 0, 1, 1], [], []>} : vector<8x128xf32>, vector<128x128xf32>, vector<8x128xf32> -> vector<8x128xf32>
    %c0_25 = arith.constant 0 : index
    %c0_26 = arith.constant 0 : index
    %c0_27 = arith.constant 0 : index
    %47 = vector.load %arg7[%c0_25, %c0_26, %c0_27] : memref<4x1x128xf32, #tpu.memory_space<vmem>>, vector<1x1x128xf32>
    %48 = vector.shape_cast %47 : vector<1x1x128xf32> to vector<1x128xf32>
    %49 = vector.broadcast %48 : vector<1x128xf32> to vector<8x128xf32>
    %50 = arith.addf %46, %49 : vector<8x128xf32>
    %c0_28 = arith.constant 0 : index
    %c0_29 = arith.constant 0 : index
    %c0_30 = arith.constant 0 : index
    %51 = vector.load %arg8[%c0_28, %c0_29, %c0_30] : memref<4x128x128xf32, #tpu.memory_space<vmem>>, vector<1x128x128xf32>
    %52 = vector.shape_cast %51 : vector<1x128x128xf32> to vector<128x128xf32>
    %cst_31 = arith.constant dense<0.000000e+00> : vector<8x128xf32>
    %53 = tpu.matmul %43, %52, %cst_31 {dimension_numbers = #tpu.dot_dimension_numbers<[1], [0], [0], [1], [0, 0, 1, 1], [], []>} : vector<8x128xf32>, vector<128x128xf32>, vector<8x128xf32> -> vector<8x128xf32>
    %c0_32 = arith.constant 0 : index
    %c0_33 = arith.constant 0 : index
    %c0_34 = arith.constant 0 : index
    %54 = vector.load %arg9[%c0_32, %c0_33, %c0_34] : memref<4x1x128xf32, #tpu.memory_space<vmem>>, vector<1x1x128xf32>
    %55 = vector.shape_cast %54 : vector<1x1x128xf32> to vector<1x128xf32>
    %56 = vector.broadcast %55 : vector<1x128xf32> to vector<8x128xf32>
    %57 = arith.addf %53, %56 : vector<8x128xf32>
    %c0_35 = arith.constant 0 : index
    %c0_36 = arith.constant 0 : index
    %c0_37 = arith.constant 0 : index
    %58 = vector.load %arg10[%c0_35, %c0_36, %c0_37] : memref<4x128x128xf32, #tpu.memory_space<vmem>>, vector<1x128x128xf32>
    %59 = vector.shape_cast %58 : vector<1x128x128xf32> to vector<128x128xf32>
    %cst_38 = arith.constant dense<0.000000e+00> : vector<8x128xf32>
    %60 = tpu.matmul %43, %59, %cst_38 {dimension_numbers = #tpu.dot_dimension_numbers<[1], [0], [0], [1], [0, 0, 1, 1], [], []>} : vector<8x128xf32>, vector<128x128xf32>, vector<8x128xf32> -> vector<8x128xf32>
    %c0_39 = arith.constant 0 : index
    %c0_40 = arith.constant 0 : index
    %c0_41 = arith.constant 0 : index
    %61 = vector.load %arg11[%c0_39, %c0_40, %c0_41] : memref<4x1x128xf32, #tpu.memory_space<vmem>>, vector<1x1x128xf32>
    %62 = vector.shape_cast %61 : vector<1x1x128xf32> to vector<1x128xf32>
    %63 = vector.broadcast %62 : vector<1x128xf32> to vector<8x128xf32>
    %64 = arith.addf %60, %63 : vector<8x128xf32>
    %65 = vector.extract_strided_slice %50 {offsets = [0, 0], sizes = [8, 32], strides = [1, 1]} : vector<8x128xf32> to vector<8x32xf32>
    %66 = vector.extract_strided_slice %57 {offsets = [0, 0], sizes = [8, 32], strides = [1, 1]} : vector<8x128xf32> to vector<8x32xf32>
    %67 = tpu.transpose %66, [1, 0] : vector<8x32xf32> -> vector<32x8xf32>
    %cst_42 = arith.constant dense<0.000000e+00> : vector<8x8xf32>
    %68 = tpu.matmul %65, %67, %cst_42 {dimension_numbers = #tpu.dot_dimension_numbers<[1], [0], [0], [1], [0, 0, 1, 1], [], []>} : vector<8x32xf32>, vector<32x8xf32>, vector<8x8xf32> -> vector<8x8xf32>
    %cst_43 = arith.constant 0.0883883461 : f32
    %69 = vector.broadcast %cst_43 : f32 to vector<8x8xf32>
    %70 = arith.mulf %68, %69 : vector<8x8xf32>
    %71 = arith.addf %70, %17 : vector<8x8xf32>
    %cst_44 = arith.constant dense<0xFF800000> : vector<8xf32>
    %72 = vector.multi_reduction <maximumf>, %71, %cst_44 [1] : vector<8x8xf32> to vector<8xf32>
    %73 = vector.shape_cast %72 : vector<8xf32> to vector<8x1xf32>
    %74 = vector.broadcast %73 : vector<8x1xf32> to vector<8x8xf32>
    %75 = arith.subf %71, %74 : vector<8x8xf32>
    %76 = math.exp %75 : vector<8x8xf32>
    %cst_45 = arith.constant dense<0.000000e+00> : vector<8xf32>
    %77 = vector.multi_reduction <add>, %76, %cst_45 [1] : vector<8x8xf32> to vector<8xf32>
    %78 = vector.shape_cast %77 : vector<8xf32> to vector<8x1xf32>
    %79 = tpu.reciprocal %78 {approx = true} : vector<8x1xf32> -> vector<8x1xf32>
    %80 = vector.broadcast %79 : vector<8x1xf32> to vector<8x8xf32>
    %81 = arith.mulf %76, %80 : vector<8x8xf32>
    %82 = vector.extract_strided_slice %64 {offsets = [0, 0], sizes = [8, 32], strides = [1, 1]} : vector<8x128xf32> to vector<8x32xf32>
    %cst_46 = arith.constant dense<0.000000e+00> : vector<8x32xf32>
    %83 = tpu.matmul %81, %82, %cst_46 {dimension_numbers = #tpu.dot_dimension_numbers<[1], [0], [0], [1], [0, 0, 1, 1], [], []>} : vector<8x8xf32>, vector<8x32xf32>, vector<8x32xf32> -> vector<8x32xf32>
    %84 = vector.extract_strided_slice %50 {offsets = [0, 32], sizes = [8, 32], strides = [1, 1]} : vector<8x128xf32> to vector<8x32xf32>
    %85 = vector.extract_strided_slice %57 {offsets = [0, 32], sizes = [8, 32], strides = [1, 1]} : vector<8x128xf32> to vector<8x32xf32>
    %86 = tpu.transpose %85, [1, 0] : vector<8x32xf32> -> vector<32x8xf32>
    %cst_47 = arith.constant dense<0.000000e+00> : vector<8x8xf32>
    %87 = tpu.matmul %84, %86, %cst_47 {dimension_numbers = #tpu.dot_dimension_numbers<[1], [0], [0], [1], [0, 0, 1, 1], [], []>} : vector<8x32xf32>, vector<32x8xf32>, vector<8x8xf32> -> vector<8x8xf32>
    %cst_48 = arith.constant 0.0883883461 : f32
    %88 = vector.broadcast %cst_48 : f32 to vector<8x8xf32>
    %89 = arith.mulf %87, %88 : vector<8x8xf32>
    %90 = arith.addf %89, %17 : vector<8x8xf32>
    %cst_49 = arith.constant dense<0xFF800000> : vector<8xf32>
    %91 = vector.multi_reduction <maximumf>, %90, %cst_49 [1] : vector<8x8xf32> to vector<8xf32>
    %92 = vector.shape_cast %91 : vector<8xf32> to vector<8x1xf32>
    %93 = vector.broadcast %92 : vector<8x1xf32> to vector<8x8xf32>
    %94 = arith.subf %90, %93 : vector<8x8xf32>
    %95 = math.exp %94 : vector<8x8xf32>
    %cst_50 = arith.constant dense<0.000000e+00> : vector<8xf32>
    %96 = vector.multi_reduction <add>, %95, %cst_50 [1] : vector<8x8xf32> to vector<8xf32>
    %97 = vector.shape_cast %96 : vector<8xf32> to vector<8x1xf32>
    %98 = tpu.reciprocal %97 {approx = true} : vector<8x1xf32> -> vector<8x1xf32>
    %99 = vector.broadcast %98 : vector<8x1xf32> to vector<8x8xf32>
    %100 = arith.mulf %95, %99 : vector<8x8xf32>
    %101 = vector.extract_strided_slice %64 {offsets = [0, 32], sizes = [8, 32], strides = [1, 1]} : vector<8x128xf32> to vector<8x32xf32>
    %cst_51 = arith.constant dense<0.000000e+00> : vector<8x32xf32>
    %102 = tpu.matmul %100, %101, %cst_51 {dimension_numbers = #tpu.dot_dimension_numbers<[1], [0], [0], [1], [0, 0, 1, 1], [], []>} : vector<8x8xf32>, vector<8x32xf32>, vector<8x32xf32> -> vector<8x32xf32>
    %103 = vector.extract_strided_slice %50 {offsets = [0, 64], sizes = [8, 32], strides = [1, 1]} : vector<8x128xf32> to vector<8x32xf32>
    %104 = vector.extract_strided_slice %57 {offsets = [0, 64], sizes = [8, 32], strides = [1, 1]} : vector<8x128xf32> to vector<8x32xf32>
    %105 = tpu.transpose %104, [1, 0] : vector<8x32xf32> -> vector<32x8xf32>
    %cst_52 = arith.constant dense<0.000000e+00> : vector<8x8xf32>
    %106 = tpu.matmul %103, %105, %cst_52 {dimension_numbers = #tpu.dot_dimension_numbers<[1], [0], [0], [1], [0, 0, 1, 1], [], []>} : vector<8x32xf32>, vector<32x8xf32>, vector<8x8xf32> -> vector<8x8xf32>
    %cst_53 = arith.constant 0.0883883461 : f32
    %107 = vector.broadcast %cst_53 : f32 to vector<8x8xf32>
    %108 = arith.mulf %106, %107 : vector<8x8xf32>
    %109 = arith.addf %108, %17 : vector<8x8xf32>
    %cst_54 = arith.constant dense<0xFF800000> : vector<8xf32>
    %110 = vector.multi_reduction <maximumf>, %109, %cst_54 [1] : vector<8x8xf32> to vector<8xf32>
    %111 = vector.shape_cast %110 : vector<8xf32> to vector<8x1xf32>
    %112 = vector.broadcast %111 : vector<8x1xf32> to vector<8x8xf32>
    %113 = arith.subf %109, %112 : vector<8x8xf32>
    %114 = math.exp %113 : vector<8x8xf32>
    %cst_55 = arith.constant dense<0.000000e+00> : vector<8xf32>
    %115 = vector.multi_reduction <add>, %114, %cst_55 [1] : vector<8x8xf32> to vector<8xf32>
    %116 = vector.shape_cast %115 : vector<8xf32> to vector<8x1xf32>
    %117 = tpu.reciprocal %116 {approx = true} : vector<8x1xf32> -> vector<8x1xf32>
    %118 = vector.broadcast %117 : vector<8x1xf32> to vector<8x8xf32>
    %119 = arith.mulf %114, %118 : vector<8x8xf32>
    %120 = vector.extract_strided_slice %64 {offsets = [0, 64], sizes = [8, 32], strides = [1, 1]} : vector<8x128xf32> to vector<8x32xf32>
    %cst_56 = arith.constant dense<0.000000e+00> : vector<8x32xf32>
    %121 = tpu.matmul %119, %120, %cst_56 {dimension_numbers = #tpu.dot_dimension_numbers<[1], [0], [0], [1], [0, 0, 1, 1], [], []>} : vector<8x8xf32>, vector<8x32xf32>, vector<8x32xf32> -> vector<8x32xf32>
    %122 = vector.extract_strided_slice %50 {offsets = [0, 96], sizes = [8, 32], strides = [1, 1]} : vector<8x128xf32> to vector<8x32xf32>
    %123 = vector.extract_strided_slice %57 {offsets = [0, 96], sizes = [8, 32], strides = [1, 1]} : vector<8x128xf32> to vector<8x32xf32>
    %124 = tpu.transpose %123, [1, 0] : vector<8x32xf32> -> vector<32x8xf32>
    %cst_57 = arith.constant dense<0.000000e+00> : vector<8x8xf32>
    %125 = tpu.matmul %122, %124, %cst_57 {dimension_numbers = #tpu.dot_dimension_numbers<[1], [0], [0], [1], [0, 0, 1, 1], [], []>} : vector<8x32xf32>, vector<32x8xf32>, vector<8x8xf32> -> vector<8x8xf32>
    %cst_58 = arith.constant 0.0883883461 : f32
    %126 = vector.broadcast %cst_58 : f32 to vector<8x8xf32>
    %127 = arith.mulf %125, %126 : vector<8x8xf32>
    %128 = arith.addf %127, %17 : vector<8x8xf32>
    %cst_59 = arith.constant dense<0xFF800000> : vector<8xf32>
    %129 = vector.multi_reduction <maximumf>, %128, %cst_59 [1] : vector<8x8xf32> to vector<8xf32>
    %130 = vector.shape_cast %129 : vector<8xf32> to vector<8x1xf32>
    %131 = vector.broadcast %130 : vector<8x1xf32> to vector<8x8xf32>
    %132 = arith.subf %128, %131 : vector<8x8xf32>
    %133 = math.exp %132 : vector<8x8xf32>
    %cst_60 = arith.constant dense<0.000000e+00> : vector<8xf32>
    %134 = vector.multi_reduction <add>, %133, %cst_60 [1] : vector<8x8xf32> to vector<8xf32>
    %135 = vector.shape_cast %134 : vector<8xf32> to vector<8x1xf32>
    %136 = tpu.reciprocal %135 {approx = true} : vector<8x1xf32> -> vector<8x1xf32>
    %137 = vector.broadcast %136 : vector<8x1xf32> to vector<8x8xf32>
    %138 = arith.mulf %133, %137 : vector<8x8xf32>
    %139 = vector.extract_strided_slice %64 {offsets = [0, 96], sizes = [8, 32], strides = [1, 1]} : vector<8x128xf32> to vector<8x32xf32>
    %cst_61 = arith.constant dense<0.000000e+00> : vector<8x32xf32>
    %140 = tpu.matmul %138, %139, %cst_61 {dimension_numbers = #tpu.dot_dimension_numbers<[1], [0], [0], [1], [0, 0, 1, 1], [], []>} : vector<8x8xf32>, vector<8x32xf32>, vector<8x32xf32> -> vector<8x32xf32>
    %141 = tpu.concatenate %83, %102, %121, %140 in 1 : vector<8x32xf32>, vector<8x32xf32>, vector<8x32xf32>, vector<8x32xf32> -> vector<8x128xf32>
    %c0_62 = arith.constant 0 : index
    %c0_63 = arith.constant 0 : index
    %c0_64 = arith.constant 0 : index
    %142 = vector.load %arg12[%c0_62, %c0_63, %c0_64] : memref<4x128x128xf32, #tpu.memory_space<vmem>>, vector<1x128x128xf32>
    %143 = vector.shape_cast %142 : vector<1x128x128xf32> to vector<128x128xf32>
    %cst_65 = arith.constant dense<0.000000e+00> : vector<8x128xf32>
    %144 = tpu.matmul %141, %143, %cst_65 {dimension_numbers = #tpu.dot_dimension_numbers<[1], [0], [0], [1], [0, 0, 1, 1], [], []>} : vector<8x128xf32>, vector<128x128xf32>, vector<8x128xf32> -> vector<8x128xf32>
    %145 = arith.addf %11, %144 : vector<8x128xf32>
    %c0_66 = arith.constant 0 : index
    %c0_67 = arith.constant 0 : index
    %c0_68 = arith.constant 0 : index
    %146 = vector.load %arg13[%c0_66, %c0_67, %c0_68] : memref<4x1x128xf32, #tpu.memory_space<vmem>>, vector<1x1x128xf32>
    %147 = vector.shape_cast %146 : vector<1x1x128xf32> to vector<1x128xf32>
    %148 = vector.broadcast %147 : vector<1x128xf32> to vector<8x128xf32>
    %149 = arith.addf %145, %148 : vector<8x128xf32>
    %c0_69 = arith.constant 0 : index
    %c0_70 = arith.constant 0 : index
    %c0_71 = arith.constant 0 : index
    %150 = vector.load %arg14[%c0_69, %c0_70, %c0_71] : memref<4x1x128xf32, #tpu.memory_space<vmem>>, vector<1x1x128xf32>
    %151 = vector.shape_cast %150 : vector<1x1x128xf32> to vector<1x128xf32>
    %c0_72 = arith.constant 0 : index
    %c0_73 = arith.constant 0 : index
    %c0_74 = arith.constant 0 : index
    %152 = vector.load %arg15[%c0_72, %c0_73, %c0_74] : memref<4x1x128xf32, #tpu.memory_space<vmem>>, vector<1x1x128xf32>
    %153 = vector.shape_cast %152 : vector<1x1x128xf32> to vector<1x128xf32>
    %cst_75 = arith.constant dense<0.000000e+00> : vector<128xf32>
    %154 = vector.multi_reduction <add>, %149, %cst_75 [0] : vector<8x128xf32> to vector<128xf32>
    %155 = vector.shape_cast %154 : vector<128xf32> to vector<1x128xf32>
    %cst_76 = arith.constant 8.000000e+00 : f32
    %156 = vector.broadcast %cst_76 : f32 to vector<1x128xf32>
    %157 = arith.divf %155, %156 : vector<1x128xf32>
    %158 = vector.broadcast %157 : vector<1x128xf32> to vector<8x128xf32>
    %159 = arith.subf %149, %158 : vector<8x128xf32>
    %160 = arith.mulf %159, %159 : vector<8x128xf32>
    %cst_77 = arith.constant dense<0.000000e+00> : vector<128xf32>
    %161 = vector.multi_reduction <add>, %160, %cst_77 [0] : vector<8x128xf32> to vector<128xf32>
    %162 = vector.shape_cast %161 : vector<128xf32> to vector<1x128xf32>
    %cst_78 = arith.constant 7.000000e+00 : f32
    %163 = vector.broadcast %cst_78 : f32 to vector<1x128xf32>
    %164 = arith.divf %162, %163 : vector<1x128xf32>
    %165 = vector.broadcast %157 : vector<1x128xf32> to vector<8x128xf32>
    %166 = arith.subf %149, %165 : vector<8x128xf32>
    %cst_79 = arith.constant 9.99999974E-6 : f32
    %167 = vector.broadcast %cst_79 : f32 to vector<1x128xf32>
    %168 = arith.addf %164, %167 : vector<1x128xf32>
    %169 = math.rsqrt %168 : vector<1x128xf32>
    %170 = vector.broadcast %169 : vector<1x128xf32> to vector<8x128xf32>
    %171 = arith.mulf %166, %170 : vector<8x128xf32>
    %172 = vector.broadcast %151 : vector<1x128xf32> to vector<8x128xf32>
    %173 = arith.mulf %172, %171 : vector<8x128xf32>
    %174 = vector.broadcast %153 : vector<1x128xf32> to vector<8x128xf32>
    %175 = arith.addf %173, %174 : vector<8x128xf32>
    %c0_80 = arith.constant 0 : index
    %c0_81 = arith.constant 0 : index
    %c0_82 = arith.constant 0 : index
    %176 = vector.load %arg16[%c0_80, %c0_81, %c0_82] : memref<4x128x512xf32, #tpu.memory_space<vmem>>, vector<1x128x512xf32>
    %177 = vector.shape_cast %176 : vector<1x128x512xf32> to vector<128x512xf32>
    %c0_83 = arith.constant 0 : index
    %c0_84 = arith.constant 0 : index
    %c0_85 = arith.constant 0 : index
    %178 = vector.load %arg17[%c0_83, %c0_84, %c0_85] : memref<4x1x512xf32, #tpu.memory_space<vmem>>, vector<1x1x512xf32>
    %179 = vector.shape_cast %178 : vector<1x1x512xf32> to vector<1x512xf32>
    %c0_86 = arith.constant 0 : index
    %c0_87 = arith.constant 0 : index
    %c0_88 = arith.constant 0 : index
    %180 = vector.load %arg18[%c0_86, %c0_87, %c0_88] : memref<4x512x128xf32, #tpu.memory_space<vmem>>, vector<1x512x128xf32>
    %181 = vector.shape_cast %180 : vector<1x512x128xf32> to vector<512x128xf32>
    %c0_89 = arith.constant 0 : index
    %c0_90 = arith.constant 0 : index
    %c0_91 = arith.constant 0 : index
    %182 = vector.load %arg19[%c0_89, %c0_90, %c0_91] : memref<4x1x128xf32, #tpu.memory_space<vmem>>, vector<1x1x128xf32>
    %183 = vector.shape_cast %182 : vector<1x1x128xf32> to vector<1x128xf32>
    %cst_92 = arith.constant dense<0.000000e+00> : vector<8x512xf32>
    %184 = tpu.matmul %175, %177, %cst_92 {dimension_numbers = #tpu.dot_dimension_numbers<[1], [0], [0], [1], [0, 0, 1, 1], [], []>} : vector<8x128xf32>, vector<128x512xf32>, vector<8x512xf32> -> vector<8x512xf32>
    %185 = vector.broadcast %179 : vector<1x512xf32> to vector<8x512xf32>
    %186 = arith.addf %184, %185 : vector<8x512xf32>
    %cst_93 = arith.constant 0.000000e+00 : f32
    %187 = vector.broadcast %cst_93 : f32 to vector<8x512xf32>
    %188 = arith.maximumf %186, %187 : vector<8x512xf32>
    %cst_94 = arith.constant dense<0.000000e+00> : vector<8x128xf32>
    %189 = tpu.matmul %188, %181, %cst_94 {dimension_numbers = #tpu.dot_dimension_numbers<[1], [0], [0], [1], [0, 0, 1, 1], [], []>} : vector<8x512xf32>, vector<512x128xf32>, vector<8x128xf32> -> vector<8x128xf32>
    %190 = vector.broadcast %183 : vector<1x128xf32> to vector<8x128xf32>
    %191 = arith.addf %189, %190 : vector<8x128xf32>
    %192 = arith.addf %149, %191 : vector<8x128xf32>
    %c1 = arith.constant 1 : index
    %c0_95 = arith.constant 0 : index
    %c0_96 = arith.constant 0 : index
    %193 = vector.load %arg4[%c1, %c0_95, %c0_96] : memref<4x1x128xf32, #tpu.memory_space<vmem>>, vector<1x1x128xf32>
    %194 = vector.shape_cast %193 : vector<1x1x128xf32> to vector<1x128xf32>
    %c1_97 = arith.constant 1 : index
    %c0_98 = arith.constant 0 : index
    %c0_99 = arith.constant 0 : index
    %195 = vector.load %arg5[%c1_97, %c0_98, %c0_99] : memref<4x1x128xf32, #tpu.memory_space<vmem>>, vector<1x1x128xf32>
    %196 = vector.shape_cast %195 : vector<1x1x128xf32> to vector<1x128xf32>
    %cst_100 = arith.constant dense<0.000000e+00> : vector<128xf32>
    %197 = vector.multi_reduction <add>, %192, %cst_100 [0] : vector<8x128xf32> to vector<128xf32>
    %198 = vector.shape_cast %197 : vector<128xf32> to vector<1x128xf32>
    %cst_101 = arith.constant 8.000000e+00 : f32
    %199 = vector.broadcast %cst_101 : f32 to vector<1x128xf32>
    %200 = arith.divf %198, %199 : vector<1x128xf32>
    %201 = vector.broadcast %200 : vector<1x128xf32> to vector<8x128xf32>
    %202 = arith.subf %192, %201 : vector<8x128xf32>
    %203 = arith.mulf %202, %202 : vector<8x128xf32>
    %cst_102 = arith.constant dense<0.000000e+00> : vector<128xf32>
    %204 = vector.multi_reduction <add>, %203, %cst_102 [0] : vector<8x128xf32> to vector<128xf32>
    %205 = vector.shape_cast %204 : vector<128xf32> to vector<1x128xf32>
    %cst_103 = arith.constant 7.000000e+00 : f32
    %206 = vector.broadcast %cst_103 : f32 to vector<1x128xf32>
    %207 = arith.divf %205, %206 : vector<1x128xf32>
    %208 = vector.broadcast %200 : vector<1x128xf32> to vector<8x128xf32>
    %209 = arith.subf %192, %208 : vector<8x128xf32>
    %cst_104 = arith.constant 9.99999974E-6 : f32
    %210 = vector.broadcast %cst_104 : f32 to vector<1x128xf32>
    %211 = arith.addf %207, %210 : vector<1x128xf32>
    %212 = math.rsqrt %211 : vector<1x128xf32>
    %213 = vector.broadcast %212 : vector<1x128xf32> to vector<8x128xf32>
    %214 = arith.mulf %209, %213 : vector<8x128xf32>
    %215 = vector.broadcast %194 : vector<1x128xf32> to vector<8x128xf32>
    %216 = arith.mulf %215, %214 : vector<8x128xf32>
    %217 = vector.broadcast %196 : vector<1x128xf32> to vector<8x128xf32>
    %218 = arith.addf %216, %217 : vector<8x128xf32>
    %c1_105 = arith.constant 1 : index
    %c0_106 = arith.constant 0 : index
    %c0_107 = arith.constant 0 : index
    %219 = vector.load %arg6[%c1_105, %c0_106, %c0_107] : memref<4x128x128xf32, #tpu.memory_space<vmem>>, vector<1x128x128xf32>
    %220 = vector.shape_cast %219 : vector<1x128x128xf32> to vector<128x128xf32>
    %cst_108 = arith.constant dense<0.000000e+00> : vector<8x128xf32>
    %221 = tpu.matmul %218, %220, %cst_108 {dimension_numbers = #tpu.dot_dimension_numbers<[1], [0], [0], [1], [0, 0, 1, 1], [], []>} : vector<8x128xf32>, vector<128x128xf32>, vector<8x128xf32> -> vector<8x128xf32>
    %c1_109 = arith.constant 1 : index
    %c0_110 = arith.constant 0 : index
    %c0_111 = arith.constant 0 : index
    %222 = vector.load %arg7[%c1_109, %c0_110, %c0_111] : memref<4x1x128xf32, #tpu.memory_space<vmem>>, vector<1x1x128xf32>
    %223 = vector.shape_cast %222 : vector<1x1x128xf32> to vector<1x128xf32>
    %224 = vector.broadcast %223 : vector<1x128xf32> to vector<8x128xf32>
    %225 = arith.addf %221, %224 : vector<8x128xf32>
    %c1_112 = arith.constant 1 : index
    %c0_113 = arith.constant 0 : index
    %c0_114 = arith.constant 0 : index
    %226 = vector.load %arg8[%c1_112, %c0_113, %c0_114] : memref<4x128x128xf32, #tpu.memory_space<vmem>>, vector<1x128x128xf32>
    %227 = vector.shape_cast %226 : vector<1x128x128xf32> to vector<128x128xf32>
    %cst_115 = arith.constant dense<0.000000e+00> : vector<8x128xf32>
    %228 = tpu.matmul %218, %227, %cst_115 {dimension_numbers = #tpu.dot_dimension_numbers<[1], [0], [0], [1], [0, 0, 1, 1], [], []>} : vector<8x128xf32>, vector<128x128xf32>, vector<8x128xf32> -> vector<8x128xf32>
    %c1_116 = arith.constant 1 : index
    %c0_117 = arith.constant 0 : index
    %c0_118 = arith.constant 0 : index
    %229 = vector.load %arg9[%c1_116, %c0_117, %c0_118] : memref<4x1x128xf32, #tpu.memory_space<vmem>>, vector<1x1x128xf32>
    %230 = vector.shape_cast %229 : vector<1x1x128xf32> to vector<1x128xf32>
    %231 = vector.broadcast %230 : vector<1x128xf32> to vector<8x128xf32>
    %232 = arith.addf %228, %231 : vector<8x128xf32>
    %c1_119 = arith.constant 1 : index
    %c0_120 = arith.constant 0 : index
    %c0_121 = arith.constant 0 : index
    %233 = vector.load %arg10[%c1_119, %c0_120, %c0_121] : memref<4x128x128xf32, #tpu.memory_space<vmem>>, vector<1x128x128xf32>
    %234 = vector.shape_cast %233 : vector<1x128x128xf32> to vector<128x128xf32>
    %cst_122 = arith.constant dense<0.000000e+00> : vector<8x128xf32>
    %235 = tpu.matmul %218, %234, %cst_122 {dimension_numbers = #tpu.dot_dimension_numbers<[1], [0], [0], [1], [0, 0, 1, 1], [], []>} : vector<8x128xf32>, vector<128x128xf32>, vector<8x128xf32> -> vector<8x128xf32>
    %c1_123 = arith.constant 1 : index
    %c0_124 = arith.constant 0 : index
    %c0_125 = arith.constant 0 : index
    %236 = vector.load %arg11[%c1_123, %c0_124, %c0_125] : memref<4x1x128xf32, #tpu.memory_space<vmem>>, vector<1x1x128xf32>
    %237 = vector.shape_cast %236 : vector<1x1x128xf32> to vector<1x128xf32>
    %238 = vector.broadcast %237 : vector<1x128xf32> to vector<8x128xf32>
    %239 = arith.addf %235, %238 : vector<8x128xf32>
    %240 = vector.extract_strided_slice %225 {offsets = [0, 0], sizes = [8, 32], strides = [1, 1]} : vector<8x128xf32> to vector<8x32xf32>
    %241 = vector.extract_strided_slice %232 {offsets = [0, 0], sizes = [8, 32], strides = [1, 1]} : vector<8x128xf32> to vector<8x32xf32>
    %242 = tpu.transpose %241, [1, 0] : vector<8x32xf32> -> vector<32x8xf32>
    %cst_126 = arith.constant dense<0.000000e+00> : vector<8x8xf32>
    %243 = tpu.matmul %240, %242, %cst_126 {dimension_numbers = #tpu.dot_dimension_numbers<[1], [0], [0], [1], [0, 0, 1, 1], [], []>} : vector<8x32xf32>, vector<32x8xf32>, vector<8x8xf32> -> vector<8x8xf32>
    %cst_127 = arith.constant 0.0883883461 : f32
    %244 = vector.broadcast %cst_127 : f32 to vector<8x8xf32>
    %245 = arith.mulf %243, %244 : vector<8x8xf32>
    %246 = arith.addf %245, %17 : vector<8x8xf32>
    %cst_128 = arith.constant dense<0xFF800000> : vector<8xf32>
    %247 = vector.multi_reduction <maximumf>, %246, %cst_128 [1] : vector<8x8xf32> to vector<8xf32>
    %248 = vector.shape_cast %247 : vector<8xf32> to vector<8x1xf32>
    %249 = vector.broadcast %248 : vector<8x1xf32> to vector<8x8xf32>
    %250 = arith.subf %246, %249 : vector<8x8xf32>
    %251 = math.exp %250 : vector<8x8xf32>
    %cst_129 = arith.constant dense<0.000000e+00> : vector<8xf32>
    %252 = vector.multi_reduction <add>, %251, %cst_129 [1] : vector<8x8xf32> to vector<8xf32>
    %253 = vector.shape_cast %252 : vector<8xf32> to vector<8x1xf32>
    %254 = tpu.reciprocal %253 {approx = true} : vector<8x1xf32> -> vector<8x1xf32>
    %255 = vector.broadcast %254 : vector<8x1xf32> to vector<8x8xf32>
    %256 = arith.mulf %251, %255 : vector<8x8xf32>
    %257 = vector.extract_strided_slice %239 {offsets = [0, 0], sizes = [8, 32], strides = [1, 1]} : vector<8x128xf32> to vector<8x32xf32>
    %cst_130 = arith.constant dense<0.000000e+00> : vector<8x32xf32>
    %258 = tpu.matmul %256, %257, %cst_130 {dimension_numbers = #tpu.dot_dimension_numbers<[1], [0], [0], [1], [0, 0, 1, 1], [], []>} : vector<8x8xf32>, vector<8x32xf32>, vector<8x32xf32> -> vector<8x32xf32>
    %259 = vector.extract_strided_slice %225 {offsets = [0, 32], sizes = [8, 32], strides = [1, 1]} : vector<8x128xf32> to vector<8x32xf32>
    %260 = vector.extract_strided_slice %232 {offsets = [0, 32], sizes = [8, 32], strides = [1, 1]} : vector<8x128xf32> to vector<8x32xf32>
    %261 = tpu.transpose %260, [1, 0] : vector<8x32xf32> -> vector<32x8xf32>
    %cst_131 = arith.constant dense<0.000000e+00> : vector<8x8xf32>
    %262 = tpu.matmul %259, %261, %cst_131 {dimension_numbers = #tpu.dot_dimension_numbers<[1], [0], [0], [1], [0, 0, 1, 1], [], []>} : vector<8x32xf32>, vector<32x8xf32>, vector<8x8xf32> -> vector<8x8xf32>
    %cst_132 = arith.constant 0.0883883461 : f32
    %263 = vector.broadcast %cst_132 : f32 to vector<8x8xf32>
    %264 = arith.mulf %262, %263 : vector<8x8xf32>
    %265 = arith.addf %264, %17 : vector<8x8xf32>
    %cst_133 = arith.constant dense<0xFF800000> : vector<8xf32>
    %266 = vector.multi_reduction <maximumf>, %265, %cst_133 [1] : vector<8x8xf32> to vector<8xf32>
    %267 = vector.shape_cast %266 : vector<8xf32> to vector<8x1xf32>
    %268 = vector.broadcast %267 : vector<8x1xf32> to vector<8x8xf32>
    %269 = arith.subf %265, %268 : vector<8x8xf32>
    %270 = math.exp %269 : vector<8x8xf32>
    %cst_134 = arith.constant dense<0.000000e+00> : vector<8xf32>
    %271 = vector.multi_reduction <add>, %270, %cst_134 [1] : vector<8x8xf32> to vector<8xf32>
    %272 = vector.shape_cast %271 : vector<8xf32> to vector<8x1xf32>
    %273 = tpu.reciprocal %272 {approx = true} : vector<8x1xf32> -> vector<8x1xf32>
    %274 = vector.broadcast %273 : vector<8x1xf32> to vector<8x8xf32>
    %275 = arith.mulf %270, %274 : vector<8x8xf32>
    %276 = vector.extract_strided_slice %239 {offsets = [0, 32], sizes = [8, 32], strides = [1, 1]} : vector<8x128xf32> to vector<8x32xf32>
    %cst_135 = arith.constant dense<0.000000e+00> : vector<8x32xf32>
    %277 = tpu.matmul %275, %276, %cst_135 {dimension_numbers = #tpu.dot_dimension_numbers<[1], [0], [0], [1], [0, 0, 1, 1], [], []>} : vector<8x8xf32>, vector<8x32xf32>, vector<8x32xf32> -> vector<8x32xf32>
    %278 = vector.extract_strided_slice %225 {offsets = [0, 64], sizes = [8, 32], strides = [1, 1]} : vector<8x128xf32> to vector<8x32xf32>
    %279 = vector.extract_strided_slice %232 {offsets = [0, 64], sizes = [8, 32], strides = [1, 1]} : vector<8x128xf32> to vector<8x32xf32>
    %280 = tpu.transpose %279, [1, 0] : vector<8x32xf32> -> vector<32x8xf32>
    %cst_136 = arith.constant dense<0.000000e+00> : vector<8x8xf32>
    %281 = tpu.matmul %278, %280, %cst_136 {dimension_numbers = #tpu.dot_dimension_numbers<[1], [0], [0], [1], [0, 0, 1, 1], [], []>} : vector<8x32xf32>, vector<32x8xf32>, vector<8x8xf32> -> vector<8x8xf32>
    %cst_137 = arith.constant 0.0883883461 : f32
    %282 = vector.broadcast %cst_137 : f32 to vector<8x8xf32>
    %283 = arith.mulf %281, %282 : vector<8x8xf32>
    %284 = arith.addf %283, %17 : vector<8x8xf32>
    %cst_138 = arith.constant dense<0xFF800000> : vector<8xf32>
    %285 = vector.multi_reduction <maximumf>, %284, %cst_138 [1] : vector<8x8xf32> to vector<8xf32>
    %286 = vector.shape_cast %285 : vector<8xf32> to vector<8x1xf32>
    %287 = vector.broadcast %286 : vector<8x1xf32> to vector<8x8xf32>
    %288 = arith.subf %284, %287 : vector<8x8xf32>
    %289 = math.exp %288 : vector<8x8xf32>
    %cst_139 = arith.constant dense<0.000000e+00> : vector<8xf32>
    %290 = vector.multi_reduction <add>, %289, %cst_139 [1] : vector<8x8xf32> to vector<8xf32>
    %291 = vector.shape_cast %290 : vector<8xf32> to vector<8x1xf32>
    %292 = tpu.reciprocal %291 {approx = true} : vector<8x1xf32> -> vector<8x1xf32>
    %293 = vector.broadcast %292 : vector<8x1xf32> to vector<8x8xf32>
    %294 = arith.mulf %289, %293 : vector<8x8xf32>
    %295 = vector.extract_strided_slice %239 {offsets = [0, 64], sizes = [8, 32], strides = [1, 1]} : vector<8x128xf32> to vector<8x32xf32>
    %cst_140 = arith.constant dense<0.000000e+00> : vector<8x32xf32>
    %296 = tpu.matmul %294, %295, %cst_140 {dimension_numbers = #tpu.dot_dimension_numbers<[1], [0], [0], [1], [0, 0, 1, 1], [], []>} : vector<8x8xf32>, vector<8x32xf32>, vector<8x32xf32> -> vector<8x32xf32>
    %297 = vector.extract_strided_slice %225 {offsets = [0, 96], sizes = [8, 32], strides = [1, 1]} : vector<8x128xf32> to vector<8x32xf32>
    %298 = vector.extract_strided_slice %232 {offsets = [0, 96], sizes = [8, 32], strides = [1, 1]} : vector<8x128xf32> to vector<8x32xf32>
    %299 = tpu.transpose %298, [1, 0] : vector<8x32xf32> -> vector<32x8xf32>
    %cst_141 = arith.constant dense<0.000000e+00> : vector<8x8xf32>
    %300 = tpu.matmul %297, %299, %cst_141 {dimension_numbers = #tpu.dot_dimension_numbers<[1], [0], [0], [1], [0, 0, 1, 1], [], []>} : vector<8x32xf32>, vector<32x8xf32>, vector<8x8xf32> -> vector<8x8xf32>
    %cst_142 = arith.constant 0.0883883461 : f32
    %301 = vector.broadcast %cst_142 : f32 to vector<8x8xf32>
    %302 = arith.mulf %300, %301 : vector<8x8xf32>
    %303 = arith.addf %302, %17 : vector<8x8xf32>
    %cst_143 = arith.constant dense<0xFF800000> : vector<8xf32>
    %304 = vector.multi_reduction <maximumf>, %303, %cst_143 [1] : vector<8x8xf32> to vector<8xf32>
    %305 = vector.shape_cast %304 : vector<8xf32> to vector<8x1xf32>
    %306 = vector.broadcast %305 : vector<8x1xf32> to vector<8x8xf32>
    %307 = arith.subf %303, %306 : vector<8x8xf32>
    %308 = math.exp %307 : vector<8x8xf32>
    %cst_144 = arith.constant dense<0.000000e+00> : vector<8xf32>
    %309 = vector.multi_reduction <add>, %308, %cst_144 [1] : vector<8x8xf32> to vector<8xf32>
    %310 = vector.shape_cast %309 : vector<8xf32> to vector<8x1xf32>
    %311 = tpu.reciprocal %310 {approx = true} : vector<8x1xf32> -> vector<8x1xf32>
    %312 = vector.broadcast %311 : vector<8x1xf32> to vector<8x8xf32>
    %313 = arith.mulf %308, %312 : vector<8x8xf32>
    %314 = vector.extract_strided_slice %239 {offsets = [0, 96], sizes = [8, 32], strides = [1, 1]} : vector<8x128xf32> to vector<8x32xf32>
    %cst_145 = arith.constant dense<0.000000e+00> : vector<8x32xf32>
    %315 = tpu.matmul %313, %314, %cst_145 {dimension_numbers = #tpu.dot_dimension_numbers<[1], [0], [0], [1], [0, 0, 1, 1], [], []>} : vector<8x8xf32>, vector<8x32xf32>, vector<8x32xf32> -> vector<8x32xf32>
    %316 = tpu.concatenate %258, %277, %296, %315 in 1 : vector<8x32xf32>, vector<8x32xf32>, vector<8x32xf32>, vector<8x32xf32> -> vector<8x128xf32>
    %c1_146 = arith.constant 1 : index
    %c0_147 = arith.constant 0 : index
    %c0_148 = arith.constant 0 : index
    %317 = vector.load %arg12[%c1_146, %c0_147, %c0_148] : memref<4x128x128xf32, #tpu.memory_space<vmem>>, vector<1x128x128xf32>
    %318 = vector.shape_cast %317 : vector<1x128x128xf32> to vector<128x128xf32>
    %cst_149 = arith.constant dense<0.000000e+00> : vector<8x128xf32>
    %319 = tpu.matmul %316, %318, %cst_149 {dimension_numbers = #tpu.dot_dimension_numbers<[1], [0], [0], [1], [0, 0, 1, 1], [], []>} : vector<8x128xf32>, vector<128x128xf32>, vector<8x128xf32> -> vector<8x128xf32>
    %320 = arith.addf %192, %319 : vector<8x128xf32>
    %c1_150 = arith.constant 1 : index
    %c0_151 = arith.constant 0 : index
    %c0_152 = arith.constant 0 : index
    %321 = vector.load %arg13[%c1_150, %c0_151, %c0_152] : memref<4x1x128xf32, #tpu.memory_space<vmem>>, vector<1x1x128xf32>
    %322 = vector.shape_cast %321 : vector<1x1x128xf32> to vector<1x128xf32>
    %323 = vector.broadcast %322 : vector<1x128xf32> to vector<8x128xf32>
    %324 = arith.addf %320, %323 : vector<8x128xf32>
    %c1_153 = arith.constant 1 : index
    %c0_154 = arith.constant 0 : index
    %c0_155 = arith.constant 0 : index
    %325 = vector.load %arg14[%c1_153, %c0_154, %c0_155] : memref<4x1x128xf32, #tpu.memory_space<vmem>>, vector<1x1x128xf32>
    %326 = vector.shape_cast %325 : vector<1x1x128xf32> to vector<1x128xf32>
    %c1_156 = arith.constant 1 : index
    %c0_157 = arith.constant 0 : index
    %c0_158 = arith.constant 0 : index
    %327 = vector.load %arg15[%c1_156, %c0_157, %c0_158] : memref<4x1x128xf32, #tpu.memory_space<vmem>>, vector<1x1x128xf32>
    %328 = vector.shape_cast %327 : vector<1x1x128xf32> to vector<1x128xf32>
    %cst_159 = arith.constant dense<0.000000e+00> : vector<128xf32>
    %329 = vector.multi_reduction <add>, %324, %cst_159 [0] : vector<8x128xf32> to vector<128xf32>
    %330 = vector.shape_cast %329 : vector<128xf32> to vector<1x128xf32>
    %cst_160 = arith.constant 8.000000e+00 : f32
    %331 = vector.broadcast %cst_160 : f32 to vector<1x128xf32>
    %332 = arith.divf %330, %331 : vector<1x128xf32>
    %333 = vector.broadcast %332 : vector<1x128xf32> to vector<8x128xf32>
    %334 = arith.subf %324, %333 : vector<8x128xf32>
    %335 = arith.mulf %334, %334 : vector<8x128xf32>
    %cst_161 = arith.constant dense<0.000000e+00> : vector<128xf32>
    %336 = vector.multi_reduction <add>, %335, %cst_161 [0] : vector<8x128xf32> to vector<128xf32>
    %337 = vector.shape_cast %336 : vector<128xf32> to vector<1x128xf32>
    %cst_162 = arith.constant 7.000000e+00 : f32
    %338 = vector.broadcast %cst_162 : f32 to vector<1x128xf32>
    %339 = arith.divf %337, %338 : vector<1x128xf32>
    %340 = vector.broadcast %332 : vector<1x128xf32> to vector<8x128xf32>
    %341 = arith.subf %324, %340 : vector<8x128xf32>
    %cst_163 = arith.constant 9.99999974E-6 : f32
    %342 = vector.broadcast %cst_163 : f32 to vector<1x128xf32>
    %343 = arith.addf %339, %342 : vector<1x128xf32>
    %344 = math.rsqrt %343 : vector<1x128xf32>
    %345 = vector.broadcast %344 : vector<1x128xf32> to vector<8x128xf32>
    %346 = arith.mulf %341, %345 : vector<8x128xf32>
    %347 = vector.broadcast %326 : vector<1x128xf32> to vector<8x128xf32>
    %348 = arith.mulf %347, %346 : vector<8x128xf32>
    %349 = vector.broadcast %328 : vector<1x128xf32> to vector<8x128xf32>
    %350 = arith.addf %348, %349 : vector<8x128xf32>
    %c1_164 = arith.constant 1 : index
    %c0_165 = arith.constant 0 : index
    %c0_166 = arith.constant 0 : index
    %351 = vector.load %arg16[%c1_164, %c0_165, %c0_166] : memref<4x128x512xf32, #tpu.memory_space<vmem>>, vector<1x128x512xf32>
    %352 = vector.shape_cast %351 : vector<1x128x512xf32> to vector<128x512xf32>
    %c1_167 = arith.constant 1 : index
    %c0_168 = arith.constant 0 : index
    %c0_169 = arith.constant 0 : index
    %353 = vector.load %arg17[%c1_167, %c0_168, %c0_169] : memref<4x1x512xf32, #tpu.memory_space<vmem>>, vector<1x1x512xf32>
    %354 = vector.shape_cast %353 : vector<1x1x512xf32> to vector<1x512xf32>
    %c1_170 = arith.constant 1 : index
    %c0_171 = arith.constant 0 : index
    %c0_172 = arith.constant 0 : index
    %355 = vector.load %arg18[%c1_170, %c0_171, %c0_172] : memref<4x512x128xf32, #tpu.memory_space<vmem>>, vector<1x512x128xf32>
    %356 = vector.shape_cast %355 : vector<1x512x128xf32> to vector<512x128xf32>
    %c1_173 = arith.constant 1 : index
    %c0_174 = arith.constant 0 : index
    %c0_175 = arith.constant 0 : index
    %357 = vector.load %arg19[%c1_173, %c0_174, %c0_175] : memref<4x1x128xf32, #tpu.memory_space<vmem>>, vector<1x1x128xf32>
    %358 = vector.shape_cast %357 : vector<1x1x128xf32> to vector<1x128xf32>
    %cst_176 = arith.constant dense<0.000000e+00> : vector<8x512xf32>
    %359 = tpu.matmul %350, %352, %cst_176 {dimension_numbers = #tpu.dot_dimension_numbers<[1], [0], [0], [1], [0, 0, 1, 1], [], []>} : vector<8x128xf32>, vector<128x512xf32>, vector<8x512xf32> -> vector<8x512xf32>
    %360 = vector.broadcast %354 : vector<1x512xf32> to vector<8x512xf32>
    %361 = arith.addf %359, %360 : vector<8x512xf32>
    %cst_177 = arith.constant 0.000000e+00 : f32
    %362 = vector.broadcast %cst_177 : f32 to vector<8x512xf32>
    %363 = arith.maximumf %361, %362 : vector<8x512xf32>
    %cst_178 = arith.constant dense<0.000000e+00> : vector<8x128xf32>
    %364 = tpu.matmul %363, %356, %cst_178 {dimension_numbers = #tpu.dot_dimension_numbers<[1], [0], [0], [1], [0, 0, 1, 1], [], []>} : vector<8x512xf32>, vector<512x128xf32>, vector<8x128xf32> -> vector<8x128xf32>
    %365 = vector.broadcast %358 : vector<1x128xf32> to vector<8x128xf32>
    %366 = arith.addf %364, %365 : vector<8x128xf32>
    %367 = arith.addf %324, %366 : vector<8x128xf32>
    %c2 = arith.constant 2 : index
    %c0_179 = arith.constant 0 : index
    %c0_180 = arith.constant 0 : index
    %368 = vector.load %arg4[%c2, %c0_179, %c0_180] : memref<4x1x128xf32, #tpu.memory_space<vmem>>, vector<1x1x128xf32>
    %369 = vector.shape_cast %368 : vector<1x1x128xf32> to vector<1x128xf32>
    %c2_181 = arith.constant 2 : index
    %c0_182 = arith.constant 0 : index
    %c0_183 = arith.constant 0 : index
    %370 = vector.load %arg5[%c2_181, %c0_182, %c0_183] : memref<4x1x128xf32, #tpu.memory_space<vmem>>, vector<1x1x128xf32>
    %371 = vector.shape_cast %370 : vector<1x1x128xf32> to vector<1x128xf32>
    %cst_184 = arith.constant dense<0.000000e+00> : vector<128xf32>
    %372 = vector.multi_reduction <add>, %367, %cst_184 [0] : vector<8x128xf32> to vector<128xf32>
    %373 = vector.shape_cast %372 : vector<128xf32> to vector<1x128xf32>
    %cst_185 = arith.constant 8.000000e+00 : f32
    %374 = vector.broadcast %cst_185 : f32 to vector<1x128xf32>
    %375 = arith.divf %373, %374 : vector<1x128xf32>
    %376 = vector.broadcast %375 : vector<1x128xf32> to vector<8x128xf32>
    %377 = arith.subf %367, %376 : vector<8x128xf32>
    %378 = arith.mulf %377, %377 : vector<8x128xf32>
    %cst_186 = arith.constant dense<0.000000e+00> : vector<128xf32>
    %379 = vector.multi_reduction <add>, %378, %cst_186 [0] : vector<8x128xf32> to vector<128xf32>
    %380 = vector.shape_cast %379 : vector<128xf32> to vector<1x128xf32>
    %cst_187 = arith.constant 7.000000e+00 : f32
    %381 = vector.broadcast %cst_187 : f32 to vector<1x128xf32>
    %382 = arith.divf %380, %381 : vector<1x128xf32>
    %383 = vector.broadcast %375 : vector<1x128xf32> to vector<8x128xf32>
    %384 = arith.subf %367, %383 : vector<8x128xf32>
    %cst_188 = arith.constant 9.99999974E-6 : f32
    %385 = vector.broadcast %cst_188 : f32 to vector<1x128xf32>
    %386 = arith.addf %382, %385 : vector<1x128xf32>
    %387 = math.rsqrt %386 : vector<1x128xf32>
    %388 = vector.broadcast %387 : vector<1x128xf32> to vector<8x128xf32>
    %389 = arith.mulf %384, %388 : vector<8x128xf32>
    %390 = vector.broadcast %369 : vector<1x128xf32> to vector<8x128xf32>
    %391 = arith.mulf %390, %389 : vector<8x128xf32>
    %392 = vector.broadcast %371 : vector<1x128xf32> to vector<8x128xf32>
    %393 = arith.addf %391, %392 : vector<8x128xf32>
    %c2_189 = arith.constant 2 : index
    %c0_190 = arith.constant 0 : index
    %c0_191 = arith.constant 0 : index
    %394 = vector.load %arg6[%c2_189, %c0_190, %c0_191] : memref<4x128x128xf32, #tpu.memory_space<vmem>>, vector<1x128x128xf32>
    %395 = vector.shape_cast %394 : vector<1x128x128xf32> to vector<128x128xf32>
    %cst_192 = arith.constant dense<0.000000e+00> : vector<8x128xf32>
    %396 = tpu.matmul %393, %395, %cst_192 {dimension_numbers = #tpu.dot_dimension_numbers<[1], [0], [0], [1], [0, 0, 1, 1], [], []>} : vector<8x128xf32>, vector<128x128xf32>, vector<8x128xf32> -> vector<8x128xf32>
    %c2_193 = arith.constant 2 : index
    %c0_194 = arith.constant 0 : index
    %c0_195 = arith.constant 0 : index
    %397 = vector.load %arg7[%c2_193, %c0_194, %c0_195] : memref<4x1x128xf32, #tpu.memory_space<vmem>>, vector<1x1x128xf32>
    %398 = vector.shape_cast %397 : vector<1x1x128xf32> to vector<1x128xf32>
    %399 = vector.broadcast %398 : vector<1x128xf32> to vector<8x128xf32>
    %400 = arith.addf %396, %399 : vector<8x128xf32>
    %c2_196 = arith.constant 2 : index
    %c0_197 = arith.constant 0 : index
    %c0_198 = arith.constant 0 : index
    %401 = vector.load %arg8[%c2_196, %c0_197, %c0_198] : memref<4x128x128xf32, #tpu.memory_space<vmem>>, vector<1x128x128xf32>
    %402 = vector.shape_cast %401 : vector<1x128x128xf32> to vector<128x128xf32>
    %cst_199 = arith.constant dense<0.000000e+00> : vector<8x128xf32>
    %403 = tpu.matmul %393, %402, %cst_199 {dimension_numbers = #tpu.dot_dimension_numbers<[1], [0], [0], [1], [0, 0, 1, 1], [], []>} : vector<8x128xf32>, vector<128x128xf32>, vector<8x128xf32> -> vector<8x128xf32>
    %c2_200 = arith.constant 2 : index
    %c0_201 = arith.constant 0 : index
    %c0_202 = arith.constant 0 : index
    %404 = vector.load %arg9[%c2_200, %c0_201, %c0_202] : memref<4x1x128xf32, #tpu.memory_space<vmem>>, vector<1x1x128xf32>
    %405 = vector.shape_cast %404 : vector<1x1x128xf32> to vector<1x128xf32>
    %406 = vector.broadcast %405 : vector<1x128xf32> to vector<8x128xf32>
    %407 = arith.addf %403, %406 : vector<8x128xf32>
    %c2_203 = arith.constant 2 : index
    %c0_204 = arith.constant 0 : index
    %c0_205 = arith.constant 0 : index
    %408 = vector.load %arg10[%c2_203, %c0_204, %c0_205] : memref<4x128x128xf32, #tpu.memory_space<vmem>>, vector<1x128x128xf32>
    %409 = vector.shape_cast %408 : vector<1x128x128xf32> to vector<128x128xf32>
    %cst_206 = arith.constant dense<0.000000e+00> : vector<8x128xf32>
    %410 = tpu.matmul %393, %409, %cst_206 {dimension_numbers = #tpu.dot_dimension_numbers<[1], [0], [0], [1], [0, 0, 1, 1], [], []>} : vector<8x128xf32>, vector<128x128xf32>, vector<8x128xf32> -> vector<8x128xf32>
    %c2_207 = arith.constant 2 : index
    %c0_208 = arith.constant 0 : index
    %c0_209 = arith.constant 0 : index
    %411 = vector.load %arg11[%c2_207, %c0_208, %c0_209] : memref<4x1x128xf32, #tpu.memory_space<vmem>>, vector<1x1x128xf32>
    %412 = vector.shape_cast %411 : vector<1x1x128xf32> to vector<1x128xf32>
    %413 = vector.broadcast %412 : vector<1x128xf32> to vector<8x128xf32>
    %414 = arith.addf %410, %413 : vector<8x128xf32>
    %415 = vector.extract_strided_slice %400 {offsets = [0, 0], sizes = [8, 32], strides = [1, 1]} : vector<8x128xf32> to vector<8x32xf32>
    %416 = vector.extract_strided_slice %407 {offsets = [0, 0], sizes = [8, 32], strides = [1, 1]} : vector<8x128xf32> to vector<8x32xf32>
    %417 = tpu.transpose %416, [1, 0] : vector<8x32xf32> -> vector<32x8xf32>
    %cst_210 = arith.constant dense<0.000000e+00> : vector<8x8xf32>
    %418 = tpu.matmul %415, %417, %cst_210 {dimension_numbers = #tpu.dot_dimension_numbers<[1], [0], [0], [1], [0, 0, 1, 1], [], []>} : vector<8x32xf32>, vector<32x8xf32>, vector<8x8xf32> -> vector<8x8xf32>
    %cst_211 = arith.constant 0.0883883461 : f32
    %419 = vector.broadcast %cst_211 : f32 to vector<8x8xf32>
    %420 = arith.mulf %418, %419 : vector<8x8xf32>
    %421 = arith.addf %420, %17 : vector<8x8xf32>
    %cst_212 = arith.constant dense<0xFF800000> : vector<8xf32>
    %422 = vector.multi_reduction <maximumf>, %421, %cst_212 [1] : vector<8x8xf32> to vector<8xf32>
    %423 = vector.shape_cast %422 : vector<8xf32> to vector<8x1xf32>
    %424 = vector.broadcast %423 : vector<8x1xf32> to vector<8x8xf32>
    %425 = arith.subf %421, %424 : vector<8x8xf32>
    %426 = math.exp %425 : vector<8x8xf32>
    %cst_213 = arith.constant dense<0.000000e+00> : vector<8xf32>
    %427 = vector.multi_reduction <add>, %426, %cst_213 [1] : vector<8x8xf32> to vector<8xf32>
    %428 = vector.shape_cast %427 : vector<8xf32> to vector<8x1xf32>
    %429 = tpu.reciprocal %428 {approx = true} : vector<8x1xf32> -> vector<8x1xf32>
    %430 = vector.broadcast %429 : vector<8x1xf32> to vector<8x8xf32>
    %431 = arith.mulf %426, %430 : vector<8x8xf32>
    %432 = vector.extract_strided_slice %414 {offsets = [0, 0], sizes = [8, 32], strides = [1, 1]} : vector<8x128xf32> to vector<8x32xf32>
    %cst_214 = arith.constant dense<0.000000e+00> : vector<8x32xf32>
    %433 = tpu.matmul %431, %432, %cst_214 {dimension_numbers = #tpu.dot_dimension_numbers<[1], [0], [0], [1], [0, 0, 1, 1], [], []>} : vector<8x8xf32>, vector<8x32xf32>, vector<8x32xf32> -> vector<8x32xf32>
    %434 = vector.extract_strided_slice %400 {offsets = [0, 32], sizes = [8, 32], strides = [1, 1]} : vector<8x128xf32> to vector<8x32xf32>
    %435 = vector.extract_strided_slice %407 {offsets = [0, 32], sizes = [8, 32], strides = [1, 1]} : vector<8x128xf32> to vector<8x32xf32>
    %436 = tpu.transpose %435, [1, 0] : vector<8x32xf32> -> vector<32x8xf32>
    %cst_215 = arith.constant dense<0.000000e+00> : vector<8x8xf32>
    %437 = tpu.matmul %434, %436, %cst_215 {dimension_numbers = #tpu.dot_dimension_numbers<[1], [0], [0], [1], [0, 0, 1, 1], [], []>} : vector<8x32xf32>, vector<32x8xf32>, vector<8x8xf32> -> vector<8x8xf32>
    %cst_216 = arith.constant 0.0883883461 : f32
    %438 = vector.broadcast %cst_216 : f32 to vector<8x8xf32>
    %439 = arith.mulf %437, %438 : vector<8x8xf32>
    %440 = arith.addf %439, %17 : vector<8x8xf32>
    %cst_217 = arith.constant dense<0xFF800000> : vector<8xf32>
    %441 = vector.multi_reduction <maximumf>, %440, %cst_217 [1] : vector<8x8xf32> to vector<8xf32>
    %442 = vector.shape_cast %441 : vector<8xf32> to vector<8x1xf32>
    %443 = vector.broadcast %442 : vector<8x1xf32> to vector<8x8xf32>
    %444 = arith.subf %440, %443 : vector<8x8xf32>
    %445 = math.exp %444 : vector<8x8xf32>
    %cst_218 = arith.constant dense<0.000000e+00> : vector<8xf32>
    %446 = vector.multi_reduction <add>, %445, %cst_218 [1] : vector<8x8xf32> to vector<8xf32>
    %447 = vector.shape_cast %446 : vector<8xf32> to vector<8x1xf32>
    %448 = tpu.reciprocal %447 {approx = true} : vector<8x1xf32> -> vector<8x1xf32>
    %449 = vector.broadcast %448 : vector<8x1xf32> to vector<8x8xf32>
    %450 = arith.mulf %445, %449 : vector<8x8xf32>
    %451 = vector.extract_strided_slice %414 {offsets = [0, 32], sizes = [8, 32], strides = [1, 1]} : vector<8x128xf32> to vector<8x32xf32>
    %cst_219 = arith.constant dense<0.000000e+00> : vector<8x32xf32>
    %452 = tpu.matmul %450, %451, %cst_219 {dimension_numbers = #tpu.dot_dimension_numbers<[1], [0], [0], [1], [0, 0, 1, 1], [], []>} : vector<8x8xf32>, vector<8x32xf32>, vector<8x32xf32> -> vector<8x32xf32>
    %453 = vector.extract_strided_slice %400 {offsets = [0, 64], sizes = [8, 32], strides = [1, 1]} : vector<8x128xf32> to vector<8x32xf32>
    %454 = vector.extract_strided_slice %407 {offsets = [0, 64], sizes = [8, 32], strides = [1, 1]} : vector<8x128xf32> to vector<8x32xf32>
    %455 = tpu.transpose %454, [1, 0] : vector<8x32xf32> -> vector<32x8xf32>
    %cst_220 = arith.constant dense<0.000000e+00> : vector<8x8xf32>
    %456 = tpu.matmul %453, %455, %cst_220 {dimension_numbers = #tpu.dot_dimension_numbers<[1], [0], [0], [1], [0, 0, 1, 1], [], []>} : vector<8x32xf32>, vector<32x8xf32>, vector<8x8xf32> -> vector<8x8xf32>
    %cst_221 = arith.constant 0.0883883461 : f32
    %457 = vector.broadcast %cst_221 : f32 to vector<8x8xf32>
    %458 = arith.mulf %456, %457 : vector<8x8xf32>
    %459 = arith.addf %458, %17 : vector<8x8xf32>
    %cst_222 = arith.constant dense<0xFF800000> : vector<8xf32>
    %460 = vector.multi_reduction <maximumf>, %459, %cst_222 [1] : vector<8x8xf32> to vector<8xf32>
    %461 = vector.shape_cast %460 : vector<8xf32> to vector<8x1xf32>
    %462 = vector.broadcast %461 : vector<8x1xf32> to vector<8x8xf32>
    %463 = arith.subf %459, %462 : vector<8x8xf32>
    %464 = math.exp %463 : vector<8x8xf32>
    %cst_223 = arith.constant dense<0.000000e+00> : vector<8xf32>
    %465 = vector.multi_reduction <add>, %464, %cst_223 [1] : vector<8x8xf32> to vector<8xf32>
    %466 = vector.shape_cast %465 : vector<8xf32> to vector<8x1xf32>
    %467 = tpu.reciprocal %466 {approx = true} : vector<8x1xf32> -> vector<8x1xf32>
    %468 = vector.broadcast %467 : vector<8x1xf32> to vector<8x8xf32>
    %469 = arith.mulf %464, %468 : vector<8x8xf32>
    %470 = vector.extract_strided_slice %414 {offsets = [0, 64], sizes = [8, 32], strides = [1, 1]} : vector<8x128xf32> to vector<8x32xf32>
    %cst_224 = arith.constant dense<0.000000e+00> : vector<8x32xf32>
    %471 = tpu.matmul %469, %470, %cst_224 {dimension_numbers = #tpu.dot_dimension_numbers<[1], [0], [0], [1], [0, 0, 1, 1], [], []>} : vector<8x8xf32>, vector<8x32xf32>, vector<8x32xf32> -> vector<8x32xf32>
    %472 = vector.extract_strided_slice %400 {offsets = [0, 96], sizes = [8, 32], strides = [1, 1]} : vector<8x128xf32> to vector<8x32xf32>
    %473 = vector.extract_strided_slice %407 {offsets = [0, 96], sizes = [8, 32], strides = [1, 1]} : vector<8x128xf32> to vector<8x32xf32>
    %474 = tpu.transpose %473, [1, 0] : vector<8x32xf32> -> vector<32x8xf32>
    %cst_225 = arith.constant dense<0.000000e+00> : vector<8x8xf32>
    %475 = tpu.matmul %472, %474, %cst_225 {dimension_numbers = #tpu.dot_dimension_numbers<[1], [0], [0], [1], [0, 0, 1, 1], [], []>} : vector<8x32xf32>, vector<32x8xf32>, vector<8x8xf32> -> vector<8x8xf32>
    %cst_226 = arith.constant 0.0883883461 : f32
    %476 = vector.broadcast %cst_226 : f32 to vector<8x8xf32>
    %477 = arith.mulf %475, %476 : vector<8x8xf32>
    %478 = arith.addf %477, %17 : vector<8x8xf32>
    %cst_227 = arith.constant dense<0xFF800000> : vector<8xf32>
    %479 = vector.multi_reduction <maximumf>, %478, %cst_227 [1] : vector<8x8xf32> to vector<8xf32>
    %480 = vector.shape_cast %479 : vector<8xf32> to vector<8x1xf32>
    %481 = vector.broadcast %480 : vector<8x1xf32> to vector<8x8xf32>
    %482 = arith.subf %478, %481 : vector<8x8xf32>
    %483 = math.exp %482 : vector<8x8xf32>
    %cst_228 = arith.constant dense<0.000000e+00> : vector<8xf32>
    %484 = vector.multi_reduction <add>, %483, %cst_228 [1] : vector<8x8xf32> to vector<8xf32>
    %485 = vector.shape_cast %484 : vector<8xf32> to vector<8x1xf32>
    %486 = tpu.reciprocal %485 {approx = true} : vector<8x1xf32> -> vector<8x1xf32>
    %487 = vector.broadcast %486 : vector<8x1xf32> to vector<8x8xf32>
    %488 = arith.mulf %483, %487 : vector<8x8xf32>
    %489 = vector.extract_strided_slice %414 {offsets = [0, 96], sizes = [8, 32], strides = [1, 1]} : vector<8x128xf32> to vector<8x32xf32>
    %cst_229 = arith.constant dense<0.000000e+00> : vector<8x32xf32>
    %490 = tpu.matmul %488, %489, %cst_229 {dimension_numbers = #tpu.dot_dimension_numbers<[1], [0], [0], [1], [0, 0, 1, 1], [], []>} : vector<8x8xf32>, vector<8x32xf32>, vector<8x32xf32> -> vector<8x32xf32>
    %491 = tpu.concatenate %433, %452, %471, %490 in 1 : vector<8x32xf32>, vector<8x32xf32>, vector<8x32xf32>, vector<8x32xf32> -> vector<8x128xf32>
    %c2_230 = arith.constant 2 : index
    %c0_231 = arith.constant 0 : index
    %c0_232 = arith.constant 0 : index
    %492 = vector.load %arg12[%c2_230, %c0_231, %c0_232] : memref<4x128x128xf32, #tpu.memory_space<vmem>>, vector<1x128x128xf32>
    %493 = vector.shape_cast %492 : vector<1x128x128xf32> to vector<128x128xf32>
    %cst_233 = arith.constant dense<0.000000e+00> : vector<8x128xf32>
    %494 = tpu.matmul %491, %493, %cst_233 {dimension_numbers = #tpu.dot_dimension_numbers<[1], [0], [0], [1], [0, 0, 1, 1], [], []>} : vector<8x128xf32>, vector<128x128xf32>, vector<8x128xf32> -> vector<8x128xf32>
    %495 = arith.addf %367, %494 : vector<8x128xf32>
    %c2_234 = arith.constant 2 : index
    %c0_235 = arith.constant 0 : index
    %c0_236 = arith.constant 0 : index
    %496 = vector.load %arg13[%c2_234, %c0_235, %c0_236] : memref<4x1x128xf32, #tpu.memory_space<vmem>>, vector<1x1x128xf32>
    %497 = vector.shape_cast %496 : vector<1x1x128xf32> to vector<1x128xf32>
    %498 = vector.broadcast %497 : vector<1x128xf32> to vector<8x128xf32>
    %499 = arith.addf %495, %498 : vector<8x128xf32>
    %c2_237 = arith.constant 2 : index
    %c0_238 = arith.constant 0 : index
    %c0_239 = arith.constant 0 : index
    %500 = vector.load %arg14[%c2_237, %c0_238, %c0_239] : memref<4x1x128xf32, #tpu.memory_space<vmem>>, vector<1x1x128xf32>
    %501 = vector.shape_cast %500 : vector<1x1x128xf32> to vector<1x128xf32>
    %c2_240 = arith.constant 2 : index
    %c0_241 = arith.constant 0 : index
    %c0_242 = arith.constant 0 : index
    %502 = vector.load %arg15[%c2_240, %c0_241, %c0_242] : memref<4x1x128xf32, #tpu.memory_space<vmem>>, vector<1x1x128xf32>
    %503 = vector.shape_cast %502 : vector<1x1x128xf32> to vector<1x128xf32>
    %cst_243 = arith.constant dense<0.000000e+00> : vector<128xf32>
    %504 = vector.multi_reduction <add>, %499, %cst_243 [0] : vector<8x128xf32> to vector<128xf32>
    %505 = vector.shape_cast %504 : vector<128xf32> to vector<1x128xf32>
    %cst_244 = arith.constant 8.000000e+00 : f32
    %506 = vector.broadcast %cst_244 : f32 to vector<1x128xf32>
    %507 = arith.divf %505, %506 : vector<1x128xf32>
    %508 = vector.broadcast %507 : vector<1x128xf32> to vector<8x128xf32>
    %509 = arith.subf %499, %508 : vector<8x128xf32>
    %510 = arith.mulf %509, %509 : vector<8x128xf32>
    %cst_245 = arith.constant dense<0.000000e+00> : vector<128xf32>
    %511 = vector.multi_reduction <add>, %510, %cst_245 [0] : vector<8x128xf32> to vector<128xf32>
    %512 = vector.shape_cast %511 : vector<128xf32> to vector<1x128xf32>
    %cst_246 = arith.constant 7.000000e+00 : f32
    %513 = vector.broadcast %cst_246 : f32 to vector<1x128xf32>
    %514 = arith.divf %512, %513 : vector<1x128xf32>
    %515 = vector.broadcast %507 : vector<1x128xf32> to vector<8x128xf32>
    %516 = arith.subf %499, %515 : vector<8x128xf32>
    %cst_247 = arith.constant 9.99999974E-6 : f32
    %517 = vector.broadcast %cst_247 : f32 to vector<1x128xf32>
    %518 = arith.addf %514, %517 : vector<1x128xf32>
    %519 = math.rsqrt %518 : vector<1x128xf32>
    %520 = vector.broadcast %519 : vector<1x128xf32> to vector<8x128xf32>
    %521 = arith.mulf %516, %520 : vector<8x128xf32>
    %522 = vector.broadcast %501 : vector<1x128xf32> to vector<8x128xf32>
    %523 = arith.mulf %522, %521 : vector<8x128xf32>
    %524 = vector.broadcast %503 : vector<1x128xf32> to vector<8x128xf32>
    %525 = arith.addf %523, %524 : vector<8x128xf32>
    %c2_248 = arith.constant 2 : index
    %c0_249 = arith.constant 0 : index
    %c0_250 = arith.constant 0 : index
    %526 = vector.load %arg16[%c2_248, %c0_249, %c0_250] : memref<4x128x512xf32, #tpu.memory_space<vmem>>, vector<1x128x512xf32>
    %527 = vector.shape_cast %526 : vector<1x128x512xf32> to vector<128x512xf32>
    %c2_251 = arith.constant 2 : index
    %c0_252 = arith.constant 0 : index
    %c0_253 = arith.constant 0 : index
    %528 = vector.load %arg17[%c2_251, %c0_252, %c0_253] : memref<4x1x512xf32, #tpu.memory_space<vmem>>, vector<1x1x512xf32>
    %529 = vector.shape_cast %528 : vector<1x1x512xf32> to vector<1x512xf32>
    %c2_254 = arith.constant 2 : index
    %c0_255 = arith.constant 0 : index
    %c0_256 = arith.constant 0 : index
    %530 = vector.load %arg18[%c2_254, %c0_255, %c0_256] : memref<4x512x128xf32, #tpu.memory_space<vmem>>, vector<1x512x128xf32>
    %531 = vector.shape_cast %530 : vector<1x512x128xf32> to vector<512x128xf32>
    %c2_257 = arith.constant 2 : index
    %c0_258 = arith.constant 0 : index
    %c0_259 = arith.constant 0 : index
    %532 = vector.load %arg19[%c2_257, %c0_258, %c0_259] : memref<4x1x128xf32, #tpu.memory_space<vmem>>, vector<1x1x128xf32>
    %533 = vector.shape_cast %532 : vector<1x1x128xf32> to vector<1x128xf32>
    %cst_260 = arith.constant dense<0.000000e+00> : vector<8x512xf32>
    %534 = tpu.matmul %525, %527, %cst_260 {dimension_numbers = #tpu.dot_dimension_numbers<[1], [0], [0], [1], [0, 0, 1, 1], [], []>} : vector<8x128xf32>, vector<128x512xf32>, vector<8x512xf32> -> vector<8x512xf32>
    %535 = vector.broadcast %529 : vector<1x512xf32> to vector<8x512xf32>
    %536 = arith.addf %534, %535 : vector<8x512xf32>
    %cst_261 = arith.constant 0.000000e+00 : f32
    %537 = vector.broadcast %cst_261 : f32 to vector<8x512xf32>
    %538 = arith.maximumf %536, %537 : vector<8x512xf32>
    %cst_262 = arith.constant dense<0.000000e+00> : vector<8x128xf32>
    %539 = tpu.matmul %538, %531, %cst_262 {dimension_numbers = #tpu.dot_dimension_numbers<[1], [0], [0], [1], [0, 0, 1, 1], [], []>} : vector<8x512xf32>, vector<512x128xf32>, vector<8x128xf32> -> vector<8x128xf32>
    %540 = vector.broadcast %533 : vector<1x128xf32> to vector<8x128xf32>
    %541 = arith.addf %539, %540 : vector<8x128xf32>
    %542 = arith.addf %499, %541 : vector<8x128xf32>
    %c3 = arith.constant 3 : index
    %c0_263 = arith.constant 0 : index
    %c0_264 = arith.constant 0 : index
    %543 = vector.load %arg4[%c3, %c0_263, %c0_264] : memref<4x1x128xf32, #tpu.memory_space<vmem>>, vector<1x1x128xf32>
    %544 = vector.shape_cast %543 : vector<1x1x128xf32> to vector<1x128xf32>
    %c3_265 = arith.constant 3 : index
    %c0_266 = arith.constant 0 : index
    %c0_267 = arith.constant 0 : index
    %545 = vector.load %arg5[%c3_265, %c0_266, %c0_267] : memref<4x1x128xf32, #tpu.memory_space<vmem>>, vector<1x1x128xf32>
    %546 = vector.shape_cast %545 : vector<1x1x128xf32> to vector<1x128xf32>
    %cst_268 = arith.constant dense<0.000000e+00> : vector<128xf32>
    %547 = vector.multi_reduction <add>, %542, %cst_268 [0] : vector<8x128xf32> to vector<128xf32>
    %548 = vector.shape_cast %547 : vector<128xf32> to vector<1x128xf32>
    %cst_269 = arith.constant 8.000000e+00 : f32
    %549 = vector.broadcast %cst_269 : f32 to vector<1x128xf32>
    %550 = arith.divf %548, %549 : vector<1x128xf32>
    %551 = vector.broadcast %550 : vector<1x128xf32> to vector<8x128xf32>
    %552 = arith.subf %542, %551 : vector<8x128xf32>
    %553 = arith.mulf %552, %552 : vector<8x128xf32>
    %cst_270 = arith.constant dense<0.000000e+00> : vector<128xf32>
    %554 = vector.multi_reduction <add>, %553, %cst_270 [0] : vector<8x128xf32> to vector<128xf32>
    %555 = vector.shape_cast %554 : vector<128xf32> to vector<1x128xf32>
    %cst_271 = arith.constant 7.000000e+00 : f32
    %556 = vector.broadcast %cst_271 : f32 to vector<1x128xf32>
    %557 = arith.divf %555, %556 : vector<1x128xf32>
    %558 = vector.broadcast %550 : vector<1x128xf32> to vector<8x128xf32>
    %559 = arith.subf %542, %558 : vector<8x128xf32>
    %cst_272 = arith.constant 9.99999974E-6 : f32
    %560 = vector.broadcast %cst_272 : f32 to vector<1x128xf32>
    %561 = arith.addf %557, %560 : vector<1x128xf32>
    %562 = math.rsqrt %561 : vector<1x128xf32>
    %563 = vector.broadcast %562 : vector<1x128xf32> to vector<8x128xf32>
    %564 = arith.mulf %559, %563 : vector<8x128xf32>
    %565 = vector.broadcast %544 : vector<1x128xf32> to vector<8x128xf32>
    %566 = arith.mulf %565, %564 : vector<8x128xf32>
    %567 = vector.broadcast %546 : vector<1x128xf32> to vector<8x128xf32>
    %568 = arith.addf %566, %567 : vector<8x128xf32>
    %c3_273 = arith.constant 3 : index
    %c0_274 = arith.constant 0 : index
    %c0_275 = arith.constant 0 : index
    %569 = vector.load %arg6[%c3_273, %c0_274, %c0_275] : memref<4x128x128xf32, #tpu.memory_space<vmem>>, vector<1x128x128xf32>
    %570 = vector.shape_cast %569 : vector<1x128x128xf32> to vector<128x128xf32>
    %cst_276 = arith.constant dense<0.000000e+00> : vector<8x128xf32>
    %571 = tpu.matmul %568, %570, %cst_276 {dimension_numbers = #tpu.dot_dimension_numbers<[1], [0], [0], [1], [0, 0, 1, 1], [], []>} : vector<8x128xf32>, vector<128x128xf32>, vector<8x128xf32> -> vector<8x128xf32>
    %c3_277 = arith.constant 3 : index
    %c0_278 = arith.constant 0 : index
    %c0_279 = arith.constant 0 : index
    %572 = vector.load %arg7[%c3_277, %c0_278, %c0_279] : memref<4x1x128xf32, #tpu.memory_space<vmem>>, vector<1x1x128xf32>
    %573 = vector.shape_cast %572 : vector<1x1x128xf32> to vector<1x128xf32>
    %574 = vector.broadcast %573 : vector<1x128xf32> to vector<8x128xf32>
    %575 = arith.addf %571, %574 : vector<8x128xf32>
    %c3_280 = arith.constant 3 : index
    %c0_281 = arith.constant 0 : index
    %c0_282 = arith.constant 0 : index
    %576 = vector.load %arg8[%c3_280, %c0_281, %c0_282] : memref<4x128x128xf32, #tpu.memory_space<vmem>>, vector<1x128x128xf32>
    %577 = vector.shape_cast %576 : vector<1x128x128xf32> to vector<128x128xf32>
    %cst_283 = arith.constant dense<0.000000e+00> : vector<8x128xf32>
    %578 = tpu.matmul %568, %577, %cst_283 {dimension_numbers = #tpu.dot_dimension_numbers<[1], [0], [0], [1], [0, 0, 1, 1], [], []>} : vector<8x128xf32>, vector<128x128xf32>, vector<8x128xf32> -> vector<8x128xf32>
    %c3_284 = arith.constant 3 : index
    %c0_285 = arith.constant 0 : index
    %c0_286 = arith.constant 0 : index
    %579 = vector.load %arg9[%c3_284, %c0_285, %c0_286] : memref<4x1x128xf32, #tpu.memory_space<vmem>>, vector<1x1x128xf32>
    %580 = vector.shape_cast %579 : vector<1x1x128xf32> to vector<1x128xf32>
    %581 = vector.broadcast %580 : vector<1x128xf32> to vector<8x128xf32>
    %582 = arith.addf %578, %581 : vector<8x128xf32>
    %c3_287 = arith.constant 3 : index
    %c0_288 = arith.constant 0 : index
    %c0_289 = arith.constant 0 : index
    %583 = vector.load %arg10[%c3_287, %c0_288, %c0_289] : memref<4x128x128xf32, #tpu.memory_space<vmem>>, vector<1x128x128xf32>
    %584 = vector.shape_cast %583 : vector<1x128x128xf32> to vector<128x128xf32>
    %cst_290 = arith.constant dense<0.000000e+00> : vector<8x128xf32>
    %585 = tpu.matmul %568, %584, %cst_290 {dimension_numbers = #tpu.dot_dimension_numbers<[1], [0], [0], [1], [0, 0, 1, 1], [], []>} : vector<8x128xf32>, vector<128x128xf32>, vector<8x128xf32> -> vector<8x128xf32>
    %c3_291 = arith.constant 3 : index
    %c0_292 = arith.constant 0 : index
    %c0_293 = arith.constant 0 : index
    %586 = vector.load %arg11[%c3_291, %c0_292, %c0_293] : memref<4x1x128xf32, #tpu.memory_space<vmem>>, vector<1x1x128xf32>
    %587 = vector.shape_cast %586 : vector<1x1x128xf32> to vector<1x128xf32>
    %588 = vector.broadcast %587 : vector<1x128xf32> to vector<8x128xf32>
    %589 = arith.addf %585, %588 : vector<8x128xf32>
    %590 = vector.extract_strided_slice %575 {offsets = [0, 0], sizes = [8, 32], strides = [1, 1]} : vector<8x128xf32> to vector<8x32xf32>
    %591 = vector.extract_strided_slice %582 {offsets = [0, 0], sizes = [8, 32], strides = [1, 1]} : vector<8x128xf32> to vector<8x32xf32>
    %592 = tpu.transpose %591, [1, 0] : vector<8x32xf32> -> vector<32x8xf32>
    %cst_294 = arith.constant dense<0.000000e+00> : vector<8x8xf32>
    %593 = tpu.matmul %590, %592, %cst_294 {dimension_numbers = #tpu.dot_dimension_numbers<[1], [0], [0], [1], [0, 0, 1, 1], [], []>} : vector<8x32xf32>, vector<32x8xf32>, vector<8x8xf32> -> vector<8x8xf32>
    %cst_295 = arith.constant 0.0883883461 : f32
    %594 = vector.broadcast %cst_295 : f32 to vector<8x8xf32>
    %595 = arith.mulf %593, %594 : vector<8x8xf32>
    %596 = arith.addf %595, %17 : vector<8x8xf32>
    %cst_296 = arith.constant dense<0xFF800000> : vector<8xf32>
    %597 = vector.multi_reduction <maximumf>, %596, %cst_296 [1] : vector<8x8xf32> to vector<8xf32>
    %598 = vector.shape_cast %597 : vector<8xf32> to vector<8x1xf32>
    %599 = vector.broadcast %598 : vector<8x1xf32> to vector<8x8xf32>
    %600 = arith.subf %596, %599 : vector<8x8xf32>
    %601 = math.exp %600 : vector<8x8xf32>
    %cst_297 = arith.constant dense<0.000000e+00> : vector<8xf32>
    %602 = vector.multi_reduction <add>, %601, %cst_297 [1] : vector<8x8xf32> to vector<8xf32>
    %603 = vector.shape_cast %602 : vector<8xf32> to vector<8x1xf32>
    %604 = tpu.reciprocal %603 {approx = true} : vector<8x1xf32> -> vector<8x1xf32>
    %605 = vector.broadcast %604 : vector<8x1xf32> to vector<8x8xf32>
    %606 = arith.mulf %601, %605 : vector<8x8xf32>
    %607 = vector.extract_strided_slice %589 {offsets = [0, 0], sizes = [8, 32], strides = [1, 1]} : vector<8x128xf32> to vector<8x32xf32>
    %cst_298 = arith.constant dense<0.000000e+00> : vector<8x32xf32>
    %608 = tpu.matmul %606, %607, %cst_298 {dimension_numbers = #tpu.dot_dimension_numbers<[1], [0], [0], [1], [0, 0, 1, 1], [], []>} : vector<8x8xf32>, vector<8x32xf32>, vector<8x32xf32> -> vector<8x32xf32>
    %609 = vector.extract_strided_slice %575 {offsets = [0, 32], sizes = [8, 32], strides = [1, 1]} : vector<8x128xf32> to vector<8x32xf32>
    %610 = vector.extract_strided_slice %582 {offsets = [0, 32], sizes = [8, 32], strides = [1, 1]} : vector<8x128xf32> to vector<8x32xf32>
    %611 = tpu.transpose %610, [1, 0] : vector<8x32xf32> -> vector<32x8xf32>
    %cst_299 = arith.constant dense<0.000000e+00> : vector<8x8xf32>
    %612 = tpu.matmul %609, %611, %cst_299 {dimension_numbers = #tpu.dot_dimension_numbers<[1], [0], [0], [1], [0, 0, 1, 1], [], []>} : vector<8x32xf32>, vector<32x8xf32>, vector<8x8xf32> -> vector<8x8xf32>
    %cst_300 = arith.constant 0.0883883461 : f32
    %613 = vector.broadcast %cst_300 : f32 to vector<8x8xf32>
    %614 = arith.mulf %612, %613 : vector<8x8xf32>
    %615 = arith.addf %614, %17 : vector<8x8xf32>
    %cst_301 = arith.constant dense<0xFF800000> : vector<8xf32>
    %616 = vector.multi_reduction <maximumf>, %615, %cst_301 [1] : vector<8x8xf32> to vector<8xf32>
    %617 = vector.shape_cast %616 : vector<8xf32> to vector<8x1xf32>
    %618 = vector.broadcast %617 : vector<8x1xf32> to vector<8x8xf32>
    %619 = arith.subf %615, %618 : vector<8x8xf32>
    %620 = math.exp %619 : vector<8x8xf32>
    %cst_302 = arith.constant dense<0.000000e+00> : vector<8xf32>
    %621 = vector.multi_reduction <add>, %620, %cst_302 [1] : vector<8x8xf32> to vector<8xf32>
    %622 = vector.shape_cast %621 : vector<8xf32> to vector<8x1xf32>
    %623 = tpu.reciprocal %622 {approx = true} : vector<8x1xf32> -> vector<8x1xf32>
    %624 = vector.broadcast %623 : vector<8x1xf32> to vector<8x8xf32>
    %625 = arith.mulf %620, %624 : vector<8x8xf32>
    %626 = vector.extract_strided_slice %589 {offsets = [0, 32], sizes = [8, 32], strides = [1, 1]} : vector<8x128xf32> to vector<8x32xf32>
    %cst_303 = arith.constant dense<0.000000e+00> : vector<8x32xf32>
    %627 = tpu.matmul %625, %626, %cst_303 {dimension_numbers = #tpu.dot_dimension_numbers<[1], [0], [0], [1], [0, 0, 1, 1], [], []>} : vector<8x8xf32>, vector<8x32xf32>, vector<8x32xf32> -> vector<8x32xf32>
    %628 = vector.extract_strided_slice %575 {offsets = [0, 64], sizes = [8, 32], strides = [1, 1]} : vector<8x128xf32> to vector<8x32xf32>
    %629 = vector.extract_strided_slice %582 {offsets = [0, 64], sizes = [8, 32], strides = [1, 1]} : vector<8x128xf32> to vector<8x32xf32>
    %630 = tpu.transpose %629, [1, 0] : vector<8x32xf32> -> vector<32x8xf32>
    %cst_304 = arith.constant dense<0.000000e+00> : vector<8x8xf32>
    %631 = tpu.matmul %628, %630, %cst_304 {dimension_numbers = #tpu.dot_dimension_numbers<[1], [0], [0], [1], [0, 0, 1, 1], [], []>} : vector<8x32xf32>, vector<32x8xf32>, vector<8x8xf32> -> vector<8x8xf32>
    %cst_305 = arith.constant 0.0883883461 : f32
    %632 = vector.broadcast %cst_305 : f32 to vector<8x8xf32>
    %633 = arith.mulf %631, %632 : vector<8x8xf32>
    %634 = arith.addf %633, %17 : vector<8x8xf32>
    %cst_306 = arith.constant dense<0xFF800000> : vector<8xf32>
    %635 = vector.multi_reduction <maximumf>, %634, %cst_306 [1] : vector<8x8xf32> to vector<8xf32>
    %636 = vector.shape_cast %635 : vector<8xf32> to vector<8x1xf32>
    %637 = vector.broadcast %636 : vector<8x1xf32> to vector<8x8xf32>
    %638 = arith.subf %634, %637 : vector<8x8xf32>
    %639 = math.exp %638 : vector<8x8xf32>
    %cst_307 = arith.constant dense<0.000000e+00> : vector<8xf32>
    %640 = vector.multi_reduction <add>, %639, %cst_307 [1] : vector<8x8xf32> to vector<8xf32>
    %641 = vector.shape_cast %640 : vector<8xf32> to vector<8x1xf32>
    %642 = tpu.reciprocal %641 {approx = true} : vector<8x1xf32> -> vector<8x1xf32>
    %643 = vector.broadcast %642 : vector<8x1xf32> to vector<8x8xf32>
    %644 = arith.mulf %639, %643 : vector<8x8xf32>
    %645 = vector.extract_strided_slice %589 {offsets = [0, 64], sizes = [8, 32], strides = [1, 1]} : vector<8x128xf32> to vector<8x32xf32>
    %cst_308 = arith.constant dense<0.000000e+00> : vector<8x32xf32>
    %646 = tpu.matmul %644, %645, %cst_308 {dimension_numbers = #tpu.dot_dimension_numbers<[1], [0], [0], [1], [0, 0, 1, 1], [], []>} : vector<8x8xf32>, vector<8x32xf32>, vector<8x32xf32> -> vector<8x32xf32>
    %647 = vector.extract_strided_slice %575 {offsets = [0, 96], sizes = [8, 32], strides = [1, 1]} : vector<8x128xf32> to vector<8x32xf32>
    %648 = vector.extract_strided_slice %582 {offsets = [0, 96], sizes = [8, 32], strides = [1, 1]} : vector<8x128xf32> to vector<8x32xf32>
    %649 = tpu.transpose %648, [1, 0] : vector<8x32xf32> -> vector<32x8xf32>
    %cst_309 = arith.constant dense<0.000000e+00> : vector<8x8xf32>
    %650 = tpu.matmul %647, %649, %cst_309 {dimension_numbers = #tpu.dot_dimension_numbers<[1], [0], [0], [1], [0, 0, 1, 1], [], []>} : vector<8x32xf32>, vector<32x8xf32>, vector<8x8xf32> -> vector<8x8xf32>
    %cst_310 = arith.constant 0.0883883461 : f32
    %651 = vector.broadcast %cst_310 : f32 to vector<8x8xf32>
    %652 = arith.mulf %650, %651 : vector<8x8xf32>
    %653 = arith.addf %652, %17 : vector<8x8xf32>
    %cst_311 = arith.constant dense<0xFF800000> : vector<8xf32>
    %654 = vector.multi_reduction <maximumf>, %653, %cst_311 [1] : vector<8x8xf32> to vector<8xf32>
    %655 = vector.shape_cast %654 : vector<8xf32> to vector<8x1xf32>
    %656 = vector.broadcast %655 : vector<8x1xf32> to vector<8x8xf32>
    %657 = arith.subf %653, %656 : vector<8x8xf32>
    %658 = math.exp %657 : vector<8x8xf32>
    %cst_312 = arith.constant dense<0.000000e+00> : vector<8xf32>
    %659 = vector.multi_reduction <add>, %658, %cst_312 [1] : vector<8x8xf32> to vector<8xf32>
    %660 = vector.shape_cast %659 : vector<8xf32> to vector<8x1xf32>
    %661 = tpu.reciprocal %660 {approx = true} : vector<8x1xf32> -> vector<8x1xf32>
    %662 = vector.broadcast %661 : vector<8x1xf32> to vector<8x8xf32>
    %663 = arith.mulf %658, %662 : vector<8x8xf32>
    %664 = vector.extract_strided_slice %589 {offsets = [0, 96], sizes = [8, 32], strides = [1, 1]} : vector<8x128xf32> to vector<8x32xf32>
    %cst_313 = arith.constant dense<0.000000e+00> : vector<8x32xf32>
    %665 = tpu.matmul %663, %664, %cst_313 {dimension_numbers = #tpu.dot_dimension_numbers<[1], [0], [0], [1], [0, 0, 1, 1], [], []>} : vector<8x8xf32>, vector<8x32xf32>, vector<8x32xf32> -> vector<8x32xf32>
    %666 = tpu.concatenate %608, %627, %646, %665 in 1 : vector<8x32xf32>, vector<8x32xf32>, vector<8x32xf32>, vector<8x32xf32> -> vector<8x128xf32>
    %c3_314 = arith.constant 3 : index
    %c0_315 = arith.constant 0 : index
    %c0_316 = arith.constant 0 : index
    %667 = vector.load %arg12[%c3_314, %c0_315, %c0_316] : memref<4x128x128xf32, #tpu.memory_space<vmem>>, vector<1x128x128xf32>
    %668 = vector.shape_cast %667 : vector<1x128x128xf32> to vector<128x128xf32>
    %cst_317 = arith.constant dense<0.000000e+00> : vector<8x128xf32>
    %669 = tpu.matmul %666, %668, %cst_317 {dimension_numbers = #tpu.dot_dimension_numbers<[1], [0], [0], [1], [0, 0, 1, 1], [], []>} : vector<8x128xf32>, vector<128x128xf32>, vector<8x128xf32> -> vector<8x128xf32>
    %670 = arith.addf %542, %669 : vector<8x128xf32>
    %c3_318 = arith.constant 3 : index
    %c0_319 = arith.constant 0 : index
    %c0_320 = arith.constant 0 : index
    %671 = vector.load %arg13[%c3_318, %c0_319, %c0_320] : memref<4x1x128xf32, #tpu.memory_space<vmem>>, vector<1x1x128xf32>
    %672 = vector.shape_cast %671 : vector<1x1x128xf32> to vector<1x128xf32>
    %673 = vector.broadcast %672 : vector<1x128xf32> to vector<8x128xf32>
    %674 = arith.addf %670, %673 : vector<8x128xf32>
    %c3_321 = arith.constant 3 : index
    %c0_322 = arith.constant 0 : index
    %c0_323 = arith.constant 0 : index
    %675 = vector.load %arg14[%c3_321, %c0_322, %c0_323] : memref<4x1x128xf32, #tpu.memory_space<vmem>>, vector<1x1x128xf32>
    %676 = vector.shape_cast %675 : vector<1x1x128xf32> to vector<1x128xf32>
    %c3_324 = arith.constant 3 : index
    %c0_325 = arith.constant 0 : index
    %c0_326 = arith.constant 0 : index
    %677 = vector.load %arg15[%c3_324, %c0_325, %c0_326] : memref<4x1x128xf32, #tpu.memory_space<vmem>>, vector<1x1x128xf32>
    %678 = vector.shape_cast %677 : vector<1x1x128xf32> to vector<1x128xf32>
    %cst_327 = arith.constant dense<0.000000e+00> : vector<128xf32>
    %679 = vector.multi_reduction <add>, %674, %cst_327 [0] : vector<8x128xf32> to vector<128xf32>
    %680 = vector.shape_cast %679 : vector<128xf32> to vector<1x128xf32>
    %cst_328 = arith.constant 8.000000e+00 : f32
    %681 = vector.broadcast %cst_328 : f32 to vector<1x128xf32>
    %682 = arith.divf %680, %681 : vector<1x128xf32>
    %683 = vector.broadcast %682 : vector<1x128xf32> to vector<8x128xf32>
    %684 = arith.subf %674, %683 : vector<8x128xf32>
    %685 = arith.mulf %684, %684 : vector<8x128xf32>
    %cst_329 = arith.constant dense<0.000000e+00> : vector<128xf32>
    %686 = vector.multi_reduction <add>, %685, %cst_329 [0] : vector<8x128xf32> to vector<128xf32>
    %687 = vector.shape_cast %686 : vector<128xf32> to vector<1x128xf32>
    %cst_330 = arith.constant 7.000000e+00 : f32
    %688 = vector.broadcast %cst_330 : f32 to vector<1x128xf32>
    %689 = arith.divf %687, %688 : vector<1x128xf32>
    %690 = vector.broadcast %682 : vector<1x128xf32> to vector<8x128xf32>
    %691 = arith.subf %674, %690 : vector<8x128xf32>
    %cst_331 = arith.constant 9.99999974E-6 : f32
    %692 = vector.broadcast %cst_331 : f32 to vector<1x128xf32>
    %693 = arith.addf %689, %692 : vector<1x128xf32>
    %694 = math.rsqrt %693 : vector<1x128xf32>
    %695 = vector.broadcast %694 : vector<1x128xf32> to vector<8x128xf32>
    %696 = arith.mulf %691, %695 : vector<8x128xf32>
    %697 = vector.broadcast %676 : vector<1x128xf32> to vector<8x128xf32>
    %698 = arith.mulf %697, %696 : vector<8x128xf32>
    %699 = vector.broadcast %678 : vector<1x128xf32> to vector<8x128xf32>
    %700 = arith.addf %698, %699 : vector<8x128xf32>
    %c3_332 = arith.constant 3 : index
    %c0_333 = arith.constant 0 : index
    %c0_334 = arith.constant 0 : index
    %701 = vector.load %arg16[%c3_332, %c0_333, %c0_334] : memref<4x128x512xf32, #tpu.memory_space<vmem>>, vector<1x128x512xf32>
    %702 = vector.shape_cast %701 : vector<1x128x512xf32> to vector<128x512xf32>
    %c3_335 = arith.constant 3 : index
    %c0_336 = arith.constant 0 : index
    %c0_337 = arith.constant 0 : index
    %703 = vector.load %arg17[%c3_335, %c0_336, %c0_337] : memref<4x1x512xf32, #tpu.memory_space<vmem>>, vector<1x1x512xf32>
    %704 = vector.shape_cast %703 : vector<1x1x512xf32> to vector<1x512xf32>
    %c3_338 = arith.constant 3 : index
    %c0_339 = arith.constant 0 : index
    %c0_340 = arith.constant 0 : index
    %705 = vector.load %arg18[%c3_338, %c0_339, %c0_340] : memref<4x512x128xf32, #tpu.memory_space<vmem>>, vector<1x512x128xf32>
    %706 = vector.shape_cast %705 : vector<1x512x128xf32> to vector<512x128xf32>
    %c3_341 = arith.constant 3 : index
    %c0_342 = arith.constant 0 : index
    %c0_343 = arith.constant 0 : index
    %707 = vector.load %arg19[%c3_341, %c0_342, %c0_343] : memref<4x1x128xf32, #tpu.memory_space<vmem>>, vector<1x1x128xf32>
    %708 = vector.shape_cast %707 : vector<1x1x128xf32> to vector<1x128xf32>
    %cst_344 = arith.constant dense<0.000000e+00> : vector<8x512xf32>
    %709 = tpu.matmul %700, %702, %cst_344 {dimension_numbers = #tpu.dot_dimension_numbers<[1], [0], [0], [1], [0, 0, 1, 1], [], []>} : vector<8x128xf32>, vector<128x512xf32>, vector<8x512xf32> -> vector<8x512xf32>
    %710 = vector.broadcast %704 : vector<1x512xf32> to vector<8x512xf32>
    %711 = arith.addf %709, %710 : vector<8x512xf32>
    %cst_345 = arith.constant 0.000000e+00 : f32
    %712 = vector.broadcast %cst_345 : f32 to vector<8x512xf32>
    %713 = arith.maximumf %711, %712 : vector<8x512xf32>
    %cst_346 = arith.constant dense<0.000000e+00> : vector<8x128xf32>
    %714 = tpu.matmul %713, %706, %cst_346 {dimension_numbers = #tpu.dot_dimension_numbers<[1], [0], [0], [1], [0, 0, 1, 1], [], []>} : vector<8x512xf32>, vector<512x128xf32>, vector<8x128xf32> -> vector<8x128xf32>
    %715 = vector.broadcast %708 : vector<1x128xf32> to vector<8x128xf32>
    %716 = arith.addf %714, %715 : vector<8x128xf32>
    %717 = arith.addf %674, %716 : vector<8x128xf32>
    %c0_347 = arith.constant 0 : index
    %c0_348 = arith.constant 0 : index
    %718 = vector.load %arg20[%c0_347, %c0_348] : memref<128x512xf32, #tpu.memory_space<vmem>>, vector<128x512xf32>
    %c0_349 = arith.constant 0 : index
    %c0_350 = arith.constant 0 : index
    %719 = vector.load %arg21[%c0_349, %c0_350] : memref<1x512xf32, #tpu.memory_space<vmem>>, vector<1x512xf32>
    %c0_351 = arith.constant 0 : index
    %c0_352 = arith.constant 0 : index
    %720 = vector.load %arg22[%c0_351, %c0_352] : memref<512x128xf32, #tpu.memory_space<vmem>>, vector<512x128xf32>
    %c0_353 = arith.constant 0 : index
    %c0_354 = arith.constant 0 : index
    %721 = vector.load %arg23[%c0_353, %c0_354] : memref<1x128xf32, #tpu.memory_space<vmem>>, vector<1x128xf32>
    %cst_355 = arith.constant dense<0.000000e+00> : vector<8x512xf32>
    %722 = tpu.matmul %717, %718, %cst_355 {dimension_numbers = #tpu.dot_dimension_numbers<[1], [0], [0], [1], [0, 0, 1, 1], [], []>} : vector<8x128xf32>, vector<128x512xf32>, vector<8x512xf32> -> vector<8x512xf32>
    %723 = vector.broadcast %719 : vector<1x512xf32> to vector<8x512xf32>
    %724 = arith.addf %722, %723 : vector<8x512xf32>
    %cst_356 = arith.constant 0.000000e+00 : f32
    %725 = vector.broadcast %cst_356 : f32 to vector<8x512xf32>
    %726 = arith.maximumf %724, %725 : vector<8x512xf32>
    %cst_357 = arith.constant dense<0.000000e+00> : vector<8x128xf32>
    %727 = tpu.matmul %726, %720, %cst_357 {dimension_numbers = #tpu.dot_dimension_numbers<[1], [0], [0], [1], [0, 0, 1, 1], [], []>} : vector<8x512xf32>, vector<512x128xf32>, vector<8x128xf32> -> vector<8x128xf32>
    %728 = vector.broadcast %721 : vector<1x128xf32> to vector<8x128xf32>
    %729 = arith.addf %727, %728 : vector<8x128xf32>
    %c0_358 = arith.constant 0 : index
    %c0_359 = arith.constant 0 : index
    %730 = vector.load %arg24[%c0_358, %c0_359] : memref<128x128xf32, #tpu.memory_space<vmem>>, vector<128x128xf32>
    %cst_360 = arith.constant dense<0.000000e+00> : vector<8x128xf32>
    %731 = tpu.matmul %729, %730, %cst_360 {dimension_numbers = #tpu.dot_dimension_numbers<[1], [0], [0], [1], [0, 0, 1, 1], [], []>} : vector<8x128xf32>, vector<128x128xf32>, vector<8x128xf32> -> vector<8x128xf32>
    %c0_361 = arith.constant 0 : index
    %c0_362 = arith.constant 0 : index
    %732 = vector.load %arg25[%c0_361, %c0_362] : memref<1x128xf32, #tpu.memory_space<vmem>>, vector<1x128xf32>
    %733 = vector.broadcast %732 : vector<1x128xf32> to vector<8x128xf32>
    %734 = arith.addf %731, %733 : vector<8x128xf32>
    %c0_363 = arith.constant 0 : index
    %c0_364 = arith.constant 0 : index
    %c0_365 = arith.constant 0 : index
    %735 = vector.load %arg26[%c0_363, %c0_364, %c0_365] : memref<1x8x128xf32, #tpu.memory_space<vmem>>, vector<1x8x128xf32>
    %736 = vector.shape_cast %735 : vector<1x8x128xf32> to vector<8x128xf32>
    %737 = vector.shape_cast %734 : vector<8x128xf32> to vector<1x8x128xf32>
    tpu.vector_store %arg26[%c0_363, %c0_364, %c0_365], %737 {strides = array<i32>} : memref<1x8x128xf32, #tpu.memory_space<vmem>>, vector<1x8x128xf32>,
    return
  }
  func.func @transform_0(%arg0: i32) -> (i32, i32, i32) {
    %c0_i32 = arith.constant 0 : i32
    %c0_i32_0 = arith.constant 0 : i32
    %c0_i32_1 = arith.constant 0 : i32
    return %arg0, %c0_i32, %c0_i32_0 : i32, i32, i32
  }
  func.func @transform_1(%arg0: i32) -> (i32, i32) {
    %c0_i32 = arith.constant 0 : i32
    %c0_i32_0 = arith.constant 0 : i32
    %c0_i32_1 = arith.constant 0 : i32
    return %c0_i32, %c0_i32_0 : i32, i32
  }
  func.func @transform_2(%arg0: i32) -> (i32, i32) {
    %c0_i32 = arith.constant 0 : i32
    %c0_i32_0 = arith.constant 0 : i32
    %c0_i32_1 = arith.constant 0 : i32
    return %c0_i32, %c0_i32_0 : i32, i32
  }
  func.func @transform_3(%arg0: i32) -> (i32, i32, i32) {
    %c0_i32 = arith.constant 0 : i32
    %c0_i32_0 = arith.constant 0 : i32
    %c0_i32_1 = arith.constant 0 : i32
    %c0_i32_2 = arith.constant 0 : i32
    return %c0_i32, %c0_i32_0, %c0_i32_1 : i32, i32, i32
  }
  func.func @transform_4(%arg0: i32) -> (i32, i32, i32) {
    %c0_i32 = arith.constant 0 : i32
    %c0_i32_0 = arith.constant 0 : i32
    %c0_i32_1 = arith.constant 0 : i32
    %c0_i32_2 = arith.constant 0 : i32
    return %c0_i32, %c0_i32_0, %c0_i32_1 : i32, i32, i32
  }
  func.func @transform_5(%arg0: i32) -> (i32, i32, i32) {
    %c0_i32 = arith.constant 0 : i32
    %c0_i32_0 = arith.constant 0 : i32
    %c0_i32_1 = arith.constant 0 : i32
    %c0_i32_2 = arith.constant 0 : i32
    return %c0_i32, %c0_i32_0, %c0_i32_1 : i32, i32, i32
  }
  func.func @transform_6(%arg0: i32) -> (i32, i32, i32) {
    %c0_i32 = arith.constant 0 : i32
    %c0_i32_0 = arith.constant 0 : i32
    %c0_i32_1 = arith.constant 0 : i32
    %c0_i32_2 = arith.constant 0 : i32
    return %c0_i32, %c0_i32_0, %c0_i32_1 : i32, i32, i32
  }
  func.func @transform_7(%arg0: i32) -> (i32, i32, i32) {
    %c0_i32 = arith.constant 0 : i32
    %c0_i32_0 = arith.constant 0 : i32
    %c0_i32_1 = arith.constant 0 : i32
    %c0_i32_2 = arith.constant 0 : i32
    return %c0_i32, %c0_i32_0, %c0_i32_1 : i32, i32, i32
  }
  func.func @transform_8(%arg0: i32) -> (i32, i32, i32) {
    %c0_i32 = arith.constant 0 : i32
    %c0_i32_0 = arith.constant 0 : i32
    %c0_i32_1 = arith.constant 0 : i32
    %c0_i32_2 = arith.constant 0 : i32
    return %c0_i32, %c0_i32_0, %c0_i32_1 : i32, i32, i32
  }
  func.func @transform_9(%arg0: i32) -> (i32, i32, i32) {
    %c0_i32 = arith.constant 0 : i32
    %c0_i32_0 = arith.constant 0 : i32
    %c0_i32_1 = arith.constant 0 : i32
    %c0_i32_2 = arith.constant 0 : i32
    return %c0_i32, %c0_i32_0, %c0_i32_1 : i32, i32, i32
  }
  func.func @transform_10(%arg0: i32) -> (i32, i32, i32) {
    %c0_i32 = arith.constant 0 : i32
    %c0_i32_0 = arith.constant 0 : i32
    %c0_i32_1 = arith.constant 0 : i32
    %c0_i32_2 = arith.constant 0 : i32
    return %c0_i32, %c0_i32_0, %c0_i32_1 : i32, i32, i32
  }
  func.func @transform_11(%arg0: i32) -> (i32, i32, i32) {
    %c0_i32 = arith.constant 0 : i32
    %c0_i32_0 = arith.constant 0 : i32
    %c0_i32_1 = arith.constant 0 : i32
    %c0_i32_2 = arith.constant 0 : i32
    return %c0_i32, %c0_i32_0, %c0_i32_1 : i32, i32, i32
  }
  func.func @transform_12(%arg0: i32) -> (i32, i32, i32) {
    %c0_i32 = arith.constant 0 : i32
    %c0_i32_0 = arith.constant 0 : i32
    %c0_i32_1 = arith.constant 0 : i32
    %c0_i32_2 = arith.constant 0 : i32
    return %c0_i32, %c0_i32_0, %c0_i32_1 : i32, i32, i32
  }
  func.func @transform_13(%arg0: i32) -> (i32, i32, i32) {
    %c0_i32 = arith.constant 0 : i32
    %c0_i32_0 = arith.constant 0 : i32
    %c0_i32_1 = arith.constant 0 : i32
    %c0_i32_2 = arith.constant 0 : i32
    return %c0_i32, %c0_i32_0, %c0_i32_1 : i32, i32, i32
  }
  func.func @transform_14(%arg0: i32) -> (i32, i32, i32) {
    %c0_i32 = arith.constant 0 : i32
    %c0_i32_0 = arith.constant 0 : i32
    %c0_i32_1 = arith.constant 0 : i32
    %c0_i32_2 = arith.constant 0 : i32
    return %c0_i32, %c0_i32_0, %c0_i32_1 : i32, i32, i32
  }
  func.func @transform_15(%arg0: i32) -> (i32, i32, i32) {
    %c0_i32 = arith.constant 0 : i32
    %c0_i32_0 = arith.constant 0 : i32
    %c0_i32_1 = arith.constant 0 : i32
    %c0_i32_2 = arith.constant 0 : i32
    return %c0_i32, %c0_i32_0, %c0_i32_1 : i32, i32, i32
  }
  func.func @transform_16(%arg0: i32) -> (i32, i32, i32) {
    %c0_i32 = arith.constant 0 : i32
    %c0_i32_0 = arith.constant 0 : i32
    %c0_i32_1 = arith.constant 0 : i32
    %c0_i32_2 = arith.constant 0 : i32
    return %c0_i32, %c0_i32_0, %c0_i32_1 : i32, i32, i32
  }
  func.func @transform_17(%arg0: i32) -> (i32, i32, i32) {
    %c0_i32 = arith.constant 0 : i32
    %c0_i32_0 = arith.constant 0 : i32
    %c0_i32_1 = arith.constant 0 : i32
    %c0_i32_2 = arith.constant 0 : i32
    return %c0_i32, %c0_i32_0, %c0_i32_1 : i32, i32, i32
  }
  func.func @transform_18(%arg0: i32) -> (i32, i32, i32) {
    %c0_i32 = arith.constant 0 : i32
    %c0_i32_0 = arith.constant 0 : i32
    %c0_i32_1 = arith.constant 0 : i32
    %c0_i32_2 = arith.constant 0 : i32
    return %c0_i32, %c0_i32_0, %c0_i32_1 : i32, i32, i32
  }
  func.func @transform_19(%arg0: i32) -> (i32, i32) {
    %c0_i32 = arith.constant 0 : i32
    %c0_i32_0 = arith.constant 0 : i32
    %c0_i32_1 = arith.constant 0 : i32
    return %c0_i32, %c0_i32_0 : i32, i32
  }
  func.func @transform_20(%arg0: i32) -> (i32, i32) {
    %c0_i32 = arith.constant 0 : i32
    %c0_i32_0 = arith.constant 0 : i32
    %c0_i32_1 = arith.constant 0 : i32
    return %c0_i32, %c0_i32_0 : i32, i32
  }
  func.func @transform_21(%arg0: i32) -> (i32, i32) {
    %c0_i32 = arith.constant 0 : i32
    %c0_i32_0 = arith.constant 0 : i32
    %c0_i32_1 = arith.constant 0 : i32
    return %c0_i32, %c0_i32_0 : i32, i32
  }
  func.func @transform_22(%arg0: i32) -> (i32, i32) {
    %c0_i32 = arith.constant 0 : i32
    %c0_i32_0 = arith.constant 0 : i32
    %c0_i32_1 = arith.constant 0 : i32
    return %c0_i32, %c0_i32_0 : i32, i32
  }
  func.func @transform_23(%arg0: i32) -> (i32, i32) {
    %c0_i32 = arith.constant 0 : i32
    %c0_i32_0 = arith.constant 0 : i32
    %c0_i32_1 = arith.constant 0 : i32
    return %c0_i32, %c0_i32_0 : i32, i32
  }
  func.func @transform_24(%arg0: i32) -> (i32, i32) {
    %c0_i32 = arith.constant 0 : i32
    %c0_i32_0 = arith.constant 0 : i32
    %c0_i32_1 = arith.constant 0 : i32
    return %c0_i32, %c0_i32_0 : i32, i32
  }
  func.func @transform_25(%arg0: i32) -> (i32, i32, i32) {
    %c0_i32 = arith.constant 0 : i32
    %c0_i32_0 = arith.constant 0 : i32
    %c0_i32_1 = arith.constant 0 : i32
    return %arg0, %c0_i32, %c0_i32_0 : i32, i32, i32
  }
}

</mosaic_0001>

<llo_original>
// kernel: tpu_custom_call.1
$region0: #{tpu_custom_call.1}
  #allocation0 [shape = 'u32[]', space=smem, size = 0x4, offset = 0x4, fixed_abs, tag = 'smem constant byte address 0x4 - core index']
  #allocation1 [shape = 'u32[144,128]{1,0:T(1,128)}', space=vmem, size = 0x12000, scoped, tag = 'internal scratch']
  %s0 = inlined_call_operand.vmem [shape: s32[2,8,1], index: 0, kind: input, shape index: {}]
  %s1 = inlined_call_operand.hbm [shape: f32[128,128], index: 1, kind: input, shape index: {}]
  %s2 = inlined_call_operand.vmem [shape: f32[8,128], index: 2, kind: input, shape index: {}]
  %s3 = inlined_call_operand.vmem [shape: f32[4,1,128], index: 3, kind: input, shape index: {}]
  %s4 = inlined_call_operand.vmem [shape: f32[4,1,128], index: 4, kind: input, shape index: {}]
  %s5 = inlined_call_operand.hbm [shape: f32[4,128,128], index: 5, kind: input, shape index: {}]
  %s6 = inlined_call_operand.vmem [shape: f32[4,1,128], index: 6, kind: input, shape index: {}]
  %s7 = inlined_call_operand.hbm [shape: f32[4,128,128], index: 7, kind: input, shape index: {}]
  %s8 = inlined_call_operand.vmem [shape: f32[4,1,128], index: 8, kind: input, shape index: {}]
  %s9 = inlined_call_operand.hbm [shape: f32[4,128,128], index: 9, kind: input, shape index: {}]
  %s10 = inlined_call_operand.vmem [shape: f32[4,1,128], index: 10, kind: input, shape index: {}]
  %s11 = inlined_call_operand.hbm [shape: f32[4,128,128], index: 11, kind: input, shape index: {}]
  %s12 = inlined_call_operand.vmem [shape: f32[4,1,128], index: 12, kind: input, shape index: {}]
  %s13 = inlined_call_operand.vmem [shape: f32[4,1,128], index: 13, kind: input, shape index: {}]
  %s14 = inlined_call_operand.vmem [shape: f32[4,1,128], index: 14, kind: input, shape index: {}]
  %s15 = inlined_call_operand.hbm [shape: f32[4,128,512], index: 15, kind: input, shape index: {}]
  %s16 = inlined_call_operand.vmem [shape: f32[4,1,512], index: 16, kind: input, shape index: {}]
  %s17 = inlined_call_operand.hbm [shape: f32[4,512,128], index: 17, kind: input, shape index: {}]
  %s18 = inlined_call_operand.vmem [shape: f32[4,1,128], index: 18, kind: input, shape index: {}]
  %s19 = inlined_call_operand.hbm [shape: f32[128,512], index: 19, kind: input, shape index: {}]
  %s20 = inlined_call_operand.vmem [shape: f32[1,512], index: 20, kind: input, shape index: {}]
  %s21 = inlined_call_operand.hbm [shape: f32[512,128], index: 21, kind: input, shape index: {}]
  %s22 = inlined_call_operand.vmem [shape: f32[1,128], index: 22, kind: input, shape index: {}]
  %s23 = inlined_call_operand.hbm [shape: f32[128,128], index: 23, kind: input, shape index: {}]
  %s24 = inlined_call_operand.vmem [shape: f32[1,128], index: 24, kind: input, shape index: {}]
  %s25 = inlined_call_operand.hbm [shape: f32[2,8,128], index: 25, kind: output, shape index: {}]
  %s26 = sld [smem:[#allocation0]]
  $region173: #{tpu_custom_call.1} parent=0
    _
  %s28 = ssub.s32 1, %s26
  %s29 = scalar_select 0, %s28, %s26
  $region1: #{tpu_custom_call.1} parent=0
    #allocation2 [shape = 'u8[65536]{0}', space=vmem, size = 0x10000, scoped, tag = 'input window, operand 1, single buffered']
    #allocation3 [shape = 's32[2]{0}', space=sflag, size = 0x8, scoped, tag = 'scoped memory for tpu_custom_call.1']
    #allocation4 [shape = 's32[2]{0}', space=sflag, size = 0x8, scoped, tag = 'scoped memory for tpu_custom_call.1']
    #allocation5 [shape = 'u8[262144]{0}', space=vmem, size = 0x40000, scoped, tag = 'input window, operand 5, single buffered']
    #allocation6 [shape = 's32[1]{0}', space=sflag, size = 0x4, scoped, tag = 'scoped memory for tpu_custom_call.1']
    #allocation7 [shape = 'u8[262144]{0}', space=vmem, size = 0x40000, scoped, tag = 'input window, operand 7, single buffered']
    #allocation8 [shape = 'u8[262144]{0}', space=vmem, size = 0x40000, scoped, tag = 'input window, operand 9, single buffered']
    #allocation9 [shape = 's32[1]{0}', space=sflag, size = 0x4, scoped, tag = 'scoped memory for tpu_custom_call.1']
    #allocation10 [shape = 'u8[262144]{0}', space=vmem, size = 0x40000, scoped, tag = 'input window, operand 11, single buffered']
    #allocation11 [shape = 'u8[1048576]{0}', space=vmem, size = 0x100000, scoped, tag = 'input window, operand 15, single buffered']
    #allocation12 [shape = 's32[1]{0}', space=sflag, size = 0x4, scoped, tag = 'scoped memory for tpu_custom_call.1']
    #allocation13 [shape = 'u8[1048576]{0}', space=vmem, size = 0x100000, scoped, tag = 'input window, operand 17, single buffered']
    #allocation14 [shape = 'u8[262144]{0}', space=vmem, size = 0x40000, scoped, tag = 'input window, operand 19, single buffered']
    #allocation15 [shape = 's32[1]{0}', space=sflag, size = 0x4, scoped, tag = 'scoped memory for tpu_custom_call.1']
    #allocation16 [shape = 'u8[262144]{0}', space=vmem, size = 0x40000, scoped, tag = 'input window, operand 21, single buffered']
    #allocation17 [shape = 'u8[65536]{0}', space=vmem, size = 0x10000, scoped, tag = 'input window, operand 23, single buffered']
    #allocation18 [shape = 's32[1]{0}', space=sflag, size = 0x4, scoped, tag = 'scoped memory for tpu_custom_call.1']
    #allocation19 [shape = 'u8[8192]{0}', space=vmem, size = 0x2000, scoped, tag = 'output window, operand 0']
    %30 = vsyncpa [#allocation3], 0
    %31 = vsyncpa [#allocation6], 0
    %32 = vsyncpa [#allocation9], 0
    %33 = vsyncpa [#allocation12], 0
    %34 = vsyncpa [#allocation15], 0
    %35 = vsyncpa [#allocation18], 0
    %36 = vsyncpa [#allocation4], 0
    %s37 = scalar_lea.sflag [#allocation4], 1
    %38 = vsyncpa %s37, 0
    loop: start=0, step=1, limit=4
    $region2: #{tpu_custom_call.1} parent=1 // loop_pre_header
      _
    $region3: #{tpu_custom_call.1} parent=1 // loop_header
      %s40 = sphi 0, %s44
      %p41 = scmp.ge.s32.totalorder %s40, 4
      %s50 = sphi 0, %s52
      %s53 = sphi 0, %s50
      %s54 = sphi 0, %s53
      %s70 = sphi 0, %s54
      %s74 = sphi 0, %s74
      %s76 = sphi 0, %s74
      %s77 = sphi 0, %s76
      %s91 = sphi 0, %s77
      %s95 = sphi 0, %s95
      %s97 = sphi 0, %s95
      %s98 = sphi 0, %s97
      %s112 = sphi 0, %s98
      %s116 = sphi 0, %s116
      %s118 = sphi 0, %s116
      %s119 = sphi 0, %s118
      %s133 = sphi 0, %s119
      %s137 = sphi 0, %s137
      %s139 = sphi 0, %s137
      %s140 = sphi 0, %s139
      %s154 = sphi 0, %s140
      %s158 = sphi 0, %s158
      %s160 = sphi 0, %s158
      %s161 = sphi 0, %s160
      %s175 = sphi 0, %s161
      %s179 = sphi 0, %s179
      %s181 = sphi 0, %s179
      %s182 = sphi 0, %s181
      %s196 = sphi 0, %s182
      %s200 = sphi 0, %s200
      %s202 = sphi 0, %s200
      %s203 = sphi 0, %s202
      %s217 = sphi 0, %s203
      %s221 = sphi 0, %s221
      %s223 = sphi 0, %s221
      %s224 = sphi 0, %s223
      %s238 = sphi 0, %s224
      %s242 = sphi 0, %s242
      %s244 = sphi 0, %s242
      %s245 = sphi 0, %s244
      %s259 = sphi 0, %s245
      %s263 = sphi 0, %s263
      %s265 = sphi 0, %s263
      %s266 = sphi 0, %s265
      %s280 = sphi 0, %s266
      %s284 = sphi 0, %s284
      %s286 = sphi 0, %s284
      %s287 = sphi 0, %s286
      %s301 = sphi 0, %s287
      %s305 = sphi 0, %s305
      %s307 = sphi 0, %s305
      %s308 = sphi 0, %s307
      %s322 = sphi 0, %s308
      %s326 = sphi 0, %s326
      %s328 = sphi 0, %s326
      %s329 = sphi 0, %s328
      %s343 = sphi 0, %s329
      %s347 = sphi 0, %s347
      %s349 = sphi 0, %s347
      %s350 = sphi 0, %s349
      %s364 = sphi 0, %s350
      %s368 = sphi 0, %s368
      %s370 = sphi 0, %s368
      %s371 = sphi 0, %s370
      %s385 = sphi 0, %s371
      %s389 = sphi 0, %s389
      %s391 = sphi 0, %s389
      %s392 = sphi 0, %s391
      %s406 = sphi 0, %s392
      %s410 = sphi 0, %s410
      %s412 = sphi 0, %s410
      %s413 = sphi 0, %s412
      %s427 = sphi 0, %s413
      %s431 = sphi 0, %s431
      %s433 = sphi 0, %s431
      %s434 = sphi 0, %s433
      %s448 = sphi 0, %s434
      %s452 = sphi 0, %s452
      %s454 = sphi 0, %s452
      %s455 = sphi 0, %s454
      %s469 = sphi 0, %s455
      %s473 = sphi 0, %s473
      %s475 = sphi 0, %s473
      %s476 = sphi 0, %s475
      %s490 = sphi 0, %s476
      %s494 = sphi 0, %s494
      %s496 = sphi 0, %s494
      %s497 = sphi 0, %s496
      %s511 = sphi 0, %s497
      %s515 = sphi 0, %s515
      %s517 = sphi 0, %s515
      %s518 = sphi 0, %s517
      %s532 = sphi 0, %s518
      %s536 = sphi 0, %s536
      %s538 = sphi 0, %s536
      %s539 = sphi 0, %s538
      %s553 = sphi 0, %s539
      %s557 = sphi 0, %s557
      %s559 = sphi 0, %s557
      %s560 = sphi 0, %s559
      %s574 = sphi 0, %s560
      %s580 = sphi 0, %s582
      %s583 = sphi 0, %s580
      %s584 = sphi 0, %s583
      %s600 = sphi 0, %s584
    $region4: #{tpu_custom_call.1} parent=1 // loop_header_branch
      %43 = sbr.rel (%p41) target = $region8
    $region5: #{tpu_custom_call.1} parent=1 // loop_body
      %s45 = ssub.s32 %s40, 1
      %s46 = ssub.s32 %s40, 2
      %s47 = sadd.s32 %s40, 1
      %s48 = ssub.s32 %s40, %s47
      %p49 = scmp.eq.s32.totalorder %s48, 0
      %s51 = sadd.s32 %s50, 1
      %s52 = scalar_select %p49, %s50, %s51
      %p55 = pneg %p49
      %p56 = scmp.eq.s32.totalorder %s40, 1
      %p57 = por %p55, %p56
      %p58 = scmp.ne.s32.totalorder %s50, %s53
      %p59 = scmp.eq.s32.totalorder %s40, 0
      %p60 = por %p58, %p59
      %p61 = scmp.ne.s32.totalorder %s50, %s53
      %p62 = scmp.eq.s32.totalorder %s45, 1
      %p63 = por %p61, %p62
      %p64 = scmp.ne.s32.totalorder %s53, %s54
      %p65 = scmp.eq.s32.totalorder %s45, 0
      %p66 = por %p64, %p65
      %p67 = scmp.ne.s32.totalorder %s53, %s54
      %p68 = scmp.eq.s32.totalorder %s46, 1
      %p69 = por %p67, %p68
      %p71 = scmp.ne.s32.totalorder %s54, %s70
      %p72 = scmp.eq.s32.totalorder %s46, 0
      %p73 = por %p71, %p72
      %s75 = sadd.s32 %s74, 1
      %p78 = scmp.eq.s32.totalorder %s40, 1
      %p79 = scmp.ne.s32.totalorder %s74, %s76
      %p80 = scmp.eq.s32.totalorder %s40, 0
      %p81 = por %p79, %p80
      %p82 = scmp.ne.s32.totalorder %s74, %s76
      %p83 = scmp.eq.s32.totalorder %s45, 1
      %p84 = por %p82, %p83
      %p85 = scmp.ne.s32.totalorder %s76, %s77
      %p86 = scmp.eq.s32.totalorder %s45, 0
      %p87 = por %p85, %p86
      %p88 = scmp.ne.s32.totalorder %s76, %s77
      %p89 = scmp.eq.s32.totalorder %s46, 1
      %p90 = por %p88, %p89
      %p92 = scmp.ne.s32.totalorder %s77, %s91
      %p93 = scmp.eq.s32.totalorder %s46, 0
      %p94 = por %p92, %p93
      %s96 = sadd.s32 %s95, 1
      %p99 = scmp.eq.s32.totalorder %s40, 1
      %p100 = scmp.ne.s32.totalorder %s95, %s97
      %p101 = scmp.eq.s32.totalorder %s40, 0
      %p102 = por %p100, %p101
      %p103 = scmp.ne.s32.totalorder %s95, %s97
      %p104 = scmp.eq.s32.totalorder %s45, 1
      %p105 = por %p103, %p104
      %p106 = scmp.ne.s32.totalorder %s97, %s98
      %p107 = scmp.eq.s32.totalorder %s45, 0
      %p108 = por %p106, %p107
      %p109 = scmp.ne.s32.totalorder %s97, %s98
      %p110 = scmp.eq.s32.totalorder %s46, 1
      %p111 = por %p109, %p110
      %p113 = scmp.ne.s32.totalorder %s98, %s112
      %p114 = scmp.eq.s32.totalorder %s46, 0
      %p115 = por %p113, %p114
      %s117 = sadd.s32 %s116, 1
      %p120 = scmp.eq.s32.totalorder %s40, 1
      %p121 = scmp.ne.s32.totalorder %s116, %s118
      %p122 = scmp.eq.s32.totalorder %s40, 0
      %p123 = por %p121, %p122
      %p124 = scmp.ne.s32.totalorder %s116, %s118
      %p125 = scmp.eq.s32.totalorder %s45, 1
      %p126 = por %p124, %p125
      %p127 = scmp.ne.s32.totalorder %s118, %s119
      %p128 = scmp.eq.s32.totalorder %s45, 0
      %p129 = por %p127, %p128
      %p130 = scmp.ne.s32.totalorder %s118, %s119
      %p131 = scmp.eq.s32.totalorder %s46, 1
      %p132 = por %p130, %p131
      %p134 = scmp.ne.s32.totalorder %s119, %s133
      %p135 = scmp.eq.s32.totalorder %s46, 0
      %p136 = por %p134, %p135
      %s138 = sadd.s32 %s137, 1
      %p141 = scmp.eq.s32.totalorder %s40, 1
      %p142 = scmp.ne.s32.totalorder %s137, %s139
      %p143 = scmp.eq.s32.totalorder %s40, 0
      %p144 = por %p142, %p143
      %p145 = scmp.ne.s32.totalorder %s137, %s139
      %p146 = scmp.eq.s32.totalorder %s45, 1
      %p147 = por %p145, %p146
      %p148 = scmp.ne.s32.totalorder %s139, %s140
      %p149 = scmp.eq.s32.totalorder %s45, 0
      %p150 = por %p148, %p149
      %p151 = scmp.ne.s32.totalorder %s139, %s140
      %p152 = scmp.eq.s32.totalorder %s46, 1
      %p153 = por %p151, %p152
      %p155 = scmp.ne.s32.totalorder %s140, %s154
      %p156 = scmp.eq.s32.totalorder %s46, 0
      %p157 = por %p155, %p156
      %s159 = sadd.s32 %s158, 1
      %p162 = scmp.eq.s32.totalorder %s40, 1
      %p163 = scmp.ne.s32.totalorder %s158, %s160
      %p164 = scmp.eq.s32.totalorder %s40, 0
      %p165 = por %p163, %p164
      %p166 = scmp.ne.s32.totalorder %s158, %s160
      %p167 = scmp.eq.s32.totalorder %s45, 1
      %p168 = por %p166, %p167
      %p169 = scmp.ne.s32.totalorder %s160, %s161
      %p170 = scmp.eq.s32.totalorder %s45, 0
      %p171 = por %p169, %p170
      %p172 = scmp.ne.s32.totalorder %s160, %s161
      %p173 = scmp.eq.s32.totalorder %s46, 1
      %p174 = por %p172, %p173
      %p176 = scmp.ne.s32.totalorder %s161, %s175
      %p177 = scmp.eq.s32.totalorder %s46, 0
      %p178 = por %p176, %p177
      %s180 = sadd.s32 %s179, 1
      %p183 = scmp.eq.s32.totalorder %s40, 1
      %p184 = scmp.ne.s32.totalorder %s179, %s181
      %p185 = scmp.eq.s32.totalorder %s40, 0
      %p186 = por %p184, %p185
      %p187 = scmp.ne.s32.totalorder %s179, %s181
      %p188 = scmp.eq.s32.totalorder %s45, 1
      %p189 = por %p187, %p188
      %p190 = scmp.ne.s32.totalorder %s181, %s182
      %p191 = scmp.eq.s32.totalorder %s45, 0
      %p192 = por %p190, %p191
      %p193 = scmp.ne.s32.totalorder %s181, %s182
      %p194 = scmp.eq.s32.totalorder %s46, 1
      %p195 = por %p193, %p194
      %p197 = scmp.ne.s32.totalorder %s182, %s196
      %p198 = scmp.eq.s32.totalorder %s46, 0
      %p199 = por %p197, %p198
      %s201 = sadd.s32 %s200, 1
      %p204 = scmp.eq.s32.totalorder %s40, 1
      %p205 = scmp.ne.s32.totalorder %s200, %s202
      %p206 = scmp.eq.s32.totalorder %s40, 0
      %p207 = por %p205, %p206
      %p208 = scmp.ne.s32.totalorder %s200, %s202
      %p209 = scmp.eq.s32.totalorder %s45, 1
      %p210 = por %p208, %p209
      %p211 = scmp.ne.s32.totalorder %s202, %s203
      %p212 = scmp.eq.s32.totalorder %s45, 0
      %p213 = por %p211, %p212
      %p214 = scmp.ne.s32.totalorder %s202, %s203
      %p215 = scmp.eq.s32.totalorder %s46, 1
      %p216 = por %p214, %p215
      %p218 = scmp.ne.s32.totalorder %s203, %s217
      %p219 = scmp.eq.s32.totalorder %s46, 0
      %p220 = por %p218, %p219
      %s222 = sadd.s32 %s221, 1
      %p225 = scmp.eq.s32.totalorder %s40, 1
      %p226 = scmp.ne.s32.totalorder %s221, %s223
      %p227 = scmp.eq.s32.totalorder %s40, 0
      %p228 = por %p226, %p227
      %p229 = scmp.ne.s32.totalorder %s221, %s223
      %p230 = scmp.eq.s32.totalorder %s45, 1
      %p231 = por %p229, %p230
      %p232 = scmp.ne.s32.totalorder %s223, %s224
      %p233 = scmp.eq.s32.totalorder %s45, 0
      %p234 = por %p232, %p233
      %p235 = scmp.ne.s32.totalorder %s223, %s224
      %p236 = scmp.eq.s32.totalorder %s46, 1
      %p237 = por %p235, %p236
      %p239 = scmp.ne.s32.totalorder %s224, %s238
      %p240 = scmp.eq.s32.totalorder %s46, 0
      %p241 = por %p239, %p240
      %s243 = sadd.s32 %s242, 1
      %p246 = scmp.eq.s32.totalorder %s40, 1
      %p247 = scmp.ne.s32.totalorder %s242, %s244
      %p248 = scmp.eq.s32.totalorder %s40, 0
      %p249 = por %p247, %p248
      %p250 = scmp.ne.s32.totalorder %s242, %s244
      %p251 = scmp.eq.s32.totalorder %s45, 1
      %p252 = por %p250, %p251
      %p253 = scmp.ne.s32.totalorder %s244, %s245
      %p254 = scmp.eq.s32.totalorder %s45, 0
      %p255 = por %p253, %p254
      %p256 = scmp.ne.s32.totalorder %s244, %s245
      %p257 = scmp.eq.s32.totalorder %s46, 1
      %p258 = por %p256, %p257
      %p260 = scmp.ne.s32.totalorder %s245, %s259
      %p261 = scmp.eq.s32.totalorder %s46, 0
      %p262 = por %p260, %p261
      %s264 = sadd.s32 %s263, 1
      %p267 = scmp.eq.s32.totalorder %s40, 1
      %p268 = scmp.ne.s32.totalorder %s263, %s265
      %p269 = scmp.eq.s32.totalorder %s40, 0
      %p270 = por %p268, %p269
      %p271 = scmp.ne.s32.totalorder %s263, %s265
      %p272 = scmp.eq.s32.totalorder %s45, 1
      %p273 = por %p271, %p272
      %p274 = scmp.ne.s32.totalorder %s265, %s266
      %p275 = scmp.eq.s32.totalorder %s45, 0
      %p276 = por %p274, %p275
      %p277 = scmp.ne.s32.totalorder %s265, %s266
      %p278 = scmp.eq.s32.totalorder %s46, 1
      %p279 = por %p277, %p278
      %p281 = scmp.ne.s32.totalorder %s266, %s280
      %p282 = scmp.eq.s32.totalorder %s46, 0
      %p283 = por %p281, %p282
      %s285 = sadd.s32 %s284, 1
      %p288 = scmp.eq.s32.totalorder %s40, 1
      %p289 = scmp.ne.s32.totalorder %s284, %s286
      %p290 = scmp.eq.s32.totalorder %s40, 0
      %p291 = por %p289, %p290
      %p292 = scmp.ne.s32.totalorder %s284, %s286
      %p293 = scmp.eq.s32.totalorder %s45, 1
      %p294 = por %p292, %p293
      %p295 = scmp.ne.s32.totalorder %s286, %s287
      %p296 = scmp.eq.s32.totalorder %s45, 0
      %p297 = por %p295, %p296
      %p298 = scmp.ne.s32.totalorder %s286, %s287
      %p299 = scmp.eq.s32.totalorder %s46, 1
      %p300 = por %p298, %p299
      %p302 = scmp.ne.s32.totalorder %s287, %s301
      %p303 = scmp.eq.s32.totalorder %s46, 0
      %p304 = por %p302, %p303
      %s306 = sadd.s32 %s305, 1
      %p309 = scmp.eq.s32.totalorder %s40, 1
      %p310 = scmp.ne.s32.totalorder %s305, %s307
      %p311 = scmp.eq.s32.totalorder %s40, 0
      %p312 = por %p310, %p311
      %p313 = scmp.ne.s32.totalorder %s305, %s307
      %p314 = scmp.eq.s32.totalorder %s45, 1
      %p315 = por %p313, %p314
      %p316 = scmp.ne.s32.totalorder %s307, %s308
      %p317 = scmp.eq.s32.totalorder %s45, 0
      %p318 = por %p316, %p317
      %p319 = scmp.ne.s32.totalorder %s307, %s308
      %p320 = scmp.eq.s32.totalorder %s46, 1
      %p321 = por %p319, %p320
      %p323 = scmp.ne.s32.totalorder %s308, %s322
      %p324 = scmp.eq.s32.totalorder %s46, 0
      %p325 = por %p323, %p324
      %s327 = sadd.s32 %s326, 1
      %p330 = scmp.eq.s32.totalorder %s40, 1
      %p331 = scmp.ne.s32.totalorder %s326, %s328
      %p332 = scmp.eq.s32.totalorder %s40, 0
      %p333 = por %p331, %p332
      %p334 = scmp.ne.s32.totalorder %s326, %s328
      %p335 = scmp.eq.s32.totalorder %s45, 1
      %p336 = por %p334, %p335
      %p337 = scmp.ne.s32.totalorder %s328, %s329
      %p338 = scmp.eq.s32.totalorder %s45, 0
      %p339 = por %p337, %p338
      %p340 = scmp.ne.s32.totalorder %s328, %s329
      %p341 = scmp.eq.s32.totalorder %s46, 1
      %p342 = por %p340, %p341
      %p344 = scmp.ne.s32.totalorder %s329, %s343
      %p345 = scmp.eq.s32.totalorder %s46, 0
      %p346 = por %p344, %p345
      %s348 = sadd.s32 %s347, 1
      %p351 = scmp.eq.s32.totalorder %s40, 1
      %p352 = scmp.ne.s32.totalorder %s347, %s349
      %p353 = scmp.eq.s32.totalorder %s40, 0
      %p354 = por %p352, %p353
      %p355 = scmp.ne.s32.totalorder %s347, %s349
      %p356 = scmp.eq.s32.totalorder %s45, 1
      %p357 = por %p355, %p356
      %p358 = scmp.ne.s32.totalorder %s349, %s350
      %p359 = scmp.eq.s32.totalorder %s45, 0
      %p360 = por %p358, %p359
      %p361 = scmp.ne.s32.totalorder %s349, %s350
      %p362 = scmp.eq.s32.totalorder %s46, 1
      %p363 = por %p361, %p362
      %p365 = scmp.ne.s32.totalorder %s350, %s364
      %p366 = scmp.eq.s32.totalorder %s46, 0
      %p367 = por %p365, %p366
      %s369 = sadd.s32 %s368, 1
      %p372 = scmp.eq.s32.totalorder %s40, 1
      %p373 = scmp.ne.s32.totalorder %s368, %s370
      %p374 = scmp.eq.s32.totalorder %s40, 0
      %p375 = por %p373, %p374
      %p376 = scmp.ne.s32.totalorder %s368, %s370
      %p377 = scmp.eq.s32.totalorder %s45, 1
      %p378 = por %p376, %p377
      %p379 = scmp.ne.s32.totalorder %s370, %s371
      %p380 = scmp.eq.s32.totalorder %s45, 0
      %p381 = por %p379, %p380
      %p382 = scmp.ne.s32.totalorder %s370, %s371
      %p383 = scmp.eq.s32.totalorder %s46, 1
      %p384 = por %p382, %p383
      %p386 = scmp.ne.s32.totalorder %s371, %s385
      %p387 = scmp.eq.s32.totalorder %s46, 0
      %p388 = por %p386, %p387
      %s390 = sadd.s32 %s389, 1
      %p393 = scmp.eq.s32.totalorder %s40, 1
      %p394 = scmp.ne.s32.totalorder %s389, %s391
      %p395 = scmp.eq.s32.totalorder %s40, 0
      %p396 = por %p394, %p395
      %p397 = scmp.ne.s32.totalorder %s389, %s391
      %p398 = scmp.eq.s32.totalorder %s45, 1
      %p399 = por %p397, %p398
      %p400 = scmp.ne.s32.totalorder %s391, %s392
      %p401 = scmp.eq.s32.totalorder %s45, 0
      %p402 = por %p400, %p401
      %p403 = scmp.ne.s32.totalorder %s391, %s392
      %p404 = scmp.eq.s32.totalorder %s46, 1
      %p405 = por %p403, %p404
      %p407 = scmp.ne.s32.totalorder %s392, %s406
      %p408 = scmp.eq.s32.totalorder %s46, 0
      %p409 = por %p407, %p408
      %s411 = sadd.s32 %s410, 1
      %p414 = scmp.eq.s32.totalorder %s40, 1
      %p415 = scmp.ne.s32.totalorder %s410, %s412
      %p416 = scmp.eq.s32.totalorder %s40, 0
      %p417 = por %p415, %p416
      %p418 = scmp.ne.s32.totalorder %s410, %s412
      %p419 = scmp.eq.s32.totalorder %s45, 1
      %p420 = por %p418, %p419
      %p421 = scmp.ne.s32.totalorder %s412, %s413
      %p422 = scmp.eq.s32.totalorder %s45, 0
      %p423 = por %p421, %p422
      %p424 = scmp.ne.s32.totalorder %s412, %s413
      %p425 = scmp.eq.s32.totalorder %s46, 1
      %p426 = por %p424, %p425
      %p428 = scmp.ne.s32.totalorder %s413, %s427
      %p429 = scmp.eq.s32.totalorder %s46, 0
      %p430 = por %p428, %p429
      %s432 = sadd.s32 %s431, 1
      %p435 = scmp.eq.s32.totalorder %s40, 1
      %p436 = scmp.ne.s32.totalorder %s431, %s433
      %p437 = scmp.eq.s32.totalorder %s40, 0
      %p438 = por %p436, %p437
      %p439 = scmp.ne.s32.totalorder %s431, %s433
      %p440 = scmp.eq.s32.totalorder %s45, 1
      %p441 = por %p439, %p440
      %p442 = scmp.ne.s32.totalorder %s433, %s434
      %p443 = scmp.eq.s32.totalorder %s45, 0
      %p444 = por %p442, %p443
      %p445 = scmp.ne.s32.totalorder %s433, %s434
      %p446 = scmp.eq.s32.totalorder %s46, 1
      %p447 = por %p445, %p446
      %p449 = scmp.ne.s32.totalorder %s434, %s448
      %p450 = scmp.eq.s32.totalorder %s46, 0
      %p451 = por %p449, %p450
      %s453 = sadd.s32 %s452, 1
      %p456 = scmp.eq.s32.totalorder %s40, 1
      %p457 = scmp.ne.s32.totalorder %s452, %s454
      %p458 = scmp.eq.s32.totalorder %s40, 0
      %p459 = por %p457, %p458
      %p460 = scmp.ne.s32.totalorder %s452, %s454
      %p461 = scmp.eq.s32.totalorder %s45, 1
      %p462 = por %p460, %p461
      %p463 = scmp.ne.s32.totalorder %s454, %s455
      %p464 = scmp.eq.s32.totalorder %s45, 0
      %p465 = por %p463, %p464
      %p466 = scmp.ne.s32.totalorder %s454, %s455
      %p467 = scmp.eq.s32.totalorder %s46, 1
      %p468 = por %p466, %p467
      %p470 = scmp.ne.s32.totalorder %s455, %s469
      %p471 = scmp.eq.s32.totalorder %s46, 0
      %p472 = por %p470, %p471
      %s474 = sadd.s32 %s473, 1
      %p477 = scmp.eq.s32.totalorder %s40, 1
      %p478 = scmp.ne.s32.totalorder %s473, %s475
      %p479 = scmp.eq.s32.totalorder %s40, 0
      %p480 = por %p478, %p479
      %p481 = scmp.ne.s32.totalorder %s473, %s475
      %p482 = scmp.eq.s32.totalorder %s45, 1
      %p483 = por %p481, %p482
      %p484 = scmp.ne.s32.totalorder %s475, %s476
      %p485 = scmp.eq.s32.totalorder %s45, 0
      %p486 = por %p484, %p485
      %p487 = scmp.ne.s32.totalorder %s475, %s476
      %p488 = scmp.eq.s32.totalorder %s46, 1
      %p489 = por %p487, %p488
      %p491 = scmp.ne.s32.totalorder %s476, %s490
      %p492 = scmp.eq.s32.totalorder %s46, 0
      %p493 = por %p491, %p492
      %s495 = sadd.s32 %s494, 1
      %p498 = scmp.eq.s32.totalorder %s40, 1
      %p499 = scmp.ne.s32.totalorder %s494, %s496
      %p500 = scmp.eq.s32.totalorder %s40, 0
      %p501 = por %p499, %p500
      %p502 = scmp.ne.s32.totalorder %s494, %s496
      %p503 = scmp.eq.s32.totalorder %s45, 1
      %p504 = por %p502, %p503
      %p505 = scmp.ne.s32.totalorder %s496, %s497
      %p506 = scmp.eq.s32.totalorder %s45, 0
      %p507 = por %p505, %p506
      %p508 = scmp.ne.s32.totalorder %s496, %s497
      %p509 = scmp.eq.s32.totalorder %s46, 1
      %p510 = por %p508, %p509
      %p512 = scmp.ne.s32.totalorder %s497, %s511
      %p513 = scmp.eq.s32.totalorder %s46, 0
      %p514 = por %p512, %p513
      %s516 = sadd.s32 %s515, 1
      %p519 = scmp.eq.s32.totalorder %s40, 1
      %p520 = scmp.ne.s32.totalorder %s515, %s517
      %p521 = scmp.eq.s32.totalorder %s40, 0
      %p522 = por %p520, %p521
      %p523 = scmp.ne.s32.totalorder %s515, %s517
      %p524 = scmp.eq.s32.totalorder %s45, 1
      %p525 = por %p523, %p524
      %p526 = scmp.ne.s32.totalorder %s517, %s518
      %p527 = scmp.eq.s32.totalorder %s45, 0
      %p528 = por %p526, %p527
      %p529 = scmp.ne.s32.totalorder %s517, %s518
      %p530 = scmp.eq.s32.totalorder %s46, 1
      %p531 = por %p529, %p530
      %p533 = scmp.ne.s32.totalorder %s518, %s532
      %p534 = scmp.eq.s32.totalorder %s46, 0
      %p535 = por %p533, %p534
      %s537 = sadd.s32 %s536, 1
      %p540 = scmp.eq.s32.totalorder %s40, 1
      %p541 = scmp.ne.s32.totalorder %s536, %s538
      %p542 = scmp.eq.s32.totalorder %s40, 0
      %p543 = por %p541, %p542
      %p544 = scmp.ne.s32.totalorder %s536, %s538
      %p545 = scmp.eq.s32.totalorder %s45, 1
      %p546 = por %p544, %p545
      %p547 = scmp.ne.s32.totalorder %s538, %s539
      %p548 = scmp.eq.s32.totalorder %s45, 0
      %p549 = por %p547, %p548
      %p550 = scmp.ne.s32.totalorder %s538, %s539
      %p551 = scmp.eq.s32.totalorder %s46, 1
      %p552 = por %p550, %p551
      %p554 = scmp.ne.s32.totalorder %s539, %s553
      %p555 = scmp.eq.s32.totalorder %s46, 0
      %p556 = por %p554, %p555
      %s558 = sadd.s32 %s557, 1
      %p561 = scmp.eq.s32.totalorder %s40, 1
      %p562 = scmp.ne.s32.totalorder %s557, %s559
      %p563 = scmp.eq.s32.totalorder %s40, 0
      %p564 = por %p562, %p563
      %p565 = scmp.ne.s32.totalorder %s557, %s559
      %p566 = scmp.eq.s32.totalorder %s45, 1
      %p567 = por %p565, %p566
      %p568 = scmp.ne.s32.totalorder %s559, %s560
      %p569 = scmp.eq.s32.totalorder %s45, 0
      %p570 = por %p568, %p569
      %p571 = scmp.ne.s32.totalorder %s559, %s560
      %p572 = scmp.eq.s32.totalorder %s46, 1
      %p573 = por %p571, %p572
      %p575 = scmp.ne.s32.totalorder %s560, %s574
      %p576 = scmp.eq.s32.totalorder %s46, 0
      %p577 = por %p575, %p576
      %s578 = ssub.s32 %s40, %s47
      %p579 = scmp.eq.s32.totalorder %s578, 0
      %s581 = sadd.s32 %s580, 1
      %s582 = scalar_select %p579, %s580, %s581
      %p585 = pneg %p579
      %p586 = scmp.eq.s32.totalorder %s40, 1
      %p587 = por %p585, %p586
      %p588 = scmp.ne.s32.totalorder %s580, %s583
      %p589 = scmp.eq.s32.totalorder %s40, 0
      %p590 = por %p588, %p589
      %p591 = scmp.ne.s32.totalorder %s580, %s583
      %p592 = scmp.eq.s32.totalorder %s45, 1
      %p593 = por %p591, %p592
      %p594 = scmp.ne.s32.totalorder %s583, %s584
      %p595 = scmp.eq.s32.totalorder %s45, 0
      %p596 = por %p594, %p595
      %p597 = scmp.ne.s32.totalorder %s583, %s584
      %p598 = scmp.eq.s32.totalorder %s46, 1
      %p599 = por %p597, %p598
      %p601 = scmp.ne.s32.totalorder %s584, %s600
      %p602 = scmp.eq.s32.totalorder %s46, 0
      %p603 = por %p601, %p602
      %p604 = scmp.le.s32.totalorder 1, %s40
      %p605 = scmp.lt.s32.totalorder %s40, 3
      %p606 = pnand %p604, %p605
      %p607 = pneg %p606
      // Predicated region
      $region9: #{tpu_custom_call.1} parent=5 // pred_check
        _
      $region10: #{tpu_custom_call.1} parent=5 // pred_check_branch
        %609 = sbr.rel (%p606) target = $region12
      $region11: #{tpu_custom_call.1} parent=5 // pred_region
        %s610 = ssub.s32 %s40, 1
        // Predicated region
        $region13: #{tpu_custom_call.1} parent=11 // pred_check
          %p611 = pneg %p87
        $region14: #{tpu_custom_call.1} parent=11 // pred_check_branch
          %613 = sbr.rel (%p611) target = $region16
        $region15: #{tpu_custom_call.1} parent=11 // pred_region
          %s615 = ssub.s32 2048, 2048
          %616 = vsyncadd [#allocation3], %s615
          %s617 = sshll.u32 [#allocation2], 4
          %s618 = int_to_ptr.vmem [resolvable:$true] %s617
          %623 = dma.hbm_to_vmem [thread:$0]  %s1, 2048, %s618, [#allocation3], 128, 128, 8
        $region16: #{tpu_custom_call.1} parent=11 // pred_fallthru
          _
        // Predicated region
        $region17: #{tpu_custom_call.1} parent=11 // pred_check
          %p624 = pneg %p108
        $region18: #{tpu_custom_call.1} parent=11 // pred_check_branch
          %626 = sbr.rel (%p624) target = $region20
        $region19: #{tpu_custom_call.1} parent=11 // pred_region
          _
        $region20: #{tpu_custom_call.1} parent=11 // pred_fallthru
          _
        // Predicated region
        $region21: #{tpu_custom_call.1} parent=11 // pred_check
          %p627 = pneg %p129
        $region22: #{tpu_custom_call.1} parent=11 // pred_check_branch
          %629 = sbr.rel (%p627) target = $region24
        $region23: #{tpu_custom_call.1} parent=11 // pred_region
          _
        $region24: #{tpu_custom_call.1} parent=11 // pred_fallthru
          _
        // Predicated region
        $region25: #{tpu_custom_call.1} parent=11 // pred_check
          %p630 = pneg %p150
        $region26: #{tpu_custom_call.1} parent=11 // pred_check_branch
          %632 = sbr.rel (%p630) target = $region28
        $region27: #{tpu_custom_call.1} parent=11 // pred_region
          _
        $region28: #{tpu_custom_call.1} parent=11 // pred_fallthru
          _
        // Predicated region
        $region29: #{tpu_custom_call.1} parent=11 // pred_check
          %p633 = pneg %p171
        $region30: #{tpu_custom_call.1} parent=11 // pred_check_branch
          %635 = sbr.rel (%p633) target = $region32
        $region31: #{tpu_custom_call.1} parent=11 // pred_region
          %s637 = ssub.s32 8192, 8192
          %638 = vsyncadd [#allocation6], %s637
          %s639 = sshll.u32 [#allocation5], 4
          %s640 = int_to_ptr.vmem [resolvable:$true] %s639
          %645 = dma.hbm_to_vmem [thread:$0]  %s5, 8192, %s640, [#allocation6], 128, 128, 8
        $region32: #{tpu_custom_call.1} parent=11 // pred_fallthru
          _
        // Predicated region
        $region33: #{tpu_custom_call.1} parent=11 // pred_check
          %p646 = pneg %p192
        $region34: #{tpu_custom_call.1} parent=11 // pred_check_branch
          %648 = sbr.rel (%p646) target = $region36
        $region35: #{tpu_custom_call.1} parent=11 // pred_region
          _
        $region36: #{tpu_custom_call.1} parent=11 // pred_fallthru
          _
        // Predicated region
        $region37: #{tpu_custom_call.1} parent=11 // pred_check
          %p649 = pneg %p213
        $region38: #{tpu_custom_call.1} parent=11 // pred_check_branch
          %651 = sbr.rel (%p649) target = $region40
        $region39: #{tpu_custom_call.1} parent=11 // pred_region
          %s653 = ssub.s32 8192, 8192
          %654 = vsyncadd [#allocation6], %s653
          %s655 = sshll.u32 [#allocation7], 4
          %s656 = int_to_ptr.vmem [resolvable:$true] %s655
          %661 = dma.hbm_to_vmem [thread:$0]  %s7, 8192, %s656, [#allocation6], 128, 128, 8
        $region40: #{tpu_custom_call.1} parent=11 // pred_fallthru
          _
        // Predicated region
        $region41: #{tpu_custom_call.1} parent=11 // pred_check
          %p662 = pneg %p234
        $region42: #{tpu_custom_call.1} parent=11 // pred_check_branch
          %664 = sbr.rel (%p662) target = $region44
        $region43: #{tpu_custom_call.1} parent=11 // pred_region
          _
        $region44: #{tpu_custom_call.1} parent=11 // pred_fallthru
          _
        // Predicated region
        $region45: #{tpu_custom_call.1} parent=11 // pred_check
          %p665 = pneg %p255
        $region46: #{tpu_custom_call.1} parent=11 // pred_check_branch
          %667 = sbr.rel (%p665) target = $region48
        $region47: #{tpu_custom_call.1} parent=11 // pred_region
          %s669 = ssub.s32 8192, 8192
          %670 = vsyncadd [#allocation9], %s669
          %s671 = sshll.u32 [#allocation8], 4
          %s672 = int_to_ptr.vmem [resolvable:$true] %s671
          %677 = dma.hbm_to_vmem [thread:$0]  %s9, 8192, %s672, [#allocation9], 128, 128, 8
        $region48: #{tpu_custom_call.1} parent=11 // pred_fallthru
          _
        // Predicated region
        $region49: #{tpu_custom_call.1} parent=11 // pred_check
          %p678 = pneg %p276
        $region50: #{tpu_custom_call.1} parent=11 // pred_check_branch
          %680 = sbr.rel (%p678) target = $region52
        $region51: #{tpu_custom_call.1} parent=11 // pred_region
          _
        $region52: #{tpu_custom_call.1} parent=11 // pred_fallthru
          _
        // Predicated region
        $region53: #{tpu_custom_call.1} parent=11 // pred_check
          %p681 = pneg %p297
        $region54: #{tpu_custom_call.1} parent=11 // pred_check_branch
          %683 = sbr.rel (%p681) target = $region56
        $region55: #{tpu_custom_call.1} parent=11 // pred_region
          %s685 = ssub.s32 8192, 8192
          %686 = vsyncadd [#allocation9], %s685
          %s687 = sshll.u32 [#allocation10], 4
          %s688 = int_to_ptr.vmem [resolvable:$true] %s687
          %693 = dma.hbm_to_vmem [thread:$0]  %s11, 8192, %s688, [#allocation9], 128, 128, 8
        $region56: #{tpu_custom_call.1} parent=11 // pred_fallthru
          _
        // Predicated region
        $region57: #{tpu_custom_call.1} parent=11 // pred_check
          %p694 = pneg %p318
        $region58: #{tpu_custom_call.1} parent=11 // pred_check_branch
          %696 = sbr.rel (%p694) target = $region60
        $region59: #{tpu_custom_call.1} parent=11 // pred_region
          _
        $region60: #{tpu_custom_call.1} parent=11 // pred_fallthru
          _
        // Predicated region
        $region61: #{tpu_custom_call.1} parent=11 // pred_check
          %p697 = pneg %p339
        $region62: #{tpu_custom_call.1} parent=11 // pred_check_branch
          %699 = sbr.rel (%p697) target = $region64
        $region63: #{tpu_custom_call.1} parent=11 // pred_region
          _
        $region64: #{tpu_custom_call.1} parent=11 // pred_fallthru
          _
        // Predicated region
        $region65: #{tpu_custom_call.1} parent=11 // pred_check
          %p700 = pneg %p360
        $region66: #{tpu_custom_call.1} parent=11 // pred_check_branch
          %702 = sbr.rel (%p700) target = $region68
        $region67: #{tpu_custom_call.1} parent=11 // pred_region
          _
        $region68: #{tpu_custom_call.1} parent=11 // pred_fallthru
          _
        // Predicated region
        $region69: #{tpu_custom_call.1} parent=11 // pred_check
          %p703 = pneg %p381
        $region70: #{tpu_custom_call.1} parent=11 // pred_check_branch
          %705 = sbr.rel (%p703) target = $region72
        $region71: #{tpu_custom_call.1} parent=11 // pred_region
          %s707 = ssub.s32 32768, 32768
          %708 = vsyncadd [#allocation12], %s707
          %s709 = sshll.u32 [#allocation11], 4
          %s710 = int_to_ptr.vmem [resolvable:$true] %s709
          %715 = dma.hbm_to_vmem [thread:$0]  %s15, 32768, %s710, [#allocation12], 512, 512, 32
        $region72: #{tpu_custom_call.1} parent=11 // pred_fallthru
          _
        // Predicated region
        $region73: #{tpu_custom_call.1} parent=11 // pred_check
          %p716 = pneg %p402
        $region74: #{tpu_custom_call.1} parent=11 // pred_check_branch
          %718 = sbr.rel (%p716) target = $region76
        $region75: #{tpu_custom_call.1} parent=11 // pred_region
          _
        $region76: #{tpu_custom_call.1} parent=11 // pred_fallthru
          _
        // Predicated region
        $region77: #{tpu_custom_call.1} parent=11 // pred_check
          %p719 = pneg %p423
        $region78: #{tpu_custom_call.1} parent=11 // pred_check_branch
          %721 = sbr.rel (%p719) target = $region80
        $region79: #{tpu_custom_call.1} parent=11 // pred_region
          %s723 = ssub.s32 32768, 32768
          %724 = vsyncadd [#allocation12], %s723
          %s725 = sshll.u32 [#allocation13], 4
          %s726 = int_to_ptr.vmem [resolvable:$true] %s725
          %731 = dma.hbm_to_vmem [thread:$0]  %s17, 32768, %s726, [#allocation12], 128, 128, 8
        $region80: #{tpu_custom_call.1} parent=11 // pred_fallthru
          _
        // Predicated region
        $region81: #{tpu_custom_call.1} parent=11 // pred_check
          %p732 = pneg %p444
        $region82: #{tpu_custom_call.1} parent=11 // pred_check_branch
          %734 = sbr.rel (%p732) target = $region84
        $region83: #{tpu_custom_call.1} parent=11 // pred_region
          _
        $region84: #{tpu_custom_call.1} parent=11 // pred_fallthru
          _
        // Predicated region
        $region85: #{tpu_custom_call.1} parent=11 // pred_check
          %p735 = pneg %p465
        $region86: #{tpu_custom_call.1} parent=11 // pred_check_branch
          %737 = sbr.rel (%p735) target = $region88
        $region87: #{tpu_custom_call.1} parent=11 // pred_region
          %s739 = ssub.s32 8192, 8192
          %740 = vsyncadd [#allocation15], %s739
          %s741 = sshll.u32 [#allocation14], 4
          %s742 = int_to_ptr.vmem [resolvable:$true] %s741
          %747 = dma.hbm_to_vmem [thread:$0]  %s19, 8192, %s742, [#allocation15], 512, 512, 32
        $region88: #{tpu_custom_call.1} parent=11 // pred_fallthru
          _
        // Predicated region
        $region89: #{tpu_custom_call.1} parent=11 // pred_check
          %p748 = pneg %p486
        $region90: #{tpu_custom_call.1} parent=11 // pred_check_branch
          %750 = sbr.rel (%p748) target = $region92
        $region91: #{tpu_custom_call.1} parent=11 // pred_region
          _
        $region92: #{tpu_custom_call.1} parent=11 // pred_fallthru
          _
        // Predicated region
        $region93: #{tpu_custom_call.1} parent=11 // pred_check
          %p751 = pneg %p507
        $region94: #{tpu_custom_call.1} parent=11 // pred_check_branch
          %753 = sbr.rel (%p751) target = $region96
        $region95: #{tpu_custom_call.1} parent=11 // pred_region
          %s755 = ssub.s32 8192, 8192
          %756 = vsyncadd [#allocation15], %s755
          %s757 = sshll.u32 [#allocation16], 4
          %s758 = int_to_ptr.vmem [resolvable:$true] %s757
          %763 = dma.hbm_to_vmem [thread:$0]  %s21, 8192, %s758, [#allocation15], 128, 128, 8
        $region96: #{tpu_custom_call.1} parent=11 // pred_fallthru
          _
        // Predicated region
        $region97: #{tpu_custom_call.1} parent=11 // pred_check
          %p764 = pneg %p528
        $region98: #{tpu_custom_call.1} parent=11 // pred_check_branch
          %766 = sbr.rel (%p764) target = $region100
        $region99: #{tpu_custom_call.1} parent=11 // pred_region
          _
        $region100: #{tpu_custom_call.1} parent=11 // pred_fallthru
          _
        // Predicated region
        $region101: #{tpu_custom_call.1} parent=11 // pred_check
          %p767 = pneg %p549
        $region102: #{tpu_custom_call.1} parent=11 // pred_check_branch
          %769 = sbr.rel (%p767) target = $region104
        $region103: #{tpu_custom_call.1} parent=11 // pred_region
          %s771 = ssub.s32 2048, 2048
          %772 = vsyncadd [#allocation18], %s771
          %s773 = sshll.u32 [#allocation17], 4
          %s774 = int_to_ptr.vmem [resolvable:$true] %s773
          %779 = dma.hbm_to_vmem [thread:$0]  %s23, 2048, %s774, [#allocation18], 128, 128, 8
        $region104: #{tpu_custom_call.1} parent=11 // pred_fallthru
          _
        // Predicated region
        $region105: #{tpu_custom_call.1} parent=11 // pred_check
          %p780 = pneg %p570
        $region106: #{tpu_custom_call.1} parent=11 // pred_check_branch
          %782 = sbr.rel (%p780) target = $region108
        $region107: #{tpu_custom_call.1} parent=11 // pred_region
          _
        $region108: #{tpu_custom_call.1} parent=11 // pred_fallthru
          _
      $region12: #{tpu_custom_call.1} parent=5 // pred_fallthru
        _
      %p783 = scmp.lt.s32.totalorder %s40, 2
      // Predicated region
      $region109: #{tpu_custom_call.1} parent=5 // pred_check
        %p784 = pneg %p783
      $region110: #{tpu_custom_call.1} parent=5 // pred_check_branch
        %786 = sbr.rel (%p784) target = $region112
      $region111: #{tpu_custom_call.1} parent=5 // pred_region
        // Predicated region
        $region113: #{tpu_custom_call.1} parent=111 // pred_check
          %p787 = pneg %p60
        $region114: #{tpu_custom_call.1} parent=111 // pred_check_branch
          %789 = sbr.rel (%p787) target = $region116
        $region115: #{tpu_custom_call.1} parent=111 // pred_region
          %p790 = scmp.lt.s32.totalorder %s40, 1
          %s791 = scalar_select %p790, %s40, 1
          %s792 = smul.addr %s791, 8
          %s793 = scalar_lea.vmem %s0, %s792
        $region116: #{tpu_custom_call.1} parent=111 // pred_fallthru
          _
      $region112: #{tpu_custom_call.1} parent=5 // pred_fallthru
        _
      %p794 = scmp.le.s32.totalorder 1, %s40
      %p795 = scmp.lt.s32.totalorder %s40, 3
      %p796 = pnand %p794, %p795
      %p797 = pneg %p796
      // Predicated region
      $region117: #{tpu_custom_call.1} parent=5 // pred_check
        _
      $region118: #{tpu_custom_call.1} parent=5 // pred_check_branch
        %799 = sbr.rel (%p796) target = $region120
      $region119: #{tpu_custom_call.1} parent=5 // pred_region
        %s800 = ssub.s32 %s40, 1
        // Predicated region
        $region121: #{tpu_custom_call.1} parent=119 // pred_check
          %p801 = pneg %p87
        $region122: #{tpu_custom_call.1} parent=119 // pred_check_branch
          %803 = sbr.rel (%p801) target = $region124
        $region123: #{tpu_custom_call.1} parent=119 // pred_region
          %804 = dma.done [#allocation3], 2048
        $region124: #{tpu_custom_call.1} parent=119 // pred_fallthru
          _
        // Predicated region
        $region125: #{tpu_custom_call.1} parent=119 // pred_check
          %p805 = pneg %p171
        $region126: #{tpu_custom_call.1} parent=119 // pred_check_branch
          %807 = sbr.rel (%p805) target = $region128
        $region127: #{tpu_custom_call.1} parent=119 // pred_region
          %808 = dma.done [#allocation6], 8192
        $region128: #{tpu_custom_call.1} parent=119 // pred_fallthru
          _
        // Predicated region
        $region129: #{tpu_custom_call.1} parent=119 // pred_check
          %p809 = pneg %p213
        $region130: #{tpu_custom_call.1} parent=119 // pred_check_branch
          %811 = sbr.rel (%p809) target = $region132
        $region131: #{tpu_custom_call.1} parent=119 // pred_region
          %812 = dma.done [#allocation6], 8192
        $region132: #{tpu_custom_call.1} parent=119 // pred_fallthru
          _
        // Predicated region
        $region133: #{tpu_custom_call.1} parent=119 // pred_check
          %p813 = pneg %p255
        $region134: #{tpu_custom_call.1} parent=119 // pred_check_branch
          %815 = sbr.rel (%p813) target = $region136
        $region135: #{tpu_custom_call.1} parent=119 // pred_region
          %816 = dma.done [#allocation9], 8192
        $region136: #{tpu_custom_call.1} parent=119 // pred_fallthru
          _
        // Predicated region
        $region137: #{tpu_custom_call.1} parent=119 // pred_check
          %p817 = pneg %p297
        $region138: #{tpu_custom_call.1} parent=119 // pred_check_branch
          %819 = sbr.rel (%p817) target = $region140
        $region139: #{tpu_custom_call.1} parent=119 // pred_region
          %820 = dma.done [#allocation9], 8192
        $region140: #{tpu_custom_call.1} parent=119 // pred_fallthru
          _
        // Predicated region
        $region141: #{tpu_custom_call.1} parent=119 // pred_check
          %p821 = pneg %p381
        $region142: #{tpu_custom_call.1} parent=119 // pred_check_branch
          %823 = sbr.rel (%p821) target = $region144
        $region143: #{tpu_custom_call.1} parent=119 // pred_region
          %824 = dma.done [#allocation12], 32768
        $region144: #{tpu_custom_call.1} parent=119 // pred_fallthru
          _
        // Predicated region
        $region145: #{tpu_custom_call.1} parent=119 // pred_check
          %p825 = pneg %p423
        $region146: #{tpu_custom_call.1} parent=119 // pred_check_branch
          %827 = sbr.rel (%p825) target = $region148
        $region147: #{tpu_custom_call.1} parent=119 // pred_region
          %828 = dma.done [#allocation12], 32768
        $region148: #{tpu_custom_call.1} parent=119 // pred_fallthru
          _
        // Predicated region
        $region149: #{tpu_custom_call.1} parent=119 // pred_check
          %p829 = pneg %p465
        $region150: #{tpu_custom_call.1} parent=119 // pred_check_branch
          %831 = sbr.rel (%p829) target = $region152
        $region151: #{tpu_custom_call.1} parent=119 // pred_region
          %832 = dma.done [#allocation15], 8192
        $region152: #{tpu_custom_call.1} parent=119 // pred_fallthru
          _
        // Predicated region
        $region153: #{tpu_custom_call.1} parent=119 // pred_check
          %p833 = pneg %p507
        $region154: #{tpu_custom_call.1} parent=119 // pred_check_branch
          %835 = sbr.rel (%p833) target = $region156
        $region155: #{tpu_custom_call.1} parent=119 // pred_region
          %836 = dma.done [#allocation15], 8192
        $region156: #{tpu_custom_call.1} parent=119 // pred_fallthru
          _
        // Predicated region
        $region157: #{tpu_custom_call.1} parent=119 // pred_check
          %p837 = pneg %p549
        $region158: #{tpu_custom_call.1} parent=119 // pred_check_branch
          %839 = sbr.rel (%p837) target = $region160
        $region159: #{tpu_custom_call.1} parent=119 // pred_region
          %840 = dma.done [#allocation18], 2048
        $region160: #{tpu_custom_call.1} parent=119 // pred_fallthru
          _
        %p841 = scmp.lt.s32.totalorder %s45, 1
        %s842 = scalar_select %p841, %s45, 1
        %s843 = smul.addr %s842, 8
        %s844 = scalar_lea.vmem %s0, %s843
        %p845 = pneg %p66
        %p846 = pneg %p63
        %p847 = pneg %p87
        %p848 = pneg %p84
        %p849 = pneg %p108
        %p850 = pneg %p105
        %p851 = pneg %p129
        %p852 = pneg %p126
        %p853 = pneg %p150
        %p854 = pneg %p147
        %p855 = pneg %p171
        %p856 = pneg %p168
        %p857 = pneg %p192
        %p858 = pneg %p189
        %p859 = pneg %p213
        %p860 = pneg %p210
        %p861 = pneg %p234
        %p862 = pneg %p231
        %p863 = pneg %p255
        %p864 = pneg %p252
        %p865 = pneg %p276
        %p866 = pneg %p273
        %p867 = pneg %p297
        %p868 = pneg %p294
        %p869 = pneg %p318
        %p870 = pneg %p315
        %p871 = pneg %p339
        %p872 = pneg %p336
        %p873 = pneg %p360
        %p874 = pneg %p357
        %p875 = pneg %p381
        %p876 = pneg %p378
        %p877 = pneg %p402
        %p878 = pneg %p399
        %p879 = pneg %p423
        %p880 = pneg %p420
        %p881 = pneg %p444
        %p882 = pneg %p441
        %p883 = pneg %p465
        %p884 = pneg %p462
        %p885 = pneg %p486
        %p886 = pneg %p483
        %p887 = pneg %p507
        %p888 = pneg %p504
        %p889 = pneg %p528
        %p890 = pneg %p525
        %p891 = pneg %p549
        %p892 = pneg %p546
        %p893 = pneg %p570
        %p894 = pneg %p567
        %p895 = pneg %p596
        %p896 = pneg %p593
        %s897 = sand.u32 %s583, 1
        %s898 = scalar_lea.sflag [#allocation4], %s897
        %s899 = sand.u32 %s583, 1
        %s900 = smul.addr %s899, 8
        %s901 = scalar_lea.vmem [#allocation19], %s900
        %p902 = scmp.lt.s32.totalorder %s45, 1
        %s903 = scalar_select %p902, %s45, 1
        %s904 = smul.addr %s903, 8
        %s905 = scalar_lea.vmem %s0, %s904
        %v906 = vld [vmem:[%s905] sm:$0xff]
        %v907 = vlaneseq
        %v908 = vand.u32 %v907, 127
        %909 = vset.pattern.permute.xlu0 0
        %910 = vperm.xlu0 %909, %v906
        %v911 = vpop.permute.xlu0 %910
        %vm912 = vcmp.eq.s32.totalorder %v908, %v911
        %v913 = vsel %vm912, 1.0, 0.0
        %v914 = vld [vmem:[#allocation2] sm:$0xff]
        %v915 = vld [vmem:[#allocation2 + $0x8] sm:$0xff]
        %v916 = vld [vmem:[#allocation2 + $0x10] sm:$0xff]
        %v917 = vld [vmem:[#allocation2 + $0x18] sm:$0xff]
        %v918 = vld [vmem:[#allocation2 + $0x20] sm:$0xff]
        %v919 = vld [vmem:[#allocation2 + $0x28] sm:$0xff]
        %v920 = vld [vmem:[#allocation2 + $0x30] sm:$0xff]
        %v921 = vld [vmem:[#allocation2 + $0x38] sm:$0xff]
        %v922 = vld [vmem:[#allocation2 + $0x40] sm:$0xff]
        %v923 = vld [vmem:[#allocation2 + $0x48] sm:$0xff]
        %v924 = vld [vmem:[#allocation2 + $0x50] sm:$0xff]
        %v925 = vld [vmem:[#allocation2 + $0x58] sm:$0xff]
        %v926 = vld [vmem:[#allocation2 + $0x60] sm:$0xff]
        %v927 = vld [vmem:[#allocation2 + $0x68] sm:$0xff]
        %v928 = vld [vmem:[#allocation2 + $0x70] sm:$0xff]
        %v929 = vld [vmem:[#allocation2 + $0x78] sm:$0xff]
        %v930 = vld [vmem:[%s2] sm:$0xff]
        %931 = vmatprep.subr.mxu0 0.0
        %932 = vmatpush1.msra.mxu0 %v914
        %933 = vmatprep.subr.mxu0 0.0
        %934 = vmatpush1.msra.mxu0 %v915
        %935 = vmatprep.subr.mxu0 0.0
        %936 = vmatpush1.msra.mxu0 %v916
        %937 = vmatprep.subr.mxu0 0.0
        %938 = vmatpush1.msra.mxu0 %v917
        %939 = vmatprep.subr.mxu0 0.0
        %940 = vmatpush1.msra.mxu0 %v918
        %941 = vmatprep.subr.mxu0 0.0
        %942 = vmatpush1.msra.mxu0 %v919
        %943 = vmatprep.subr.mxu0 0.0
        %944 = vmatpush1.msra.mxu0 %v920
        %945 = vmatprep.subr.mxu0 0.0
        %946 = vmatpush1.msra.mxu0 %v921
        %947 = vmatprep.subr.mxu0 0.0
        %948 = vmatpush1.msra.mxu0 %v922
        %949 = vmatprep.subr.mxu0 0.0
        %950 = vmatpush1.msra.mxu0 %v923
        %951 = vmatprep.subr.mxu0 0.0
        %952 = vmatpush1.msra.mxu0 %v924
        %953 = vmatprep.subr.mxu0 0.0
        %954 = vmatpush1.msra.mxu0 %v925
        %955 = vmatprep.subr.mxu0 0.0
        %956 = vmatpush1.msra.mxu0 %v926
        %957 = vmatprep.subr.mxu0 0.0
        %958 = vmatpush1.msra.mxu0 %v927
        %959 = vmatprep.subr.mxu0 0.0
        %960 = vmatpush1.msra.mxu0 %v928
        %961 = vmatprep.subr.mxu0 0.0
        %962 = vmatpush1.msra.mxu0 %v929
        %963 = vmatprep.subr.mxu0 0.0
        %964 = vmatpush1.msra.mxu0 0.0
        %965 = vmatprep.subr.mxu0 0.0
        %966 = vmatpush1.msra.mxu0 0.0
        %967 = vmatprep.subr.mxu0 0.0
        %968 = vmatpush1.msra.mxu0 0.0
        %969 = vmatprep.subr.mxu0 0.0
        %970 = vmatpush1.msra.mxu0 0.0
        %971 = vmatprep.subr.mxu0 0.0
        %972 = vmatpush1.msra.mxu0 0.0
        %973 = vmatprep.subr.mxu0 0.0
        %974 = vmatpush1.msra.mxu0 0.0
        %975 = vmatprep.subr.mxu0 0.0
        %976 = vmatpush1.msra.mxu0 0.0
        %977 = vmatprep.subr.mxu0 0.0
        %978 = vmatpush1.msra.mxu0 0.0
        %979 = vmatprep.subr.mxu0 0.0
        %980 = vmatpush1.msra.mxu0 0.0
        %981 = vmatprep.subr.mxu0 0.0
        %982 = vmatpush1.msra.mxu0 0.0
        %983 = vmatprep.subr.mxu0 0.0
        %984 = vmatpush1.msra.mxu0 0.0
        %985 = vmatprep.subr.mxu0 0.0
        %986 = vmatpush1.msra.mxu0 0.0
        %987 = vmatprep.subr.mxu0 0.0
        %988 = vmatpush1.msra.mxu0 0.0
        %989 = vmatprep.subr.mxu0 0.0
        %990 = vmatpush1.msra.mxu0 0.0
        %991 = vmatprep.subr.mxu0 0.0
        %992 = vmatpush1.msra.mxu0 0.0
        %993 = vmatprep.subr.mxu0 0.0
        %994 = vmatpush1.msra.mxu0 0.0
        %995 = vmatprep.mubr.f32.mxu0 0.0
        %996 = vmatmul.mubr.f32.gmra.mrb[0].mxu0 %v913
        %v997 = vpop.f32.mrb[0].mxu0
        %v998 = vadd.f32 %v930, %v997
        %v999 = vpop.f32.mrb[0].mxu0
        %1000 = vdwg.mxu0
        %v1001 = vlaneseq
        %v1002 = vshrl.u32 %v1001, 7
        %vm1003 = vcmp.le.s32.totalorder %v908, %v1002
        %v1004 = vsel %vm1003, 0.0, -1e+30
        %v1005 = vld [vmem:[%s3] sm:$0x1]
        %v1006 = vld [vmem:[%s4] sm:$0x1]
        %v1007 = vrot.slane %v998, 4
        %v1008 = vadd.f32 %v998, %v1007
        %v1009 = vrot.slane %v1008, 2
        %v1010 = vadd.f32 %v1008, %v1009
        %v1011 = vrot.slane %v1010, 1
        %v1012 = vadd.f32 %v1010, %v1011
        %v1013 = vrcp.pop 8.0
        %v1014 = vmul.f32 %v1012, %v1013
        %v1015 = vsub.f32 %v998, %v1014
        %v1016 = vmul.f32 %v1015, %v1015
        %v1017 = vrot.slane %v1016, 4
        %v1018 = vadd.f32 %v1016, %v1017
        %v1019 = vrot.slane %v1018, 2
        %v1020 = vadd.f32 %v1018, %v1019
        %v1021 = vrot.slane %v1020, 1
        %v1022 = vadd.f32 %v1020, %v1021
        %v1023 = vrcp.pop 7.0
        %v1024 = vmul.f32 %v1022, %v1023
        %v1025 = vadd.f32 %v1024, 1e-05
        %v1026 = vrsqrt.pop %v1025
        %v1027 = vmul.f32 %v1015, %v1026
        %v1029 = vlaneseq
        %v1030 = vshrl.u32 %v1029, 7
        %v1031 = vsub.s32 0, %v1030
        %v1032 = vrot.slane %v1005, %v1031
        %v1034 = vmul.f32 %v1032, %v1027
        %v1036 = vlaneseq
        %v1037 = vshrl.u32 %v1036, 7
        %v1038 = vsub.s32 0, %v1037
        %v1039 = vrot.slane %v1006, %v1038
        %v1041 = vadd.f32 %v1034, %v1039
        %v1042 = vld [vmem:[#allocation5] sm:$0xff]
        %v1043 = vld [vmem:[#allocation5 + $0x8] sm:$0xff]
        %v1044 = vld [vmem:[#allocation5 + $0x10] sm:$0xff]
        %v1045 = vld [vmem:[#allocation5 + $0x18] sm:$0xff]
        %v1046 = vld [vmem:[#allocation5 + $0x20] sm:$0xff]
        %v1047 = vld [vmem:[#allocation5 + $0x28] sm:$0xff]
        %v1048 = vld [vmem:[#allocation5 + $0x30] sm:$0xff]
        %v1049 = vld [vmem:[#allocation5 + $0x38] sm:$0xff]
        %v1050 = vld [vmem:[#allocation5 + $0x40] sm:$0xff]
        %v1051 = vld [vmem:[#allocation5 + $0x48] sm:$0xff]
        %v1052 = vld [vmem:[#allocation5 + $0x50] sm:$0xff]
        %v1053 = vld [vmem:[#allocation5 + $0x58] sm:$0xff]
        %v1054 = vld [vmem:[#allocation5 + $0x60] sm:$0xff]
        %v1055 = vld [vmem:[#allocation5 + $0x68] sm:$0xff]
        %v1056 = vld [vmem:[#allocation5 + $0x70] sm:$0xff]
        %v1057 = vld [vmem:[#allocation5 + $0x78] sm:$0xff]
        %v1058 = vld [vmem:[%s6] sm:$0x1]
        %v1060 = vlaneseq
        %v1061 = vshrl.u32 %v1060, 7
        %v1062 = vsub.s32 0, %v1061
        %v1063 = vrot.slane %v1058, %v1062
        %1065 = vmatprep.subr.mxu0 0.0
        %1066 = vmatpush1.msra.mxu0 %v1042
        %1067 = vmatprep.subr.mxu0 0.0
        %1068 = vmatpush1.msra.mxu0 %v1043
        %1069 = vmatprep.subr.mxu0 0.0
        %1070 = vmatpush1.msra.mxu0 %v1044
        %1071 = vmatprep.subr.mxu0 0.0
        %1072 = vmatpush1.msra.mxu0 %v1045
        %1073 = vmatprep.subr.mxu0 0.0
        %1074 = vmatpush1.msra.mxu0 %v1046
        %1075 = vmatprep.subr.mxu0 0.0
        %1076 = vmatpush1.msra.mxu0 %v1047
        %1077 = vmatprep.subr.mxu0 0.0
        %1078 = vmatpush1.msra.mxu0 %v1048
        %1079 = vmatprep.subr.mxu0 0.0
        %1080 = vmatpush1.msra.mxu0 %v1049
        %1081 = vmatprep.subr.mxu0 0.0
        %1082 = vmatpush1.msra.mxu0 %v1050
        %1083 = vmatprep.subr.mxu0 0.0
        %1084 = vmatpush1.msra.mxu0 %v1051
        %1085 = vmatprep.subr.mxu0 0.0
        %1086 = vmatpush1.msra.mxu0 %v1052
        %1087 = vmatprep.subr.mxu0 0.0
        %1088 = vmatpush1.msra.mxu0 %v1053
        %1089 = vmatprep.subr.mxu0 0.0
        %1090 = vmatpush1.msra.mxu0 %v1054
        %1091 = vmatprep.subr.mxu0 0.0
        %1092 = vmatpush1.msra.mxu0 %v1055
        %1093 = vmatprep.subr.mxu0 0.0
        %1094 = vmatpush1.msra.mxu0 %v1056
        %1095 = vmatprep.subr.mxu0 0.0
        %1096 = vmatpush1.msra.mxu0 %v1057
        %1097 = vmatprep.subr.mxu0 0.0
        %1098 = vmatpush1.msra.mxu0 0.0
        %1099 = vmatprep.subr.mxu0 0.0
        %1100 = vmatpush1.msra.mxu0 0.0
        %1101 = vmatprep.subr.mxu0 0.0
        %1102 = vmatpush1.msra.mxu0 0.0
        %1103 = vmatprep.subr.mxu0 0.0
        %1104 = vmatpush1.msra.mxu0 0.0
        %1105 = vmatprep.subr.mxu0 0.0
        %1106 = vmatpush1.msra.mxu0 0.0
        %1107 = vmatprep.subr.mxu0 0.0
        %1108 = vmatpush1.msra.mxu0 0.0
        %1109 = vmatprep.subr.mxu0 0.0
        %1110 = vmatpush1.msra.mxu0 0.0
        %1111 = vmatprep.subr.mxu0 0.0
        %1112 = vmatpush1.msra.mxu0 0.0
        %1113 = vmatprep.subr.mxu0 0.0
        %1114 = vmatpush1.msra.mxu0 0.0
        %1115 = vmatprep.subr.mxu0 0.0
        %1116 = vmatpush1.msra.mxu0 0.0
        %1117 = vmatprep.subr.mxu0 0.0
        %1118 = vmatpush1.msra.mxu0 0.0
        %1119 = vmatprep.subr.mxu0 0.0
        %1120 = vmatpush1.msra.mxu0 0.0
        %1121 = vmatprep.subr.mxu0 0.0
        %1122 = vmatpush1.msra.mxu0 0.0
        %1123 = vmatprep.subr.mxu0 0.0
        %1124 = vmatpush1.msra.mxu0 0.0
        %1125 = vmatprep.subr.mxu0 0.0
        %1126 = vmatpush1.msra.mxu0 0.0
        %1127 = vmatprep.subr.mxu0 0.0
        %1128 = vmatpush1.msra.mxu0 0.0
        %1129 = vmatprep.mubr.f32.mxu0 0.0
        %1130 = vmatmul.mubr.f32.gmra.mrb[0].mxu0 %v1041
        %v1131 = vpop.f32.mrb[0].mxu0
        %v1132 = vadd.f32 %v1063, %v1131
        %v1133 = vpop.f32.mrb[0].mxu0
        %1134 = vdwg.mxu0
        %v1135 = vld [vmem:[#allocation7] sm:$0xff]
        %v1136 = vld [vmem:[#allocation7 + $0x8] sm:$0xff]
        %v1137 = vld [vmem:[#allocation7 + $0x10] sm:$0xff]
        %v1138 = vld [vmem:[#allocation7 + $0x18] sm:$0xff]
        %v1139 = vld [vmem:[#allocation7 + $0x20] sm:$0xff]
        %v1140 = vld [vmem:[#allocation7 + $0x28] sm:$0xff]
        %v1141 = vld [vmem:[#allocation7 + $0x30] sm:$0xff]
        %v1142 = vld [vmem:[#allocation7 + $0x38] sm:$0xff]
        %v1143 = vld [vmem:[#allocation7 + $0x40] sm:$0xff]
        %v1144 = vld [vmem:[#allocation7 + $0x48] sm:$0xff]
        %v1145 = vld [vmem:[#allocation7 + $0x50] sm:$0xff]
        %v1146 = vld [vmem:[#allocation7 + $0x58] sm:$0xff]
        %v1147 = vld [vmem:[#allocation7 + $0x60] sm:$0xff]
        %v1148 = vld [vmem:[#allocation7 + $0x68] sm:$0xff]
        %v1149 = vld [vmem:[#allocation7 + $0x70] sm:$0xff]
        %v1150 = vld [vmem:[#allocation7 + $0x78] sm:$0xff]
        %v1151 = vld [vmem:[%s8] sm:$0x1]
        %v1153 = vlaneseq
        %v1154 = vshrl.u32 %v1153, 7
        %v1155 = vsub.s32 0, %v1154
        %v1156 = vrot.slane %v1151, %v1155
        %1158 = vmatprep.subr.mxu0 0.0
        %1159 = vmatpush1.msra.mxu0 %v1135
        %1160 = vmatprep.subr.mxu0 0.0
        %1161 = vmatpush1.msra.mxu0 %v1136
        %1162 = vmatprep.subr.mxu0 0.0
        %1163 = vmatpush1.msra.mxu0 %v1137
        %1164 = vmatprep.subr.mxu0 0.0
        %1165 = vmatpush1.msra.mxu0 %v1138
        %1166 = vmatprep.subr.mxu0 0.0
        %1167 = vmatpush1.msra.mxu0 %v1139
        %1168 = vmatprep.subr.mxu0 0.0
        %1169 = vmatpush1.msra.mxu0 %v1140
        %1170 = vmatprep.subr.mxu0 0.0
        %1171 = vmatpush1.msra.mxu0 %v1141
        %1172 = vmatprep.subr.mxu0 0.0
        %1173 = vmatpush1.msra.mxu0 %v1142
        %1174 = vmatprep.subr.mxu0 0.0
        %1175 = vmatpush1.msra.mxu0 %v1143
        %1176 = vmatprep.subr.mxu0 0.0
        %1177 = vmatpush1.msra.mxu0 %v1144
        %1178 = vmatprep.subr.mxu0 0.0
        %1179 = vmatpush1.msra.mxu0 %v1145
        %1180 = vmatprep.subr.mxu0 0.0
        %1181 = vmatpush1.msra.mxu0 %v1146
        %1182 = vmatprep.subr.mxu0 0.0
        %1183 = vmatpush1.msra.mxu0 %v1147
        %1184 = vmatprep.subr.mxu0 0.0
        %1185 = vmatpush1.msra.mxu0 %v1148
        %1186 = vmatprep.subr.mxu0 0.0
        %1187 = vmatpush1.msra.mxu0 %v1149
        %1188 = vmatprep.subr.mxu0 0.0
        %1189 = vmatpush1.msra.mxu0 %v1150
        %1190 = vmatprep.subr.mxu0 0.0
        %1191 = vmatpush1.msra.mxu0 0.0
        %1192 = vmatprep.subr.mxu0 0.0
        %1193 = vmatpush1.msra.mxu0 0.0
        %1194 = vmatprep.subr.mxu0 0.0
        %1195 = vmatpush1.msra.mxu0 0.0
        %1196 = vmatprep.subr.mxu0 0.0
        %1197 = vmatpush1.msra.mxu0 0.0
        %1198 = vmatprep.subr.mxu0 0.0
        %1199 = vmatpush1.msra.mxu0 0.0
        %1200 = vmatprep.subr.mxu0 0.0
        %1201 = vmatpush1.msra.mxu0 0.0
        %1202 = vmatprep.subr.mxu0 0.0
        %1203 = vmatpush1.msra.mxu0 0.0
        %1204 = vmatprep.subr.mxu0 0.0
        %1205 = vmatpush1.msra.mxu0 0.0
        %1206 = vmatprep.subr.mxu0 0.0
        %1207 = vmatpush1.msra.mxu0 0.0
        %1208 = vmatprep.subr.mxu0 0.0
        %1209 = vmatpush1.msra.mxu0 0.0
        %1210 = vmatprep.subr.mxu0 0.0
        %1211 = vmatpush1.msra.mxu0 0.0
        %1212 = vmatprep.subr.mxu0 0.0
        %1213 = vmatpush1.msra.mxu0 0.0
        %1214 = vmatprep.subr.mxu0 0.0
        %1215 = vmatpush1.msra.mxu0 0.0
        %1216 = vmatprep.subr.mxu0 0.0
        %1217 = vmatpush1.msra.mxu0 0.0
        %1218 = vmatprep.subr.mxu0 0.0
        %1219 = vmatpush1.msra.mxu0 0.0
        %1220 = vmatprep.subr.mxu0 0.0
        %1221 = vmatpush1.msra.mxu0 0.0
        %1222 = vmatprep.mubr.f32.mxu0 0.0
        %1223 = vmatmul.mubr.f32.gmra.mrb[0].mxu0 %v1041
        %v1224 = vpop.f32.mrb[0].mxu0
        %v1225 = vadd.f32 %v1156, %v1224
        %v1226 = vpop.f32.mrb[0].mxu0
        %1227 = vdwg.mxu0
        %v1228 = vld [vmem:[#allocation8] sm:$0xff]
        %v1229 = vld [vmem:[#allocation8 + $0x8] sm:$0xff]
        %v1230 = vld [vmem:[#allocation8 + $0x10] sm:$0xff]
        %v1231 = vld [vmem:[#allocation8 + $0x18] sm:$0xff]
        %v1232 = vld [vmem:[#allocation8 + $0x20] sm:$0xff]
        %v1233 = vld [vmem:[#allocation8 + $0x28] sm:$0xff]
        %v1234 = vld [vmem:[#allocation8 + $0x30] sm:$0xff]
        %v1235 = vld [vmem:[#allocation8 + $0x38] sm:$0xff]
        %v1236 = vld [vmem:[#allocation8 + $0x40] sm:$0xff]
        %v1237 = vld [vmem:[#allocation8 + $0x48] sm:$0xff]
        %v1238 = vld [vmem:[#allocation8 + $0x50] sm:$0xff]
        %v1239 = vld [vmem:[#allocation8 + $0x58] sm:$0xff]
        %v1240 = vld [vmem:[#allocation8 + $0x60] sm:$0xff]
        %v1241 = vld [vmem:[#allocation8 + $0x68] sm:$0xff]
        %v1242 = vld [vmem:[#allocation8 + $0x70] sm:$0xff]
        %v1243 = vld [vmem:[#allocation8 + $0x78] sm:$0xff]
        %v1244 = vld [vmem:[%s10] sm:$0x1]
        %v1246 = vlaneseq
        %v1247 = vshrl.u32 %v1246, 7
        %v1248 = vsub.s32 0, %v1247
        %v1249 = vrot.slane %v1244, %v1248
        %1251 = vmatprep.subr.mxu0 0.0
        %1252 = vmatpush1.msra.mxu0 %v1228
        %1253 = vmatprep.subr.mxu0 0.0
        %1254 = vmatpush1.msra.mxu0 %v1229
        %1255 = vmatprep.subr.mxu0 0.0
        %1256 = vmatpush1.msra.mxu0 %v1230
        %1257 = vmatprep.subr.mxu0 0.0
        %1258 = vmatpush1.msra.mxu0 %v1231
        %1259 = vmatprep.subr.mxu0 0.0
        %1260 = vmatpush1.msra.mxu0 %v1232
        %1261 = vmatprep.subr.mxu0 0.0
        %1262 = vmatpush1.msra.mxu0 %v1233
        %1263 = vmatprep.subr.mxu0 0.0
        %1264 = vmatpush1.msra.mxu0 %v1234
        %1265 = vmatprep.subr.mxu0 0.0
        %1266 = vmatpush1.msra.mxu0 %v1235
        %1267 = vmatprep.subr.mxu0 0.0
        %1268 = vmatpush1.msra.mxu0 %v1236
        %1269 = vmatprep.subr.mxu0 0.0
        %1270 = vmatpush1.msra.mxu0 %v1237
        %1271 = vmatprep.subr.mxu0 0.0
        %1272 = vmatpush1.msra.mxu0 %v1238
        %1273 = vmatprep.subr.mxu0 0.0
        %1274 = vmatpush1.msra.mxu0 %v1239
        %1275 = vmatprep.subr.mxu0 0.0
        %1276 = vmatpush1.msra.mxu0 %v1240
        %1277 = vmatprep.subr.mxu0 0.0
        %1278 = vmatpush1.msra.mxu0 %v1241
        %1279 = vmatprep.subr.mxu0 0.0
        %1280 = vmatpush1.msra.mxu0 %v1242
        %1281 = vmatprep.subr.mxu0 0.0
        %1282 = vmatpush1.msra.mxu0 %v1243
        %1283 = vmatprep.subr.mxu0 0.0
        %1284 = vmatpush1.msra.mxu0 0.0
        %1285 = vmatprep.subr.mxu0 0.0
        %1286 = vmatpush1.msra.mxu0 0.0
        %1287 = vmatprep.subr.mxu0 0.0
        %1288 = vmatpush1.msra.mxu0 0.0
        %1289 = vmatprep.subr.mxu0 0.0
        %1290 = vmatpush1.msra.mxu0 0.0
        %1291 = vmatprep.subr.mxu0 0.0
        %1292 = vmatpush1.msra.mxu0 0.0
        %1293 = vmatprep.subr.mxu0 0.0
        %1294 = vmatpush1.msra.mxu0 0.0
        %1295 = vmatprep.subr.mxu0 0.0
        %1296 = vmatpush1.msra.mxu0 0.0
        %1297 = vmatprep.subr.mxu0 0.0
        %1298 = vmatpush1.msra.mxu0 0.0
        %1299 = vmatprep.subr.mxu0 0.0
        %1300 = vmatpush1.msra.mxu0 0.0
        %1301 = vmatprep.subr.mxu0 0.0
        %1302 = vmatpush1.msra.mxu0 0.0
        %1303 = vmatprep.subr.mxu0 0.0
        %1304 = vmatpush1.msra.mxu0 0.0
        %1305 = vmatprep.subr.mxu0 0.0
        %1306 = vmatpush1.msra.mxu0 0.0
        %1307 = vmatprep.subr.mxu0 0.0
        %1308 = vmatpush1.msra.mxu0 0.0
        %1309 = vmatprep.subr.mxu0 0.0
        %1310 = vmatpush1.msra.mxu0 0.0
        %1311 = vmatprep.subr.mxu0 0.0
        %1312 = vmatpush1.msra.mxu0 0.0
        %1313 = vmatprep.subr.mxu0 0.0
        %1314 = vmatpush1.msra.mxu0 0.0
        %1315 = vmatprep.mubr.f32.mxu0 0.0
        %1316 = vmatmul.mubr.f32.gmra.mrb[0].mxu0 %v1041
        %v1317 = vpop.f32.mrb[0].mxu0
        %v1318 = vadd.f32 %v1249, %v1317
        %v1319 = vpop.f32.mrb[0].mxu0
        %1320 = vdwg.mxu0
        %vm1321 = vcmask 261120
        %v1323 = vsel %vm1321, %v1132, 0
        %v1326 = vsel %vm1321, %v1225, 0
        %1328 = vmatprep.subr.mxu0 0.0
        %1329 = vmatpush1.xpose.msra.mxu0 %v1326
        %1330 = vmatprep.subr.mxu0 0.0
        %1331 = vmatpush1.xpose.msra.mxu0 0.0
        %1332 = vmatprep.subr.mxu0 0.0
        %1333 = vmatpush1.xpose.msra.mxu0 0.0
        %1334 = vmatprep.subr.mxu0 0.0
        %1335 = vmatpush1.xpose.msra.mxu0 0.0
        %1336 = vmatprep.subr.mxu0 0.0
        %1337 = vmatpush1.xpose.msra.mxu0 0.0
        %1338 = vmatprep.subr.mxu0 0.0
        %1339 = vmatpush1.xpose.msra.mxu0 0.0
        %1340 = vmatprep.subr.mxu0 0.0
        %1341 = vmatpush1.xpose.msra.mxu0 0.0
        %1342 = vmatprep.subr.mxu0 0.0
        %1343 = vmatpush1.xpose.msra.mxu0 0.0
        %1344 = vmatprep.subr.mxu0 0.0
        %1345 = vmatpush1.xpose.msra.mxu0 0.0
        %1346 = vmatprep.subr.mxu0 0.0
        %1347 = vmatpush1.xpose.msra.mxu0 0.0
        %1348 = vmatprep.subr.mxu0 0.0
        %1349 = vmatpush1.xpose.msra.mxu0 0.0
        %1350 = vmatprep.subr.mxu0 0.0
        %1351 = vmatpush1.xpose.msra.mxu0 0.0
        %1352 = vmatprep.subr.mxu0 0.0
        %1353 = vmatpush1.xpose.msra.mxu0 0.0
        %1354 = vmatprep.subr.mxu0 0.0
        %1355 = vmatpush1.xpose.msra.mxu0 0.0
        %1356 = vmatprep.subr.mxu0 0.0
        %1357 = vmatpush1.xpose.msra.mxu0 0.0
        %1358 = vmatprep.subr.mxu0 0.0
        %1359 = vmatpush1.xpose.msra.mxu0 0.0
        %1360 = vmatprep.subr.mxu0 0.0
        %1361 = vmatpush1.xpose.msra.mxu0 0.0
        %1362 = vmatprep.subr.mxu0 0.0
        %1363 = vmatpush1.xpose.msra.mxu0 0.0
        %1364 = vmatprep.subr.mxu0 0.0
        %1365 = vmatpush1.xpose.msra.mxu0 0.0
        %1366 = vmatprep.subr.mxu0 0.0
        %1367 = vmatpush1.xpose.msra.mxu0 0.0
        %1368 = vmatprep.subr.mxu0 0.0
        %1369 = vmatpush1.xpose.msra.mxu0 0.0
        %1370 = vmatprep.subr.mxu0 0.0
        %1371 = vmatpush1.xpose.msra.mxu0 0.0
        %1372 = vmatprep.subr.mxu0 0.0
        %1373 = vmatpush1.xpose.msra.mxu0 0.0
        %1374 = vmatprep.subr.mxu0 0.0
        %1375 = vmatpush1.xpose.msra.mxu0 0.0
        %1376 = vmatprep.subr.mxu0 0.0
        %1377 = vmatpush1.xpose.msra.mxu0 0.0
        %1378 = vmatprep.subr.mxu0 0.0
        %1379 = vmatpush1.xpose.msra.mxu0 0.0
        %1380 = vmatprep.subr.mxu0 0.0
        %1381 = vmatpush1.xpose.msra.mxu0 0.0
        %1382 = vmatprep.subr.mxu0 0.0
        %1383 = vmatpush1.xpose.msra.mxu0 0.0
        %1384 = vmatprep.subr.mxu0 0.0
        %1385 = vmatpush1.xpose.msra.mxu0 0.0
        %1386 = vmatprep.subr.mxu0 0.0
        %1387 = vmatpush1.xpose.msra.mxu0 0.0
        %1388 = vmatprep.subr.mxu0 0.0
        %1389 = vmatpush1.xpose.msra.mxu0 0.0
        %1390 = vmatprep.subr.mxu0 0.0
        %1391 = vmatpush1.xpose.msra.mxu0 0.0
        %1392 = vmatprep.mubr.f32.mxu0 0.0
        %1393 = vmatmul.mubr.f32.gmra.mrb[0].mxu0 %v1323
        %v1394 = vpop.f32.mrb[0].mxu0
        %v1395 = vadd.f32 0.0, %v1394
        %v1396 = vpop.f32.mrb[0].mxu0
        %1397 = vdwg.mxu0
        %v1398 = vmul.f32 %v1395, 0.088388346
        %v1399 = vadd.f32 %v1398, %v1004
        %vm1400 = vcmask 64512
        %v1401 = vsel %vm1400, %v1399, -inf
        %1402 = vmax.xlane.f32.xlu0 %v1401
        %v1403 = vpop.xlane.xlu0 %1402
        %v1404 = vsub.f32 %v1399, %v1403
        %v1405 = vmul.f32 %v1404, 1.442695
        %v1406 = vpow.pop %v1405
        %v1407 = vsel %vm1400, %v1406, 0.0
        %1408 = vadd.xlane.f32.xlu0 %v1407
        %v1409 = vpop.xlane.xlu0 %1408
        %v1410 = vrcp.pop %v1409
        %v1411 = vmul.f32 %v1406, %v1410
        %v1413 = vsel %vm1400, %v1411, 0
        %1415 = vmatprep.subr.mxu0 0.0
        %1416 = vmatpush1.msra.mxu0 %v1318
        %1417 = vmatprep.subr.mxu0 0.0
        %1418 = vmatpush1.msra.mxu0 0.0
        %1419 = vmatprep.subr.mxu0 0.0
        %1420 = vmatpush1.msra.mxu0 0.0
        %1421 = vmatprep.subr.mxu0 0.0
        %1422 = vmatpush1.msra.mxu0 0.0
        %1423 = vmatprep.subr.mxu0 0.0
        %1424 = vmatpush1.msra.mxu0 0.0
        %1425 = vmatprep.subr.mxu0 0.0
        %1426 = vmatpush1.msra.mxu0 0.0
        %1427 = vmatprep.subr.mxu0 0.0
        %1428 = vmatpush1.msra.mxu0 0.0
        %1429 = vmatprep.subr.mxu0 0.0
        %1430 = vmatpush1.msra.mxu0 0.0
        %1431 = vmatprep.subr.mxu0 0.0
        %1432 = vmatpush1.msra.mxu0 0.0
        %1433 = vmatprep.subr.mxu0 0.0
        %1434 = vmatpush1.msra.mxu0 0.0
        %1435 = vmatprep.subr.mxu0 0.0
        %1436 = vmatpush1.msra.mxu0 0.0
        %1437 = vmatprep.subr.mxu0 0.0
        %1438 = vmatpush1.msra.mxu0 0.0
        %1439 = vmatprep.subr.mxu0 0.0
        %1440 = vmatpush1.msra.mxu0 0.0
        %1441 = vmatprep.subr.mxu0 0.0
        %1442 = vmatpush1.msra.mxu0 0.0
        %1443 = vmatprep.subr.mxu0 0.0
        %1444 = vmatpush1.msra.mxu0 0.0
        %1445 = vmatprep.subr.mxu0 0.0
        %1446 = vmatpush1.msra.mxu0 0.0
        %1447 = vmatprep.subr.mxu0 0.0
        %1448 = vmatpush1.msra.mxu0 0.0
        %1449 = vmatprep.subr.mxu0 0.0
        %1450 = vmatpush1.msra.mxu0 0.0
        %1451 = vmatprep.subr.mxu0 0.0
        %1452 = vmatpush1.msra.mxu0 0.0
        %1453 = vmatprep.subr.mxu0 0.0
        %1454 = vmatpush1.msra.mxu0 0.0
        %1455 = vmatprep.subr.mxu0 0.0
        %1456 = vmatpush1.msra.mxu0 0.0
        %1457 = vmatprep.subr.mxu0 0.0
        %1458 = vmatpush1.msra.mxu0 0.0
        %1459 = vmatprep.subr.mxu0 0.0
        %1460 = vmatpush1.msra.mxu0 0.0
        %1461 = vmatprep.subr.mxu0 0.0
        %1462 = vmatpush1.msra.mxu0 0.0
        %1463 = vmatprep.subr.mxu0 0.0
        %1464 = vmatpush1.msra.mxu0 0.0
        %1465 = vmatprep.subr.mxu0 0.0
        %1466 = vmatpush1.msra.mxu0 0.0
        %1467 = vmatprep.subr.mxu0 0.0
        %1468 = vmatpush1.msra.mxu0 0.0
        %1469 = vmatprep.subr.mxu0 0.0
        %1470 = vmatpush1.msra.mxu0 0.0
        %1471 = vmatprep.subr.mxu0 0.0
        %1472 = vmatpush1.msra.mxu0 0.0
        %1473 = vmatprep.subr.mxu0 0.0
        %1474 = vmatpush1.msra.mxu0 0.0
        %1475 = vmatprep.subr.mxu0 0.0
        %1476 = vmatpush1.msra.mxu0 0.0
        %1477 = vmatprep.subr.mxu0 0.0
        %1478 = vmatpush1.msra.mxu0 0.0
        %1479 = vmatprep.mubr.f32.mxu0 0.0
        %1480 = vmatmul.mubr.f32.gmra.mrb[0].mxu0 %v1413
        %v1481 = vpop.f32.mrb[0].mxu0
        %v1482 = vadd.f32 0.0, %v1481
        %v1483 = vpop.f32.mrb[0].mxu0
        %1484 = vdwg.mxu0
        %1485 = vrot.lane.b32.xlu0 %v1132, 96
        %v1486 = vpop.permute.xlu0 %1485
        %1487 = vrot.lane.b32.xlu0 %v1225, 96
        %v1488 = vpop.permute.xlu0 %1487
        %v1489 = vsel %vm1321, %v1486, 0
        %v1491 = vsel %vm1321, %v1488, 0
        %1493 = vmatprep.subr.mxu0 0.0
        %1494 = vmatpush1.xpose.msra.mxu0 %v1491
        %1495 = vmatprep.subr.mxu0 0.0
        %1496 = vmatpush1.xpose.msra.mxu0 0.0
        %1497 = vmatprep.subr.mxu0 0.0
        %1498 = vmatpush1.xpose.msra.mxu0 0.0
        %1499 = vmatprep.subr.mxu0 0.0
        %1500 = vmatpush1.xpose.msra.mxu0 0.0
        %1501 = vmatprep.subr.mxu0 0.0
        %1502 = vmatpush1.xpose.msra.mxu0 0.0
        %1503 = vmatprep.subr.mxu0 0.0
        %1504 = vmatpush1.xpose.msra.mxu0 0.0
        %1505 = vmatprep.subr.mxu0 0.0
        %1506 = vmatpush1.xpose.msra.mxu0 0.0
        %1507 = vmatprep.subr.mxu0 0.0
        %1508 = vmatpush1.xpose.msra.mxu0 0.0
        %1509 = vmatprep.subr.mxu0 0.0
        %1510 = vmatpush1.xpose.msra.mxu0 0.0
        %1511 = vmatprep.subr.mxu0 0.0
        %1512 = vmatpush1.xpose.msra.mxu0 0.0
        %1513 = vmatprep.subr.mxu0 0.0
        %1514 = vmatpush1.xpose.msra.mxu0 0.0
        %1515 = vmatprep.subr.mxu0 0.0
        %1516 = vmatpush1.xpose.msra.mxu0 0.0
        %1517 = vmatprep.subr.mxu0 0.0
        %1518 = vmatpush1.xpose.msra.mxu0 0.0
        %1519 = vmatprep.subr.mxu0 0.0
        %1520 = vmatpush1.xpose.msra.mxu0 0.0
        %1521 = vmatprep.subr.mxu0 0.0
        %1522 = vmatpush1.xpose.msra.mxu0 0.0
        %1523 = vmatprep.subr.mxu0 0.0
        %1524 = vmatpush1.xpose.msra.mxu0 0.0
        %1525 = vmatprep.subr.mxu0 0.0
        %1526 = vmatpush1.xpose.msra.mxu0 0.0
        %1527 = vmatprep.subr.mxu0 0.0
        %1528 = vmatpush1.xpose.msra.mxu0 0.0
        %1529 = vmatprep.subr.mxu0 0.0
        %1530 = vmatpush1.xpose.msra.mxu0 0.0
        %1531 = vmatprep.subr.mxu0 0.0
        %1532 = vmatpush1.xpose.msra.mxu0 0.0
        %1533 = vmatprep.subr.mxu0 0.0
        %1534 = vmatpush1.xpose.msra.mxu0 0.0
        %1535 = vmatprep.subr.mxu0 0.0
        %1536 = vmatpush1.xpose.msra.mxu0 0.0
        %1537 = vmatprep.subr.mxu0 0.0
        %1538 = vmatpush1.xpose.msra.mxu0 0.0
        %1539 = vmatprep.subr.mxu0 0.0
        %1540 = vmatpush1.xpose.msra.mxu0 0.0
        %1541 = vmatprep.subr.mxu0 0.0
        %1542 = vmatpush1.xpose.msra.mxu0 0.0
        %1543 = vmatprep.subr.mxu0 0.0
        %1544 = vmatpush1.xpose.msra.mxu0 0.0
        %1545 = vmatprep.subr.mxu0 0.0
        %1546 = vmatpush1.xpose.msra.mxu0 0.0
        %1547 = vmatprep.subr.mxu0 0.0
        %1548 = vmatpush1.xpose.msra.mxu0 0.0
        %1549 = vmatprep.subr.mxu0 0.0
        %1550 = vmatpush1.xpose.msra.mxu0 0.0
        %1551 = vmatprep.subr.mxu0 0.0
        %1552 = vmatpush1.xpose.msra.mxu0 0.0
        %1553 = vmatprep.subr.mxu0 0.0
        %1554 = vmatpush1.xpose.msra.mxu0 0.0
        %1555 = vmatprep.subr.mxu0 0.0
        %1556 = vmatpush1.xpose.msra.mxu0 0.0
        %1557 = vmatprep.mubr.f32.mxu0 0.0
        %1558 = vmatmul.mubr.f32.gmra.mrb[0].mxu0 %v1489
        %v1559 = vpop.f32.mrb[0].mxu0
        %v1560 = vadd.f32 0.0, %v1559
        %v1561 = vpop.f32.mrb[0].mxu0
        %1562 = vdwg.mxu0
        %v1563 = vmul.f32 %v1560, 0.088388346
        %v1564 = vadd.f32 %v1563, %v1004
        %v1565 = vsel %vm1400, %v1564, -inf
        %1566 = vmax.xlane.f32.xlu0 %v1565
        %v1567 = vpop.xlane.xlu0 %1566
        %v1568 = vsub.f32 %v1564, %v1567
        %v1569 = vmul.f32 %v1568, 1.442695
        %v1570 = vpow.pop %v1569
        %v1571 = vsel %vm1400, %v1570, 0.0
        %1572 = vadd.xlane.f32.xlu0 %v1571
        %v1573 = vpop.xlane.xlu0 %1572
        %v1574 = vrcp.pop %v1573
        %v1575 = vmul.f32 %v1570, %v1574
        %1577 = vrot.lane.b32.xlu0 %v1318, 96
        %v1578 = vpop.permute.xlu0 %1577
        %v1581 = vsel %vm1400, %v1575, 0
        %1583 = vmatprep.subr.mxu0 0.0
        %1584 = vmatpush1.msra.mxu0 %v1578
        %1585 = vmatprep.subr.mxu0 0.0
        %1586 = vmatpush1.msra.mxu0 0.0
        %1587 = vmatprep.subr.mxu0 0.0
        %1588 = vmatpush1.msra.mxu0 0.0
        %1589 = vmatprep.subr.mxu0 0.0
        %1590 = vmatpush1.msra.mxu0 0.0
        %1591 = vmatprep.subr.mxu0 0.0
        %1592 = vmatpush1.msra.mxu0 0.0
        %1593 = vmatprep.subr.mxu0 0.0
        %1594 = vmatpush1.msra.mxu0 0.0
        %1595 = vmatprep.subr.mxu0 0.0
        %1596 = vmatpush1.msra.mxu0 0.0
        %1597 = vmatprep.subr.mxu0 0.0
        %1598 = vmatpush1.msra.mxu0 0.0
        %1599 = vmatprep.subr.mxu0 0.0
        %1600 = vmatpush1.msra.mxu0 0.0
        %1601 = vmatprep.subr.mxu0 0.0
        %1602 = vmatpush1.msra.mxu0 0.0
        %1603 = vmatprep.subr.mxu0 0.0
        %1604 = vmatpush1.msra.mxu0 0.0
        %1605 = vmatprep.subr.mxu0 0.0
        %1606 = vmatpush1.msra.mxu0 0.0
        %1607 = vmatprep.subr.mxu0 0.0
        %1608 = vmatpush1.msra.mxu0 0.0
        %1609 = vmatprep.subr.mxu0 0.0
        %1610 = vmatpush1.msra.mxu0 0.0
        %1611 = vmatprep.subr.mxu0 0.0
        %1612 = vmatpush1.msra.mxu0 0.0
        %1613 = vmatprep.subr.mxu0 0.0
        %1614 = vmatpush1.msra.mxu0 0.0
        %1615 = vmatprep.subr.mxu0 0.0
        %1616 = vmatpush1.msra.mxu0 0.0
        %1617 = vmatprep.subr.mxu0 0.0
        %1618 = vmatpush1.msra.mxu0 0.0
        %1619 = vmatprep.subr.mxu0 0.0
        %1620 = vmatpush1.msra.mxu0 0.0
        %1621 = vmatprep.subr.mxu0 0.0
        %1622 = vmatpush1.msra.mxu0 0.0
        %1623 = vmatprep.subr.mxu0 0.0
        %1624 = vmatpush1.msra.mxu0 0.0
        %1625 = vmatprep.subr.mxu0 0.0
        %1626 = vmatpush1.msra.mxu0 0.0
        %1627 = vmatprep.subr.mxu0 0.0
        %1628 = vmatpush1.msra.mxu0 0.0
        %1629 = vmatprep.subr.mxu0 0.0
        %1630 = vmatpush1.msra.mxu0 0.0
        %1631 = vmatprep.subr.mxu0 0.0
        %1632 = vmatpush1.msra.mxu0 0.0
        %1633 = vmatprep.subr.mxu0 0.0
        %1634 = vmatpush1.msra.mxu0 0.0
        %1635 = vmatprep.subr.mxu0 0.0
        %1636 = vmatpush1.msra.mxu0 0.0
        %1637 = vmatprep.subr.mxu0 0.0
        %1638 = vmatpush1.msra.mxu0 0.0
        %1639 = vmatprep.subr.mxu0 0.0
        %1640 = vmatpush1.msra.mxu0 0.0
        %1641 = vmatprep.subr.mxu0 0.0
        %1642 = vmatpush1.msra.mxu0 0.0
        %1643 = vmatprep.subr.mxu0 0.0
        %1644 = vmatpush1.msra.mxu0 0.0
        %1645 = vmatprep.subr.mxu0 0.0
        %1646 = vmatpush1.msra.mxu0 0.0
        %1647 = vmatprep.mubr.f32.mxu0 0.0
        %1648 = vmatmul.mubr.f32.gmra.mrb[0].mxu0 %v1581
        %v1649 = vpop.f32.mrb[0].mxu0
        %v1650 = vadd.f32 0.0, %v1649
        %v1651 = vpop.f32.mrb[0].mxu0
        %1652 = vdwg.mxu0
        %1653 = vrot.lane.b32.xlu0 %v1132, 64
        %v1654 = vpop.permute.xlu0 %1653
        %1655 = vrot.lane.b32.xlu0 %v1225, 64
        %v1656 = vpop.permute.xlu0 %1655
        %v1657 = vsel %vm1321, %v1654, 0
        %v1659 = vsel %vm1321, %v1656, 0
        %1661 = vmatprep.subr.mxu0 0.0
        %1662 = vmatpush1.xpose.msra.mxu0 %v1659
        %1663 = vmatprep.subr.mxu0 0.0
        %1664 = vmatpush1.xpose.msra.mxu0 0.0
        %1665 = vmatprep.subr.mxu0 0.0
        %1666 = vmatpush1.xpose.msra.mxu0 0.0
        %1667 = vmatprep.subr.mxu0 0.0
        %1668 = vmatpush1.xpose.msra.mxu0 0.0
        %1669 = vmatprep.subr.mxu0 0.0
        %1670 = vmatpush1.xpose.msra.mxu0 0.0
        %1671 = vmatprep.subr.mxu0 0.0
        %1672 = vmatpush1.xpose.msra.mxu0 0.0
        %1673 = vmatprep.subr.mxu0 0.0
        %1674 = vmatpush1.xpose.msra.mxu0 0.0
        %1675 = vmatprep.subr.mxu0 0.0
        %1676 = vmatpush1.xpose.msra.mxu0 0.0
        %1677 = vmatprep.subr.mxu0 0.0
        %1678 = vmatpush1.xpose.msra.mxu0 0.0
        %1679 = vmatprep.subr.mxu0 0.0
        %1680 = vmatpush1.xpose.msra.mxu0 0.0
        %1681 = vmatprep.subr.mxu0 0.0
        %1682 = vmatpush1.xpose.msra.mxu0 0.0
        %1683 = vmatprep.subr.mxu0 0.0
        %1684 = vmatpush1.xpose.msra.mxu0 0.0
        %1685 = vmatprep.subr.mxu0 0.0
        %1686 = vmatpush1.xpose.msra.mxu0 0.0
        %1687 = vmatprep.subr.mxu0 0.0
        %1688 = vmatpush1.xpose.msra.mxu0 0.0
        %1689 = vmatprep.subr.mxu0 0.0
        %1690 = vmatpush1.xpose.msra.mxu0 0.0
        %1691 = vmatprep.subr.mxu0 0.0
        %1692 = vmatpush1.xpose.msra.mxu0 0.0
        %1693 = vmatprep.subr.mxu0 0.0
        %1694 = vmatpush1.xpose.msra.mxu0 0.0
        %1695 = vmatprep.subr.mxu0 0.0
        %1696 = vmatpush1.xpose.msra.mxu0 0.0
        %1697 = vmatprep.subr.mxu0 0.0
        %1698 = vmatpush1.xpose.msra.mxu0 0.0
        %1699 = vmatprep.subr.mxu0 0.0
        %1700 = vmatpush1.xpose.msra.mxu0 0.0
        %1701 = vmatprep.subr.mxu0 0.0
        %1702 = vmatpush1.xpose.msra.mxu0 0.0
        %1703 = vmatprep.subr.mxu0 0.0
        %1704 = vmatpush1.xpose.msra.mxu0 0.0
        %1705 = vmatprep.subr.mxu0 0.0
        %1706 = vmatpush1.xpose.msra.mxu0 0.0
        %1707 = vmatprep.subr.mxu0 0.0
        %1708 = vmatpush1.xpose.msra.mxu0 0.0
        %1709 = vmatprep.subr.mxu0 0.0
        %1710 = vmatpush1.xpose.msra.mxu0 0.0
        %1711 = vmatprep.subr.mxu0 0.0
        %1712 = vmatpush1.xpose.msra.mxu0 0.0
        %1713 = vmatprep.subr.mxu0 0.0
        %1714 = vmatpush1.xpose.msra.mxu0 0.0
        %1715 = vmatprep.subr.mxu0 0.0
        %1716 = vmatpush1.xpose.msra.mxu0 0.0
        %1717 = vmatprep.subr.mxu0 0.0
        %1718 = vmatpush1.xpose.msra.mxu0 0.0
        %1719 = vmatprep.subr.mxu0 0.0
        %1720 = vmatpush1.xpose.msra.mxu0 0.0
        %1721 = vmatprep.subr.mxu0 0.0
        %1722 = vmatpush1.xpose.msra.mxu0 0.0
        %1723 = vmatprep.subr.mxu0 0.0
        %1724 = vmatpush1.xpose.msra.mxu0 0.0
        %1725 = vmatprep.mubr.f32.mxu0 0.0
        %1726 = vmatmul.mubr.f32.gmra.mrb[0].mxu0 %v1657
        %v1727 = vpop.f32.mrb[0].mxu0
        %v1728 = vadd.f32 0.0, %v1727
        %v1729 = vpop.f32.mrb[0].mxu0
        %1730 = vdwg.mxu0
        %v1731 = vmul.f32 %v1728, 0.088388346
        %v1732 = vadd.f32 %v1731, %v1004
        %v1733 = vsel %vm1400, %v1732, -inf
        %1734 = vmax.xlane.f32.xlu0 %v1733
        %v1735 = vpop.xlane.xlu0 %1734
        %v1736 = vsub.f32 %v1732, %v1735
        %v1737 = vmul.f32 %v1736, 1.442695
        %v1738 = vpow.pop %v1737
        %v1739 = vsel %vm1400, %v1738, 0.0
        %1740 = vadd.xlane.f32.xlu0 %v1739
        %v1741 = vpop.xlane.xlu0 %1740
        %v1742 = vrcp.pop %v1741
        %v1743 = vmul.f32 %v1738, %v1742
        %1744 = vrot.lane.b32.xlu0 %v1318, 64
        %v1745 = vpop.permute.xlu0 %1744
        %v1748 = vsel %vm1400, %v1743, 0
        %1750 = vmatprep.subr.mxu0 0.0
        %1751 = vmatpush1.msra.mxu0 %v1745
        %1752 = vmatprep.subr.mxu0 0.0
        %1753 = vmatpush1.msra.mxu0 0.0
        %1754 = vmatprep.subr.mxu0 0.0
        %1755 = vmatpush1.msra.mxu0 0.0
        %1756 = vmatprep.subr.mxu0 0.0
        %1757 = vmatpush1.msra.mxu0 0.0
        %1758 = vmatprep.subr.mxu0 0.0
        %1759 = vmatpush1.msra.mxu0 0.0
        %1760 = vmatprep.subr.mxu0 0.0
        %1761 = vmatpush1.msra.mxu0 0.0
        %1762 = vmatprep.subr.mxu0 0.0
        %1763 = vmatpush1.msra.mxu0 0.0
        %1764 = vmatprep.subr.mxu0 0.0
        %1765 = vmatpush1.msra.mxu0 0.0
        %1766 = vmatprep.subr.mxu0 0.0
        %1767 = vmatpush1.msra.mxu0 0.0
        %1768 = vmatprep.subr.mxu0 0.0
        %1769 = vmatpush1.msra.mxu0 0.0
        %1770 = vmatprep.subr.mxu0 0.0
        %1771 = vmatpush1.msra.mxu0 0.0
        %1772 = vmatprep.subr.mxu0 0.0
        %1773 = vmatpush1.msra.mxu0 0.0
        %1774 = vmatprep.subr.mxu0 0.0
        %1775 = vmatpush1.msra.mxu0 0.0
        %1776 = vmatprep.subr.mxu0 0.0
        %1777 = vmatpush1.msra.mxu0 0.0
        %1778 = vmatprep.subr.mxu0 0.0
        %1779 = vmatpush1.msra.mxu0 0.0
        %1780 = vmatprep.subr.mxu0 0.0
        %1781 = vmatpush1.msra.mxu0 0.0
        %1782 = vmatprep.subr.mxu0 0.0
        %1783 = vmatpush1.msra.mxu0 0.0
        %1784 = vmatprep.subr.mxu0 0.0
        %1785 = vmatpush1.msra.mxu0 0.0
        %1786 = vmatprep.subr.mxu0 0.0
        %1787 = vmatpush1.msra.mxu0 0.0
        %1788 = vmatprep.subr.mxu0 0.0
        %1789 = vmatpush1.msra.mxu0 0.0
        %1790 = vmatprep.subr.mxu0 0.0
        %1791 = vmatpush1.msra.mxu0 0.0
        %1792 = vmatprep.subr.mxu0 0.0
        %1793 = vmatpush1.msra.mxu0 0.0
        %1794 = vmatprep.subr.mxu0 0.0
        %1795 = vmatpush1.msra.mxu0 0.0
        %1796 = vmatprep.subr.mxu0 0.0
        %1797 = vmatpush1.msra.mxu0 0.0
        %1798 = vmatprep.subr.mxu0 0.0
        %1799 = vmatpush1.msra.mxu0 0.0
        %1800 = vmatprep.subr.mxu0 0.0
        %1801 = vmatpush1.msra.mxu0 0.0
        %1802 = vmatprep.subr.mxu0 0.0
        %1803 = vmatpush1.msra.mxu0 0.0
        %1804 = vmatprep.subr.mxu0 0.0
        %1805 = vmatpush1.msra.mxu0 0.0
        %1806 = vmatprep.subr.mxu0 0.0
        %1807 = vmatpush1.msra.mxu0 0.0
        %1808 = vmatprep.subr.mxu0 0.0
        %1809 = vmatpush1.msra.mxu0 0.0
        %1810 = vmatprep.subr.mxu0 0.0
        %1811 = vmatpush1.msra.mxu0 0.0
        %1812 = vmatprep.subr.mxu0 0.0
        %1813 = vmatpush1.msra.mxu0 0.0
        %1814 = vmatprep.mubr.f32.mxu0 0.0
        %1815 = vmatmul.mubr.f32.gmra.mrb[0].mxu0 %v1748
        %v1816 = vpop.f32.mrb[0].mxu0
        %v1817 = vadd.f32 0.0, %v1816
        %v1818 = vpop.f32.mrb[0].mxu0
        %1819 = vdwg.mxu0
        %1820 = vrot.lane.b32.xlu0 %v1132, 32
        %v1821 = vpop.permute.xlu0 %1820
        %1822 = vrot.lane.b32.xlu0 %v1225, 32
        %v1823 = vpop.permute.xlu0 %1822
        %v1824 = vsel %vm1321, %v1821, 0
        %v1826 = vsel %vm1321, %v1823, 0
        %1828 = vmatprep.subr.mxu0 0.0
        %1829 = vmatpush1.xpose.msra.mxu0 %v1826
        %1830 = vmatprep.subr.mxu0 0.0
        %1831 = vmatpush1.xpose.msra.mxu0 0.0
        %1832 = vmatprep.subr.mxu0 0.0
        %1833 = vmatpush1.xpose.msra.mxu0 0.0
        %1834 = vmatprep.subr.mxu0 0.0
        %1835 = vmatpush1.xpose.msra.mxu0 0.0
        %1836 = vmatprep.subr.mxu0 0.0
        %1837 = vmatpush1.xpose.msra.mxu0 0.0
        %1838 = vmatprep.subr.mxu0 0.0
        %1839 = vmatpush1.xpose.msra.mxu0 0.0
        %1840 = vmatprep.subr.mxu0 0.0
        %1841 = vmatpush1.xpose.msra.mxu0 0.0
        %1842 = vmatprep.subr.mxu0 0.0
        %1843 = vmatpush1.xpose.msra.mxu0 0.0
        %1844 = vmatprep.subr.mxu0 0.0
        %1845 = vmatpush1.xpose.msra.mxu0 0.0
        %1846 = vmatprep.subr.mxu0 0.0
        %1847 = vmatpush1.xpose.msra.mxu0 0.0
        %1848 = vmatprep.subr.mxu0 0.0
        %1849 = vmatpush1.xpose.msra.mxu0 0.0
        %1850 = vmatprep.subr.mxu0 0.0
        %1851 = vmatpush1.xpose.msra.mxu0 0.0
        %1852 = vmatprep.subr.mxu0 0.0
        %1853 = vmatpush1.xpose.msra.mxu0 0.0
        %1854 = vmatprep.subr.mxu0 0.0
        %1855 = vmatpush1.xpose.msra.mxu0 0.0
        %1856 = vmatprep.subr.mxu0 0.0
        %1857 = vmatpush1.xpose.msra.mxu0 0.0
        %1858 = vmatprep.subr.mxu0 0.0
        %1859 = vmatpush1.xpose.msra.mxu0 0.0
        %1860 = vmatprep.subr.mxu0 0.0
        %1861 = vmatpush1.xpose.msra.mxu0 0.0
        %1862 = vmatprep.subr.mxu0 0.0
        %1863 = vmatpush1.xpose.msra.mxu0 0.0
        %1864 = vmatprep.subr.mxu0 0.0
        %1865 = vmatpush1.xpose.msra.mxu0 0.0
        %1866 = vmatprep.subr.mxu0 0.0
        %1867 = vmatpush1.xpose.msra.mxu0 0.0
        %1868 = vmatprep.subr.mxu0 0.0
        %1869 = vmatpush1.xpose.msra.mxu0 0.0
        %1870 = vmatprep.subr.mxu0 0.0
        %1871 = vmatpush1.xpose.msra.mxu0 0.0
        %1872 = vmatprep.subr.mxu0 0.0
        %1873 = vmatpush1.xpose.msra.mxu0 0.0
        %1874 = vmatprep.subr.mxu0 0.0
        %1875 = vmatpush1.xpose.msra.mxu0 0.0
        %1876 = vmatprep.subr.mxu0 0.0
        %1877 = vmatpush1.xpose.msra.mxu0 0.0
        %1878 = vmatprep.subr.mxu0 0.0
        %1879 = vmatpush1.xpose.msra.mxu0 0.0
        %1880 = vmatprep.subr.mxu0 0.0
        %1881 = vmatpush1.xpose.msra.mxu0 0.0
        %1882 = vmatprep.subr.mxu0 0.0
        %1883 = vmatpush1.xpose.msra.mxu0 0.0
        %1884 = vmatprep.subr.mxu0 0.0
        %1885 = vmatpush1.xpose.msra.mxu0 0.0
        %1886 = vmatprep.subr.mxu0 0.0
        %1887 = vmatpush1.xpose.msra.mxu0 0.0
        %1888 = vmatprep.subr.mxu0 0.0
        %1889 = vmatpush1.xpose.msra.mxu0 0.0
        %1890 = vmatprep.subr.mxu0 0.0
        %1891 = vmatpush1.xpose.msra.mxu0 0.0
        %1892 = vmatprep.mubr.f32.mxu0 0.0
        %1893 = vmatmul.mubr.f32.gmra.mrb[0].mxu0 %v1824
        %v1894 = vpop.f32.mrb[0].mxu0
        %v1895 = vadd.f32 0.0, %v1894
        %v1896 = vpop.f32.mrb[0].mxu0
        %1897 = vdwg.mxu0
        %v1898 = vmul.f32 %v1895, 0.088388346
        %v1899 = vadd.f32 %v1898, %v1004
        %v1900 = vsel %vm1400, %v1899, -inf
        %1901 = vmax.xlane.f32.xlu0 %v1900
        %v1902 = vpop.xlane.xlu0 %1901
        %v1903 = vsub.f32 %v1899, %v1902
        %v1904 = vmul.f32 %v1903, 1.442695
        %v1905 = vpow.pop %v1904
        %v1906 = vsel %vm1400, %v1905, 0.0
        %1907 = vadd.xlane.f32.xlu0 %v1906
        %v1908 = vpop.xlane.xlu0 %1907
        %v1909 = vrcp.pop %v1908
        %v1910 = vmul.f32 %v1905, %v1909
        %1911 = vrot.lane.b32.xlu0 %v1318, 32
        %v1912 = vpop.permute.xlu0 %1911
        %v1915 = vsel %vm1400, %v1910, 0
        %1917 = vmatprep.subr.mxu0 0.0
        %1918 = vmatpush1.msra.mxu0 %v1912
        %1919 = vmatprep.subr.mxu0 0.0
        %1920 = vmatpush1.msra.mxu0 0.0
        %1921 = vmatprep.subr.mxu0 0.0
        %1922 = vmatpush1.msra.mxu0 0.0
        %1923 = vmatprep.subr.mxu0 0.0
        %1924 = vmatpush1.msra.mxu0 0.0
        %1925 = vmatprep.subr.mxu0 0.0
        %1926 = vmatpush1.msra.mxu0 0.0
        %1927 = vmatprep.subr.mxu0 0.0
        %1928 = vmatpush1.msra.mxu0 0.0
        %1929 = vmatprep.subr.mxu0 0.0
        %1930 = vmatpush1.msra.mxu0 0.0
        %1931 = vmatprep.subr.mxu0 0.0
        %1932 = vmatpush1.msra.mxu0 0.0
        %1933 = vmatprep.subr.mxu0 0.0
        %1934 = vmatpush1.msra.mxu0 0.0
        %1935 = vmatprep.subr.mxu0 0.0
        %1936 = vmatpush1.msra.mxu0 0.0
        %1937 = vmatprep.subr.mxu0 0.0
        %1938 = vmatpush1.msra.mxu0 0.0
        %1939 = vmatprep.subr.mxu0 0.0
        %1940 = vmatpush1.msra.mxu0 0.0
        %1941 = vmatprep.subr.mxu0 0.0
        %1942 = vmatpush1.msra.mxu0 0.0
        %1943 = vmatprep.subr.mxu0 0.0
        %1944 = vmatpush1.msra.mxu0 0.0
        %1945 = vmatprep.subr.mxu0 0.0
        %1946 = vmatpush1.msra.mxu0 0.0
        %1947 = vmatprep.subr.mxu0 0.0
        %1948 = vmatpush1.msra.mxu0 0.0
        %1949 = vmatprep.subr.mxu0 0.0
        %1950 = vmatpush1.msra.mxu0 0.0
        %1951 = vmatprep.subr.mxu0 0.0
        %1952 = vmatpush1.msra.mxu0 0.0
        %1953 = vmatprep.subr.mxu0 0.0
        %1954 = vmatpush1.msra.mxu0 0.0
        %1955 = vmatprep.subr.mxu0 0.0
        %1956 = vmatpush1.msra.mxu0 0.0
        %1957 = vmatprep.subr.mxu0 0.0
        %1958 = vmatpush1.msra.mxu0 0.0
        %1959 = vmatprep.subr.mxu0 0.0
        %1960 = vmatpush1.msra.mxu0 0.0
        %1961 = vmatprep.subr.mxu0 0.0
        %1962 = vmatpush1.msra.mxu0 0.0
        %1963 = vmatprep.subr.mxu0 0.0
        %1964 = vmatpush1.msra.mxu0 0.0
        %1965 = vmatprep.subr.mxu0 0.0
        %1966 = vmatpush1.msra.mxu0 0.0
        %1967 = vmatprep.subr.mxu0 0.0
        %1968 = vmatpush1.msra.mxu0 0.0
        %1969 = vmatprep.subr.mxu0 0.0
        %1970 = vmatpush1.msra.mxu0 0.0
        %1971 = vmatprep.subr.mxu0 0.0
        %1972 = vmatpush1.msra.mxu0 0.0
        %1973 = vmatprep.subr.mxu0 0.0
        %1974 = vmatpush1.msra.mxu0 0.0
        %1975 = vmatprep.subr.mxu0 0.0
        %1976 = vmatpush1.msra.mxu0 0.0
        %1977 = vmatprep.subr.mxu0 0.0
        %1978 = vmatpush1.msra.mxu0 0.0
        %1979 = vmatprep.subr.mxu0 0.0
        %1980 = vmatpush1.msra.mxu0 0.0
        %1981 = vmatprep.mubr.f32.mxu0 0.0
        %1982 = vmatmul.mubr.f32.gmra.mrb[0].mxu0 %v1915
        %v1983 = vpop.f32.mrb[0].mxu0
        %v1984 = vadd.f32 0.0, %v1983
        %v1985 = vpop.f32.mrb[0].mxu0
        %1986 = vdwg.mxu0
        %1988 = vrot.lane.b32.xlu0 %v1650, 32
        %v1989 = vpop.permute.xlu0 %1988
        %1992 = vrot.lane.b32.xlu0 %v1817, 64
        %v1993 = vpop.permute.xlu0 %1992
        %1996 = vrot.lane.b32.xlu0 %v1984, 96
        %v1997 = vpop.permute.xlu0 %1996
        %v1999 = vsel %vm1321, %v1482, %v1989
        %vm2000 = vcmask 523264
        %v2001 = vsel %vm2000, %v1999, %v1993
        %vm2002 = vcmask 785408
        %v2003 = vsel %vm2002, %v2001, %v1997
        %v2004 = vld [vmem:[#allocation10] sm:$0xff]
        %v2005 = vld [vmem:[#allocation10 + $0x8] sm:$0xff]
        %v2006 = vld [vmem:[#allocation10 + $0x10] sm:$0xff]
        %v2007 = vld [vmem:[#allocation10 + $0x18] sm:$0xff]
        %v2008 = vld [vmem:[#allocation10 + $0x20] sm:$0xff]
        %v2009 = vld [vmem:[#allocation10 + $0x28] sm:$0xff]
        %v2010 = vld [vmem:[#allocation10 + $0x30] sm:$0xff]
        %v2011 = vld [vmem:[#allocation10 + $0x38] sm:$0xff]
        %v2012 = vld [vmem:[#allocation10 + $0x40] sm:$0xff]
        %v2013 = vld [vmem:[#allocation10 + $0x48] sm:$0xff]
        %v2014 = vld [vmem:[#allocation10 + $0x50] sm:$0xff]
        %v2015 = vld [vmem:[#allocation10 + $0x58] sm:$0xff]
        %v2016 = vld [vmem:[#allocation10 + $0x60] sm:$0xff]
        %v2017 = vld [vmem:[#allocation10 + $0x68] sm:$0xff]
        %v2018 = vld [vmem:[#allocation10 + $0x70] sm:$0xff]
        %v2019 = vld [vmem:[#allocation10 + $0x78] sm:$0xff]
        %2020 = vmatprep.subr.mxu0 0.0
        %2021 = vmatpush1.msra.mxu0 %v2004
        %2022 = vmatprep.subr.mxu0 0.0
        %2023 = vmatpush1.msra.mxu0 %v2005
        %2024 = vmatprep.subr.mxu0 0.0
        %2025 = vmatpush1.msra.mxu0 %v2006
        %2026 = vmatprep.subr.mxu0 0.0
        %2027 = vmatpush1.msra.mxu0 %v2007
        %2028 = vmatprep.subr.mxu0 0.0
        %2029 = vmatpush1.msra.mxu0 %v2008
        %2030 = vmatprep.subr.mxu0 0.0
        %2031 = vmatpush1.msra.mxu0 %v2009
        %2032 = vmatprep.subr.mxu0 0.0
        %2033 = vmatpush1.msra.mxu0 %v2010
        %2034 = vmatprep.subr.mxu0 0.0
        %2035 = vmatpush1.msra.mxu0 %v2011
        %2036 = vmatprep.subr.mxu0 0.0
        %2037 = vmatpush1.msra.mxu0 %v2012
        %2038 = vmatprep.subr.mxu0 0.0
        %2039 = vmatpush1.msra.mxu0 %v2013
        %2040 = vmatprep.subr.mxu0 0.0
        %2041 = vmatpush1.msra.mxu0 %v2014
        %2042 = vmatprep.subr.mxu0 0.0
        %2043 = vmatpush1.msra.mxu0 %v2015
        %2044 = vmatprep.subr.mxu0 0.0
        %2045 = vmatpush1.msra.mxu0 %v2016
        %2046 = vmatprep.subr.mxu0 0.0
        %2047 = vmatpush1.msra.mxu0 %v2017
        %2048 = vmatprep.subr.mxu0 0.0
        %2049 = vmatpush1.msra.mxu0 %v2018
        %2050 = vmatprep.subr.mxu0 0.0
        %2051 = vmatpush1.msra.mxu0 %v2019
        %2052 = vmatprep.subr.mxu0 0.0
        %2053 = vmatpush1.msra.mxu0 0.0
        %2054 = vmatprep.subr.mxu0 0.0
        %2055 = vmatpush1.msra.mxu0 0.0
        %2056 = vmatprep.subr.mxu0 0.0
        %2057 = vmatpush1.msra.mxu0 0.0
        %2058 = vmatprep.subr.mxu0 0.0
        %2059 = vmatpush1.msra.mxu0 0.0
        %2060 = vmatprep.subr.mxu0 0.0
        %2061 = vmatpush1.msra.mxu0 0.0
        %2062 = vmatprep.subr.mxu0 0.0
        %2063 = vmatpush1.msra.mxu0 0.0
        %2064 = vmatprep.subr.mxu0 0.0
        %2065 = vmatpush1.msra.mxu0 0.0
        %2066 = vmatprep.subr.mxu0 0.0
        %2067 = vmatpush1.msra.mxu0 0.0
        %2068 = vmatprep.subr.mxu0 0.0
        %2069 = vmatpush1.msra.mxu0 0.0
        %2070 = vmatprep.subr.mxu0 0.0
        %2071 = vmatpush1.msra.mxu0 0.0
        %2072 = vmatprep.subr.mxu0 0.0
        %2073 = vmatpush1.msra.mxu0 0.0
        %2074 = vmatprep.subr.mxu0 0.0
        %2075 = vmatpush1.msra.mxu0 0.0
        %2076 = vmatprep.subr.mxu0 0.0
        %2077 = vmatpush1.msra.mxu0 0.0
        %2078 = vmatprep.subr.mxu0 0.0
        %2079 = vmatpush1.msra.mxu0 0.0
        %2080 = vmatprep.subr.mxu0 0.0
        %2081 = vmatpush1.msra.mxu0 0.0
        %2082 = vmatprep.subr.mxu0 0.0
        %2083 = vmatpush1.msra.mxu0 0.0
        %2084 = vmatprep.mubr.f32.mxu0 0.0
        %2085 = vmatmul.mubr.f32.gmra.mrb[0].mxu0 %v2003
        %v2086 = vpop.f32.mrb[0].mxu0
        %v2087 = vadd.f32 0.0, %v2086
        %v2088 = vpop.f32.mrb[0].mxu0
        %2089 = vdwg.mxu0
        %v2090 = vadd.f32 %v998, %v2087
        %v2091 = vld [vmem:[%s12] sm:$0x1]
        %v2093 = vlaneseq
        %v2094 = vshrl.u32 %v2093, 7
        %v2095 = vsub.s32 0, %v2094
        %v2096 = vrot.slane %v2091, %v2095
        %v2098 = vadd.f32 %v2090, %v2096
        %v2099 = vld [vmem:[%s13] sm:$0x1]
        %v2100 = vld [vmem:[%s14] sm:$0x1]
        %v2101 = vrot.slane %v2098, 4
        %v2102 = vadd.f32 %v2098, %v2101
        %v2103 = vrot.slane %v2102, 2
        %v2104 = vadd.f32 %v2102, %v2103
        %v2105 = vrot.slane %v2104, 1
        %v2106 = vadd.f32 %v2104, %v2105
        %v2107 = vmul.f32 %v2106, %v1013
        %v2108 = vsub.f32 %v2098, %v2107
        %v2109 = vmul.f32 %v2108, %v2108
        %v2110 = vrot.slane %v2109, 4
        %v2111 = vadd.f32 %v2109, %v2110
        %v2112 = vrot.slane %v2111, 2
        %v2113 = vadd.f32 %v2111, %v2112
        %v2114 = vrot.slane %v2113, 1
        %v2115 = vadd.f32 %v2113, %v2114
        %v2116 = vmul.f32 %v2115, %v1023
        %v2117 = vadd.f32 %v2116, 1e-05
        %v2118 = vrsqrt.pop %v2117
        %v2119 = vmul.f32 %v2108, %v2118
        %v2121 = vlaneseq
        %v2122 = vshrl.u32 %v2121, 7
        %v2123 = vsub.s32 0, %v2122
        %v2124 = vrot.slane %v2099, %v2123
        %v2126 = vmul.f32 %v2124, %v2119
        %v2128 = vlaneseq
        %v2129 = vshrl.u32 %v2128, 7
        %v2130 = vsub.s32 0, %v2129
        %v2131 = vrot.slane %v2100, %v2130
        %v2133 = vadd.f32 %v2126, %v2131
        %v2134 = vld [vmem:[#allocation11] sm:$0xff]
        %v2135 = vld [vmem:[#allocation11 + $0x8] sm:$0xff]
        %v2136 = vld [vmem:[#allocation11 + $0x10] sm:$0xff]
        %v2137 = vld [vmem:[#allocation11 + $0x18] sm:$0xff]
        %v2138 = vld [vmem:[#allocation11 + $0x20] sm:$0xff]
        %v2139 = vld [vmem:[#allocation11 + $0x28] sm:$0xff]
        %v2140 = vld [vmem:[#allocation11 + $0x30] sm:$0xff]
        %v2141 = vld [vmem:[#allocation11 + $0x38] sm:$0xff]
        %v2142 = vld [vmem:[#allocation11 + $0x40] sm:$0xff]
        %v2143 = vld [vmem:[#allocation11 + $0x48] sm:$0xff]
        %v2144 = vld [vmem:[#allocation11 + $0x50] sm:$0xff]
        %v2145 = vld [vmem:[#allocation11 + $0x58] sm:$0xff]
        %v2146 = vld [vmem:[#allocation11 + $0x60] sm:$0xff]
        %v2147 = vld [vmem:[#allocation11 + $0x68] sm:$0xff]
        %v2148 = vld [vmem:[#allocation11 + $0x70] sm:$0xff]
        %v2149 = vld [vmem:[#allocation11 + $0x78] sm:$0xff]
        %v2150 = vld [vmem:[#allocation11 + $0x80] sm:$0xff]
        %v2151 = vld [vmem:[#allocation11 + $0x88] sm:$0xff]
        %v2152 = vld [vmem:[#allocation11 + $0x90] sm:$0xff]
        %v2153 = vld [vmem:[#allocation11 + $0x98] sm:$0xff]
        %v2154 = vld [vmem:[#allocation11 + $0xa0] sm:$0xff]
        %v2155 = vld [vmem:[#allocation11 + $0xa8] sm:$0xff]
        %v2156 = vld [vmem:[#allocation11 + $0xb0] sm:$0xff]
        %v2157 = vld [vmem:[#allocation11 + $0xb8] sm:$0xff]
        %v2158 = vld [vmem:[#allocation11 + $0xc0] sm:$0xff]
        %v2159 = vld [vmem:[#allocation11 + $0xc8] sm:$0xff]
        %v2160 = vld [vmem:[#allocation11 + $0xd0] sm:$0xff]
        %v2161 = vld [vmem:[#allocation11 + $0xd8] sm:$0xff]
        %v2162 = vld [vmem:[#allocation11 + $0xe0] sm:$0xff]
        %v2163 = vld [vmem:[#allocation11 + $0xe8] sm:$0xff]
        %v2164 = vld [vmem:[#allocation11 + $0xf0] sm:$0xff]
        %v2165 = vld [vmem:[#allocation11 + $0xf8] sm:$0xff]
        %v2166 = vld [vmem:[#allocation11 + $0x100] sm:$0xff]
        %v2167 = vld [vmem:[#allocation11 + $0x108] sm:$0xff]
        %v2168 = vld [vmem:[#allocation11 + $0x110] sm:$0xff]
        %v2169 = vld [vmem:[#allocation11 + $0x118] sm:$0xff]
        %v2170 = vld [vmem:[#allocation11 + $0x120] sm:$0xff]
        %v2171 = vld [vmem:[#allocation11 + $0x128] sm:$0xff]
        %v2172 = vld [vmem:[#allocation11 + $0x130] sm:$0xff]
        %v2173 = vld [vmem:[#allocation11 + $0x138] sm:$0xff]
        %v2174 = vld [vmem:[#allocation11 + $0x140] sm:$0xff]
        %v2175 = vld [vmem:[#allocation11 + $0x148] sm:$0xff]
        %v2176 = vld [vmem:[#allocation11 + $0x150] sm:$0xff]
        %v2177 = vld [vmem:[#allocation11 + $0x158] sm:$0xff]
        %v2178 = vld [vmem:[#allocation11 + $0x160] sm:$0xff]
        %v2179 = vld [vmem:[#allocation11 + $0x168] sm:$0xff]
        %v2180 = vld [vmem:[#allocation11 + $0x170] sm:$0xff]
        %v2181 = vld [vmem:[#allocation11 + $0x178] sm:$0xff]
        %v2182 = vld [vmem:[#allocation11 + $0x180] sm:$0xff]
        %v2183 = vld [vmem:[#allocation11 + $0x188] sm:$0xff]
        %v2184 = vld [vmem:[#allocation11 + $0x190] sm:$0xff]
        %v2185 = vld [vmem:[#allocation11 + $0x198] sm:$0xff]
        %v2186 = vld [vmem:[#allocation11 + $0x1a0] sm:$0xff]
        %v2187 = vld [vmem:[#allocation11 + $0x1a8] sm:$0xff]
        %v2188 = vld [vmem:[#allocation11 + $0x1b0] sm:$0xff]
        %v2189 = vld [vmem:[#allocation11 + $0x1b8] sm:$0xff]
        %v2190 = vld [vmem:[#allocation11 + $0x1c0] sm:$0xff]
        %v2191 = vld [vmem:[#allocation11 + $0x1c8] sm:$0xff]
        %v2192 = vld [vmem:[#allocation11 + $0x1d0] sm:$0xff]
        %v2193 = vld [vmem:[#allocation11 + $0x1d8] sm:$0xff]
        %v2194 = vld [vmem:[#allocation11 + $0x1e0] sm:$0xff]
        %v2195 = vld [vmem:[#allocation11 + $0x1e8] sm:$0xff]
        %v2196 = vld [vmem:[#allocation11 + $0x1f0] sm:$0xff]
        %v2197 = vld [vmem:[#allocation11 + $0x1f8] sm:$0xff]
        %v2198 = vld [vmem:[%s16] sm:$0xf]
        %v2199 = vld [vmem:[#allocation13] sm:$0xff]
        %v2200 = vld [vmem:[#allocation13 + $0x8] sm:$0xff]
        %v2201 = vld [vmem:[#allocation13 + $0x10] sm:$0xff]
        %v2202 = vld [vmem:[#allocation13 + $0x18] sm:$0xff]
        %v2203 = vld [vmem:[#allocation13 + $0x20] sm:$0xff]
        %v2204 = vld [vmem:[#allocation13 + $0x28] sm:$0xff]
        %v2205 = vld [vmem:[#allocation13 + $0x30] sm:$0xff]
        %v2206 = vld [vmem:[#allocation13 + $0x38] sm:$0xff]
        %v2207 = vld [vmem:[#allocation13 + $0x40] sm:$0xff]
        %v2208 = vld [vmem:[#allocation13 + $0x48] sm:$0xff]
        %v2209 = vld [vmem:[#allocation13 + $0x50] sm:$0xff]
        %v2210 = vld [vmem:[#allocation13 + $0x58] sm:$0xff]
        %v2211 = vld [vmem:[#allocation13 + $0x60] sm:$0xff]
        %v2212 = vld [vmem:[#allocation13 + $0x68] sm:$0xff]
        %v2213 = vld [vmem:[#allocation13 + $0x70] sm:$0xff]
        %v2214 = vld [vmem:[#allocation13 + $0x78] sm:$0xff]
        %v2215 = vld [vmem:[#allocation13 + $0x80] sm:$0xff]
        %v2216 = vld [vmem:[#allocation13 + $0x88] sm:$0xff]
        %v2217 = vld [vmem:[#allocation13 + $0x90] sm:$0xff]
        %v2218 = vld [vmem:[#allocation13 + $0x98] sm:$0xff]
        %v2219 = vld [vmem:[#allocation13 + $0xa0] sm:$0xff]
        %v2220 = vld [vmem:[#allocation13 + $0xa8] sm:$0xff]
        %v2221 = vld [vmem:[#allocation13 + $0xb0] sm:$0xff]
        %v2222 = vld [vmem:[#allocation13 + $0xb8] sm:$0xff]
        %v2223 = vld [vmem:[#allocation13 + $0xc0] sm:$0xff]
        %v2224 = vld [vmem:[#allocation13 + $0xc8] sm:$0xff]
        %v2225 = vld [vmem:[#allocation13 + $0xd0] sm:$0xff]
        %v2226 = vld [vmem:[#allocation13 + $0xd8] sm:$0xff]
        %v2227 = vld [vmem:[#allocation13 + $0xe0] sm:$0xff]
        %v2228 = vld [vmem:[#allocation13 + $0xe8] sm:$0xff]
        %v2229 = vld [vmem:[#allocation13 + $0xf0] sm:$0xff]
        %v2230 = vld [vmem:[#allocation13 + $0xf8] sm:$0xff]
        %v2231 = vld [vmem:[#allocation13 + $0x100] sm:$0xff]
        %v2232 = vld [vmem:[#allocation13 + $0x108] sm:$0xff]
        %v2233 = vld [vmem:[#allocation13 + $0x110] sm:$0xff]
        %v2234 = vld [vmem:[#allocation13 + $0x118] sm:$0xff]
        %v2235 = vld [vmem:[#allocation13 + $0x120] sm:$0xff]
        %v2236 = vld [vmem:[#allocation13 + $0x128] sm:$0xff]
        %v2237 = vld [vmem:[#allocation13 + $0x130] sm:$0xff]
        %v2238 = vld [vmem:[#allocation13 + $0x138] sm:$0xff]
        %v2239 = vld [vmem:[#allocation13 + $0x140] sm:$0xff]
        %v2240 = vld [vmem:[#allocation13 + $0x148] sm:$0xff]
        %v2241 = vld [vmem:[#allocation13 + $0x150] sm:$0xff]
        %v2242 = vld [vmem:[#allocation13 + $0x158] sm:$0xff]
        %v2243 = vld [vmem:[#allocation13 + $0x160] sm:$0xff]
        %v2244 = vld [vmem:[#allocation13 + $0x168] sm:$0xff]
        %v2245 = vld [vmem:[#allocation13 + $0x170] sm:$0xff]
        %v2246 = vld [vmem:[#allocation13 + $0x178] sm:$0xff]
        %v2247 = vld [vmem:[#allocation13 + $0x180] sm:$0xff]
        %v2248 = vld [vmem:[#allocation13 + $0x188] sm:$0xff]
        %v2249 = vld [vmem:[#allocation13 + $0x190] sm:$0xff]
        %v2250 = vld [vmem:[#allocation13 + $0x198] sm:$0xff]
        %v2251 = vld [vmem:[#allocation13 + $0x1a0] sm:$0xff]
        %v2252 = vld [vmem:[#allocation13 + $0x1a8] sm:$0xff]
        %v2253 = vld [vmem:[#allocation13 + $0x1b0] sm:$0xff]
        %v2254 = vld [vmem:[#allocation13 + $0x1b8] sm:$0xff]
        %v2255 = vld [vmem:[#allocation13 + $0x1c0] sm:$0xff]
        %v2256 = vld [vmem:[#allocation13 + $0x1c8] sm:$0xff]
        %v2257 = vld [vmem:[#allocation13 + $0x1d0] sm:$0xff]
        %v2258 = vld [vmem:[#allocation13 + $0x1d8] sm:$0xff]
        %v2259 = vld [vmem:[#allocation13 + $0x1e0] sm:$0xff]
        %v2260 = vld [vmem:[#allocation13 + $0x1e8] sm:$0xff]
        %v2261 = vld [vmem:[#allocation13 + $0x1f0] sm:$0xff]
        %v2262 = vld [vmem:[#allocation13 + $0x1f8] sm:$0xff]
        %v2263 = vld [vmem:[%s18] sm:$0x1]
        %v2265 = vlaneseq
        %v2266 = vshrl.u32 %v2265, 7
        %v2267 = vsub.s32 0, %v2266
        %v2268 = vrot.slane %v2198, %v2267
        %v2269 = vlaneseq
        %v2270 = vshrl.u32 %v2269, 7
        %v2271 = vsub.s32 1, %v2270
        %v2272 = vrot.slane %v2198, %v2271
        %v2273 = vlaneseq
        %v2274 = vshrl.u32 %v2273, 7
        %v2275 = vsub.s32 2, %v2274
        %v2276 = vrot.slane %v2198, %v2275
        %v2277 = vlaneseq
        %v2278 = vshrl.u32 %v2277, 7
        %v2279 = vsub.s32 3, %v2278
        %v2280 = vrot.slane %v2198, %v2279
        %2285 = vmatprep.subr.mxu0 %v2135
        %2286 = vmatpush1.msra.mxu0 %v2134
        %2287 = vmatprep.subr.mxu0 %v2139
        %2288 = vmatpush1.msra.mxu0 %v2138
        %2289 = vmatprep.subr.mxu0 %v2143
        %2290 = vmatpush1.msra.mxu0 %v2142
        %2291 = vmatprep.subr.mxu0 %v2147
        %2292 = vmatpush1.msra.mxu0 %v2146
        %2293 = vmatprep.subr.mxu0 %v2151
        %2294 = vmatpush1.msra.mxu0 %v2150
        %2295 = vmatprep.subr.mxu0 %v2155
        %2296 = vmatpush1.msra.mxu0 %v2154
        %2297 = vmatprep.subr.mxu0 %v2159
        %2298 = vmatpush1.msra.mxu0 %v2158
        %2299 = vmatprep.subr.mxu0 %v2163
        %2300 = vmatpush1.msra.mxu0 %v2162
        %2301 = vmatprep.subr.mxu0 %v2167
        %2302 = vmatpush1.msra.mxu0 %v2166
        %2303 = vmatprep.subr.mxu0 %v2171
        %2304 = vmatpush1.msra.mxu0 %v2170
        %2305 = vmatprep.subr.mxu0 %v2175
        %2306 = vmatpush1.msra.mxu0 %v2174
        %2307 = vmatprep.subr.mxu0 %v2179
        %2308 = vmatpush1.msra.mxu0 %v2178
        %2309 = vmatprep.subr.mxu0 %v2183
        %2310 = vmatpush1.msra.mxu0 %v2182
        %2311 = vmatprep.subr.mxu0 %v2187
        %2312 = vmatpush1.msra.mxu0 %v2186
        %2313 = vmatprep.subr.mxu0 %v2191
        %2314 = vmatpush1.msra.mxu0 %v2190
        %2315 = vmatprep.subr.mxu0 %v2195
        %2316 = vmatpush1.msra.mxu0 %v2194
        %2317 = vmatprep.subr.mxu0 0.0
        %2318 = vmatpush1.msra.mxu0 0.0
        %2319 = vmatprep.subr.mxu0 0.0
        %2320 = vmatpush1.msra.mxu0 0.0
        %2321 = vmatprep.subr.mxu0 0.0
        %2322 = vmatpush1.msra.mxu0 0.0
        %2323 = vmatprep.subr.mxu0 0.0
        %2324 = vmatpush1.msra.mxu0 0.0
        %2325 = vmatprep.subr.mxu0 0.0
        %2326 = vmatpush1.msra.mxu0 0.0
        %2327 = vmatprep.subr.mxu0 0.0
        %2328 = vmatpush1.msra.mxu0 0.0
        %2329 = vmatprep.subr.mxu0 0.0
        %2330 = vmatpush1.msra.mxu0 0.0
        %2331 = vmatprep.subr.mxu0 0.0
        %2332 = vmatpush1.msra.mxu0 0.0
        %2333 = vmatprep.subr.mxu0 0.0
        %2334 = vmatpush1.msra.mxu0 0.0
        %2335 = vmatprep.subr.mxu0 0.0
        %2336 = vmatpush1.msra.mxu0 0.0
        %2337 = vmatprep.subr.mxu0 0.0
        %2338 = vmatpush1.msra.mxu0 0.0
        %2339 = vmatprep.subr.mxu0 0.0
        %2340 = vmatpush1.msra.mxu0 0.0
        %2341 = vmatprep.subr.mxu0 0.0
        %2342 = vmatpush1.msra.mxu0 0.0
        %2343 = vmatprep.subr.mxu0 0.0
        %2344 = vmatpush1.msra.mxu0 0.0
        %2345 = vmatprep.subr.mxu0 0.0
        %2346 = vmatpush1.msra.mxu0 0.0
        %2347 = vmatprep.subr.mxu0 0.0
        %2348 = vmatpush1.msra.mxu0 0.0
        %2349 = vmatprep.mubr.f32.mxu0 0.0
        %2350 = vmatmul.mubr.f32.gmra.mrb[0].mxu0 %v2133
        %v2351 = vpop.f32.mrb[0].mxu0
        %v2352 = vadd.f32 %v2268, %v2351
        %v2353 = vpop.f32.mrb[0].mxu0
        %v2354 = vadd.f32 %v2272, %v2353
        %2355 = vdwg.mxu0
        %2356 = vmatprep.subr.mxu0 %v2137
        %2357 = vmatpush1.msra.mxu0 %v2136
        %2358 = vmatprep.subr.mxu0 %v2141
        %2359 = vmatpush1.msra.mxu0 %v2140
        %2360 = vmatprep.subr.mxu0 %v2145
        %2361 = vmatpush1.msra.mxu0 %v2144
        %2362 = vmatprep.subr.mxu0 %v2149
        %2363 = vmatpush1.msra.mxu0 %v2148
        %2364 = vmatprep.subr.mxu0 %v2153
        %2365 = vmatpush1.msra.mxu0 %v2152
        %2366 = vmatprep.subr.mxu0 %v2157
        %2367 = vmatpush1.msra.mxu0 %v2156
        %2368 = vmatprep.subr.mxu0 %v2161
        %2369 = vmatpush1.msra.mxu0 %v2160
        %2370 = vmatprep.subr.mxu0 %v2165
        %2371 = vmatpush1.msra.mxu0 %v2164
        %2372 = vmatprep.subr.mxu0 %v2169
        %2373 = vmatpush1.msra.mxu0 %v2168
        %2374 = vmatprep.subr.mxu0 %v2173
        %2375 = vmatpush1.msra.mxu0 %v2172
        %2376 = vmatprep.subr.mxu0 %v2177
        %2377 = vmatpush1.msra.mxu0 %v2176
        %2378 = vmatprep.subr.mxu0 %v2181
        %2379 = vmatpush1.msra.mxu0 %v2180
        %2380 = vmatprep.subr.mxu0 %v2185
        %2381 = vmatpush1.msra.mxu0 %v2184
        %2382 = vmatprep.subr.mxu0 %v2189
        %2383 = vmatpush1.msra.mxu0 %v2188
        %2384 = vmatprep.subr.mxu0 %v2193
        %2385 = vmatpush1.msra.mxu0 %v2192
        %2386 = vmatprep.subr.mxu0 %v2197
        %2387 = vmatpush1.msra.mxu0 %v2196
        %2388 = vmatprep.subr.mxu0 0.0
        %2389 = vmatpush1.msra.mxu0 0.0
        %2390 = vmatprep.subr.mxu0 0.0
        %2391 = vmatpush1.msra.mxu0 0.0
        %2392 = vmatprep.subr.mxu0 0.0
        %2393 = vmatpush1.msra.mxu0 0.0
        %2394 = vmatprep.subr.mxu0 0.0
        %2395 = vmatpush1.msra.mxu0 0.0
        %2396 = vmatprep.subr.mxu0 0.0
        %2397 = vmatpush1.msra.mxu0 0.0
        %2398 = vmatprep.subr.mxu0 0.0
        %2399 = vmatpush1.msra.mxu0 0.0
        %2400 = vmatprep.subr.mxu0 0.0
        %2401 = vmatpush1.msra.mxu0 0.0
        %2402 = vmatprep.subr.mxu0 0.0
        %2403 = vmatpush1.msra.mxu0 0.0
        %2404 = vmatprep.subr.mxu0 0.0
        %2405 = vmatpush1.msra.mxu0 0.0
        %2406 = vmatprep.subr.mxu0 0.0
        %2407 = vmatpush1.msra.mxu0 0.0
        %2408 = vmatprep.subr.mxu0 0.0
        %2409 = vmatpush1.msra.mxu0 0.0
        %2410 = vmatprep.subr.mxu0 0.0
        %2411 = vmatpush1.msra.mxu0 0.0
        %2412 = vmatprep.subr.mxu0 0.0
        %2413 = vmatpush1.msra.mxu0 0.0
        %2414 = vmatprep.subr.mxu0 0.0
        %2415 = vmatpush1.msra.mxu0 0.0
        %2416 = vmatprep.subr.mxu0 0.0
        %2417 = vmatpush1.msra.mxu0 0.0
        %2418 = vmatprep.subr.mxu0 0.0
        %2419 = vmatpush1.msra.mxu0 0.0
        %2420 = vmatprep.mubr.f32.mxu0 0.0
        %2421 = vmatmul.mubr.f32.gmra.mrb[0].mxu0 %v2133
        %v2422 = vpop.f32.mrb[0].mxu0
        %v2423 = vadd.f32 %v2276, %v2422
        %v2424 = vpop.f32.mrb[0].mxu0
        %v2425 = vadd.f32 %v2280, %v2424
        %2426 = vdwg.mxu0
        %v2427 = vmax.f32 %v2352, 0.0
        %v2428 = vmax.f32 %v2354, 0.0
        %v2429 = vmax.f32 %v2423, 0.0
        %v2430 = vmax.f32 %v2425, 0.0
        %v2432 = vlaneseq
        %v2433 = vshrl.u32 %v2432, 7
        %v2434 = vsub.s32 0, %v2433
        %v2435 = vrot.slane %v2263, %v2434
        %2437 = vmatprep.subr.mxu0 0.0
        %2438 = vmatpush1.msra.mxu0 %v2199
        %2439 = vmatprep.subr.mxu0 0.0
        %2440 = vmatpush1.msra.mxu0 %v2200
        %2441 = vmatprep.subr.mxu0 0.0
        %2442 = vmatpush1.msra.mxu0 %v2201
        %2443 = vmatprep.subr.mxu0 0.0
        %2444 = vmatpush1.msra.mxu0 %v2202
        %2445 = vmatprep.subr.mxu0 0.0
        %2446 = vmatpush1.msra.mxu0 %v2203
        %2447 = vmatprep.subr.mxu0 0.0
        %2448 = vmatpush1.msra.mxu0 %v2204
        %2449 = vmatprep.subr.mxu0 0.0
        %2450 = vmatpush1.msra.mxu0 %v2205
        %2451 = vmatprep.subr.mxu0 0.0
        %2452 = vmatpush1.msra.mxu0 %v2206
        %2453 = vmatprep.subr.mxu0 0.0
        %2454 = vmatpush1.msra.mxu0 %v2207
        %2455 = vmatprep.subr.mxu0 0.0
        %2456 = vmatpush1.msra.mxu0 %v2208
        %2457 = vmatprep.subr.mxu0 0.0
        %2458 = vmatpush1.msra.mxu0 %v2209
        %2459 = vmatprep.subr.mxu0 0.0
        %2460 = vmatpush1.msra.mxu0 %v2210
        %2461 = vmatprep.subr.mxu0 0.0
        %2462 = vmatpush1.msra.mxu0 %v2211
        %2463 = vmatprep.subr.mxu0 0.0
        %2464 = vmatpush1.msra.mxu0 %v2212
        %2465 = vmatprep.subr.mxu0 0.0
        %2466 = vmatpush1.msra.mxu0 %v2213
        %2467 = vmatprep.subr.mxu0 0.0
        %2468 = vmatpush1.msra.mxu0 %v2214
        %2469 = vmatprep.subr.mxu0 0.0
        %2470 = vmatpush1.msra.mxu0 %v2215
        %2471 = vmatprep.subr.mxu0 0.0
        %2472 = vmatpush1.msra.mxu0 %v2216
        %2473 = vmatprep.subr.mxu0 0.0
        %2474 = vmatpush1.msra.mxu0 %v2217
        %2475 = vmatprep.subr.mxu0 0.0
        %2476 = vmatpush1.msra.mxu0 %v2218
        %2477 = vmatprep.subr.mxu0 0.0
        %2478 = vmatpush1.msra.mxu0 %v2219
        %2479 = vmatprep.subr.mxu0 0.0
        %2480 = vmatpush1.msra.mxu0 %v2220
        %2481 = vmatprep.subr.mxu0 0.0
        %2482 = vmatpush1.msra.mxu0 %v2221
        %2483 = vmatprep.subr.mxu0 0.0
        %2484 = vmatpush1.msra.mxu0 %v2222
        %2485 = vmatprep.subr.mxu0 0.0
        %2486 = vmatpush1.msra.mxu0 %v2223
        %2487 = vmatprep.subr.mxu0 0.0
        %2488 = vmatpush1.msra.mxu0 %v2224
        %2489 = vmatprep.subr.mxu0 0.0
        %2490 = vmatpush1.msra.mxu0 %v2225
        %2491 = vmatprep.subr.mxu0 0.0
        %2492 = vmatpush1.msra.mxu0 %v2226
        %2493 = vmatprep.subr.mxu0 0.0
        %2494 = vmatpush1.msra.mxu0 %v2227
        %2495 = vmatprep.subr.mxu0 0.0
        %2496 = vmatpush1.msra.mxu0 %v2228
        %2497 = vmatprep.subr.mxu0 0.0
        %2498 = vmatpush1.msra.mxu0 %v2229
        %2499 = vmatprep.subr.mxu0 0.0
        %2500 = vmatpush1.msra.mxu0 %v2230
        %2501 = vmatprep.mubr.f32.mxu0 %v2428
        %2502 = vmatmul.mubr.f32.gmra.mrb[0].mxu0 %v2427
        %v2503 = vpop.f32.mrb[0].mxu0
        %v2504 = vadd.f32 %v2435, %v2503
        %v2505 = vpop.f32.mrb[0].mxu0
        %2506 = vdwg.mxu0
        %2507 = vmatprep.subr.mxu0 0.0
        %2508 = vmatpush1.msra.mxu0 %v2231
        %2509 = vmatprep.subr.mxu0 0.0
        %2510 = vmatpush1.msra.mxu0 %v2232
        %2511 = vmatprep.subr.mxu0 0.0
        %2512 = vmatpush1.msra.mxu0 %v2233
        %2513 = vmatprep.subr.mxu0 0.0
        %2514 = vmatpush1.msra.mxu0 %v2234
        %2515 = vmatprep.subr.mxu0 0.0
        %2516 = vmatpush1.msra.mxu0 %v2235
        %2517 = vmatprep.subr.mxu0 0.0
        %2518 = vmatpush1.msra.mxu0 %v2236
        %2519 = vmatprep.subr.mxu0 0.0
        %2520 = vmatpush1.msra.mxu0 %v2237
        %2521 = vmatprep.subr.mxu0 0.0
        %2522 = vmatpush1.msra.mxu0 %v2238
        %2523 = vmatprep.subr.mxu0 0.0
        %2524 = vmatpush1.msra.mxu0 %v2239
        %2525 = vmatprep.subr.mxu0 0.0
        %2526 = vmatpush1.msra.mxu0 %v2240
        %2527 = vmatprep.subr.mxu0 0.0
        %2528 = vmatpush1.msra.mxu0 %v2241
        %2529 = vmatprep.subr.mxu0 0.0
        %2530 = vmatpush1.msra.mxu0 %v2242
        %2531 = vmatprep.subr.mxu0 0.0
        %2532 = vmatpush1.msra.mxu0 %v2243
        %2533 = vmatprep.subr.mxu0 0.0
        %2534 = vmatpush1.msra.mxu0 %v2244
        %2535 = vmatprep.subr.mxu0 0.0
        %2536 = vmatpush1.msra.mxu0 %v2245
        %2537 = vmatprep.subr.mxu0 0.0
        %2538 = vmatpush1.msra.mxu0 %v2246
        %2539 = vmatprep.subr.mxu0 0.0
        %2540 = vmatpush1.msra.mxu0 %v2247
        %2541 = vmatprep.subr.mxu0 0.0
        %2542 = vmatpush1.msra.mxu0 %v2248
        %2543 = vmatprep.subr.mxu0 0.0
        %2544 = vmatpush1.msra.mxu0 %v2249
        %2545 = vmatprep.subr.mxu0 0.0
        %2546 = vmatpush1.msra.mxu0 %v2250
        %2547 = vmatprep.subr.mxu0 0.0
        %2548 = vmatpush1.msra.mxu0 %v2251
        %2549 = vmatprep.subr.mxu0 0.0
        %2550 = vmatpush1.msra.mxu0 %v2252
        %2551 = vmatprep.subr.mxu0 0.0
        %2552 = vmatpush1.msra.mxu0 %v2253
        %2553 = vmatprep.subr.mxu0 0.0
        %2554 = vmatpush1.msra.mxu0 %v2254
        %2555 = vmatprep.subr.mxu0 0.0
        %2556 = vmatpush1.msra.mxu0 %v2255
        %2557 = vmatprep.subr.mxu0 0.0
        %2558 = vmatpush1.msra.mxu0 %v2256
        %2559 = vmatprep.subr.mxu0 0.0
        %2560 = vmatpush1.msra.mxu0 %v2257
        %2561 = vmatprep.subr.mxu0 0.0
        %2562 = vmatpush1.msra.mxu0 %v2258
        %2563 = vmatprep.subr.mxu0 0.0
        %2564 = vmatpush1.msra.mxu0 %v2259
        %2565 = vmatprep.subr.mxu0 0.0
        %2566 = vmatpush1.msra.mxu0 %v2260
        %2567 = vmatprep.subr.mxu0 0.0
        %2568 = vmatpush1.msra.mxu0 %v2261
        %2569 = vmatprep.subr.mxu0 0.0
        %2570 = vmatpush1.msra.mxu0 %v2262
        %2571 = vmatprep.mubr.f32.mxu0 %v2430
        %2572 = vmatmul.mubr.f32.gmra.mrb[0].mxu0 %v2429
        %v2573 = vpop.f32.mrb[0].mxu0
        %v2574 = vadd.f32 %v2504, %v2573
        %v2575 = vpop.f32.mrb[0].mxu0
        %2576 = vdwg.mxu0
        %v2577 = vadd.f32 %v2098, %v2574
        %s2578 = scalar_lea.vmem %s3, 1
        %v2579 = vld [vmem:[%s2578] sm:$0x1]
        %s2580 = scalar_lea.vmem %s4, 1
        %v2581 = vld [vmem:[%s2580] sm:$0x1]
        %v2582 = vrot.slane %v2577, 4
        %v2583 = vadd.f32 %v2577, %v2582
        %v2584 = vrot.slane %v2583, 2
        %v2585 = vadd.f32 %v2583, %v2584
        %v2586 = vrot.slane %v2585, 1
        %v2587 = vadd.f32 %v2585, %v2586
        %v2588 = vmul.f32 %v2587, %v1013
        %v2589 = vsub.f32 %v2577, %v2588
        %v2590 = vmul.f32 %v2589, %v2589
        %v2591 = vrot.slane %v2590, 4
        %v2592 = vadd.f32 %v2590, %v2591
        %v2593 = vrot.slane %v2592, 2
        %v2594 = vadd.f32 %v2592, %v2593
        %v2595 = vrot.slane %v2594, 1
        %v2596 = vadd.f32 %v2594, %v2595
        %v2597 = vmul.f32 %v2596, %v1023
        %v2598 = vadd.f32 %v2597, 1e-05
        %v2599 = vrsqrt.pop %v2598
        %v2600 = vmul.f32 %v2589, %v2599
        %v2602 = vlaneseq
        %v2603 = vshrl.u32 %v2602, 7
        %v2604 = vsub.s32 0, %v2603
        %v2605 = vrot.slane %v2579, %v2604
        %v2607 = vmul.f32 %v2605, %v2600
        %v2609 = vlaneseq
        %v2610 = vshrl.u32 %v2609, 7
        %v2611 = vsub.s32 0, %v2610
        %v2612 = vrot.slane %v2581, %v2611
        %v2614 = vadd.f32 %v2607, %v2612
        %s2615 = scalar_lea.vmem [#allocation5], 128
        %v2616 = vld [vmem:[%s2615] sm:$0xff]
        %v2617 = vld [vmem:[%s2615 + $0x8] sm:$0xff]
        %v2618 = vld [vmem:[%s2615 + $0x10] sm:$0xff]
        %v2619 = vld [vmem:[%s2615 + $0x18] sm:$0xff]
        %v2620 = vld [vmem:[%s2615 + $0x20] sm:$0xff]
        %v2621 = vld [vmem:[%s2615 + $0x28] sm:$0xff]
        %v2622 = vld [vmem:[%s2615 + $0x30] sm:$0xff]
        %v2623 = vld [vmem:[%s2615 + $0x38] sm:$0xff]
        %v2624 = vld [vmem:[%s2615 + $0x40] sm:$0xff]
        %v2625 = vld [vmem:[%s2615 + $0x48] sm:$0xff]
        %v2626 = vld [vmem:[%s2615 + $0x50] sm:$0xff]
        %v2627 = vld [vmem:[%s2615 + $0x58] sm:$0xff]
        %v2628 = vld [vmem:[%s2615 + $0x60] sm:$0xff]
        %v2629 = vld [vmem:[%s2615 + $0x68] sm:$0xff]
        %v2630 = vld [vmem:[%s2615 + $0x70] sm:$0xff]
        %v2631 = vld [vmem:[%s2615 + $0x78] sm:$0xff]
        %s2632 = scalar_lea.vmem %s6, 1
        %v2633 = vld [vmem:[%s2632] sm:$0x1]
        %v2635 = vlaneseq
        %v2636 = vshrl.u32 %v2635, 7
        %v2637 = vsub.s32 0, %v2636
        %v2638 = vrot.slane %v2633, %v2637
        %2640 = vmatprep.subr.mxu0 0.0
        %2641 = vmatpush1.msra.mxu0 %v2616
        %2642 = vmatprep.subr.mxu0 0.0
        %2643 = vmatpush1.msra.mxu0 %v2617
        %2644 = vmatprep.subr.mxu0 0.0
        %2645 = vmatpush1.msra.mxu0 %v2618
        %2646 = vmatprep.subr.mxu0 0.0
        %2647 = vmatpush1.msra.mxu0 %v2619
        %2648 = vmatprep.subr.mxu0 0.0
        %2649 = vmatpush1.msra.mxu0 %v2620
        %2650 = vmatprep.subr.mxu0 0.0
        %2651 = vmatpush1.msra.mxu0 %v2621
        %2652 = vmatprep.subr.mxu0 0.0
        %2653 = vmatpush1.msra.mxu0 %v2622
        %2654 = vmatprep.subr.mxu0 0.0
        %2655 = vmatpush1.msra.mxu0 %v2623
        %2656 = vmatprep.subr.mxu0 0.0
        %2657 = vmatpush1.msra.mxu0 %v2624
        %2658 = vmatprep.subr.mxu0 0.0
        %2659 = vmatpush1.msra.mxu0 %v2625
        %2660 = vmatprep.subr.mxu0 0.0
        %2661 = vmatpush1.msra.mxu0 %v2626
        %2662 = vmatprep.subr.mxu0 0.0
        %2663 = vmatpush1.msra.mxu0 %v2627
        %2664 = vmatprep.subr.mxu0 0.0
        %2665 = vmatpush1.msra.mxu0 %v2628
        %2666 = vmatprep.subr.mxu0 0.0
        %2667 = vmatpush1.msra.mxu0 %v2629
        %2668 = vmatprep.subr.mxu0 0.0
        %2669 = vmatpush1.msra.mxu0 %v2630
        %2670 = vmatprep.subr.mxu0 0.0
        %2671 = vmatpush1.msra.mxu0 %v2631
        %2672 = vmatprep.subr.mxu0 0.0
        %2673 = vmatpush1.msra.mxu0 0.0
        %2674 = vmatprep.subr.mxu0 0.0
        %2675 = vmatpush1.msra.mxu0 0.0
        %2676 = vmatprep.subr.mxu0 0.0
        %2677 = vmatpush1.msra.mxu0 0.0
        %2678 = vmatprep.subr.mxu0 0.0
        %2679 = vmatpush1.msra.mxu0 0.0
        %2680 = vmatprep.subr.mxu0 0.0
        %2681 = vmatpush1.msra.mxu0 0.0
        %2682 = vmatprep.subr.mxu0 0.0
        %2683 = vmatpush1.msra.mxu0 0.0
        %2684 = vmatprep.subr.mxu0 0.0
        %2685 = vmatpush1.msra.mxu0 0.0
        %2686 = vmatprep.subr.mxu0 0.0
        %2687 = vmatpush1.msra.mxu0 0.0
        %2688 = vmatprep.subr.mxu0 0.0
        %2689 = vmatpush1.msra.mxu0 0.0
        %2690 = vmatprep.subr.mxu0 0.0
        %2691 = vmatpush1.msra.mxu0 0.0
        %2692 = vmatprep.subr.mxu0 0.0
        %2693 = vmatpush1.msra.mxu0 0.0
        %2694 = vmatprep.subr.mxu0 0.0
        %2695 = vmatpush1.msra.mxu0 0.0
        %2696 = vmatprep.subr.mxu0 0.0
        %2697 = vmatpush1.msra.mxu0 0.0
        %2698 = vmatprep.subr.mxu0 0.0
        %2699 = vmatpush1.msra.mxu0 0.0
        %2700 = vmatprep.subr.mxu0 0.0
        %2701 = vmatpush1.msra.mxu0 0.0
        %2702 = vmatprep.subr.mxu0 0.0
        %2703 = vmatpush1.msra.mxu0 0.0
        %2704 = vmatprep.mubr.f32.mxu0 0.0
        %2705 = vmatmul.mubr.f32.gmra.mrb[0].mxu0 %v2614
        %v2706 = vpop.f32.mrb[0].mxu0
        %v2707 = vadd.f32 %v2638, %v2706
        %v2708 = vpop.f32.mrb[0].mxu0
        %2709 = vdwg.mxu0
        %s2710 = scalar_lea.vmem [#allocation7], 128
        %v2711 = vld [vmem:[%s2710] sm:$0xff]
        %v2712 = vld [vmem:[%s2710 + $0x8] sm:$0xff]
        %v2713 = vld [vmem:[%s2710 + $0x10] sm:$0xff]
        %v2714 = vld [vmem:[%s2710 + $0x18] sm:$0xff]
        %v2715 = vld [vmem:[%s2710 + $0x20] sm:$0xff]
        %v2716 = vld [vmem:[%s2710 + $0x28] sm:$0xff]
        %v2717 = vld [vmem:[%s2710 + $0x30] sm:$0xff]
        %v2718 = vld [vmem:[%s2710 + $0x38] sm:$0xff]
        %v2719 = vld [vmem:[%s2710 + $0x40] sm:$0xff]
        %v2720 = vld [vmem:[%s2710 + $0x48] sm:$0xff]
        %v2721 = vld [vmem:[%s2710 + $0x50] sm:$0xff]
        %v2722 = vld [vmem:[%s2710 + $0x58] sm:$0xff]
        %v2723 = vld [vmem:[%s2710 + $0x60] sm:$0xff]
        %v2724 = vld [vmem:[%s2710 + $0x68] sm:$0xff]
        %v2725 = vld [vmem:[%s2710 + $0x70] sm:$0xff]
        %v2726 = vld [vmem:[%s2710 + $0x78] sm:$0xff]
        %s2727 = scalar_lea.vmem %s8, 1
        %v2728 = vld [vmem:[%s2727] sm:$0x1]
        %v2730 = vlaneseq
        %v2731 = vshrl.u32 %v2730, 7
        %v2732 = vsub.s32 0, %v2731
        %v2733 = vrot.slane %v2728, %v2732
        %2735 = vmatprep.subr.mxu0 0.0
        %2736 = vmatpush1.msra.mxu0 %v2711
        %2737 = vmatprep.subr.mxu0 0.0
        %2738 = vmatpush1.msra.mxu0 %v2712
        %2739 = vmatprep.subr.mxu0 0.0
        %2740 = vmatpush1.msra.mxu0 %v2713
        %2741 = vmatprep.subr.mxu0 0.0
        %2742 = vmatpush1.msra.mxu0 %v2714
        %2743 = vmatprep.subr.mxu0 0.0
        %2744 = vmatpush1.msra.mxu0 %v2715
        %2745 = vmatprep.subr.mxu0 0.0
        %2746 = vmatpush1.msra.mxu0 %v2716
        %2747 = vmatprep.subr.mxu0 0.0
        %2748 = vmatpush1.msra.mxu0 %v2717
        %2749 = vmatprep.subr.mxu0 0.0
        %2750 = vmatpush1.msra.mxu0 %v2718
        %2751 = vmatprep.subr.mxu0 0.0
        %2752 = vmatpush1.msra.mxu0 %v2719
        %2753 = vmatprep.subr.mxu0 0.0
        %2754 = vmatpush1.msra.mxu0 %v2720
        %2755 = vmatprep.subr.mxu0 0.0
        %2756 = vmatpush1.msra.mxu0 %v2721
        %2757 = vmatprep.subr.mxu0 0.0
        %2758 = vmatpush1.msra.mxu0 %v2722
        %2759 = vmatprep.subr.mxu0 0.0
        %2760 = vmatpush1.msra.mxu0 %v2723
        %2761 = vmatprep.subr.mxu0 0.0
        %2762 = vmatpush1.msra.mxu0 %v2724
        %2763 = vmatprep.subr.mxu0 0.0
        %2764 = vmatpush1.msra.mxu0 %v2725
        %2765 = vmatprep.subr.mxu0 0.0
        %2766 = vmatpush1.msra.mxu0 %v2726
        %2767 = vmatprep.subr.mxu0 0.0
        %2768 = vmatpush1.msra.mxu0 0.0
        %2769 = vmatprep.subr.mxu0 0.0
        %2770 = vmatpush1.msra.mxu0 0.0
        %2771 = vmatprep.subr.mxu0 0.0
        %2772 = vmatpush1.msra.mxu0 0.0
        %2773 = vmatprep.subr.mxu0 0.0
        %2774 = vmatpush1.msra.mxu0 0.0
        %2775 = vmatprep.subr.mxu0 0.0
        %2776 = vmatpush1.msra.mxu0 0.0
        %2777 = vmatprep.subr.mxu0 0.0
        %2778 = vmatpush1.msra.mxu0 0.0
        %2779 = vmatprep.subr.mxu0 0.0
        %2780 = vmatpush1.msra.mxu0 0.0
        %2781 = vmatprep.subr.mxu0 0.0
        %2782 = vmatpush1.msra.mxu0 0.0
        %2783 = vmatprep.subr.mxu0 0.0
        %2784 = vmatpush1.msra.mxu0 0.0
        %2785 = vmatprep.subr.mxu0 0.0
        %2786 = vmatpush1.msra.mxu0 0.0
        %2787 = vmatprep.subr.mxu0 0.0
        %2788 = vmatpush1.msra.mxu0 0.0
        %2789 = vmatprep.subr.mxu0 0.0
        %2790 = vmatpush1.msra.mxu0 0.0
        %2791 = vmatprep.subr.mxu0 0.0
        %2792 = vmatpush1.msra.mxu0 0.0
        %2793 = vmatprep.subr.mxu0 0.0
        %2794 = vmatpush1.msra.mxu0 0.0
        %2795 = vmatprep.subr.mxu0 0.0
        %2796 = vmatpush1.msra.mxu0 0.0
        %2797 = vmatprep.subr.mxu0 0.0
        %2798 = vmatpush1.msra.mxu0 0.0
        %2799 = vmatprep.mubr.f32.mxu0 0.0
        %2800 = vmatmul.mubr.f32.gmra.mrb[0].mxu0 %v2614
        %v2801 = vpop.f32.mrb[0].mxu0
        %v2802 = vadd.f32 %v2733, %v2801
        %v2803 = vpop.f32.mrb[0].mxu0
        %2804 = vdwg.mxu0
        %s2805 = scalar_lea.vmem [#allocation8], 128
        %v2806 = vld [vmem:[%s2805] sm:$0xff]
        %v2807 = vld [vmem:[%s2805 + $0x8] sm:$0xff]
        %v2808 = vld [vmem:[%s2805 + $0x10] sm:$0xff]
        %v2809 = vld [vmem:[%s2805 + $0x18] sm:$0xff]
        %v2810 = vld [vmem:[%s2805 + $0x20] sm:$0xff]
        %v2811 = vld [vmem:[%s2805 + $0x28] sm:$0xff]
        %v2812 = vld [vmem:[%s2805 + $0x30] sm:$0xff]
        %v2813 = vld [vmem:[%s2805 + $0x38] sm:$0xff]
        %v2814 = vld [vmem:[%s2805 + $0x40] sm:$0xff]
        %v2815 = vld [vmem:[%s2805 + $0x48] sm:$0xff]
        %v2816 = vld [vmem:[%s2805 + $0x50] sm:$0xff]
        %v2817 = vld [vmem:[%s2805 + $0x58] sm:$0xff]
        %v2818 = vld [vmem:[%s2805 + $0x60] sm:$0xff]
        %v2819 = vld [vmem:[%s2805 + $0x68] sm:$0xff]
        %v2820 = vld [vmem:[%s2805 + $0x70] sm:$0xff]
        %v2821 = vld [vmem:[%s2805 + $0x78] sm:$0xff]
        %s2822 = scalar_lea.vmem %s10, 1
        %v2823 = vld [vmem:[%s2822] sm:$0x1]
        %v2825 = vlaneseq
        %v2826 = vshrl.u32 %v2825, 7
        %v2827 = vsub.s32 0, %v2826
        %v2828 = vrot.slane %v2823, %v2827
        %2830 = vmatprep.subr.mxu0 0.0
        %2831 = vmatpush1.msra.mxu0 %v2806
        %2832 = vmatprep.subr.mxu0 0.0
        %2833 = vmatpush1.msra.mxu0 %v2807
        %2834 = vmatprep.subr.mxu0 0.0
        %2835 = vmatpush1.msra.mxu0 %v2808
        %2836 = vmatprep.subr.mxu0 0.0
        %2837 = vmatpush1.msra.mxu0 %v2809
        %2838 = vmatprep.subr.mxu0 0.0
        %2839 = vmatpush1.msra.mxu0 %v2810
        %2840 = vmatprep.subr.mxu0 0.0
        %2841 = vmatpush1.msra.mxu0 %v2811
        %2842 = vmatprep.subr.mxu0 0.0
        %2843 = vmatpush1.msra.mxu0 %v2812
        %2844 = vmatprep.subr.mxu0 0.0
        %2845 = vmatpush1.msra.mxu0 %v2813
        %2846 = vmatprep.subr.mxu0 0.0
        %2847 = vmatpush1.msra.mxu0 %v2814
        %2848 = vmatprep.subr.mxu0 0.0
        %2849 = vmatpush1.msra.mxu0 %v2815
        %2850 = vmatprep.subr.mxu0 0.0
        %2851 = vmatpush1.msra.mxu0 %v2816
        %2852 = vmatprep.subr.mxu0 0.0
        %2853 = vmatpush1.msra.mxu0 %v2817
        %2854 = vmatprep.subr.mxu0 0.0
        %2855 = vmatpush1.msra.mxu0 %v2818
        %2856 = vmatprep.subr.mxu0 0.0
        %2857 = vmatpush1.msra.mxu0 %v2819
        %2858 = vmatprep.subr.mxu0 0.0
        %2859 = vmatpush1.msra.mxu0 %v2820
        %2860 = vmatprep.subr.mxu0 0.0
        %2861 = vmatpush1.msra.mxu0 %v2821
        %2862 = vmatprep.subr.mxu0 0.0
        %2863 = vmatpush1.msra.mxu0 0.0
        %2864 = vmatprep.subr.mxu0 0.0
        %2865 = vmatpush1.msra.mxu0 0.0
        %2866 = vmatprep.subr.mxu0 0.0
        %2867 = vmatpush1.msra.mxu0 0.0
        %2868 = vmatprep.subr.mxu0 0.0
        %2869 = vmatpush1.msra.mxu0 0.0
        %2870 = vmatprep.subr.mxu0 0.0
        %2871 = vmatpush1.msra.mxu0 0.0
        %2872 = vmatprep.subr.mxu0 0.0
        %2873 = vmatpush1.msra.mxu0 0.0
        %2874 = vmatprep.subr.mxu0 0.0
        %2875 = vmatpush1.msra.mxu0 0.0
        %2876 = vmatprep.subr.mxu0 0.0
        %2877 = vmatpush1.msra.mxu0 0.0
        %2878 = vmatprep.subr.mxu0 0.0
        %2879 = vmatpush1.msra.mxu0 0.0
        %2880 = vmatprep.subr.mxu0 0.0
        %2881 = vmatpush1.msra.mxu0 0.0
        %2882 = vmatprep.subr.mxu0 0.0
        %2883 = vmatpush1.msra.mxu0 0.0
        %2884 = vmatprep.subr.mxu0 0.0
        %2885 = vmatpush1.msra.mxu0 0.0
        %2886 = vmatprep.subr.mxu0 0.0
        %2887 = vmatpush1.msra.mxu0 0.0
        %2888 = vmatprep.subr.mxu0 0.0
        %2889 = vmatpush1.msra.mxu0 0.0
        %2890 = vmatprep.subr.mxu0 0.0
        %2891 = vmatpush1.msra.mxu0 0.0
        %2892 = vmatprep.subr.mxu0 0.0
        %2893 = vmatpush1.msra.mxu0 0.0
        %2894 = vmatprep.mubr.f32.mxu0 0.0
        %2895 = vmatmul.mubr.f32.gmra.mrb[0].mxu0 %v2614
        %v2896 = vpop.f32.mrb[0].mxu0
        %v2897 = vadd.f32 %v2828, %v2896
        %v2898 = vpop.f32.mrb[0].mxu0
        %2899 = vdwg.mxu0
        %v2901 = vsel %vm1321, %v2707, 0
        %v2904 = vsel %vm1321, %v2802, 0
        %2906 = vmatprep.subr.mxu0 0.0
        %2907 = vmatpush1.xpose.msra.mxu0 %v2904
        %2908 = vmatprep.subr.mxu0 0.0
        %2909 = vmatpush1.xpose.msra.mxu0 0.0
        %2910 = vmatprep.subr.mxu0 0.0
        %2911 = vmatpush1.xpose.msra.mxu0 0.0
        %2912 = vmatprep.subr.mxu0 0.0
        %2913 = vmatpush1.xpose.msra.mxu0 0.0
        %2914 = vmatprep.subr.mxu0 0.0
        %2915 = vmatpush1.xpose.msra.mxu0 0.0
        %2916 = vmatprep.subr.mxu0 0.0
        %2917 = vmatpush1.xpose.msra.mxu0 0.0
        %2918 = vmatprep.subr.mxu0 0.0
        %2919 = vmatpush1.xpose.msra.mxu0 0.0
        %2920 = vmatprep.subr.mxu0 0.0
        %2921 = vmatpush1.xpose.msra.mxu0 0.0
        %2922 = vmatprep.subr.mxu0 0.0
        %2923 = vmatpush1.xpose.msra.mxu0 0.0
        %2924 = vmatprep.subr.mxu0 0.0
        %2925 = vmatpush1.xpose.msra.mxu0 0.0
        %2926 = vmatprep.subr.mxu0 0.0
        %2927 = vmatpush1.xpose.msra.mxu0 0.0
        %2928 = vmatprep.subr.mxu0 0.0
        %2929 = vmatpush1.xpose.msra.mxu0 0.0
        %2930 = vmatprep.subr.mxu0 0.0
        %2931 = vmatpush1.xpose.msra.mxu0 0.0
        %2932 = vmatprep.subr.mxu0 0.0
        %2933 = vmatpush1.xpose.msra.mxu0 0.0
        %2934 = vmatprep.subr.mxu0 0.0
        %2935 = vmatpush1.xpose.msra.mxu0 0.0
        %2936 = vmatprep.subr.mxu0 0.0
        %2937 = vmatpush1.xpose.msra.mxu0 0.0
        %2938 = vmatprep.subr.mxu0 0.0
        %2939 = vmatpush1.xpose.msra.mxu0 0.0
        %2940 = vmatprep.subr.mxu0 0.0
        %2941 = vmatpush1.xpose.msra.mxu0 0.0
        %2942 = vmatprep.subr.mxu0 0.0
        %2943 = vmatpush1.xpose.msra.mxu0 0.0
        %2944 = vmatprep.subr.mxu0 0.0
        %2945 = vmatpush1.xpose.msra.mxu0 0.0
        %2946 = vmatprep.subr.mxu0 0.0
        %2947 = vmatpush1.xpose.msra.mxu0 0.0
        %2948 = vmatprep.subr.mxu0 0.0
        %2949 = vmatpush1.xpose.msra.mxu0 0.0
        %2950 = vmatprep.subr.mxu0 0.0
        %2951 = vmatpush1.xpose.msra.mxu0 0.0
        %2952 = vmatprep.subr.mxu0 0.0
        %2953 = vmatpush1.xpose.msra.mxu0 0.0
        %2954 = vmatprep.subr.mxu0 0.0
        %2955 = vmatpush1.xpose.msra.mxu0 0.0
        %2956 = vmatprep.subr.mxu0 0.0
        %2957 = vmatpush1.xpose.msra.mxu0 0.0
        %2958 = vmatprep.subr.mxu0 0.0
        %2959 = vmatpush1.xpose.msra.mxu0 0.0
        %2960 = vmatprep.subr.mxu0 0.0
        %2961 = vmatpush1.xpose.msra.mxu0 0.0
        %2962 = vmatprep.subr.mxu0 0.0
        %2963 = vmatpush1.xpose.msra.mxu0 0.0
        %2964 = vmatprep.subr.mxu0 0.0
        %2965 = vmatpush1.xpose.msra.mxu0 0.0
        %2966 = vmatprep.subr.mxu0 0.0
        %2967 = vmatpush1.xpose.msra.mxu0 0.0
        %2968 = vmatprep.subr.mxu0 0.0
        %2969 = vmatpush1.xpose.msra.mxu0 0.0
        %2970 = vmatprep.mubr.f32.mxu0 0.0
        %2971 = vmatmul.mubr.f32.gmra.mrb[0].mxu0 %v2901
        %v2972 = vpop.f32.mrb[0].mxu0
        %v2973 = vadd.f32 0.0, %v2972
        %v2974 = vpop.f32.mrb[0].mxu0
        %2975 = vdwg.mxu0
        %v2976 = vmul.f32 %v2973, 0.088388346
        %v2977 = vadd.f32 %v2976, %v1004
        %v2978 = vsel %vm1400, %v2977, -inf
        %2979 = vmax.xlane.f32.xlu0 %v2978
        %v2980 = vpop.xlane.xlu0 %2979
        %v2981 = vsub.f32 %v2977, %v2980
        %v2982 = vmul.f32 %v2981, 1.442695
        %v2983 = vpow.pop %v2982
        %v2984 = vsel %vm1400, %v2983, 0.0
        %2985 = vadd.xlane.f32.xlu0 %v2984
        %v2986 = vpop.xlane.xlu0 %2985
        %v2987 = vrcp.pop %v2986
        %v2988 = vmul.f32 %v2983, %v2987
        %v2990 = vsel %vm1400, %v2988, 0
        %2992 = vmatprep.subr.mxu0 0.0
        %2993 = vmatpush1.msra.mxu0 %v2897
        %2994 = vmatprep.subr.mxu0 0.0
        %2995 = vmatpush1.msra.mxu0 0.0
        %2996 = vmatprep.subr.mxu0 0.0
        %2997 = vmatpush1.msra.mxu0 0.0
        %2998 = vmatprep.subr.mxu0 0.0
        %2999 = vmatpush1.msra.mxu0 0.0
        %3000 = vmatprep.subr.mxu0 0.0
        %3001 = vmatpush1.msra.mxu0 0.0
        %3002 = vmatprep.subr.mxu0 0.0
        %3003 = vmatpush1.msra.mxu0 0.0
        %3004 = vmatprep.subr.mxu0 0.0
        %3005 = vmatpush1.msra.mxu0 0.0
        %3006 = vmatprep.subr.mxu0 0.0
        %3007 = vmatpush1.msra.mxu0 0.0
        %3008 = vmatprep.subr.mxu0 0.0
        %3009 = vmatpush1.msra.mxu0 0.0
        %3010 = vmatprep.subr.mxu0 0.0
        %3011 = vmatpush1.msra.mxu0 0.0
        %3012 = vmatprep.subr.mxu0 0.0
        %3013 = vmatpush1.msra.mxu0 0.0
        %3014 = vmatprep.subr.mxu0 0.0
        %3015 = vmatpush1.msra.mxu0 0.0
        %3016 = vmatprep.subr.mxu0 0.0
        %3017 = vmatpush1.msra.mxu0 0.0
        %3018 = vmatprep.subr.mxu0 0.0
        %3019 = vmatpush1.msra.mxu0 0.0
        %3020 = vmatprep.subr.mxu0 0.0
        %3021 = vmatpush1.msra.mxu0 0.0
        %3022 = vmatprep.subr.mxu0 0.0
        %3023 = vmatpush1.msra.mxu0 0.0
        %3024 = vmatprep.subr.mxu0 0.0
        %3025 = vmatpush1.msra.mxu0 0.0
        %3026 = vmatprep.subr.mxu0 0.0
        %3027 = vmatpush1.msra.mxu0 0.0
        %3028 = vmatprep.subr.mxu0 0.0
        %3029 = vmatpush1.msra.mxu0 0.0
        %3030 = vmatprep.subr.mxu0 0.0
        %3031 = vmatpush1.msra.mxu0 0.0
        %3032 = vmatprep.subr.mxu0 0.0
        %3033 = vmatpush1.msra.mxu0 0.0
        %3034 = vmatprep.subr.mxu0 0.0
        %3035 = vmatpush1.msra.mxu0 0.0
        %3036 = vmatprep.subr.mxu0 0.0
        %3037 = vmatpush1.msra.mxu0 0.0
        %3038 = vmatprep.subr.mxu0 0.0
        %3039 = vmatpush1.msra.mxu0 0.0
        %3040 = vmatprep.subr.mxu0 0.0
        %3041 = vmatpush1.msra.mxu0 0.0
        %3042 = vmatprep.subr.mxu0 0.0
        %3043 = vmatpush1.msra.mxu0 0.0
        %3044 = vmatprep.subr.mxu0 0.0
        %3045 = vmatpush1.msra.mxu0 0.0
        %3046 = vmatprep.subr.mxu0 0.0
        %3047 = vmatpush1.msra.mxu0 0.0
        %3048 = vmatprep.subr.mxu0 0.0
        %3049 = vmatpush1.msra.mxu0 0.0
        %3050 = vmatprep.subr.mxu0 0.0
        %3051 = vmatpush1.msra.mxu0 0.0
        %3052 = vmatprep.subr.mxu0 0.0
        %3053 = vmatpush1.msra.mxu0 0.0
        %3054 = vmatprep.subr.mxu0 0.0
        %3055 = vmatpush1.msra.mxu0 0.0
        %3056 = vmatprep.mubr.f32.mxu0 0.0
        %3057 = vmatmul.mubr.f32.gmra.mrb[0].mxu0 %v2990
        %v3058 = vpop.f32.mrb[0].mxu0
        %v3059 = vadd.f32 0.0, %v3058
        %v3060 = vpop.f32.mrb[0].mxu0
        %3061 = vdwg.mxu0
        %3062 = vrot.lane.b32.xlu0 %v2707, 96
        %v3063 = vpop.permute.xlu0 %3062
        %3064 = vrot.lane.b32.xlu0 %v2802, 96
        %v3065 = vpop.permute.xlu0 %3064
        %v3066 = vsel %vm1321, %v3063, 0
        %v3068 = vsel %vm1321, %v3065, 0
        %3070 = vmatprep.subr.mxu0 0.0
        %3071 = vmatpush1.xpose.msra.mxu0 %v3068
        %3072 = vmatprep.subr.mxu0 0.0
        %3073 = vmatpush1.xpose.msra.mxu0 0.0
        %3074 = vmatprep.subr.mxu0 0.0
        %3075 = vmatpush1.xpose.msra.mxu0 0.0
        %3076 = vmatprep.subr.mxu0 0.0
        %3077 = vmatpush1.xpose.msra.mxu0 0.0
        %3078 = vmatprep.subr.mxu0 0.0
        %3079 = vmatpush1.xpose.msra.mxu0 0.0
        %3080 = vmatprep.subr.mxu0 0.0
        %3081 = vmatpush1.xpose.msra.mxu0 0.0
        %3082 = vmatprep.subr.mxu0 0.0
        %3083 = vmatpush1.xpose.msra.mxu0 0.0
        %3084 = vmatprep.subr.mxu0 0.0
        %3085 = vmatpush1.xpose.msra.mxu0 0.0
        %3086 = vmatprep.subr.mxu0 0.0
        %3087 = vmatpush1.xpose.msra.mxu0 0.0
        %3088 = vmatprep.subr.mxu0 0.0
        %3089 = vmatpush1.xpose.msra.mxu0 0.0
        %3090 = vmatprep.subr.mxu0 0.0
        %3091 = vmatpush1.xpose.msra.mxu0 0.0
        %3092 = vmatprep.subr.mxu0 0.0
        %3093 = vmatpush1.xpose.msra.mxu0 0.0
        %3094 = vmatprep.subr.mxu0 0.0
        %3095 = vmatpush1.xpose.msra.mxu0 0.0
        %3096 = vmatprep.subr.mxu0 0.0
        %3097 = vmatpush1.xpose.msra.mxu0 0.0
        %3098 = vmatprep.subr.mxu0 0.0
        %3099 = vmatpush1.xpose.msra.mxu0 0.0
        %3100 = vmatprep.subr.mxu0 0.0
        %3101 = vmatpush1.xpose.msra.mxu0 0.0
        %3102 = vmatprep.subr.mxu0 0.0
        %3103 = vmatpush1.xpose.msra.mxu0 0.0
        %3104 = vmatprep.subr.mxu0 0.0
        %3105 = vmatpush1.xpose.msra.mxu0 0.0
        %3106 = vmatprep.subr.mxu0 0.0
        %3107 = vmatpush1.xpose.msra.mxu0 0.0
        %3108 = vmatprep.subr.mxu0 0.0
        %3109 = vmatpush1.xpose.msra.mxu0 0.0
        %3110 = vmatprep.subr.mxu0 0.0
        %3111 = vmatpush1.xpose.msra.mxu0 0.0
        %3112 = vmatprep.subr.mxu0 0.0
        %3113 = vmatpush1.xpose.msra.mxu0 0.0
        %3114 = vmatprep.subr.mxu0 0.0
        %3115 = vmatpush1.xpose.msra.mxu0 0.0
        %3116 = vmatprep.subr.mxu0 0.0
        %3117 = vmatpush1.xpose.msra.mxu0 0.0
        %3118 = vmatprep.subr.mxu0 0.0
        %3119 = vmatpush1.xpose.msra.mxu0 0.0
        %3120 = vmatprep.subr.mxu0 0.0
        %3121 = vmatpush1.xpose.msra.mxu0 0.0
        %3122 = vmatprep.subr.mxu0 0.0
        %3123 = vmatpush1.xpose.msra.mxu0 0.0
        %3124 = vmatprep.subr.mxu0 0.0
        %3125 = vmatpush1.xpose.msra.mxu0 0.0
        %3126 = vmatprep.subr.mxu0 0.0
        %3127 = vmatpush1.xpose.msra.mxu0 0.0
        %3128 = vmatprep.subr.mxu0 0.0
        %3129 = vmatpush1.xpose.msra.mxu0 0.0
        %3130 = vmatprep.subr.mxu0 0.0
        %3131 = vmatpush1.xpose.msra.mxu0 0.0
        %3132 = vmatprep.subr.mxu0 0.0
        %3133 = vmatpush1.xpose.msra.mxu0 0.0
        %3134 = vmatprep.mubr.f32.mxu0 0.0
        %3135 = vmatmul.mubr.f32.gmra.mrb[0].mxu0 %v3066
        %v3136 = vpop.f32.mrb[0].mxu0
        %v3137 = vadd.f32 0.0, %v3136
        %v3138 = vpop.f32.mrb[0].mxu0
        %3139 = vdwg.mxu0
        %v3140 = vmul.f32 %v3137, 0.088388346
        %v3141 = vadd.f32 %v3140, %v1004
        %v3142 = vsel %vm1400, %v3141, -inf
        %3143 = vmax.xlane.f32.xlu0 %v3142
        %v3144 = vpop.xlane.xlu0 %3143
        %v3145 = vsub.f32 %v3141, %v3144
        %v3146 = vmul.f32 %v3145, 1.442695
        %v3147 = vpow.pop %v3146
        %v3148 = vsel %vm1400, %v3147, 0.0
        %3149 = vadd.xlane.f32.xlu0 %v3148
        %v3150 = vpop.xlane.xlu0 %3149
        %v3151 = vrcp.pop %v3150
        %v3152 = vmul.f32 %v3147, %v3151
        %3154 = vrot.lane.b32.xlu0 %v2897, 96
        %v3155 = vpop.permute.xlu0 %3154
        %v3158 = vsel %vm1400, %v3152, 0
        %3160 = vmatprep.subr.mxu0 0.0
        %3161 = vmatpush1.msra.mxu0 %v3155
        %3162 = vmatprep.subr.mxu0 0.0
        %3163 = vmatpush1.msra.mxu0 0.0
        %3164 = vmatprep.subr.mxu0 0.0
        %3165 = vmatpush1.msra.mxu0 0.0
        %3166 = vmatprep.subr.mxu0 0.0
        %3167 = vmatpush1.msra.mxu0 0.0
        %3168 = vmatprep.subr.mxu0 0.0
        %3169 = vmatpush1.msra.mxu0 0.0
        %3170 = vmatprep.subr.mxu0 0.0
        %3171 = vmatpush1.msra.mxu0 0.0
        %3172 = vmatprep.subr.mxu0 0.0
        %3173 = vmatpush1.msra.mxu0 0.0
        %3174 = vmatprep.subr.mxu0 0.0
        %3175 = vmatpush1.msra.mxu0 0.0
        %3176 = vmatprep.subr.mxu0 0.0
        %3177 = vmatpush1.msra.mxu0 0.0
        %3178 = vmatprep.subr.mxu0 0.0
        %3179 = vmatpush1.msra.mxu0 0.0
        %3180 = vmatprep.subr.mxu0 0.0
        %3181 = vmatpush1.msra.mxu0 0.0
        %3182 = vmatprep.subr.mxu0 0.0
        %3183 = vmatpush1.msra.mxu0 0.0
        %3184 = vmatprep.subr.mxu0 0.0
        %3185 = vmatpush1.msra.mxu0 0.0
        %3186 = vmatprep.subr.mxu0 0.0
        %3187 = vmatpush1.msra.mxu0 0.0
        %3188 = vmatprep.subr.mxu0 0.0
        %3189 = vmatpush1.msra.mxu0 0.0
        %3190 = vmatprep.subr.mxu0 0.0
        %3191 = vmatpush1.msra.mxu0 0.0
        %3192 = vmatprep.subr.mxu0 0.0
        %3193 = vmatpush1.msra.mxu0 0.0
        %3194 = vmatprep.subr.mxu0 0.0
        %3195 = vmatpush1.msra.mxu0 0.0
        %3196 = vmatprep.subr.mxu0 0.0
        %3197 = vmatpush1.msra.mxu0 0.0
        %3198 = vmatprep.subr.mxu0 0.0
        %3199 = vmatpush1.msra.mxu0 0.0
        %3200 = vmatprep.subr.mxu0 0.0
        %3201 = vmatpush1.msra.mxu0 0.0
        %3202 = vmatprep.subr.mxu0 0.0
        %3203 = vmatpush1.msra.mxu0 0.0
        %3204 = vmatprep.subr.mxu0 0.0
        %3205 = vmatpush1.msra.mxu0 0.0
        %3206 = vmatprep.subr.mxu0 0.0
        %3207 = vmatpush1.msra.mxu0 0.0
        %3208 = vmatprep.subr.mxu0 0.0
        %3209 = vmatpush1.msra.mxu0 0.0
        %3210 = vmatprep.subr.mxu0 0.0
        %3211 = vmatpush1.msra.mxu0 0.0
        %3212 = vmatprep.subr.mxu0 0.0
        %3213 = vmatpush1.msra.mxu0 0.0
        %3214 = vmatprep.subr.mxu0 0.0
        %3215 = vmatpush1.msra.mxu0 0.0
        %3216 = vmatprep.subr.mxu0 0.0
        %3217 = vmatpush1.msra.mxu0 0.0
        %3218 = vmatprep.subr.mxu0 0.0
        %3219 = vmatpush1.msra.mxu0 0.0
        %3220 = vmatprep.subr.mxu0 0.0
        %3221 = vmatpush1.msra.mxu0 0.0
        %3222 = vmatprep.subr.mxu0 0.0
        %3223 = vmatpush1.msra.mxu0 0.0
        %3224 = vmatprep.mubr.f32.mxu0 0.0
        %3225 = vmatmul.mubr.f32.gmra.mrb[0].mxu0 %v3158
        %v3226 = vpop.f32.mrb[0].mxu0
        %v3227 = vadd.f32 0.0, %v3226
        %v3228 = vpop.f32.mrb[0].mxu0
        %3229 = vdwg.mxu0
        %3230 = vrot.lane.b32.xlu0 %v2707, 64
        %v3231 = vpop.permute.xlu0 %3230
        %3232 = vrot.lane.b32.xlu0 %v2802, 64
        %v3233 = vpop.permute.xlu0 %3232
        %v3234 = vsel %vm1321, %v3231, 0
        %v3236 = vsel %vm1321, %v3233, 0
        %3238 = vmatprep.subr.mxu0 0.0
        %3239 = vmatpush1.xpose.msra.mxu0 %v3236
        %3240 = vmatprep.subr.mxu0 0.0
        %3241 = vmatpush1.xpose.msra.mxu0 0.0
        %3242 = vmatprep.subr.mxu0 0.0
        %3243 = vmatpush1.xpose.msra.mxu0 0.0
        %3244 = vmatprep.subr.mxu0 0.0
        %3245 = vmatpush1.xpose.msra.mxu0 0.0
        %3246 = vmatprep.subr.mxu0 0.0
        %3247 = vmatpush1.xpose.msra.mxu0 0.0
        %3248 = vmatprep.subr.mxu0 0.0
        %3249 = vmatpush1.xpose.msra.mxu0 0.0
        %3250 = vmatprep.subr.mxu0 0.0
        %3251 = vmatpush1.xpose.msra.mxu0 0.0
        %3252 = vmatprep.subr.mxu0 0.0
        %3253 = vmatpush1.xpose.msra.mxu0 0.0
        %3254 = vmatprep.subr.mxu0 0.0
        %3255 = vmatpush1.xpose.msra.mxu0 0.0
        %3256 = vmatprep.subr.mxu0 0.0
        %3257 = vmatpush1.xpose.msra.mxu0 0.0
        %3258 = vmatprep.subr.mxu0 0.0
        %3259 = vmatpush1.xpose.msra.mxu0 0.0
        %3260 = vmatprep.subr.mxu0 0.0
        %3261 = vmatpush1.xpose.msra.mxu0 0.0
        %3262 = vmatprep.subr.mxu0 0.0
        %3263 = vmatpush1.xpose.msra.mxu0 0.0
        %3264 = vmatprep.subr.mxu0 0.0
        %3265 = vmatpush1.xpose.msra.mxu0 0.0
        %3266 = vmatprep.subr.mxu0 0.0
        %3267 = vmatpush1.xpose.msra.mxu0 0.0
        %3268 = vmatprep.subr.mxu0 0.0
        %3269 = vmatpush1.xpose.msra.mxu0 0.0
        %3270 = vmatprep.subr.mxu0 0.0
        %3271 = vmatpush1.xpose.msra.mxu0 0.0
        %3272 = vmatprep.subr.mxu0 0.0
        %3273 = vmatpush1.xpose.msra.mxu0 0.0
        %3274 = vmatprep.subr.mxu0 0.0
        %3275 = vmatpush1.xpose.msra.mxu0 0.0
        %3276 = vmatprep.subr.mxu0 0.0
        %3277 = vmatpush1.xpose.msra.mxu0 0.0
        %3278 = vmatprep.subr.mxu0 0.0
        %3279 = vmatpush1.xpose.msra.mxu0 0.0
        %3280 = vmatprep.subr.mxu0 0.0
        %3281 = vmatpush1.xpose.msra.mxu0 0.0
        %3282 = vmatprep.subr.mxu0 0.0
        %3283 = vmatpush1.xpose.msra.mxu0 0.0
        %3284 = vmatprep.subr.mxu0 0.0
        %3285 = vmatpush1.xpose.msra.mxu0 0.0
        %3286 = vmatprep.subr.mxu0 0.0
        %3287 = vmatpush1.xpose.msra.mxu0 0.0
        %3288 = vmatprep.subr.mxu0 0.0
        %3289 = vmatpush1.xpose.msra.mxu0 0.0
        %3290 = vmatprep.subr.mxu0 0.0
        %3291 = vmatpush1.xpose.msra.mxu0 0.0
        %3292 = vmatprep.subr.mxu0 0.0
        %3293 = vmatpush1.xpose.msra.mxu0 0.0
        %3294 = vmatprep.subr.mxu0 0.0
        %3295 = vmatpush1.xpose.msra.mxu0 0.0
        %3296 = vmatprep.subr.mxu0 0.0
        %3297 = vmatpush1.xpose.msra.mxu0 0.0
        %3298 = vmatprep.subr.mxu0 0.0
        %3299 = vmatpush1.xpose.msra.mxu0 0.0
        %3300 = vmatprep.subr.mxu0 0.0
        %3301 = vmatpush1.xpose.msra.mxu0 0.0
        %3302 = vmatprep.mubr.f32.mxu0 0.0
        %3303 = vmatmul.mubr.f32.gmra.mrb[0].mxu0 %v3234
        %v3304 = vpop.f32.mrb[0].mxu0
        %v3305 = vadd.f32 0.0, %v3304
        %v3306 = vpop.f32.mrb[0].mxu0
        %3307 = vdwg.mxu0
        %v3308 = vmul.f32 %v3305, 0.088388346
        %v3309 = vadd.f32 %v3308, %v1004
        %v3310 = vsel %vm1400, %v3309, -inf
        %3311 = vmax.xlane.f32.xlu0 %v3310
        %v3312 = vpop.xlane.xlu0 %3311
        %v3313 = vsub.f32 %v3309, %v3312
        %v3314 = vmul.f32 %v3313, 1.442695
        %v3315 = vpow.pop %v3314
        %v3316 = vsel %vm1400, %v3315, 0.0
        %3317 = vadd.xlane.f32.xlu0 %v3316
        %v3318 = vpop.xlane.xlu0 %3317
        %v3319 = vrcp.pop %v3318
        %v3320 = vmul.f32 %v3315, %v3319
        %3321 = vrot.lane.b32.xlu0 %v2897, 64
        %v3322 = vpop.permute.xlu0 %3321
        %v3325 = vsel %vm1400, %v3320, 0
        %3327 = vmatprep.subr.mxu0 0.0
        %3328 = vmatpush1.msra.mxu0 %v3322
        %3329 = vmatprep.subr.mxu0 0.0
        %3330 = vmatpush1.msra.mxu0 0.0
        %3331 = vmatprep.subr.mxu0 0.0
        %3332 = vmatpush1.msra.mxu0 0.0
        %3333 = vmatprep.subr.mxu0 0.0
        %3334 = vmatpush1.msra.mxu0 0.0
        %3335 = vmatprep.subr.mxu0 0.0
        %3336 = vmatpush1.msra.mxu0 0.0
        %3337 = vmatprep.subr.mxu0 0.0
        %3338 = vmatpush1.msra.mxu0 0.0
        %3339 = vmatprep.subr.mxu0 0.0
        %3340 = vmatpush1.msra.mxu0 0.0
        %3341 = vmatprep.subr.mxu0 0.0
        %3342 = vmatpush1.msra.mxu0 0.0
        %3343 = vmatprep.subr.mxu0 0.0
        %3344 = vmatpush1.msra.mxu0 0.0
        %3345 = vmatprep.subr.mxu0 0.0
        %3346 = vmatpush1.msra.mxu0 0.0
        %3347 = vmatprep.subr.mxu0 0.0
        %3348 = vmatpush1.msra.mxu0 0.0
        %3349 = vmatprep.subr.mxu0 0.0
        %3350 = vmatpush1.msra.mxu0 0.0
        %3351 = vmatprep.subr.mxu0 0.0
        %3352 = vmatpush1.msra.mxu0 0.0
        %3353 = vmatprep.subr.mxu0 0.0
        %3354 = vmatpush1.msra.mxu0 0.0
        %3355 = vmatprep.subr.mxu0 0.0
        %3356 = vmatpush1.msra.mxu0 0.0
        %3357 = vmatprep.subr.mxu0 0.0
        %3358 = vmatpush1.msra.mxu0 0.0
        %3359 = vmatprep.subr.mxu0 0.0
        %3360 = vmatpush1.msra.mxu0 0.0
        %3361 = vmatprep.subr.mxu0 0.0
        %3362 = vmatpush1.msra.mxu0 0.0
        %3363 = vmatprep.subr.mxu0 0.0
        %3364 = vmatpush1.msra.mxu0 0.0
        %3365 = vmatprep.subr.mxu0 0.0
        %3366 = vmatpush1.msra.mxu0 0.0
        %3367 = vmatprep.subr.mxu0 0.0
        %3368 = vmatpush1.msra.mxu0 0.0
        %3369 = vmatprep.subr.mxu0 0.0
        %3370 = vmatpush1.msra.mxu0 0.0
        %3371 = vmatprep.subr.mxu0 0.0
        %3372 = vmatpush1.msra.mxu0 0.0
        %3373 = vmatprep.subr.mxu0 0.0
        %3374 = vmatpush1.msra.mxu0 0.0
        %3375 = vmatprep.subr.mxu0 0.0
        %3376 = vmatpush1.msra.mxu0 0.0
        %3377 = vmatprep.subr.mxu0 0.0
        %3378 = vmatpush1.msra.mxu0 0.0
        %3379 = vmatprep.subr.mxu0 0.0
        %3380 = vmatpush1.msra.mxu0 0.0
        %3381 = vmatprep.subr.mxu0 0.0
        %3382 = vmatpush1.msra.mxu0 0.0
        %3383 = vmatprep.subr.mxu0 0.0
        %3384 = vmatpush1.msra.mxu0 0.0
        %3385 = vmatprep.subr.mxu0 0.0
        %3386 = vmatpush1.msra.mxu0 0.0
        %3387 = vmatprep.subr.mxu0 0.0
        %3388 = vmatpush1.msra.mxu0 0.0
        %3389 = vmatprep.subr.mxu0 0.0
        %3390 = vmatpush1.msra.mxu0 0.0
        %3391 = vmatprep.mubr.f32.mxu0 0.0
        %3392 = vmatmul.mubr.f32.gmra.mrb[0].mxu0 %v3325
        %v3393 = vpop.f32.mrb[0].mxu0
        %v3394 = vadd.f32 0.0, %v3393
        %v3395 = vpop.f32.mrb[0].mxu0
        %3396 = vdwg.mxu0
        %3397 = vrot.lane.b32.xlu0 %v2707, 32
        %v3398 = vpop.permute.xlu0 %3397
        %3399 = vrot.lane.b32.xlu0 %v2802, 32
        %v3400 = vpop.permute.xlu0 %3399
        %v3401 = vsel %vm1321, %v3398, 0
        %v3403 = vsel %vm1321, %v3400, 0
        %3405 = vmatprep.subr.mxu0 0.0
        %3406 = vmatpush1.xpose.msra.mxu0 %v3403
        %3407 = vmatprep.subr.mxu0 0.0
        %3408 = vmatpush1.xpose.msra.mxu0 0.0
        %3409 = vmatprep.subr.mxu0 0.0
        %3410 = vmatpush1.xpose.msra.mxu0 0.0
        %3411 = vmatprep.subr.mxu0 0.0
        %3412 = vmatpush1.xpose.msra.mxu0 0.0
        %3413 = vmatprep.subr.mxu0 0.0
        %3414 = vmatpush1.xpose.msra.mxu0 0.0
        %3415 = vmatprep.subr.mxu0 0.0
        %3416 = vmatpush1.xpose.msra.mxu0 0.0
        %3417 = vmatprep.subr.mxu0 0.0
        %3418 = vmatpush1.xpose.msra.mxu0 0.0
        %3419 = vmatprep.subr.mxu0 0.0
        %3420 = vmatpush1.xpose.msra.mxu0 0.0
        %3421 = vmatprep.subr.mxu0 0.0
        %3422 = vmatpush1.xpose.msra.mxu0 0.0
        %3423 = vmatprep.subr.mxu0 0.0
        %3424 = vmatpush1.xpose.msra.mxu0 0.0
        %3425 = vmatprep.subr.mxu0 0.0
        %3426 = vmatpush1.xpose.msra.mxu0 0.0
        %3427 = vmatprep.subr.mxu0 0.0
        %3428 = vmatpush1.xpose.msra.mxu0 0.0
        %3429 = vmatprep.subr.mxu0 0.0
        %3430 = vmatpush1.xpose.msra.mxu0 0.0
        %3431 = vmatprep.subr.mxu0 0.0
        %3432 = vmatpush1.xpose.msra.mxu0 0.0
        %3433 = vmatprep.subr.mxu0 0.0
        %3434 = vmatpush1.xpose.msra.mxu0 0.0
        %3435 = vmatprep.subr.mxu0 0.0
        %3436 = vmatpush1.xpose.msra.mxu0 0.0
        %3437 = vmatprep.subr.mxu0 0.0
        %3438 = vmatpush1.xpose.msra.mxu0 0.0
        %3439 = vmatprep.subr.mxu0 0.0
        %3440 = vmatpush1.xpose.msra.mxu0 0.0
        %3441 = vmatprep.subr.mxu0 0.0
        %3442 = vmatpush1.xpose.msra.mxu0 0.0
        %3443 = vmatprep.subr.mxu0 0.0
        %3444 = vmatpush1.xpose.msra.mxu0 0.0
        %3445 = vmatprep.subr.mxu0 0.0
        %3446 = vmatpush1.xpose.msra.mxu0 0.0
        %3447 = vmatprep.subr.mxu0 0.0
        %3448 = vmatpush1.xpose.msra.mxu0 0.0
        %3449 = vmatprep.subr.mxu0 0.0
        %3450 = vmatpush1.xpose.msra.mxu0 0.0
        %3451 = vmatprep.subr.mxu0 0.0
        %3452 = vmatpush1.xpose.msra.mxu0 0.0
        %3453 = vmatprep.subr.mxu0 0.0
        %3454 = vmatpush1.xpose.msra.mxu0 0.0
        %3455 = vmatprep.subr.mxu0 0.0
        %3456 = vmatpush1.xpose.msra.mxu0 0.0
        %3457 = vmatprep.subr.mxu0 0.0
        %3458 = vmatpush1.xpose.msra.mxu0 0.0
        %3459 = vmatprep.subr.mxu0 0.0
        %3460 = vmatpush1.xpose.msra.mxu0 0.0
        %3461 = vmatprep.subr.mxu0 0.0
        %3462 = vmatpush1.xpose.msra.mxu0 0.0
        %3463 = vmatprep.subr.mxu0 0.0
        %3464 = vmatpush1.xpose.msra.mxu0 0.0
        %3465 = vmatprep.subr.mxu0 0.0
        %3466 = vmatpush1.xpose.msra.mxu0 0.0
        %3467 = vmatprep.subr.mxu0 0.0
        %3468 = vmatpush1.xpose.msra.mxu0 0.0
        %3469 = vmatprep.mubr.f32.mxu0 0.0
        %3470 = vmatmul.mubr.f32.gmra.mrb[0].mxu0 %v3401
        %v3471 = vpop.f32.mrb[0].mxu0
        %v3472 = vadd.f32 0.0, %v3471
        %v3473 = vpop.f32.mrb[0].mxu0
        %3474 = vdwg.mxu0
        %v3475 = vmul.f32 %v3472, 0.088388346
        %v3476 = vadd.f32 %v3475, %v1004
        %v3477 = vsel %vm1400, %v3476, -inf
        %3478 = vmax.xlane.f32.xlu0 %v3477
        %v3479 = vpop.xlane.xlu0 %3478
        %v3480 = vsub.f32 %v3476, %v3479
        %v3481 = vmul.f32 %v3480, 1.442695
        %v3482 = vpow.pop %v3481
        %v3483 = vsel %vm1400, %v3482, 0.0
        %3484 = vadd.xlane.f32.xlu0 %v3483
        %v3485 = vpop.xlane.xlu0 %3484
        %v3486 = vrcp.pop %v3485
        %v3487 = vmul.f32 %v3482, %v3486
        %3488 = vrot.lane.b32.xlu0 %v2897, 32
        %v3489 = vpop.permute.xlu0 %3488
        %v3492 = vsel %vm1400, %v3487, 0
        %3494 = vmatprep.subr.mxu0 0.0
        %3495 = vmatpush1.msra.mxu0 %v3489
        %3496 = vmatprep.subr.mxu0 0.0
        %3497 = vmatpush1.msra.mxu0 0.0
        %3498 = vmatprep.subr.mxu0 0.0
        %3499 = vmatpush1.msra.mxu0 0.0
        %3500 = vmatprep.subr.mxu0 0.0
        %3501 = vmatpush1.msra.mxu0 0.0
        %3502 = vmatprep.subr.mxu0 0.0
        %3503 = vmatpush1.msra.mxu0 0.0
        %3504 = vmatprep.subr.mxu0 0.0
        %3505 = vmatpush1.msra.mxu0 0.0
        %3506 = vmatprep.subr.mxu0 0.0
        %3507 = vmatpush1.msra.mxu0 0.0
        %3508 = vmatprep.subr.mxu0 0.0
        %3509 = vmatpush1.msra.mxu0 0.0
        %3510 = vmatprep.subr.mxu0 0.0
        %3511 = vmatpush1.msra.mxu0 0.0
        %3512 = vmatprep.subr.mxu0 0.0
        %3513 = vmatpush1.msra.mxu0 0.0
        %3514 = vmatprep.subr.mxu0 0.0
        %3515 = vmatpush1.msra.mxu0 0.0
        %3516 = vmatprep.subr.mxu0 0.0
        %3517 = vmatpush1.msra.mxu0 0.0
        %3518 = vmatprep.subr.mxu0 0.0
        %3519 = vmatpush1.msra.mxu0 0.0
        %3520 = vmatprep.subr.mxu0 0.0
        %3521 = vmatpush1.msra.mxu0 0.0
        %3522 = vmatprep.subr.mxu0 0.0
        %3523 = vmatpush1.msra.mxu0 0.0
        %3524 = vmatprep.subr.mxu0 0.0
        %3525 = vmatpush1.msra.mxu0 0.0
        %3526 = vmatprep.subr.mxu0 0.0
        %3527 = vmatpush1.msra.mxu0 0.0
        %3528 = vmatprep.subr.mxu0 0.0
        %3529 = vmatpush1.msra.mxu0 0.0
        %3530 = vmatprep.subr.mxu0 0.0
        %3531 = vmatpush1.msra.mxu0 0.0
        %3532 = vmatprep.subr.mxu0 0.0
        %3533 = vmatpush1.msra.mxu0 0.0
        %3534 = vmatprep.subr.mxu0 0.0
        %3535 = vmatpush1.msra.mxu0 0.0
        %3536 = vmatprep.subr.mxu0 0.0
        %3537 = vmatpush1.msra.mxu0 0.0
        %3538 = vmatprep.subr.mxu0 0.0
        %3539 = vmatpush1.msra.mxu0 0.0
        %3540 = vmatprep.subr.mxu0 0.0
        %3541 = vmatpush1.msra.mxu0 0.0
        %3542 = vmatprep.subr.mxu0 0.0
        %3543 = vmatpush1.msra.mxu0 0.0
        %3544 = vmatprep.subr.mxu0 0.0
        %3545 = vmatpush1.msra.mxu0 0.0
        %3546 = vmatprep.subr.mxu0 0.0
        %3547 = vmatpush1.msra.mxu0 0.0
        %3548 = vmatprep.subr.mxu0 0.0
        %3549 = vmatpush1.msra.mxu0 0.0
        %3550 = vmatprep.subr.mxu0 0.0
        %3551 = vmatpush1.msra.mxu0 0.0
        %3552 = vmatprep.subr.mxu0 0.0
        %3553 = vmatpush1.msra.mxu0 0.0
        %3554 = vmatprep.subr.mxu0 0.0
        %3555 = vmatpush1.msra.mxu0 0.0
        %3556 = vmatprep.subr.mxu0 0.0
        %3557 = vmatpush1.msra.mxu0 0.0
        %3558 = vmatprep.mubr.f32.mxu0 0.0
        %3559 = vmatmul.mubr.f32.gmra.mrb[0].mxu0 %v3492
        %v3560 = vpop.f32.mrb[0].mxu0
        %v3561 = vadd.f32 0.0, %v3560
        %v3562 = vpop.f32.mrb[0].mxu0
        %3563 = vdwg.mxu0
        %3565 = vrot.lane.b32.xlu0 %v3227, 32
        %v3566 = vpop.permute.xlu0 %3565
        %3569 = vrot.lane.b32.xlu0 %v3394, 64
        %v3570 = vpop.permute.xlu0 %3569
        %3573 = vrot.lane.b32.xlu0 %v3561, 96
        %v3574 = vpop.permute.xlu0 %3573
        %v3576 = vsel %vm1321, %v3059, %v3566
        %v3577 = vsel %vm2000, %v3576, %v3570
        %v3578 = vsel %vm2002, %v3577, %v3574
        %s3579 = scalar_lea.vmem [#allocation10], 128
        %v3580 = vld [vmem:[%s3579] sm:$0xff]
        %v3581 = vld [vmem:[%s3579 + $0x8] sm:$0xff]
        %v3582 = vld [vmem:[%s3579 + $0x10] sm:$0xff]
        %v3583 = vld [vmem:[%s3579 + $0x18] sm:$0xff]
        %v3584 = vld [vmem:[%s3579 + $0x20] sm:$0xff]
        %v3585 = vld [vmem:[%s3579 + $0x28] sm:$0xff]
        %v3586 = vld [vmem:[%s3579 + $0x30] sm:$0xff]
        %v3587 = vld [vmem:[%s3579 + $0x38] sm:$0xff]
        %v3588 = vld [vmem:[%s3579 + $0x40] sm:$0xff]
        %v3589 = vld [vmem:[%s3579 + $0x48] sm:$0xff]
        %v3590 = vld [vmem:[%s3579 + $0x50] sm:$0xff]
        %v3591 = vld [vmem:[%s3579 + $0x58] sm:$0xff]
        %v3592 = vld [vmem:[%s3579 + $0x60] sm:$0xff]
        %v3593 = vld [vmem:[%s3579 + $0x68] sm:$0xff]
        %v3594 = vld [vmem:[%s3579 + $0x70] sm:$0xff]
        %v3595 = vld [vmem:[%s3579 + $0x78] sm:$0xff]
        %3596 = vmatprep.subr.mxu0 0.0
        %3597 = vmatpush1.msra.mxu0 %v3580
        %3598 = vmatprep.subr.mxu0 0.0
        %3599 = vmatpush1.msra.mxu0 %v3581
        %3600 = vmatprep.subr.mxu0 0.0
        %3601 = vmatpush1.msra.mxu0 %v3582
        %3602 = vmatprep.subr.mxu0 0.0
        %3603 = vmatpush1.msra.mxu0 %v3583
        %3604 = vmatprep.subr.mxu0 0.0
        %3605 = vmatpush1.msra.mxu0 %v3584
        %3606 = vmatprep.subr.mxu0 0.0
        %3607 = vmatpush1.msra.mxu0 %v3585
        %3608 = vmatprep.subr.mxu0 0.0
        %3609 = vmatpush1.msra.mxu0 %v3586
        %3610 = vmatprep.subr.mxu0 0.0
        %3611 = vmatpush1.msra.mxu0 %v3587
        %3612 = vmatprep.subr.mxu0 0.0
        %3613 = vmatpush1.msra.mxu0 %v3588
        %3614 = vmatprep.subr.mxu0 0.0
        %3615 = vmatpush1.msra.mxu0 %v3589
        %3616 = vmatprep.subr.mxu0 0.0
        %3617 = vmatpush1.msra.mxu0 %v3590
        %3618 = vmatprep.subr.mxu0 0.0
        %3619 = vmatpush1.msra.mxu0 %v3591
        %3620 = vmatprep.subr.mxu0 0.0
        %3621 = vmatpush1.msra.mxu0 %v3592
        %3622 = vmatprep.subr.mxu0 0.0
        %3623 = vmatpush1.msra.mxu0 %v3593
        %3624 = vmatprep.subr.mxu0 0.0
        %3625 = vmatpush1.msra.mxu0 %v3594
        %3626 = vmatprep.subr.mxu0 0.0
        %3627 = vmatpush1.msra.mxu0 %v3595
        %3628 = vmatprep.subr.mxu0 0.0
        %3629 = vmatpush1.msra.mxu0 0.0
        %3630 = vmatprep.subr.mxu0 0.0
        %3631 = vmatpush1.msra.mxu0 0.0
        %3632 = vmatprep.subr.mxu0 0.0
        %3633 = vmatpush1.msra.mxu0 0.0
        %3634 = vmatprep.subr.mxu0 0.0
        %3635 = vmatpush1.msra.mxu0 0.0
        %3636 = vmatprep.subr.mxu0 0.0
        %3637 = vmatpush1.msra.mxu0 0.0
        %3638 = vmatprep.subr.mxu0 0.0
        %3639 = vmatpush1.msra.mxu0 0.0
        %3640 = vmatprep.subr.mxu0 0.0
        %3641 = vmatpush1.msra.mxu0 0.0
        %3642 = vmatprep.subr.mxu0 0.0
        %3643 = vmatpush1.msra.mxu0 0.0
        %3644 = vmatprep.subr.mxu0 0.0
        %3645 = vmatpush1.msra.mxu0 0.0
        %3646 = vmatprep.subr.mxu0 0.0
        %3647 = vmatpush1.msra.mxu0 0.0
        %3648 = vmatprep.subr.mxu0 0.0
        %3649 = vmatpush1.msra.mxu0 0.0
        %3650 = vmatprep.subr.mxu0 0.0
        %3651 = vmatpush1.msra.mxu0 0.0
        %3652 = vmatprep.subr.mxu0 0.0
        %3653 = vmatpush1.msra.mxu0 0.0
        %3654 = vmatprep.subr.mxu0 0.0
        %3655 = vmatpush1.msra.mxu0 0.0
        %3656 = vmatprep.subr.mxu0 0.0
        %3657 = vmatpush1.msra.mxu0 0.0
        %3658 = vmatprep.subr.mxu0 0.0
        %3659 = vmatpush1.msra.mxu0 0.0
        %3660 = vmatprep.mubr.f32.mxu0 0.0
        %3661 = vmatmul.mubr.f32.gmra.mrb[0].mxu0 %v3578
        %v3662 = vpop.f32.mrb[0].mxu0
        %v3663 = vadd.f32 0.0, %v3662
        %v3664 = vpop.f32.mrb[0].mxu0
        %3665 = vdwg.mxu0
        %v3666 = vadd.f32 %v2577, %v3663
        %s3667 = scalar_lea.vmem %s12, 1
        %v3668 = vld [vmem:[%s3667] sm:$0x1]
        %v3670 = vlaneseq
        %v3671 = vshrl.u32 %v3670, 7
        %v3672 = vsub.s32 0, %v3671
        %v3673 = vrot.slane %v3668, %v3672
        %v3675 = vadd.f32 %v3666, %v3673
        %s3676 = scalar_lea.vmem %s13, 1
        %v3677 = vld [vmem:[%s3676] sm:$0x1]
        %s3678 = scalar_lea.vmem %s14, 1
        %v3679 = vld [vmem:[%s3678] sm:$0x1]
        %v3680 = vrot.slane %v3675, 4
        %v3681 = vadd.f32 %v3675, %v3680
        %v3682 = vrot.slane %v3681, 2
        %v3683 = vadd.f32 %v3681, %v3682
        %v3684 = vrot.slane %v3683, 1
        %v3685 = vadd.f32 %v3683, %v3684
        %v3686 = vmul.f32 %v3685, %v1013
        %v3687 = vsub.f32 %v3675, %v3686
        %v3688 = vmul.f32 %v3687, %v3687
        %v3689 = vrot.slane %v3688, 4
        %v3690 = vadd.f32 %v3688, %v3689
        %v3691 = vrot.slane %v3690, 2
        %v3692 = vadd.f32 %v3690, %v3691
        %v3693 = vrot.slane %v3692, 1
        %v3694 = vadd.f32 %v3692, %v3693
        %v3695 = vmul.f32 %v3694, %v1023
        %v3696 = vadd.f32 %v3695, 1e-05
        %v3697 = vrsqrt.pop %v3696
        %v3698 = vmul.f32 %v3687, %v3697
        %v3700 = vlaneseq
        %v3701 = vshrl.u32 %v3700, 7
        %v3702 = vsub.s32 0, %v3701
        %v3703 = vrot.slane %v3677, %v3702
        %v3705 = vmul.f32 %v3703, %v3698
        %v3707 = vlaneseq
        %v3708 = vshrl.u32 %v3707, 7
        %v3709 = vsub.s32 0, %v3708
        %v3710 = vrot.slane %v3679, %v3709
        %v3712 = vadd.f32 %v3705, %v3710
        %s3713 = scalar_lea.vmem [#allocation11], 512
        %v3714 = vld [vmem:[%s3713] sm:$0xff]
        %v3715 = vld [vmem:[%s3713 + $0x8] sm:$0xff]
        %v3716 = vld [vmem:[%s3713 + $0x10] sm:$0xff]
        %v3717 = vld [vmem:[%s3713 + $0x18] sm:$0xff]
        %v3718 = vld [vmem:[%s3713 + $0x20] sm:$0xff]
        %v3719 = vld [vmem:[%s3713 + $0x28] sm:$0xff]
        %v3720 = vld [vmem:[%s3713 + $0x30] sm:$0xff]
        %v3721 = vld [vmem:[%s3713 + $0x38] sm:$0xff]
        %v3722 = vld [vmem:[%s3713 + $0x40] sm:$0xff]
        %v3723 = vld [vmem:[%s3713 + $0x48] sm:$0xff]
        %v3724 = vld [vmem:[%s3713 + $0x50] sm:$0xff]
        %v3725 = vld [vmem:[%s3713 + $0x58] sm:$0xff]
        %v3726 = vld [vmem:[%s3713 + $0x60] sm:$0xff]
        %v3727 = vld [vmem:[%s3713 + $0x68] sm:$0xff]
        %v3728 = vld [vmem:[%s3713 + $0x70] sm:$0xff]
        %v3729 = vld [vmem:[%s3713 + $0x78] sm:$0xff]
        %v3730 = vld [vmem:[%s3713 + $0x80] sm:$0xff]
        %v3731 = vld [vmem:[%s3713 + $0x88] sm:$0xff]
        %v3732 = vld [vmem:[%s3713 + $0x90] sm:$0xff]
        %v3733 = vld [vmem:[%s3713 + $0x98] sm:$0xff]
        %v3734 = vld [vmem:[%s3713 + $0xa0] sm:$0xff]
        %v3735 = vld [vmem:[%s3713 + $0xa8] sm:$0xff]
        %v3736 = vld [vmem:[%s3713 + $0xb0] sm:$0xff]
        %v3737 = vld [vmem:[%s3713 + $0xb8] sm:$0xff]
        %v3738 = vld [vmem:[%s3713 + $0xc0] sm:$0xff]
        %v3739 = vld [vmem:[%s3713 + $0xc8] sm:$0xff]
        %v3740 = vld [vmem:[%s3713 + $0xd0] sm:$0xff]
        %v3741 = vld [vmem:[%s3713 + $0xd8] sm:$0xff]
        %v3742 = vld [vmem:[%s3713 + $0xe0] sm:$0xff]
        %v3743 = vld [vmem:[%s3713 + $0xe8] sm:$0xff]
        %v3744 = vld [vmem:[%s3713 + $0xf0] sm:$0xff]
        %v3745 = vld [vmem:[%s3713 + $0xf8] sm:$0xff]
        %v3746 = vld [vmem:[%s3713 + $0x100] sm:$0xff]
        %v3747 = vld [vmem:[%s3713 + $0x108] sm:$0xff]
        %v3748 = vld [vmem:[%s3713 + $0x110] sm:$0xff]
        %v3749 = vld [vmem:[%s3713 + $0x118] sm:$0xff]
        %v3750 = vld [vmem:[%s3713 + $0x120] sm:$0xff]
        %v3751 = vld [vmem:[%s3713 + $0x128] sm:$0xff]
        %v3752 = vld [vmem:[%s3713 + $0x130] sm:$0xff]
        %v3753 = vld [vmem:[%s3713 + $0x138] sm:$0xff]
        %v3754 = vld [vmem:[%s3713 + $0x140] sm:$0xff]
        %v3755 = vld [vmem:[%s3713 + $0x148] sm:$0xff]
        %v3756 = vld [vmem:[%s3713 + $0x150] sm:$0xff]
        %v3757 = vld [vmem:[%s3713 + $0x158] sm:$0xff]
        %v3758 = vld [vmem:[%s3713 + $0x160] sm:$0xff]
        %v3759 = vld [vmem:[%s3713 + $0x168] sm:$0xff]
        %v3760 = vld [vmem:[%s3713 + $0x170] sm:$0xff]
        %v3761 = vld [vmem:[%s3713 + $0x178] sm:$0xff]
        %v3762 = vld [vmem:[%s3713 + $0x180] sm:$0xff]
        %v3763 = vld [vmem:[%s3713 + $0x188] sm:$0xff]
        %v3764 = vld [vmem:[%s3713 + $0x190] sm:$0xff]
        %v3765 = vld [vmem:[%s3713 + $0x198] sm:$0xff]
        %v3766 = vld [vmem:[%s3713 + $0x1a0] sm:$0xff]
        %v3767 = vld [vmem:[%s3713 + $0x1a8] sm:$0xff]
        %v3768 = vld [vmem:[%s3713 + $0x1b0] sm:$0xff]
        %v3769 = vld [vmem:[%s3713 + $0x1b8] sm:$0xff]
        %v3770 = vld [vmem:[%s3713 + $0x1c0] sm:$0xff]
        %v3771 = vld [vmem:[%s3713 + $0x1c8] sm:$0xff]
        %v3772 = vld [vmem:[%s3713 + $0x1d0] sm:$0xff]
        %v3773 = vld [vmem:[%s3713 + $0x1d8] sm:$0xff]
        %v3774 = vld [vmem:[%s3713 + $0x1e0] sm:$0xff]
        %v3775 = vld [vmem:[%s3713 + $0x1e8] sm:$0xff]
        %v3776 = vld [vmem:[%s3713 + $0x1f0] sm:$0xff]
        %v3777 = vld [vmem:[%s3713 + $0x1f8] sm:$0xff]
        %s3778 = scalar_lea.vmem %s16, 4
        %v3779 = vld [vmem:[%s3778] sm:$0xf]
        %s3780 = scalar_lea.vmem [#allocation13], 512
        %v3781 = vld [vmem:[%s3780] sm:$0xff]
        %v3782 = vld [vmem:[%s3780 + $0x8] sm:$0xff]
        %v3783 = vld [vmem:[%s3780 + $0x10] sm:$0xff]
        %v3784 = vld [vmem:[%s3780 + $0x18] sm:$0xff]
        %v3785 = vld [vmem:[%s3780 + $0x20] sm:$0xff]
        %v3786 = vld [vmem:[%s3780 + $0x28] sm:$0xff]
        %v3787 = vld [vmem:[%s3780 + $0x30] sm:$0xff]
        %v3788 = vld [vmem:[%s3780 + $0x38] sm:$0xff]
        %v3789 = vld [vmem:[%s3780 + $0x40] sm:$0xff]
        %v3790 = vld [vmem:[%s3780 + $0x48] sm:$0xff]
        %v3791 = vld [vmem:[%s3780 + $0x50] sm:$0xff]
        %v3792 = vld [vmem:[%s3780 + $0x58] sm:$0xff]
        %v3793 = vld [vmem:[%s3780 + $0x60] sm:$0xff]
        %v3794 = vld [vmem:[%s3780 + $0x68] sm:$0xff]
        %v3795 = vld [vmem:[%s3780 + $0x70] sm:$0xff]
        %v3796 = vld [vmem:[%s3780 + $0x78] sm:$0xff]
        %v3797 = vld [vmem:[%s3780 + $0x80] sm:$0xff]
        %v3798 = vld [vmem:[%s3780 + $0x88] sm:$0xff]
        %v3799 = vld [vmem:[%s3780 + $0x90] sm:$0xff]
        %v3800 = vld [vmem:[%s3780 + $0x98] sm:$0xff]
        %v3801 = vld [vmem:[%s3780 + $0xa0] sm:$0xff]
        %v3802 = vld [vmem:[%s3780 + $0xa8] sm:$0xff]
        %v3803 = vld [vmem:[%s3780 + $0xb0] sm:$0xff]
        %v3804 = vld [vmem:[%s3780 + $0xb8] sm:$0xff]
        %v3805 = vld [vmem:[%s3780 + $0xc0] sm:$0xff]
        %v3806 = vld [vmem:[%s3780 + $0xc8] sm:$0xff]
        %v3807 = vld [vmem:[%s3780 + $0xd0] sm:$0xff]
        %v3808 = vld [vmem:[%s3780 + $0xd8] sm:$0xff]
        %v3809 = vld [vmem:[%s3780 + $0xe0] sm:$0xff]
        %v3810 = vld [vmem:[%s3780 + $0xe8] sm:$0xff]
        %v3811 = vld [vmem:[%s3780 + $0xf0] sm:$0xff]
        %v3812 = vld [vmem:[%s3780 + $0xf8] sm:$0xff]
        %v3813 = vld [vmem:[%s3780 + $0x100] sm:$0xff]
        %v3814 = vld [vmem:[%s3780 + $0x108] sm:$0xff]
        %v3815 = vld [vmem:[%s3780 + $0x110] sm:$0xff]
        %v3816 = vld [vmem:[%s3780 + $0x118] sm:$0xff]
        %v3817 = vld [vmem:[%s3780 + $0x120] sm:$0xff]
        %v3818 = vld [vmem:[%s3780 + $0x128] sm:$0xff]
        %v3819 = vld [vmem:[%s3780 + $0x130] sm:$0xff]
        %v3820 = vld [vmem:[%s3780 + $0x138] sm:$0xff]
        %v3821 = vld [vmem:[%s3780 + $0x140] sm:$0xff]
        %v3822 = vld [vmem:[%s3780 + $0x148] sm:$0xff]
        %v3823 = vld [vmem:[%s3780 + $0x150] sm:$0xff]
        %v3824 = vld [vmem:[%s3780 + $0x158] sm:$0xff]
        %v3825 = vld [vmem:[%s3780 + $0x160] sm:$0xff]
        %v3826 = vld [vmem:[%s3780 + $0x168] sm:$0xff]
        %v3827 = vld [vmem:[%s3780 + $0x170] sm:$0xff]
        %v3828 = vld [vmem:[%s3780 + $0x178] sm:$0xff]
        %v3829 = vld [vmem:[%s3780 + $0x180] sm:$0xff]
        %v3830 = vld [vmem:[%s3780 + $0x188] sm:$0xff]
        %v3831 = vld [vmem:[%s3780 + $0x190] sm:$0xff]
        %v3832 = vld [vmem:[%s3780 + $0x198] sm:$0xff]
        %v3833 = vld [vmem:[%s3780 + $0x1a0] sm:$0xff]
        %v3834 = vld [vmem:[%s3780 + $0x1a8] sm:$0xff]
        %v3835 = vld [vmem:[%s3780 + $0x1b0] sm:$0xff]
        %v3836 = vld [vmem:[%s3780 + $0x1b8] sm:$0xff]
        %v3837 = vld [vmem:[%s3780 + $0x1c0] sm:$0xff]
        %v3838 = vld [vmem:[%s3780 + $0x1c8] sm:$0xff]
        %v3839 = vld [vmem:[%s3780 + $0x1d0] sm:$0xff]
        %v3840 = vld [vmem:[%s3780 + $0x1d8] sm:$0xff]
        %v3841 = vld [vmem:[%s3780 + $0x1e0] sm:$0xff]
        %v3842 = vld [vmem:[%s3780 + $0x1e8] sm:$0xff]
        %v3843 = vld [vmem:[%s3780 + $0x1f0] sm:$0xff]
        %v3844 = vld [vmem:[%s3780 + $0x1f8] sm:$0xff]
        %s3845 = scalar_lea.vmem %s18, 1
        %v3846 = vld [vmem:[%s3845] sm:$0x1]
        %v3848 = vlaneseq
        %v3849 = vshrl.u32 %v3848, 7
        %v3850 = vsub.s32 0, %v3849
        %v3851 = vrot.slane %v3779, %v3850
        %v3852 = vlaneseq
        %v3853 = vshrl.u32 %v3852, 7
        %v3854 = vsub.s32 1, %v3853
        %v3855 = vrot.slane %v3779, %v3854
        %v3856 = vlaneseq
        %v3857 = vshrl.u32 %v3856, 7
        %v3858 = vsub.s32 2, %v3857
        %v3859 = vrot.slane %v3779, %v3858
        %v3860 = vlaneseq
        %v3861 = vshrl.u32 %v3860, 7
        %v3862 = vsub.s32 3, %v3861
        %v3863 = vrot.slane %v3779, %v3862
        %3868 = vmatprep.subr.mxu0 %v3715
        %3869 = vmatpush1.msra.mxu0 %v3714
        %3870 = vmatprep.subr.mxu0 %v3719
        %3871 = vmatpush1.msra.mxu0 %v3718
        %3872 = vmatprep.subr.mxu0 %v3723
        %3873 = vmatpush1.msra.mxu0 %v3722
        %3874 = vmatprep.subr.mxu0 %v3727
        %3875 = vmatpush1.msra.mxu0 %v3726
        %3876 = vmatprep.subr.mxu0 %v3731
        %3877 = vmatpush1.msra.mxu0 %v3730
        %3878 = vmatprep.subr.mxu0 %v3735
        %3879 = vmatpush1.msra.mxu0 %v3734
        %3880 = vmatprep.subr.mxu0 %v3739
        %3881 = vmatpush1.msra.mxu0 %v3738
        %3882 = vmatprep.subr.mxu0 %v3743
        %3883 = vmatpush1.msra.mxu0 %v3742
        %3884 = vmatprep.subr.mxu0 %v3747
        %3885 = vmatpush1.msra.mxu0 %v3746
        %3886 = vmatprep.subr.mxu0 %v3751
        %3887 = vmatpush1.msra.mxu0 %v3750
        %3888 = vmatprep.subr.mxu0 %v3755
        %3889 = vmatpush1.msra.mxu0 %v3754
        %3890 = vmatprep.subr.mxu0 %v3759
        %3891 = vmatpush1.msra.mxu0 %v3758
        %3892 = vmatprep.subr.mxu0 %v3763
        %3893 = vmatpush1.msra.mxu0 %v3762
        %3894 = vmatprep.subr.mxu0 %v3767
        %3895 = vmatpush1.msra.mxu0 %v3766
        %3896 = vmatprep.subr.mxu0 %v3771
        %3897 = vmatpush1.msra.mxu0 %v3770
        %3898 = vmatprep.subr.mxu0 %v3775
        %3899 = vmatpush1.msra.mxu0 %v3774
        %3900 = vmatprep.subr.mxu0 0.0
        %3901 = vmatpush1.msra.mxu0 0.0
        %3902 = vmatprep.subr.mxu0 0.0
        %3903 = vmatpush1.msra.mxu0 0.0
        %3904 = vmatprep.subr.mxu0 0.0
        %3905 = vmatpush1.msra.mxu0 0.0
        %3906 = vmatprep.subr.mxu0 0.0
        %3907 = vmatpush1.msra.mxu0 0.0
        %3908 = vmatprep.subr.mxu0 0.0
        %3909 = vmatpush1.msra.mxu0 0.0
        %3910 = vmatprep.subr.mxu0 0.0
        %3911 = vmatpush1.msra.mxu0 0.0
        %3912 = vmatprep.subr.mxu0 0.0
        %3913 = vmatpush1.msra.mxu0 0.0
        %3914 = vmatprep.subr.mxu0 0.0
        %3915 = vmatpush1.msra.mxu0 0.0
        %3916 = vmatprep.subr.mxu0 0.0
        %3917 = vmatpush1.msra.mxu0 0.0
        %3918 = vmatprep.subr.mxu0 0.0
        %3919 = vmatpush1.msra.mxu0 0.0
        %3920 = vmatprep.subr.mxu0 0.0
        %3921 = vmatpush1.msra.mxu0 0.0
        %3922 = vmatprep.subr.mxu0 0.0
        %3923 = vmatpush1.msra.mxu0 0.0
        %3924 = vmatprep.subr.mxu0 0.0
        %3925 = vmatpush1.msra.mxu0 0.0
        %3926 = vmatprep.subr.mxu0 0.0
        %3927 = vmatpush1.msra.mxu0 0.0
        %3928 = vmatprep.subr.mxu0 0.0
        %3929 = vmatpush1.msra.mxu0 0.0
        %3930 = vmatprep.subr.mxu0 0.0
        %3931 = vmatpush1.msra.mxu0 0.0
        %3932 = vmatprep.mubr.f32.mxu0 0.0
        %3933 = vmatmul.mubr.f32.gmra.mrb[0].mxu0 %v3712
        %v3934 = vpop.f32.mrb[0].mxu0
        %v3935 = vadd.f32 %v3851, %v3934
        %v3936 = vpop.f32.mrb[0].mxu0
        %v3937 = vadd.f32 %v3855, %v3936
        %3938 = vdwg.mxu0
        %3939 = vmatprep.subr.mxu0 %v3717
        %3940 = vmatpush1.msra.mxu0 %v3716
        %3941 = vmatprep.subr.mxu0 %v3721
        %3942 = vmatpush1.msra.mxu0 %v3720
        %3943 = vmatprep.subr.mxu0 %v3725
        %3944 = vmatpush1.msra.mxu0 %v3724
        %3945 = vmatprep.subr.mxu0 %v3729
        %3946 = vmatpush1.msra.mxu0 %v3728
        %3947 = vmatprep.subr.mxu0 %v3733
        %3948 = vmatpush1.msra.mxu0 %v3732
        %3949 = vmatprep.subr.mxu0 %v3737
        %3950 = vmatpush1.msra.mxu0 %v3736
        %3951 = vmatprep.subr.mxu0 %v3741
        %3952 = vmatpush1.msra.mxu0 %v3740
        %3953 = vmatprep.subr.mxu0 %v3745
        %3954 = vmatpush1.msra.mxu0 %v3744
        %3955 = vmatprep.subr.mxu0 %v3749
        %3956 = vmatpush1.msra.mxu0 %v3748
        %3957 = vmatprep.subr.mxu0 %v3753
        %3958 = vmatpush1.msra.mxu0 %v3752
        %3959 = vmatprep.subr.mxu0 %v3757
        %3960 = vmatpush1.msra.mxu0 %v3756
        %3961 = vmatprep.subr.mxu0 %v3761
        %3962 = vmatpush1.msra.mxu0 %v3760
        %3963 = vmatprep.subr.mxu0 %v3765
        %3964 = vmatpush1.msra.mxu0 %v3764
        %3965 = vmatprep.subr.mxu0 %v3769
        %3966 = vmatpush1.msra.mxu0 %v3768
        %3967 = vmatprep.subr.mxu0 %v3773
        %3968 = vmatpush1.msra.mxu0 %v3772
        %3969 = vmatprep.subr.mxu0 %v3777
        %3970 = vmatpush1.msra.mxu0 %v3776
        %3971 = vmatprep.subr.mxu0 0.0
        %3972 = vmatpush1.msra.mxu0 0.0
        %3973 = vmatprep.subr.mxu0 0.0
        %3974 = vmatpush1.msra.mxu0 0.0
        %3975 = vmatprep.subr.mxu0 0.0
        %3976 = vmatpush1.msra.mxu0 0.0
        %3977 = vmatprep.subr.mxu0 0.0
        %3978 = vmatpush1.msra.mxu0 0.0
        %3979 = vmatprep.subr.mxu0 0.0
        %3980 = vmatpush1.msra.mxu0 0.0
        %3981 = vmatprep.subr.mxu0 0.0
        %3982 = vmatpush1.msra.mxu0 0.0
        %3983 = vmatprep.subr.mxu0 0.0
        %3984 = vmatpush1.msra.mxu0 0.0
        %3985 = vmatprep.subr.mxu0 0.0
        %3986 = vmatpush1.msra.mxu0 0.0
        %3987 = vmatprep.subr.mxu0 0.0
        %3988 = vmatpush1.msra.mxu0 0.0
        %3989 = vmatprep.subr.mxu0 0.0
        %3990 = vmatpush1.msra.mxu0 0.0
        %3991 = vmatprep.subr.mxu0 0.0
        %3992 = vmatpush1.msra.mxu0 0.0
        %3993 = vmatprep.subr.mxu0 0.0
        %3994 = vmatpush1.msra.mxu0 0.0
        %3995 = vmatprep.subr.mxu0 0.0
        %3996 = vmatpush1.msra.mxu0 0.0
        %3997 = vmatprep.subr.mxu0 0.0
        %3998 = vmatpush1.msra.mxu0 0.0
        %3999 = vmatprep.subr.mxu0 0.0
        %4000 = vmatpush1.msra.mxu0 0.0
        %4001 = vmatprep.subr.mxu0 0.0
        %4002 = vmatpush1.msra.mxu0 0.0
        %4003 = vmatprep.mubr.f32.mxu0 0.0
        %4004 = vmatmul.mubr.f32.gmra.mrb[0].mxu0 %v3712
        %v4005 = vpop.f32.mrb[0].mxu0
        %v4006 = vadd.f32 %v3859, %v4005
        %v4007 = vpop.f32.mrb[0].mxu0
        %v4008 = vadd.f32 %v3863, %v4007
        %4009 = vdwg.mxu0
        %v4010 = vmax.f32 %v3935, 0.0
        %v4011 = vmax.f32 %v3937, 0.0
        %v4012 = vmax.f32 %v4006, 0.0
        %v4013 = vmax.f32 %v4008, 0.0
        %v4015 = vlaneseq
        %v4016 = vshrl.u32 %v4015, 7
        %v4017 = vsub.s32 0, %v4016
        %v4018 = vrot.slane %v3846, %v4017
        %4020 = vmatprep.subr.mxu0 0.0
        %4021 = vmatpush1.msra.mxu0 %v3781
        %4022 = vmatprep.subr.mxu0 0.0
        %4023 = vmatpush1.msra.mxu0 %v3782
        %4024 = vmatprep.subr.mxu0 0.0
        %4025 = vmatpush1.msra.mxu0 %v3783
        %4026 = vmatprep.subr.mxu0 0.0
        %4027 = vmatpush1.msra.mxu0 %v3784
        %4028 = vmatprep.subr.mxu0 0.0
        %4029 = vmatpush1.msra.mxu0 %v3785
        %4030 = vmatprep.subr.mxu0 0.0
        %4031 = vmatpush1.msra.mxu0 %v3786
        %4032 = vmatprep.subr.mxu0 0.0
        %4033 = vmatpush1.msra.mxu0 %v3787
        %4034 = vmatprep.subr.mxu0 0.0
        %4035 = vmatpush1.msra.mxu0 %v3788
        %4036 = vmatprep.subr.mxu0 0.0
        %4037 = vmatpush1.msra.mxu0 %v3789
        %4038 = vmatprep.subr.mxu0 0.0
        %4039 = vmatpush1.msra.mxu0 %v3790
        %4040 = vmatprep.subr.mxu0 0.0
        %4041 = vmatpush1.msra.mxu0 %v3791
        %4042 = vmatprep.subr.mxu0 0.0
        %4043 = vmatpush1.msra.mxu0 %v3792
        %4044 = vmatprep.subr.mxu0 0.0
        %4045 = vmatpush1.msra.mxu0 %v3793
        %4046 = vmatprep.subr.mxu0 0.0
        %4047 = vmatpush1.msra.mxu0 %v3794
        %4048 = vmatprep.subr.mxu0 0.0
        %4049 = vmatpush1.msra.mxu0 %v3795
        %4050 = vmatprep.subr.mxu0 0.0
        %4051 = vmatpush1.msra.mxu0 %v3796
        %4052 = vmatprep.subr.mxu0 0.0
        %4053 = vmatpush1.msra.mxu0 %v3797
        %4054 = vmatprep.subr.mxu0 0.0
        %4055 = vmatpush1.msra.mxu0 %v3798
        %4056 = vmatprep.subr.mxu0 0.0
        %4057 = vmatpush1.msra.mxu0 %v3799
        %4058 = vmatprep.subr.mxu0 0.0
        %4059 = vmatpush1.msra.mxu0 %v3800
        %4060 = vmatprep.subr.mxu0 0.0
        %4061 = vmatpush1.msra.mxu0 %v3801
        %4062 = vmatprep.subr.mxu0 0.0
        %4063 = vmatpush1.msra.mxu0 %v3802
        %4064 = vmatprep.subr.mxu0 0.0
        %4065 = vmatpush1.msra.mxu0 %v3803
        %4066 = vmatprep.subr.mxu0 0.0
        %4067 = vmatpush1.msra.mxu0 %v3804
        %4068 = vmatprep.subr.mxu0 0.0
        %4069 = vmatpush1.msra.mxu0 %v3805
        %4070 = vmatprep.subr.mxu0 0.0
        %4071 = vmatpush1.msra.mxu0 %v3806
        %4072 = vmatprep.subr.mxu0 0.0
        %4073 = vmatpush1.msra.mxu0 %v3807
        %4074 = vmatprep.subr.mxu0 0.0
        %4075 = vmatpush1.msra.mxu0 %v3808
        %4076 = vmatprep.subr.mxu0 0.0
        %4077 = vmatpush1.msra.mxu0 %v3809
        %4078 = vmatprep.subr.mxu0 0.0
        %4079 = vmatpush1.msra.mxu0 %v3810
        %4080 = vmatprep.subr.mxu0 0.0
        %4081 = vmatpush1.msra.mxu0 %v3811
        %4082 = vmatprep.subr.mxu0 0.0
        %4083 = vmatpush1.msra.mxu0 %v3812
        %4084 = vmatprep.mubr.f32.mxu0 %v4011
        %4085 = vmatmul.mubr.f32.gmra.mrb[0].mxu0 %v4010
        %v4086 = vpop.f32.mrb[0].mxu0
        %v4087 = vadd.f32 %v4018, %v4086
        %v4088 = vpop.f32.mrb[0].mxu0
        %4089 = vdwg.mxu0
        %4090 = vmatprep.subr.mxu0 0.0
        %4091 = vmatpush1.msra.mxu0 %v3813
        %4092 = vmatprep.subr.mxu0 0.0
        %4093 = vmatpush1.msra.mxu0 %v3814
        %4094 = vmatprep.subr.mxu0 0.0
        %4095 = vmatpush1.msra.mxu0 %v3815
        %4096 = vmatprep.subr.mxu0 0.0
        %4097 = vmatpush1.msra.mxu0 %v3816
        %4098 = vmatprep.subr.mxu0 0.0
        %4099 = vmatpush1.msra.mxu0 %v3817
        %4100 = vmatprep.subr.mxu0 0.0
        %4101 = vmatpush1.msra.mxu0 %v3818
        %4102 = vmatprep.subr.mxu0 0.0
        %4103 = vmatpush1.msra.mxu0 %v3819
        %4104 = vmatprep.subr.mxu0 0.0
        %4105 = vmatpush1.msra.mxu0 %v3820
        %4106 = vmatprep.subr.mxu0 0.0
        %4107 = vmatpush1.msra.mxu0 %v3821
        %4108 = vmatprep.subr.mxu0 0.0
        %4109 = vmatpush1.msra.mxu0 %v3822
        %4110 = vmatprep.subr.mxu0 0.0
        %4111 = vmatpush1.msra.mxu0 %v3823
        %4112 = vmatprep.subr.mxu0 0.0
        %4113 = vmatpush1.msra.mxu0 %v3824
        %4114 = vmatprep.subr.mxu0 0.0
        %4115 = vmatpush1.msra.mxu0 %v3825
        %4116 = vmatprep.subr.mxu0 0.0
        %4117 = vmatpush1.msra.mxu0 %v3826
        %4118 = vmatprep.subr.mxu0 0.0
        %4119 = vmatpush1.msra.mxu0 %v3827
        %4120 = vmatprep.subr.mxu0 0.0
        %4121 = vmatpush1.msra.mxu0 %v3828
        %4122 = vmatprep.subr.mxu0 0.0
        %4123 = vmatpush1.msra.mxu0 %v3829
        %4124 = vmatprep.subr.mxu0 0.0
        %4125 = vmatpush1.msra.mxu0 %v3830
        %4126 = vmatprep.subr.mxu0 0.0
        %4127 = vmatpush1.msra.mxu0 %v3831
        %4128 = vmatprep.subr.mxu0 0.0
        %4129 = vmatpush1.msra.mxu0 %v3832
        %4130 = vmatprep.subr.mxu0 0.0
        %4131 = vmatpush1.msra.mxu0 %v3833
        %4132 = vmatprep.subr.mxu0 0.0
        %4133 = vmatpush1.msra.mxu0 %v3834
        %4134 = vmatprep.subr.mxu0 0.0
        %4135 = vmatpush1.msra.mxu0 %v3835
        %4136 = vmatprep.subr.mxu0 0.0
        %4137 = vmatpush1.msra.mxu0 %v3836
        %4138 = vmatprep.subr.mxu0 0.0
        %4139 = vmatpush1.msra.mxu0 %v3837
        %4140 = vmatprep.subr.mxu0 0.0
        %4141 = vmatpush1.msra.mxu0 %v3838
        %4142 = vmatprep.subr.mxu0 0.0
        %4143 = vmatpush1.msra.mxu0 %v3839
        %4144 = vmatprep.subr.mxu0 0.0
        %4145 = vmatpush1.msra.mxu0 %v3840
        %4146 = vmatprep.subr.mxu0 0.0
        %4147 = vmatpush1.msra.mxu0 %v3841
        %4148 = vmatprep.subr.mxu0 0.0
        %4149 = vmatpush1.msra.mxu0 %v3842
        %4150 = vmatprep.subr.mxu0 0.0
        %4151 = vmatpush1.msra.mxu0 %v3843
        %4152 = vmatprep.subr.mxu0 0.0
        %4153 = vmatpush1.msra.mxu0 %v3844
        %4154 = vmatprep.mubr.f32.mxu0 %v4013
        %4155 = vmatmul.mubr.f32.gmra.mrb[0].mxu0 %v4012
        %v4156 = vpop.f32.mrb[0].mxu0
        %v4157 = vadd.f32 %v4087, %v4156
        %v4158 = vpop.f32.mrb[0].mxu0
        %4159 = vdwg.mxu0
        %v4160 = vadd.f32 %v3675, %v4157
        %s4161 = scalar_lea.vmem %s3, 2
        %v4162 = vld [vmem:[%s4161] sm:$0x1]
        %s4163 = scalar_lea.vmem %s4, 2
        %v4164 = vld [vmem:[%s4163] sm:$0x1]
        %v4165 = vrot.slane %v4160, 4
        %v4166 = vadd.f32 %v4160, %v4165
        %v4167 = vrot.slane %v4166, 2
        %v4168 = vadd.f32 %v4166, %v4167
        %v4169 = vrot.slane %v4168, 1
        %v4170 = vadd.f32 %v4168, %v4169
        %v4171 = vmul.f32 %v4170, %v1013
        %v4172 = vsub.f32 %v4160, %v4171
        %v4173 = vmul.f32 %v4172, %v4172
        %v4174 = vrot.slane %v4173, 4
        %v4175 = vadd.f32 %v4173, %v4174
        %v4176 = vrot.slane %v4175, 2
        %v4177 = vadd.f32 %v4175, %v4176
        %v4178 = vrot.slane %v4177, 1
        %v4179 = vadd.f32 %v4177, %v4178
        %v4180 = vmul.f32 %v4179, %v1023
        %v4181 = vadd.f32 %v4180, 1e-05
        %v4182 = vrsqrt.pop %v4181
        %v4183 = vmul.f32 %v4172, %v4182
        %v4185 = vlaneseq
        %v4186 = vshrl.u32 %v4185, 7
        %v4187 = vsub.s32 0, %v4186
        %v4188 = vrot.slane %v4162, %v4187
        %v4190 = vmul.f32 %v4188, %v4183
        %v4192 = vlaneseq
        %v4193 = vshrl.u32 %v4192, 7
        %v4194 = vsub.s32 0, %v4193
        %v4195 = vrot.slane %v4164, %v4194
        %v4197 = vadd.f32 %v4190, %v4195
        %s4198 = scalar_lea.vmem [#allocation5], 256
        %v4199 = vld [vmem:[%s4198] sm:$0xff]
        %v4200 = vld [vmem:[%s4198 + $0x8] sm:$0xff]
        %v4201 = vld [vmem:[%s4198 + $0x10] sm:$0xff]
        %v4202 = vld [vmem:[%s4198 + $0x18] sm:$0xff]
        %v4203 = vld [vmem:[%s4198 + $0x20] sm:$0xff]
        %v4204 = vld [vmem:[%s4198 + $0x28] sm:$0xff]
        %v4205 = vld [vmem:[%s4198 + $0x30] sm:$0xff]
        %v4206 = vld [vmem:[%s4198 + $0x38] sm:$0xff]
        %v4207 = vld [vmem:[%s4198 + $0x40] sm:$0xff]
        %v4208 = vld [vmem:[%s4198 + $0x48] sm:$0xff]
        %v4209 = vld [vmem:[%s4198 + $0x50] sm:$0xff]
        %v4210 = vld [vmem:[%s4198 + $0x58] sm:$0xff]
        %v4211 = vld [vmem:[%s4198 + $0x60] sm:$0xff]
        %v4212 = vld [vmem:[%s4198 + $0x68] sm:$0xff]
        %v4213 = vld [vmem:[%s4198 + $0x70] sm:$0xff]
        %v4214 = vld [vmem:[%s4198 + $0x78] sm:$0xff]
        %s4215 = scalar_lea.vmem %s6, 2
        %v4216 = vld [vmem:[%s4215] sm:$0x1]
        %v4218 = vlaneseq
        %v4219 = vshrl.u32 %v4218, 7
        %v4220 = vsub.s32 0, %v4219
        %v4221 = vrot.slane %v4216, %v4220
        %4223 = vmatprep.subr.mxu0 0.0
        %4224 = vmatpush1.msra.mxu0 %v4199
        %4225 = vmatprep.subr.mxu0 0.0
        %4226 = vmatpush1.msra.mxu0 %v4200
        %4227 = vmatprep.subr.mxu0 0.0
        %4228 = vmatpush1.msra.mxu0 %v4201
        %4229 = vmatprep.subr.mxu0 0.0
        %4230 = vmatpush1.msra.mxu0 %v4202
        %4231 = vmatprep.subr.mxu0 0.0
        %4232 = vmatpush1.msra.mxu0 %v4203
        %4233 = vmatprep.subr.mxu0 0.0
        %4234 = vmatpush1.msra.mxu0 %v4204
        %4235 = vmatprep.subr.mxu0 0.0
        %4236 = vmatpush1.msra.mxu0 %v4205
        %4237 = vmatprep.subr.mxu0 0.0
        %4238 = vmatpush1.msra.mxu0 %v4206
        %4239 = vmatprep.subr.mxu0 0.0
        %4240 = vmatpush1.msra.mxu0 %v4207
        %4241 = vmatprep.subr.mxu0 0.0
        %4242 = vmatpush1.msra.mxu0 %v4208
        %4243 = vmatprep.subr.mxu0 0.0
        %4244 = vmatpush1.msra.mxu0 %v4209
        %4245 = vmatprep.subr.mxu0 0.0
        %4246 = vmatpush1.msra.mxu0 %v4210
        %4247 = vmatprep.subr.mxu0 0.0
        %4248 = vmatpush1.msra.mxu0 %v4211
        %4249 = vmatprep.subr.mxu0 0.0
        %4250 = vmatpush1.msra.mxu0 %v4212
        %4251 = vmatprep.subr.mxu0 0.0
        %4252 = vmatpush1.msra.mxu0 %v4213
        %4253 = vmatprep.subr.mxu0 0.0
        %4254 = vmatpush1.msra.mxu0 %v4214
        %4255 = vmatprep.subr.mxu0 0.0
        %4256 = vmatpush1.msra.mxu0 0.0
        %4257 = vmatprep.subr.mxu0 0.0
        %4258 = vmatpush1.msra.mxu0 0.0
        %4259 = vmatprep.subr.mxu0 0.0
        %4260 = vmatpush1.msra.mxu0 0.0
        %4261 = vmatprep.subr.mxu0 0.0
        %4262 = vmatpush1.msra.mxu0 0.0
        %4263 = vmatprep.subr.mxu0 0.0
        %4264 = vmatpush1.msra.mxu0 0.0
        %4265 = vmatprep.subr.mxu0 0.0
        %4266 = vmatpush1.msra.mxu0 0.0
        %4267 = vmatprep.subr.mxu0 0.0
        %4268 = vmatpush1.msra.mxu0 0.0
        %4269 = vmatprep.subr.mxu0 0.0
        %4270 = vmatpush1.msra.mxu0 0.0
        %4271 = vmatprep.subr.mxu0 0.0
        %4272 = vmatpush1.msra.mxu0 0.0
        %4273 = vmatprep.subr.mxu0 0.0
        %4274 = vmatpush1.msra.mxu0 0.0
        %4275 = vmatprep.subr.mxu0 0.0
        %4276 = vmatpush1.msra.mxu0 0.0
        %4277 = vmatprep.subr.mxu0 0.0
        %4278 = vmatpush1.msra.mxu0 0.0
        %4279 = vmatprep.subr.mxu0 0.0
        %4280 = vmatpush1.msra.mxu0 0.0
        %4281 = vmatprep.subr.mxu0 0.0
        %4282 = vmatpush1.msra.mxu0 0.0
        %4283 = vmatprep.subr.mxu0 0.0
        %4284 = vmatpush1.msra.mxu0 0.0
        %4285 = vmatprep.subr.mxu0 0.0
        %4286 = vmatpush1.msra.mxu0 0.0
        %4287 = vmatprep.mubr.f32.mxu0 0.0
        %4288 = vmatmul.mubr.f32.gmra.mrb[0].mxu0 %v4197
        %v4289 = vpop.f32.mrb[0].mxu0
        %v4290 = vadd.f32 %v4221, %v4289
        %v4291 = vpop.f32.mrb[0].mxu0
        %4292 = vdwg.mxu0
        %s4293 = scalar_lea.vmem [#allocation7], 256
        %v4294 = vld [vmem:[%s4293] sm:$0xff]
        %v4295 = vld [vmem:[%s4293 + $0x8] sm:$0xff]
        %v4296 = vld [vmem:[%s4293 + $0x10] sm:$0xff]
        %v4297 = vld [vmem:[%s4293 + $0x18] sm:$0xff]
        %v4298 = vld [vmem:[%s4293 + $0x20] sm:$0xff]
        %v4299 = vld [vmem:[%s4293 + $0x28] sm:$0xff]
        %v4300 = vld [vmem:[%s4293 + $0x30] sm:$0xff]
        %v4301 = vld [vmem:[%s4293 + $0x38] sm:$0xff]
        %v4302 = vld [vmem:[%s4293 + $0x40] sm:$0xff]
        %v4303 = vld [vmem:[%s4293 + $0x48] sm:$0xff]
        %v4304 = vld [vmem:[%s4293 + $0x50] sm:$0xff]
        %v4305 = vld [vmem:[%s4293 + $0x58] sm:$0xff]
        %v4306 = vld [vmem:[%s4293 + $0x60] sm:$0xff]
        %v4307 = vld [vmem:[%s4293 + $0x68] sm:$0xff]
        %v4308 = vld [vmem:[%s4293 + $0x70] sm:$0xff]
        %v4309 = vld [vmem:[%s4293 + $0x78] sm:$0xff]
        %s4310 = scalar_lea.vmem %s8, 2
        %v4311 = vld [vmem:[%s4310] sm:$0x1]
        %v4313 = vlaneseq
        %v4314 = vshrl.u32 %v4313, 7
        %v4315 = vsub.s32 0, %v4314
        %v4316 = vrot.slane %v4311, %v4315
        %4318 = vmatprep.subr.mxu0 0.0
        %4319 = vmatpush1.msra.mxu0 %v4294
        %4320 = vmatprep.subr.mxu0 0.0
        %4321 = vmatpush1.msra.mxu0 %v4295
        %4322 = vmatprep.subr.mxu0 0.0
        %4323 = vmatpush1.msra.mxu0 %v4296
        %4324 = vmatprep.subr.mxu0 0.0
        %4325 = vmatpush1.msra.mxu0 %v4297
        %4326 = vmatprep.subr.mxu0 0.0
        %4327 = vmatpush1.msra.mxu0 %v4298
        %4328 = vmatprep.subr.mxu0 0.0
        %4329 = vmatpush1.msra.mxu0 %v4299
        %4330 = vmatprep.subr.mxu0 0.0
        %4331 = vmatpush1.msra.mxu0 %v4300
        %4332 = vmatprep.subr.mxu0 0.0
        %4333 = vmatpush1.msra.mxu0 %v4301
        %4334 = vmatprep.subr.mxu0 0.0
        %4335 = vmatpush1.msra.mxu0 %v4302
        %4336 = vmatprep.subr.mxu0 0.0
        %4337 = vmatpush1.msra.mxu0 %v4303
        %4338 = vmatprep.subr.mxu0 0.0
        %4339 = vmatpush1.msra.mxu0 %v4304
        %4340 = vmatprep.subr.mxu0 0.0
        %4341 = vmatpush1.msra.mxu0 %v4305
        %4342 = vmatprep.subr.mxu0 0.0
        %4343 = vmatpush1.msra.mxu0 %v4306
        %4344 = vmatprep.subr.mxu0 0.0
        %4345 = vmatpush1.msra.mxu0 %v4307
        %4346 = vmatprep.subr.mxu0 0.0
        %4347 = vmatpush1.msra.mxu0 %v4308
        %4348 = vmatprep.subr.mxu0 0.0
        %4349 = vmatpush1.msra.mxu0 %v4309
        %4350 = vmatprep.subr.mxu0 0.0
        %4351 = vmatpush1.msra.mxu0 0.0
        %4352 = vmatprep.subr.mxu0 0.0
        %4353 = vmatpush1.msra.mxu0 0.0
        %4354 = vmatprep.subr.mxu0 0.0
        %4355 = vmatpush1.msra.mxu0 0.0
        %4356 = vmatprep.subr.mxu0 0.0
        %4357 = vmatpush1.msra.mxu0 0.0
        %4358 = vmatprep.subr.mxu0 0.0
        %4359 = vmatpush1.msra.mxu0 0.0
        %4360 = vmatprep.subr.mxu0 0.0
        %4361 = vmatpush1.msra.mxu0 0.0
        %4362 = vmatprep.subr.mxu0 0.0
        %4363 = vmatpush1.msra.mxu0 0.0
        %4364 = vmatprep.subr.mxu0 0.0
        %4365 = vmatpush1.msra.mxu0 0.0
        %4366 = vmatprep.subr.mxu0 0.0
        %4367 = vmatpush1.msra.mxu0 0.0
        %4368 = vmatprep.subr.mxu0 0.0
        %4369 = vmatpush1.msra.mxu0 0.0
        %4370 = vmatprep.subr.mxu0 0.0
        %4371 = vmatpush1.msra.mxu0 0.0
        %4372 = vmatprep.subr.mxu0 0.0
        %4373 = vmatpush1.msra.mxu0 0.0
        %4374 = vmatprep.subr.mxu0 0.0
        %4375 = vmatpush1.msra.mxu0 0.0
        %4376 = vmatprep.subr.mxu0 0.0
        %4377 = vmatpush1.msra.mxu0 0.0
        %4378 = vmatprep.subr.mxu0 0.0
        %4379 = vmatpush1.msra.mxu0 0.0
        %4380 = vmatprep.subr.mxu0 0.0
        %4381 = vmatpush1.msra.mxu0 0.0
        %4382 = vmatprep.mubr.f32.mxu0 0.0
        %4383 = vmatmul.mubr.f32.gmra.mrb[0].mxu0 %v4197
        %v4384 = vpop.f32.mrb[0].mxu0
        %v4385 = vadd.f32 %v4316, %v4384
        %v4386 = vpop.f32.mrb[0].mxu0
        %4387 = vdwg.mxu0
        %s4388 = scalar_lea.vmem [#allocation8], 256
        %v4389 = vld [vmem:[%s4388] sm:$0xff]
        %v4390 = vld [vmem:[%s4388 + $0x8] sm:$0xff]
        %v4391 = vld [vmem:[%s4388 + $0x10] sm:$0xff]
        %v4392 = vld [vmem:[%s4388 + $0x18] sm:$0xff]
        %v4393 = vld [vmem:[%s4388 + $0x20] sm:$0xff]
        %v4394 = vld [vmem:[%s4388 + $0x28] sm:$0xff]
        %v4395 = vld [vmem:[%s4388 + $0x30] sm:$0xff]
        %v4396 = vld [vmem:[%s4388 + $0x38] sm:$0xff]
        %v4397 = vld [vmem:[%s4388 + $0x40] sm:$0xff]
        %v4398 = vld [vmem:[%s4388 + $0x48] sm:$0xff]
        %v4399 = vld [vmem:[%s4388 + $0x50] sm:$0xff]
        %v4400 = vld [vmem:[%s4388 + $0x58] sm:$0xff]
        %v4401 = vld [vmem:[%s4388 + $0x60] sm:$0xff]
        %v4402 = vld [vmem:[%s4388 + $0x68] sm:$0xff]
        %v4403 = vld [vmem:[%s4388 + $0x70] sm:$0xff]
        %v4404 = vld [vmem:[%s4388 + $0x78] sm:$0xff]
        %s4405 = scalar_lea.vmem %s10, 2
        %v4406 = vld [vmem:[%s4405] sm:$0x1]
        %v4408 = vlaneseq
        %v4409 = vshrl.u32 %v4408, 7
        %v4410 = vsub.s32 0, %v4409
        %v4411 = vrot.slane %v4406, %v4410
        %4413 = vmatprep.subr.mxu0 0.0
        %4414 = vmatpush1.msra.mxu0 %v4389
        %4415 = vmatprep.subr.mxu0 0.0
        %4416 = vmatpush1.msra.mxu0 %v4390
        %4417 = vmatprep.subr.mxu0 0.0
        %4418 = vmatpush1.msra.mxu0 %v4391
        %4419 = vmatprep.subr.mxu0 0.0
        %4420 = vmatpush1.msra.mxu0 %v4392
        %4421 = vmatprep.subr.mxu0 0.0
        %4422 = vmatpush1.msra.mxu0 %v4393
        %4423 = vmatprep.subr.mxu0 0.0
        %4424 = vmatpush1.msra.mxu0 %v4394
        %4425 = vmatprep.subr.mxu0 0.0
        %4426 = vmatpush1.msra.mxu0 %v4395
        %4427 = vmatprep.subr.mxu0 0.0
        %4428 = vmatpush1.msra.mxu0 %v4396
        %4429 = vmatprep.subr.mxu0 0.0
        %4430 = vmatpush1.msra.mxu0 %v4397
        %4431 = vmatprep.subr.mxu0 0.0
        %4432 = vmatpush1.msra.mxu0 %v4398
        %4433 = vmatprep.subr.mxu0 0.0
        %4434 = vmatpush1.msra.mxu0 %v4399
        %4435 = vmatprep.subr.mxu0 0.0
        %4436 = vmatpush1.msra.mxu0 %v4400
        %4437 = vmatprep.subr.mxu0 0.0
        %4438 = vmatpush1.msra.mxu0 %v4401
        %4439 = vmatprep.subr.mxu0 0.0
        %4440 = vmatpush1.msra.mxu0 %v4402
        %4441 = vmatprep.subr.mxu0 0.0
        %4442 = vmatpush1.msra.mxu0 %v4403
        %4443 = vmatprep.subr.mxu0 0.0
        %4444 = vmatpush1.msra.mxu0 %v4404
        %4445 = vmatprep.subr.mxu0 0.0
        %4446 = vmatpush1.msra.mxu0 0.0
        %4447 = vmatprep.subr.mxu0 0.0
        %4448 = vmatpush1.msra.mxu0 0.0
        %4449 = vmatprep.subr.mxu0 0.0
        %4450 = vmatpush1.msra.mxu0 0.0
        %4451 = vmatprep.subr.mxu0 0.0
        %4452 = vmatpush1.msra.mxu0 0.0
        %4453 = vmatprep.subr.mxu0 0.0
        %4454 = vmatpush1.msra.mxu0 0.0
        %4455 = vmatprep.subr.mxu0 0.0
        %4456 = vmatpush1.msra.mxu0 0.0
        %4457 = vmatprep.subr.mxu0 0.0
        %4458 = vmatpush1.msra.mxu0 0.0
        %4459 = vmatprep.subr.mxu0 0.0
        %4460 = vmatpush1.msra.mxu0 0.0
        %4461 = vmatprep.subr.mxu0 0.0
        %4462 = vmatpush1.msra.mxu0 0.0
        %4463 = vmatprep.subr.mxu0 0.0
        %4464 = vmatpush1.msra.mxu0 0.0
        %4465 = vmatprep.subr.mxu0 0.0
        %4466 = vmatpush1.msra.mxu0 0.0
        %4467 = vmatprep.subr.mxu0 0.0
        %4468 = vmatpush1.msra.mxu0 0.0
        %4469 = vmatprep.subr.mxu0 0.0
        %4470 = vmatpush1.msra.mxu0 0.0
        %4471 = vmatprep.subr.mxu0 0.0
        %4472 = vmatpush1.msra.mxu0 0.0
        %4473 = vmatprep.subr.mxu0 0.0
        %4474 = vmatpush1.msra.mxu0 0.0
        %4475 = vmatprep.subr.mxu0 0.0
        %4476 = vmatpush1.msra.mxu0 0.0
        %4477 = vmatprep.mubr.f32.mxu0 0.0
        %4478 = vmatmul.mubr.f32.gmra.mrb[0].mxu0 %v4197
        %v4479 = vpop.f32.mrb[0].mxu0
        %v4480 = vadd.f32 %v4411, %v4479
        %v4481 = vpop.f32.mrb[0].mxu0
        %4482 = vdwg.mxu0
        %v4484 = vsel %vm1321, %v4290, 0
        %v4487 = vsel %vm1321, %v4385, 0
        %4489 = vmatprep.subr.mxu0 0.0
        %4490 = vmatpush1.xpose.msra.mxu0 %v4487
        %4491 = vmatprep.subr.mxu0 0.0
        %4492 = vmatpush1.xpose.msra.mxu0 0.0
        %4493 = vmatprep.subr.mxu0 0.0
        %4494 = vmatpush1.xpose.msra.mxu0 0.0
        %4495 = vmatprep.subr.mxu0 0.0
        %4496 = vmatpush1.xpose.msra.mxu0 0.0
        %4497 = vmatprep.subr.mxu0 0.0
        %4498 = vmatpush1.xpose.msra.mxu0 0.0
        %4499 = vmatprep.subr.mxu0 0.0
        %4500 = vmatpush1.xpose.msra.mxu0 0.0
        %4501 = vmatprep.subr.mxu0 0.0
        %4502 = vmatpush1.xpose.msra.mxu0 0.0
        %4503 = vmatprep.subr.mxu0 0.0
        %4504 = vmatpush1.xpose.msra.mxu0 0.0
        %4505 = vmatprep.subr.mxu0 0.0
        %4506 = vmatpush1.xpose.msra.mxu0 0.0
        %4507 = vmatprep.subr.mxu0 0.0
        %4508 = vmatpush1.xpose.msra.mxu0 0.0
        %4509 = vmatprep.subr.mxu0 0.0
        %4510 = vmatpush1.xpose.msra.mxu0 0.0
        %4511 = vmatprep.subr.mxu0 0.0
        %4512 = vmatpush1.xpose.msra.mxu0 0.0
        %4513 = vmatprep.subr.mxu0 0.0
        %4514 = vmatpush1.xpose.msra.mxu0 0.0
        %4515 = vmatprep.subr.mxu0 0.0
        %4516 = vmatpush1.xpose.msra.mxu0 0.0
        %4517 = vmatprep.subr.mxu0 0.0
        %4518 = vmatpush1.xpose.msra.mxu0 0.0
        %4519 = vmatprep.subr.mxu0 0.0
        %4520 = vmatpush1.xpose.msra.mxu0 0.0
        %4521 = vmatprep.subr.mxu0 0.0
        %4522 = vmatpush1.xpose.msra.mxu0 0.0
        %4523 = vmatprep.subr.mxu0 0.0
        %4524 = vmatpush1.xpose.msra.mxu0 0.0
        %4525 = vmatprep.subr.mxu0 0.0
        %4526 = vmatpush1.xpose.msra.mxu0 0.0
        %4527 = vmatprep.subr.mxu0 0.0
        %4528 = vmatpush1.xpose.msra.mxu0 0.0
        %4529 = vmatprep.subr.mxu0 0.0
        %4530 = vmatpush1.xpose.msra.mxu0 0.0
        %4531 = vmatprep.subr.mxu0 0.0
        %4532 = vmatpush1.xpose.msra.mxu0 0.0
        %4533 = vmatprep.subr.mxu0 0.0
        %4534 = vmatpush1.xpose.msra.mxu0 0.0
        %4535 = vmatprep.subr.mxu0 0.0
        %4536 = vmatpush1.xpose.msra.mxu0 0.0
        %4537 = vmatprep.subr.mxu0 0.0
        %4538 = vmatpush1.xpose.msra.mxu0 0.0
        %4539 = vmatprep.subr.mxu0 0.0
        %4540 = vmatpush1.xpose.msra.mxu0 0.0
        %4541 = vmatprep.subr.mxu0 0.0
        %4542 = vmatpush1.xpose.msra.mxu0 0.0
        %4543 = vmatprep.subr.mxu0 0.0
        %4544 = vmatpush1.xpose.msra.mxu0 0.0
        %4545 = vmatprep.subr.mxu0 0.0
        %4546 = vmatpush1.xpose.msra.mxu0 0.0
        %4547 = vmatprep.subr.mxu0 0.0
        %4548 = vmatpush1.xpose.msra.mxu0 0.0
        %4549 = vmatprep.subr.mxu0 0.0
        %4550 = vmatpush1.xpose.msra.mxu0 0.0
        %4551 = vmatprep.subr.mxu0 0.0
        %4552 = vmatpush1.xpose.msra.mxu0 0.0
        %4553 = vmatprep.mubr.f32.mxu0 0.0
        %4554 = vmatmul.mubr.f32.gmra.mrb[0].mxu0 %v4484
        %v4555 = vpop.f32.mrb[0].mxu0
        %v4556 = vadd.f32 0.0, %v4555
        %v4557 = vpop.f32.mrb[0].mxu0
        %4558 = vdwg.mxu0
        %v4559 = vmul.f32 %v4556, 0.088388346
        %v4560 = vadd.f32 %v4559, %v1004
        %v4561 = vsel %vm1400, %v4560, -inf
        %4562 = vmax.xlane.f32.xlu0 %v4561
        %v4563 = vpop.xlane.xlu0 %4562
        %v4564 = vsub.f32 %v4560, %v4563
        %v4565 = vmul.f32 %v4564, 1.442695
        %v4566 = vpow.pop %v4565
        %v4567 = vsel %vm1400, %v4566, 0.0
        %4568 = vadd.xlane.f32.xlu0 %v4567
        %v4569 = vpop.xlane.xlu0 %4568
        %v4570 = vrcp.pop %v4569
        %v4571 = vmul.f32 %v4566, %v4570
        %v4573 = vsel %vm1400, %v4571, 0
        %4575 = vmatprep.subr.mxu0 0.0
        %4576 = vmatpush1.msra.mxu0 %v4480
        %4577 = vmatprep.subr.mxu0 0.0
        %4578 = vmatpush1.msra.mxu0 0.0
        %4579 = vmatprep.subr.mxu0 0.0
        %4580 = vmatpush1.msra.mxu0 0.0
        %4581 = vmatprep.subr.mxu0 0.0
        %4582 = vmatpush1.msra.mxu0 0.0
        %4583 = vmatprep.subr.mxu0 0.0
        %4584 = vmatpush1.msra.mxu0 0.0
        %4585 = vmatprep.subr.mxu0 0.0
        %4586 = vmatpush1.msra.mxu0 0.0
        %4587 = vmatprep.subr.mxu0 0.0
        %4588 = vmatpush1.msra.mxu0 0.0
        %4589 = vmatprep.subr.mxu0 0.0
        %4590 = vmatpush1.msra.mxu0 0.0
        %4591 = vmatprep.subr.mxu0 0.0
        %4592 = vmatpush1.msra.mxu0 0.0
        %4593 = vmatprep.subr.mxu0 0.0
        %4594 = vmatpush1.msra.mxu0 0.0
        %4595 = vmatprep.subr.mxu0 0.0
        %4596 = vmatpush1.msra.mxu0 0.0
        %4597 = vmatprep.subr.mxu0 0.0
        %4598 = vmatpush1.msra.mxu0 0.0
        %4599 = vmatprep.subr.mxu0 0.0
        %4600 = vmatpush1.msra.mxu0 0.0
        %4601 = vmatprep.subr.mxu0 0.0
        %4602 = vmatpush1.msra.mxu0 0.0
        %4603 = vmatprep.subr.mxu0 0.0
        %4604 = vmatpush1.msra.mxu0 0.0
        %4605 = vmatprep.subr.mxu0 0.0
        %4606 = vmatpush1.msra.mxu0 0.0
        %4607 = vmatprep.subr.mxu0 0.0
        %4608 = vmatpush1.msra.mxu0 0.0
        %4609 = vmatprep.subr.mxu0 0.0
        %4610 = vmatpush1.msra.mxu0 0.0
        %4611 = vmatprep.subr.mxu0 0.0
        %4612 = vmatpush1.msra.mxu0 0.0
        %4613 = vmatprep.subr.mxu0 0.0
        %4614 = vmatpush1.msra.mxu0 0.0
        %4615 = vmatprep.subr.mxu0 0.0
        %4616 = vmatpush1.msra.mxu0 0.0
        %4617 = vmatprep.subr.mxu0 0.0
        %4618 = vmatpush1.msra.mxu0 0.0
        %4619 = vmatprep.subr.mxu0 0.0
        %4620 = vmatpush1.msra.mxu0 0.0
        %4621 = vmatprep.subr.mxu0 0.0
        %4622 = vmatpush1.msra.mxu0 0.0
        %4623 = vmatprep.subr.mxu0 0.0
        %4624 = vmatpush1.msra.mxu0 0.0
        %4625 = vmatprep.subr.mxu0 0.0
        %4626 = vmatpush1.msra.mxu0 0.0
        %4627 = vmatprep.subr.mxu0 0.0
        %4628 = vmatpush1.msra.mxu0 0.0
        %4629 = vmatprep.subr.mxu0 0.0
        %4630 = vmatpush1.msra.mxu0 0.0
        %4631 = vmatprep.subr.mxu0 0.0
        %4632 = vmatpush1.msra.mxu0 0.0
        %4633 = vmatprep.subr.mxu0 0.0
        %4634 = vmatpush1.msra.mxu0 0.0
        %4635 = vmatprep.subr.mxu0 0.0
        %4636 = vmatpush1.msra.mxu0 0.0
        %4637 = vmatprep.subr.mxu0 0.0
        %4638 = vmatpush1.msra.mxu0 0.0
        %4639 = vmatprep.mubr.f32.mxu0 0.0
        %4640 = vmatmul.mubr.f32.gmra.mrb[0].mxu0 %v4573
        %v4641 = vpop.f32.mrb[0].mxu0
        %v4642 = vadd.f32 0.0, %v4641
        %v4643 = vpop.f32.mrb[0].mxu0
        %4644 = vdwg.mxu0
        %4645 = vrot.lane.b32.xlu0 %v4290, 96
        %v4646 = vpop.permute.xlu0 %4645
        %4647 = vrot.lane.b32.xlu0 %v4385, 96
        %v4648 = vpop.permute.xlu0 %4647
        %v4649 = vsel %vm1321, %v4646, 0
        %v4651 = vsel %vm1321, %v4648, 0
        %4653 = vmatprep.subr.mxu0 0.0
        %4654 = vmatpush1.xpose.msra.mxu0 %v4651
        %4655 = vmatprep.subr.mxu0 0.0
        %4656 = vmatpush1.xpose.msra.mxu0 0.0
        %4657 = vmatprep.subr.mxu0 0.0
        %4658 = vmatpush1.xpose.msra.mxu0 0.0
        %4659 = vmatprep.subr.mxu0 0.0
        %4660 = vmatpush1.xpose.msra.mxu0 0.0
        %4661 = vmatprep.subr.mxu0 0.0
        %4662 = vmatpush1.xpose.msra.mxu0 0.0
        %4663 = vmatprep.subr.mxu0 0.0
        %4664 = vmatpush1.xpose.msra.mxu0 0.0
        %4665 = vmatprep.subr.mxu0 0.0
        %4666 = vmatpush1.xpose.msra.mxu0 0.0
        %4667 = vmatprep.subr.mxu0 0.0
        %4668 = vmatpush1.xpose.msra.mxu0 0.0
        %4669 = vmatprep.subr.mxu0 0.0
        %4670 = vmatpush1.xpose.msra.mxu0 0.0
        %4671 = vmatprep.subr.mxu0 0.0
        %4672 = vmatpush1.xpose.msra.mxu0 0.0
        %4673 = vmatprep.subr.mxu0 0.0
        %4674 = vmatpush1.xpose.msra.mxu0 0.0
        %4675 = vmatprep.subr.mxu0 0.0
        %4676 = vmatpush1.xpose.msra.mxu0 0.0
        %4677 = vmatprep.subr.mxu0 0.0
        %4678 = vmatpush1.xpose.msra.mxu0 0.0
        %4679 = vmatprep.subr.mxu0 0.0
        %4680 = vmatpush1.xpose.msra.mxu0 0.0
        %4681 = vmatprep.subr.mxu0 0.0
        %4682 = vmatpush1.xpose.msra.mxu0 0.0
        %4683 = vmatprep.subr.mxu0 0.0
        %4684 = vmatpush1.xpose.msra.mxu0 0.0
        %4685 = vmatprep.subr.mxu0 0.0
        %4686 = vmatpush1.xpose.msra.mxu0 0.0
        %4687 = vmatprep.subr.mxu0 0.0
        %4688 = vmatpush1.xpose.msra.mxu0 0.0
        %4689 = vmatprep.subr.mxu0 0.0
        %4690 = vmatpush1.xpose.msra.mxu0 0.0
        %4691 = vmatprep.subr.mxu0 0.0
        %4692 = vmatpush1.xpose.msra.mxu0 0.0
        %4693 = vmatprep.subr.mxu0 0.0
        %4694 = vmatpush1.xpose.msra.mxu0 0.0
        %4695 = vmatprep.subr.mxu0 0.0
        %4696 = vmatpush1.xpose.msra.mxu0 0.0
        %4697 = vmatprep.subr.mxu0 0.0
        %4698 = vmatpush1.xpose.msra.mxu0 0.0
        %4699 = vmatprep.subr.mxu0 0.0
        %4700 = vmatpush1.xpose.msra.mxu0 0.0
        %4701 = vmatprep.subr.mxu0 0.0
        %4702 = vmatpush1.xpose.msra.mxu0 0.0
        %4703 = vmatprep.subr.mxu0 0.0
        %4704 = vmatpush1.xpose.msra.mxu0 0.0
        %4705 = vmatprep.subr.mxu0 0.0
        %4706 = vmatpush1.xpose.msra.mxu0 0.0
        %4707 = vmatprep.subr.mxu0 0.0
        %4708 = vmatpush1.xpose.msra.mxu0 0.0
        %4709 = vmatprep.subr.mxu0 0.0
        %4710 = vmatpush1.xpose.msra.mxu0 0.0
        %4711 = vmatprep.subr.mxu0 0.0
        %4712 = vmatpush1.xpose.msra.mxu0 0.0
        %4713 = vmatprep.subr.mxu0 0.0
        %4714 = vmatpush1.xpose.msra.mxu0 0.0
        %4715 = vmatprep.subr.mxu0 0.0
        %4716 = vmatpush1.xpose.msra.mxu0 0.0
        %4717 = vmatprep.mubr.f32.mxu0 0.0
        %4718 = vmatmul.mubr.f32.gmra.mrb[0].mxu0 %v4649
        %v4719 = vpop.f32.mrb[0].mxu0
        %v4720 = vadd.f32 0.0, %v4719
        %v4721 = vpop.f32.mrb[0].mxu0
        %4722 = vdwg.mxu0
        %v4723 = vmul.f32 %v4720, 0.088388346
        %v4724 = vadd.f32 %v4723, %v1004
        %v4725 = vsel %vm1400, %v4724, -inf
        %4726 = vmax.xlane.f32.xlu0 %v4725
        %v4727 = vpop.xlane.xlu0 %4726
        %v4728 = vsub.f32 %v4724, %v4727
        %v4729 = vmul.f32 %v4728, 1.442695
        %v4730 = vpow.pop %v4729
        %v4731 = vsel %vm1400, %v4730, 0.0
        %4732 = vadd.xlane.f32.xlu0 %v4731
        %v4733 = vpop.xlane.xlu0 %4732
        %v4734 = vrcp.pop %v4733
        %v4735 = vmul.f32 %v4730, %v4734
        %4737 = vrot.lane.b32.xlu0 %v4480, 96
        %v4738 = vpop.permute.xlu0 %4737
        %v4741 = vsel %vm1400, %v4735, 0
        %4743 = vmatprep.subr.mxu0 0.0
        %4744 = vmatpush1.msra.mxu0 %v4738
        %4745 = vmatprep.subr.mxu0 0.0
        %4746 = vmatpush1.msra.mxu0 0.0
        %4747 = vmatprep.subr.mxu0 0.0
        %4748 = vmatpush1.msra.mxu0 0.0
        %4749 = vmatprep.subr.mxu0 0.0
        %4750 = vmatpush1.msra.mxu0 0.0
        %4751 = vmatprep.subr.mxu0 0.0
        %4752 = vmatpush1.msra.mxu0 0.0
        %4753 = vmatprep.subr.mxu0 0.0
        %4754 = vmatpush1.msra.mxu0 0.0
        %4755 = vmatprep.subr.mxu0 0.0
        %4756 = vmatpush1.msra.mxu0 0.0
        %4757 = vmatprep.subr.mxu0 0.0
        %4758 = vmatpush1.msra.mxu0 0.0
        %4759 = vmatprep.subr.mxu0 0.0
        %4760 = vmatpush1.msra.mxu0 0.0
        %4761 = vmatprep.subr.mxu0 0.0
        %4762 = vmatpush1.msra.mxu0 0.0
        %4763 = vmatprep.subr.mxu0 0.0
        %4764 = vmatpush1.msra.mxu0 0.0
        %4765 = vmatprep.subr.mxu0 0.0
        %4766 = vmatpush1.msra.mxu0 0.0
        %4767 = vmatprep.subr.mxu0 0.0
        %4768 = vmatpush1.msra.mxu0 0.0
        %4769 = vmatprep.subr.mxu0 0.0
        %4770 = vmatpush1.msra.mxu0 0.0
        %4771 = vmatprep.subr.mxu0 0.0
        %4772 = vmatpush1.msra.mxu0 0.0
        %4773 = vmatprep.subr.mxu0 0.0
        %4774 = vmatpush1.msra.mxu0 0.0
        %4775 = vmatprep.subr.mxu0 0.0
        %4776 = vmatpush1.msra.mxu0 0.0
        %4777 = vmatprep.subr.mxu0 0.0
        %4778 = vmatpush1.msra.mxu0 0.0
        %4779 = vmatprep.subr.mxu0 0.0
        %4780 = vmatpush1.msra.mxu0 0.0
        %4781 = vmatprep.subr.mxu0 0.0
        %4782 = vmatpush1.msra.mxu0 0.0
        %4783 = vmatprep.subr.mxu0 0.0
        %4784 = vmatpush1.msra.mxu0 0.0
        %4785 = vmatprep.subr.mxu0 0.0
        %4786 = vmatpush1.msra.mxu0 0.0
        %4787 = vmatprep.subr.mxu0 0.0
        %4788 = vmatpush1.msra.mxu0 0.0
        %4789 = vmatprep.subr.mxu0 0.0
        %4790 = vmatpush1.msra.mxu0 0.0
        %4791 = vmatprep.subr.mxu0 0.0
        %4792 = vmatpush1.msra.mxu0 0.0
        %4793 = vmatprep.subr.mxu0 0.0
        %4794 = vmatpush1.msra.mxu0 0.0
        %4795 = vmatprep.subr.mxu0 0.0
        %4796 = vmatpush1.msra.mxu0 0.0
        %4797 = vmatprep.subr.mxu0 0.0
        %4798 = vmatpush1.msra.mxu0 0.0
        %4799 = vmatprep.subr.mxu0 0.0
        %4800 = vmatpush1.msra.mxu0 0.0
        %4801 = vmatprep.subr.mxu0 0.0
        %4802 = vmatpush1.msra.mxu0 0.0
        %4803 = vmatprep.subr.mxu0 0.0
        %4804 = vmatpush1.msra.mxu0 0.0
        %4805 = vmatprep.subr.mxu0 0.0
        %4806 = vmatpush1.msra.mxu0 0.0
        %4807 = vmatprep.mubr.f32.mxu0 0.0
        %4808 = vmatmul.mubr.f32.gmra.mrb[0].mxu0 %v4741
        %v4809 = vpop.f32.mrb[0].mxu0
        %v4810 = vadd.f32 0.0, %v4809
        %v4811 = vpop.f32.mrb[0].mxu0
        %4812 = vdwg.mxu0
        %4813 = vrot.lane.b32.xlu0 %v4290, 64
        %v4814 = vpop.permute.xlu0 %4813
        %4815 = vrot.lane.b32.xlu0 %v4385, 64
        %v4816 = vpop.permute.xlu0 %4815
        %v4817 = vsel %vm1321, %v4814, 0
        %v4819 = vsel %vm1321, %v4816, 0
        %4821 = vmatprep.subr.mxu0 0.0
        %4822 = vmatpush1.xpose.msra.mxu0 %v4819
        %4823 = vmatprep.subr.mxu0 0.0
        %4824 = vmatpush1.xpose.msra.mxu0 0.0
        %4825 = vmatprep.subr.mxu0 0.0
        %4826 = vmatpush1.xpose.msra.mxu0 0.0
        %4827 = vmatprep.subr.mxu0 0.0
        %4828 = vmatpush1.xpose.msra.mxu0 0.0
        %4829 = vmatprep.subr.mxu0 0.0
        %4830 = vmatpush1.xpose.msra.mxu0 0.0
        %4831 = vmatprep.subr.mxu0 0.0
        %4832 = vmatpush1.xpose.msra.mxu0 0.0
        %4833 = vmatprep.subr.mxu0 0.0
        %4834 = vmatpush1.xpose.msra.mxu0 0.0
        %4835 = vmatprep.subr.mxu0 0.0
        %4836 = vmatpush1.xpose.msra.mxu0 0.0
        %4837 = vmatprep.subr.mxu0 0.0
        %4838 = vmatpush1.xpose.msra.mxu0 0.0
        %4839 = vmatprep.subr.mxu0 0.0
        %4840 = vmatpush1.xpose.msra.mxu0 0.0
        %4841 = vmatprep.subr.mxu0 0.0
        %4842 = vmatpush1.xpose.msra.mxu0 0.0
        %4843 = vmatprep.subr.mxu0 0.0
        %4844 = vmatpush1.xpose.msra.mxu0 0.0
        %4845 = vmatprep.subr.mxu0 0.0
        %4846 = vmatpush1.xpose.msra.mxu0 0.0
        %4847 = vmatprep.subr.mxu0 0.0
        %4848 = vmatpush1.xpose.msra.mxu0 0.0
        %4849 = vmatprep.subr.mxu0 0.0
        %4850 = vmatpush1.xpose.msra.mxu0 0.0
        %4851 = vmatprep.subr.mxu0 0.0
        %4852 = vmatpush1.xpose.msra.mxu0 0.0
        %4853 = vmatprep.subr.mxu0 0.0
        %4854 = vmatpush1.xpose.msra.mxu0 0.0
        %4855 = vmatprep.subr.mxu0 0.0
        %4856 = vmatpush1.xpose.msra.mxu0 0.0
        %4857 = vmatprep.subr.mxu0 0.0
        %4858 = vmatpush1.xpose.msra.mxu0 0.0
        %4859 = vmatprep.subr.mxu0 0.0
        %4860 = vmatpush1.xpose.msra.mxu0 0.0
        %4861 = vmatprep.subr.mxu0 0.0
        %4862 = vmatpush1.xpose.msra.mxu0 0.0
        %4863 = vmatprep.subr.mxu0 0.0
        %4864 = vmatpush1.xpose.msra.mxu0 0.0
        %4865 = vmatprep.subr.mxu0 0.0
        %4866 = vmatpush1.xpose.msra.mxu0 0.0
        %4867 = vmatprep.subr.mxu0 0.0
        %4868 = vmatpush1.xpose.msra.mxu0 0.0
        %4869 = vmatprep.subr.mxu0 0.0
        %4870 = vmatpush1.xpose.msra.mxu0 0.0
        %4871 = vmatprep.subr.mxu0 0.0
        %4872 = vmatpush1.xpose.msra.mxu0 0.0
        %4873 = vmatprep.subr.mxu0 0.0
        %4874 = vmatpush1.xpose.msra.mxu0 0.0
        %4875 = vmatprep.subr.mxu0 0.0
        %4876 = vmatpush1.xpose.msra.mxu0 0.0
        %4877 = vmatprep.subr.mxu0 0.0
        %4878 = vmatpush1.xpose.msra.mxu0 0.0
        %4879 = vmatprep.subr.mxu0 0.0
        %4880 = vmatpush1.xpose.msra.mxu0 0.0
        %4881 = vmatprep.subr.mxu0 0.0
        %4882 = vmatpush1.xpose.msra.mxu0 0.0
        %4883 = vmatprep.subr.mxu0 0.0
        %4884 = vmatpush1.xpose.msra.mxu0 0.0
        %4885 = vmatprep.mubr.f32.mxu0 0.0
        %4886 = vmatmul.mubr.f32.gmra.mrb[0].mxu0 %v4817
        %v4887 = vpop.f32.mrb[0].mxu0
        %v4888 = vadd.f32 0.0, %v4887
        %v4889 = vpop.f32.mrb[0].mxu0
        %4890 = vdwg.mxu0
        %v4891 = vmul.f32 %v4888, 0.088388346
        %v4892 = vadd.f32 %v4891, %v1004
        %v4893 = vsel %vm1400, %v4892, -inf
        %4894 = vmax.xlane.f32.xlu0 %v4893
        %v4895 = vpop.xlane.xlu0 %4894
        %v4896 = vsub.f32 %v4892, %v4895
        %v4897 = vmul.f32 %v4896, 1.442695
        %v4898 = vpow.pop %v4897
        %v4899 = vsel %vm1400, %v4898, 0.0
        %4900 = vadd.xlane.f32.xlu0 %v4899
        %v4901 = vpop.xlane.xlu0 %4900
        %v4902 = vrcp.pop %v4901
        %v4903 = vmul.f32 %v4898, %v4902
        %4904 = vrot.lane.b32.xlu0 %v4480, 64
        %v4905 = vpop.permute.xlu0 %4904
        %v4908 = vsel %vm1400, %v4903, 0
        %4910 = vmatprep.subr.mxu0 0.0
        %4911 = vmatpush1.msra.mxu0 %v4905
        %4912 = vmatprep.subr.mxu0 0.0
        %4913 = vmatpush1.msra.mxu0 0.0
        %4914 = vmatprep.subr.mxu0 0.0
        %4915 = vmatpush1.msra.mxu0 0.0
        %4916 = vmatprep.subr.mxu0 0.0
        %4917 = vmatpush1.msra.mxu0 0.0
        %4918 = vmatprep.subr.mxu0 0.0
        %4919 = vmatpush1.msra.mxu0 0.0
        %4920 = vmatprep.subr.mxu0 0.0
        %4921 = vmatpush1.msra.mxu0 0.0
        %4922 = vmatprep.subr.mxu0 0.0
        %4923 = vmatpush1.msra.mxu0 0.0
        %4924 = vmatprep.subr.mxu0 0.0
        %4925 = vmatpush1.msra.mxu0 0.0
        %4926 = vmatprep.subr.mxu0 0.0
        %4927 = vmatpush1.msra.mxu0 0.0
        %4928 = vmatprep.subr.mxu0 0.0
        %4929 = vmatpush1.msra.mxu0 0.0
        %4930 = vmatprep.subr.mxu0 0.0
        %4931 = vmatpush1.msra.mxu0 0.0
        %4932 = vmatprep.subr.mxu0 0.0
        %4933 = vmatpush1.msra.mxu0 0.0
        %4934 = vmatprep.subr.mxu0 0.0
        %4935 = vmatpush1.msra.mxu0 0.0
        %4936 = vmatprep.subr.mxu0 0.0
        %4937 = vmatpush1.msra.mxu0 0.0
        %4938 = vmatprep.subr.mxu0 0.0
        %4939 = vmatpush1.msra.mxu0 0.0
        %4940 = vmatprep.subr.mxu0 0.0
        %4941 = vmatpush1.msra.mxu0 0.0
        %4942 = vmatprep.subr.mxu0 0.0
        %4943 = vmatpush1.msra.mxu0 0.0
        %4944 = vmatprep.subr.mxu0 0.0
        %4945 = vmatpush1.msra.mxu0 0.0
        %4946 = vmatprep.subr.mxu0 0.0
        %4947 = vmatpush1.msra.mxu0 0.0
        %4948 = vmatprep.subr.mxu0 0.0
        %4949 = vmatpush1.msra.mxu0 0.0
        %4950 = vmatprep.subr.mxu0 0.0
        %4951 = vmatpush1.msra.mxu0 0.0
        %4952 = vmatprep.subr.mxu0 0.0
        %4953 = vmatpush1.msra.mxu0 0.0
        %4954 = vmatprep.subr.mxu0 0.0
        %4955 = vmatpush1.msra.mxu0 0.0
        %4956 = vmatprep.subr.mxu0 0.0
        %4957 = vmatpush1.msra.mxu0 0.0
        %4958 = vmatprep.subr.mxu0 0.0
        %4959 = vmatpush1.msra.mxu0 0.0
        %4960 = vmatprep.subr.mxu0 0.0
        %4961 = vmatpush1.msra.mxu0 0.0
        %4962 = vmatprep.subr.mxu0 0.0
        %4963 = vmatpush1.msra.mxu0 0.0
        %4964 = vmatprep.subr.mxu0 0.0
        %4965 = vmatpush1.msra.mxu0 0.0
        %4966 = vmatprep.subr.mxu0 0.0
        %4967 = vmatpush1.msra.mxu0 0.0
        %4968 = vmatprep.subr.mxu0 0.0
        %4969 = vmatpush1.msra.mxu0 0.0
        %4970 = vmatprep.subr.mxu0 0.0
        %4971 = vmatpush1.msra.mxu0 0.0
        %4972 = vmatprep.subr.mxu0 0.0
        %4973 = vmatpush1.msra.mxu0 0.0
        %4974 = vmatprep.mubr.f32.mxu0 0.0
        %4975 = vmatmul.mubr.f32.gmra.mrb[0].mxu0 %v4908
        %v4976 = vpop.f32.mrb[0].mxu0
        %v4977 = vadd.f32 0.0, %v4976
        %v4978 = vpop.f32.mrb[0].mxu0
        %4979 = vdwg.mxu0
        %4980 = vrot.lane.b32.xlu0 %v4290, 32
        %v4981 = vpop.permute.xlu0 %4980
        %4982 = vrot.lane.b32.xlu0 %v4385, 32
        %v4983 = vpop.permute.xlu0 %4982
        %v4984 = vsel %vm1321, %v4981, 0
        %v4986 = vsel %vm1321, %v4983, 0
        %4988 = vmatprep.subr.mxu0 0.0
        %4989 = vmatpush1.xpose.msra.mxu0 %v4986
        %4990 = vmatprep.subr.mxu0 0.0
        %4991 = vmatpush1.xpose.msra.mxu0 0.0
        %4992 = vmatprep.subr.mxu0 0.0
        %4993 = vmatpush1.xpose.msra.mxu0 0.0
        %4994 = vmatprep.subr.mxu0 0.0
        %4995 = vmatpush1.xpose.msra.mxu0 0.0
        %4996 = vmatprep.subr.mxu0 0.0
        %4997 = vmatpush1.xpose.msra.mxu0 0.0
        %4998 = vmatprep.subr.mxu0 0.0
        %4999 = vmatpush1.xpose.msra.mxu0 0.0
        %5000 = vmatprep.subr.mxu0 0.0
        %5001 = vmatpush1.xpose.msra.mxu0 0.0
        %5002 = vmatprep.subr.mxu0 0.0
        %5003 = vmatpush1.xpose.msra.mxu0 0.0
        %5004 = vmatprep.subr.mxu0 0.0
        %5005 = vmatpush1.xpose.msra.mxu0 0.0
        %5006 = vmatprep.subr.mxu0 0.0
        %5007 = vmatpush1.xpose.msra.mxu0 0.0
        %5008 = vmatprep.subr.mxu0 0.0
        %5009 = vmatpush1.xpose.msra.mxu0 0.0
        %5010 = vmatprep.subr.mxu0 0.0
        %5011 = vmatpush1.xpose.msra.mxu0 0.0
        %5012 = vmatprep.subr.mxu0 0.0
        %5013 = vmatpush1.xpose.msra.mxu0 0.0
        %5014 = vmatprep.subr.mxu0 0.0
        %5015 = vmatpush1.xpose.msra.mxu0 0.0
        %5016 = vmatprep.subr.mxu0 0.0
        %5017 = vmatpush1.xpose.msra.mxu0 0.0
        %5018 = vmatprep.subr.mxu0 0.0
        %5019 = vmatpush1.xpose.msra.mxu0 0.0
        %5020 = vmatprep.subr.mxu0 0.0
        %5021 = vmatpush1.xpose.msra.mxu0 0.0
        %5022 = vmatprep.subr.mxu0 0.0
        %5023 = vmatpush1.xpose.msra.mxu0 0.0
        %5024 = vmatprep.subr.mxu0 0.0
        %5025 = vmatpush1.xpose.msra.mxu0 0.0
        %5026 = vmatprep.subr.mxu0 0.0
        %5027 = vmatpush1.xpose.msra.mxu0 0.0
        %5028 = vmatprep.subr.mxu0 0.0
        %5029 = vmatpush1.xpose.msra.mxu0 0.0
        %5030 = vmatprep.subr.mxu0 0.0
        %5031 = vmatpush1.xpose.msra.mxu0 0.0
        %5032 = vmatprep.subr.mxu0 0.0
        %5033 = vmatpush1.xpose.msra.mxu0 0.0
        %5034 = vmatprep.subr.mxu0 0.0
        %5035 = vmatpush1.xpose.msra.mxu0 0.0
        %5036 = vmatprep.subr.mxu0 0.0
        %5037 = vmatpush1.xpose.msra.mxu0 0.0
        %5038 = vmatprep.subr.mxu0 0.0
        %5039 = vmatpush1.xpose.msra.mxu0 0.0
        %5040 = vmatprep.subr.mxu0 0.0
        %5041 = vmatpush1.xpose.msra.mxu0 0.0
        %5042 = vmatprep.subr.mxu0 0.0
        %5043 = vmatpush1.xpose.msra.mxu0 0.0
        %5044 = vmatprep.subr.mxu0 0.0
        %5045 = vmatpush1.xpose.msra.mxu0 0.0
        %5046 = vmatprep.subr.mxu0 0.0
        %5047 = vmatpush1.xpose.msra.mxu0 0.0
        %5048 = vmatprep.subr.mxu0 0.0
        %5049 = vmatpush1.xpose.msra.mxu0 0.0
        %5050 = vmatprep.subr.mxu0 0.0
        %5051 = vmatpush1.xpose.msra.mxu0 0.0
        %5052 = vmatprep.mubr.f32.mxu0 0.0
        %5053 = vmatmul.mubr.f32.gmra.mrb[0].mxu0 %v4984
        %v5054 = vpop.f32.mrb[0].mxu0
        %v5055 = vadd.f32 0.0, %v5054
        %v5056 = vpop.f32.mrb[0].mxu0
        %5057 = vdwg.mxu0
        %v5058 = vmul.f32 %v5055, 0.088388346
        %v5059 = vadd.f32 %v5058, %v1004
        %v5060 = vsel %vm1400, %v5059, -inf
        %5061 = vmax.xlane.f32.xlu0 %v5060
        %v5062 = vpop.xlane.xlu0 %5061
        %v5063 = vsub.f32 %v5059, %v5062
        %v5064 = vmul.f32 %v5063, 1.442695
        %v5065 = vpow.pop %v5064
        %v5066 = vsel %vm1400, %v5065, 0.0
        %5067 = vadd.xlane.f32.xlu0 %v5066
        %v5068 = vpop.xlane.xlu0 %5067
        %v5069 = vrcp.pop %v5068
        %v5070 = vmul.f32 %v5065, %v5069
        %5071 = vrot.lane.b32.xlu0 %v4480, 32
        %v5072 = vpop.permute.xlu0 %5071
        %v5075 = vsel %vm1400, %v5070, 0
        %5077 = vmatprep.subr.mxu0 0.0
        %5078 = vmatpush1.msra.mxu0 %v5072
        %5079 = vmatprep.subr.mxu0 0.0
        %5080 = vmatpush1.msra.mxu0 0.0
        %5081 = vmatprep.subr.mxu0 0.0
        %5082 = vmatpush1.msra.mxu0 0.0
        %5083 = vmatprep.subr.mxu0 0.0
        %5084 = vmatpush1.msra.mxu0 0.0
        %5085 = vmatprep.subr.mxu0 0.0
        %5086 = vmatpush1.msra.mxu0 0.0
        %5087 = vmatprep.subr.mxu0 0.0
        %5088 = vmatpush1.msra.mxu0 0.0
        %5089 = vmatprep.subr.mxu0 0.0
        %5090 = vmatpush1.msra.mxu0 0.0
        %5091 = vmatprep.subr.mxu0 0.0
        %5092 = vmatpush1.msra.mxu0 0.0
        %5093 = vmatprep.subr.mxu0 0.0
        %5094 = vmatpush1.msra.mxu0 0.0
        %5095 = vmatprep.subr.mxu0 0.0
        %5096 = vmatpush1.msra.mxu0 0.0
        %5097 = vmatprep.subr.mxu0 0.0
        %5098 = vmatpush1.msra.mxu0 0.0
        %5099 = vmatprep.subr.mxu0 0.0
        %5100 = vmatpush1.msra.mxu0 0.0
        %5101 = vmatprep.subr.mxu0 0.0
        %5102 = vmatpush1.msra.mxu0 0.0
        %5103 = vmatprep.subr.mxu0 0.0
        %5104 = vmatpush1.msra.mxu0 0.0
        %5105 = vmatprep.subr.mxu0 0.0
        %5106 = vmatpush1.msra.mxu0 0.0
        %5107 = vmatprep.subr.mxu0 0.0
        %5108 = vmatpush1.msra.mxu0 0.0
        %5109 = vmatprep.subr.mxu0 0.0
        %5110 = vmatpush1.msra.mxu0 0.0
        %5111 = vmatprep.subr.mxu0 0.0
        %5112 = vmatpush1.msra.mxu0 0.0
        %5113 = vmatprep.subr.mxu0 0.0
        %5114 = vmatpush1.msra.mxu0 0.0
        %5115 = vmatprep.subr.mxu0 0.0
        %5116 = vmatpush1.msra.mxu0 0.0
        %5117 = vmatprep.subr.mxu0 0.0
        %5118 = vmatpush1.msra.mxu0 0.0
        %5119 = vmatprep.subr.mxu0 0.0
        %5120 = vmatpush1.msra.mxu0 0.0
        %5121 = vmatprep.subr.mxu0 0.0
        %5122 = vmatpush1.msra.mxu0 0.0
        %5123 = vmatprep.subr.mxu0 0.0
        %5124 = vmatpush1.msra.mxu0 0.0
        %5125 = vmatprep.subr.mxu0 0.0
        %5126 = vmatpush1.msra.mxu0 0.0
        %5127 = vmatprep.subr.mxu0 0.0
        %5128 = vmatpush1.msra.mxu0 0.0
        %5129 = vmatprep.subr.mxu0 0.0
        %5130 = vmatpush1.msra.mxu0 0.0
        %5131 = vmatprep.subr.mxu0 0.0
        %5132 = vmatpush1.msra.mxu0 0.0
        %5133 = vmatprep.subr.mxu0 0.0
        %5134 = vmatpush1.msra.mxu0 0.0
        %5135 = vmatprep.subr.mxu0 0.0
        %5136 = vmatpush1.msra.mxu0 0.0
        %5137 = vmatprep.subr.mxu0 0.0
        %5138 = vmatpush1.msra.mxu0 0.0
        %5139 = vmatprep.subr.mxu0 0.0
        %5140 = vmatpush1.msra.mxu0 0.0
        %5141 = vmatprep.mubr.f32.mxu0 0.0
        %5142 = vmatmul.mubr.f32.gmra.mrb[0].mxu0 %v5075
        %v5143 = vpop.f32.mrb[0].mxu0
        %v5144 = vadd.f32 0.0, %v5143
        %v5145 = vpop.f32.mrb[0].mxu0
        %5146 = vdwg.mxu0
        %5148 = vrot.lane.b32.xlu0 %v4810, 32
        %v5149 = vpop.permute.xlu0 %5148
        %5152 = vrot.lane.b32.xlu0 %v4977, 64
        %v5153 = vpop.permute.xlu0 %5152
        %5156 = vrot.lane.b32.xlu0 %v5144, 96
        %v5157 = vpop.permute.xlu0 %5156
        %v5159 = vsel %vm1321, %v4642, %v5149
        %v5160 = vsel %vm2000, %v5159, %v5153
        %v5161 = vsel %vm2002, %v5160, %v5157
        %s5162 = scalar_lea.vmem [#allocation10], 256
        %v5163 = vld [vmem:[%s5162] sm:$0xff]
        %v5164 = vld [vmem:[%s5162 + $0x8] sm:$0xff]
        %v5165 = vld [vmem:[%s5162 + $0x10] sm:$0xff]
        %v5166 = vld [vmem:[%s5162 + $0x18] sm:$0xff]
        %v5167 = vld [vmem:[%s5162 + $0x20] sm:$0xff]
        %v5168 = vld [vmem:[%s5162 + $0x28] sm:$0xff]
        %v5169 = vld [vmem:[%s5162 + $0x30] sm:$0xff]
        %v5170 = vld [vmem:[%s5162 + $0x38] sm:$0xff]
        %v5171 = vld [vmem:[%s5162 + $0x40] sm:$0xff]
        %v5172 = vld [vmem:[%s5162 + $0x48] sm:$0xff]
        %v5173 = vld [vmem:[%s5162 + $0x50] sm:$0xff]
        %v5174 = vld [vmem:[%s5162 + $0x58] sm:$0xff]
        %v5175 = vld [vmem:[%s5162 + $0x60] sm:$0xff]
        %v5176 = vld [vmem:[%s5162 + $0x68] sm:$0xff]
        %v5177 = vld [vmem:[%s5162 + $0x70] sm:$0xff]
        %v5178 = vld [vmem:[%s5162 + $0x78] sm:$0xff]
        %5179 = vmatprep.subr.mxu0 0.0
        %5180 = vmatpush1.msra.mxu0 %v5163
        %5181 = vmatprep.subr.mxu0 0.0
        %5182 = vmatpush1.msra.mxu0 %v5164
        %5183 = vmatprep.subr.mxu0 0.0
        %5184 = vmatpush1.msra.mxu0 %v5165
        %5185 = vmatprep.subr.mxu0 0.0
        %5186 = vmatpush1.msra.mxu0 %v5166
        %5187 = vmatprep.subr.mxu0 0.0
        %5188 = vmatpush1.msra.mxu0 %v5167
        %5189 = vmatprep.subr.mxu0 0.0
        %5190 = vmatpush1.msra.mxu0 %v5168
        %5191 = vmatprep.subr.mxu0 0.0
        %5192 = vmatpush1.msra.mxu0 %v5169
        %5193 = vmatprep.subr.mxu0 0.0
        %5194 = vmatpush1.msra.mxu0 %v5170
        %5195 = vmatprep.subr.mxu0 0.0
        %5196 = vmatpush1.msra.mxu0 %v5171
        %5197 = vmatprep.subr.mxu0 0.0
        %5198 = vmatpush1.msra.mxu0 %v5172
        %5199 = vmatprep.subr.mxu0 0.0
        %5200 = vmatpush1.msra.mxu0 %v5173
        %5201 = vmatprep.subr.mxu0 0.0
        %5202 = vmatpush1.msra.mxu0 %v5174
        %5203 = vmatprep.subr.mxu0 0.0
        %5204 = vmatpush1.msra.mxu0 %v5175
        %5205 = vmatprep.subr.mxu0 0.0
        %5206 = vmatpush1.msra.mxu0 %v5176
        %5207 = vmatprep.subr.mxu0 0.0
        %5208 = vmatpush1.msra.mxu0 %v5177
        %5209 = vmatprep.subr.mxu0 0.0
        %5210 = vmatpush1.msra.mxu0 %v5178
        %5211 = vmatprep.subr.mxu0 0.0
        %5212 = vmatpush1.msra.mxu0 0.0
        %5213 = vmatprep.subr.mxu0 0.0
        %5214 = vmatpush1.msra.mxu0 0.0
        %5215 = vmatprep.subr.mxu0 0.0
        %5216 = vmatpush1.msra.mxu0 0.0
        %5217 = vmatprep.subr.mxu0 0.0
        %5218 = vmatpush1.msra.mxu0 0.0
        %5219 = vmatprep.subr.mxu0 0.0
        %5220 = vmatpush1.msra.mxu0 0.0
        %5221 = vmatprep.subr.mxu0 0.0
        %5222 = vmatpush1.msra.mxu0 0.0
        %5223 = vmatprep.subr.mxu0 0.0
        %5224 = vmatpush1.msra.mxu0 0.0
        %5225 = vmatprep.subr.mxu0 0.0
        %5226 = vmatpush1.msra.mxu0 0.0
        %5227 = vmatprep.subr.mxu0 0.0
        %5228 = vmatpush1.msra.mxu0 0.0
        %5229 = vmatprep.subr.mxu0 0.0
        %5230 = vmatpush1.msra.mxu0 0.0
        %5231 = vmatprep.subr.mxu0 0.0
        %5232 = vmatpush1.msra.mxu0 0.0
        %5233 = vmatprep.subr.mxu0 0.0
        %5234 = vmatpush1.msra.mxu0 0.0
        %5235 = vmatprep.subr.mxu0 0.0
        %5236 = vmatpush1.msra.mxu0 0.0
        %5237 = vmatprep.subr.mxu0 0.0
        %5238 = vmatpush1.msra.mxu0 0.0
        %5239 = vmatprep.subr.mxu0 0.0
        %5240 = vmatpush1.msra.mxu0 0.0
        %5241 = vmatprep.subr.mxu0 0.0
        %5242 = vmatpush1.msra.mxu0 0.0
        %5243 = vmatprep.mubr.f32.mxu0 0.0
        %5244 = vmatmul.mubr.f32.gmra.mrb[0].mxu0 %v5161
        %v5245 = vpop.f32.mrb[0].mxu0
        %v5246 = vadd.f32 0.0, %v5245
        %v5247 = vpop.f32.mrb[0].mxu0
        %5248 = vdwg.mxu0
        %v5249 = vadd.f32 %v4160, %v5246
        %s5250 = scalar_lea.vmem %s12, 2
        %v5251 = vld [vmem:[%s5250] sm:$0x1]
        %v5253 = vlaneseq
        %v5254 = vshrl.u32 %v5253, 7
        %v5255 = vsub.s32 0, %v5254
        %v5256 = vrot.slane %v5251, %v5255
        %v5258 = vadd.f32 %v5249, %v5256
        %s5259 = scalar_lea.vmem %s13, 2
        %v5260 = vld [vmem:[%s5259] sm:$0x1]
        %s5261 = scalar_lea.vmem %s14, 2
        %v5262 = vld [vmem:[%s5261] sm:$0x1]
        %v5263 = vrot.slane %v5258, 4
        %v5264 = vadd.f32 %v5258, %v5263
        %v5265 = vrot.slane %v5264, 2
        %v5266 = vadd.f32 %v5264, %v5265
        %v5267 = vrot.slane %v5266, 1
        %v5268 = vadd.f32 %v5266, %v5267
        %v5269 = vmul.f32 %v5268, %v1013
        %v5270 = vsub.f32 %v5258, %v5269
        %v5271 = vmul.f32 %v5270, %v5270
        %v5272 = vrot.slane %v5271, 4
        %v5273 = vadd.f32 %v5271, %v5272
        %v5274 = vrot.slane %v5273, 2
        %v5275 = vadd.f32 %v5273, %v5274
        %v5276 = vrot.slane %v5275, 1
        %v5277 = vadd.f32 %v5275, %v5276
        %v5278 = vmul.f32 %v5277, %v1023
        %v5279 = vadd.f32 %v5278, 1e-05
        %v5280 = vrsqrt.pop %v5279
        %v5281 = vmul.f32 %v5270, %v5280
        %v5283 = vlaneseq
        %v5284 = vshrl.u32 %v5283, 7
        %v5285 = vsub.s32 0, %v5284
        %v5286 = vrot.slane %v5260, %v5285
        %v5288 = vmul.f32 %v5286, %v5281
        %v5290 = vlaneseq
        %v5291 = vshrl.u32 %v5290, 7
        %v5292 = vsub.s32 0, %v5291
        %v5293 = vrot.slane %v5262, %v5292
        %v5295 = vadd.f32 %v5288, %v5293
        %s5296 = scalar_lea.vmem [#allocation11], 1024
        %v5297 = vld [vmem:[%s5296] sm:$0xff]
        %v5298 = vld [vmem:[%s5296 + $0x8] sm:$0xff]
        %v5299 = vld [vmem:[%s5296 + $0x10] sm:$0xff]
        %v5300 = vld [vmem:[%s5296 + $0x18] sm:$0xff]
        %v5301 = vld [vmem:[%s5296 + $0x20] sm:$0xff]
        %v5302 = vld [vmem:[%s5296 + $0x28] sm:$0xff]
        %v5303 = vld [vmem:[%s5296 + $0x30] sm:$0xff]
        %v5304 = vld [vmem:[%s5296 + $0x38] sm:$0xff]
        %v5305 = vld [vmem:[%s5296 + $0x40] sm:$0xff]
        %v5306 = vld [vmem:[%s5296 + $0x48] sm:$0xff]
        %v5307 = vld [vmem:[%s5296 + $0x50] sm:$0xff]
        %v5308 = vld [vmem:[%s5296 + $0x58] sm:$0xff]
        %v5309 = vld [vmem:[%s5296 + $0x60] sm:$0xff]
        %v5310 = vld [vmem:[%s5296 + $0x68] sm:$0xff]
        %v5311 = vld [vmem:[%s5296 + $0x70] sm:$0xff]
        %v5312 = vld [vmem:[%s5296 + $0x78] sm:$0xff]
        %v5313 = vld [vmem:[%s5296 + $0x80] sm:$0xff]
        %v5314 = vld [vmem:[%s5296 + $0x88] sm:$0xff]
        %v5315 = vld [vmem:[%s5296 + $0x90] sm:$0xff]
        %v5316 = vld [vmem:[%s5296 + $0x98] sm:$0xff]
        %v5317 = vld [vmem:[%s5296 + $0xa0] sm:$0xff]
        %v5318 = vld [vmem:[%s5296 + $0xa8] sm:$0xff]
        %v5319 = vld [vmem:[%s5296 + $0xb0] sm:$0xff]
        %v5320 = vld [vmem:[%s5296 + $0xb8] sm:$0xff]
        %v5321 = vld [vmem:[%s5296 + $0xc0] sm:$0xff]
        %v5322 = vld [vmem:[%s5296 + $0xc8] sm:$0xff]
        %v5323 = vld [vmem:[%s5296 + $0xd0] sm:$0xff]
        %v5324 = vld [vmem:[%s5296 + $0xd8] sm:$0xff]
        %v5325 = vld [vmem:[%s5296 + $0xe0] sm:$0xff]
        %v5326 = vld [vmem:[%s5296 + $0xe8] sm:$0xff]
        %v5327 = vld [vmem:[%s5296 + $0xf0] sm:$0xff]
        %v5328 = vld [vmem:[%s5296 + $0xf8] sm:$0xff]
        %v5329 = vld [vmem:[%s5296 + $0x100] sm:$0xff]
        %v5330 = vld [vmem:[%s5296 + $0x108] sm:$0xff]
        %v5331 = vld [vmem:[%s5296 + $0x110] sm:$0xff]
        %v5332 = vld [vmem:[%s5296 + $0x118] sm:$0xff]
        %v5333 = vld [vmem:[%s5296 + $0x120] sm:$0xff]
        %v5334 = vld [vmem:[%s5296 + $0x128] sm:$0xff]
        %v5335 = vld [vmem:[%s5296 + $0x130] sm:$0xff]
        %v5336 = vld [vmem:[%s5296 + $0x138] sm:$0xff]
        %v5337 = vld [vmem:[%s5296 + $0x140] sm:$0xff]
        %v5338 = vld [vmem:[%s5296 + $0x148] sm:$0xff]
        %v5339 = vld [vmem:[%s5296 + $0x150] sm:$0xff]
        %v5340 = vld [vmem:[%s5296 + $0x158] sm:$0xff]
        %v5341 = vld [vmem:[%s5296 + $0x160] sm:$0xff]
        %v5342 = vld [vmem:[%s5296 + $0x168] sm:$0xff]
        %v5343 = vld [vmem:[%s5296 + $0x170] sm:$0xff]
        %v5344 = vld [vmem:[%s5296 + $0x178] sm:$0xff]
        %v5345 = vld [vmem:[%s5296 + $0x180] sm:$0xff]
        %v5346 = vld [vmem:[%s5296 + $0x188] sm:$0xff]
        %v5347 = vld [vmem:[%s5296 + $0x190] sm:$0xff]
        %v5348 = vld [vmem:[%s5296 + $0x198] sm:$0xff]
        %v5349 = vld [vmem:[%s5296 + $0x1a0] sm:$0xff]
        %v5350 = vld [vmem:[%s5296 + $0x1a8] sm:$0xff]
        %v5351 = vld [vmem:[%s5296 + $0x1b0] sm:$0xff]
        %v5352 = vld [vmem:[%s5296 + $0x1b8] sm:$0xff]
        %v5353 = vld [vmem:[%s5296 + $0x1c0] sm:$0xff]
        %v5354 = vld [vmem:[%s5296 + $0x1c8] sm:$0xff]
        %v5355 = vld [vmem:[%s5296 + $0x1d0] sm:$0xff]
        %v5356 = vld [vmem:[%s5296 + $0x1d8] sm:$0xff]
        %v5357 = vld [vmem:[%s5296 + $0x1e0] sm:$0xff]
        %v5358 = vld [vmem:[%s5296 + $0x1e8] sm:$0xff]
        %v5359 = vld [vmem:[%s5296 + $0x1f0] sm:$0xff]
        %v5360 = vld [vmem:[%s5296 + $0x1f8] sm:$0xff]
        %s5361 = scalar_lea.vmem %s16, 8
        %v5362 = vld [vmem:[%s5361] sm:$0xf]
        %s5363 = scalar_lea.vmem [#allocation13], 1024
        %v5364 = vld [vmem:[%s5363] sm:$0xff]
        %v5365 = vld [vmem:[%s5363 + $0x8] sm:$0xff]
        %v5366 = vld [vmem:[%s5363 + $0x10] sm:$0xff]
        %v5367 = vld [vmem:[%s5363 + $0x18] sm:$0xff]
        %v5368 = vld [vmem:[%s5363 + $0x20] sm:$0xff]
        %v5369 = vld [vmem:[%s5363 + $0x28] sm:$0xff]
        %v5370 = vld [vmem:[%s5363 + $0x30] sm:$0xff]
        %v5371 = vld [vmem:[%s5363 + $0x38] sm:$0xff]
        %v5372 = vld [vmem:[%s5363 + $0x40] sm:$0xff]
        %v5373 = vld [vmem:[%s5363 + $0x48] sm:$0xff]
        %v5374 = vld [vmem:[%s5363 + $0x50] sm:$0xff]
        %v5375 = vld [vmem:[%s5363 + $0x58] sm:$0xff]
        %v5376 = vld [vmem:[%s5363 + $0x60] sm:$0xff]
        %v5377 = vld [vmem:[%s5363 + $0x68] sm:$0xff]
        %v5378 = vld [vmem:[%s5363 + $0x70] sm:$0xff]
        %v5379 = vld [vmem:[%s5363 + $0x78] sm:$0xff]
        %v5380 = vld [vmem:[%s5363 + $0x80] sm:$0xff]
        %v5381 = vld [vmem:[%s5363 + $0x88] sm:$0xff]
        %v5382 = vld [vmem:[%s5363 + $0x90] sm:$0xff]
        %v5383 = vld [vmem:[%s5363 + $0x98] sm:$0xff]
        %v5384 = vld [vmem:[%s5363 + $0xa0] sm:$0xff]
        %v5385 = vld [vmem:[%s5363 + $0xa8] sm:$0xff]
        %v5386 = vld [vmem:[%s5363 + $0xb0] sm:$0xff]
        %v5387 = vld [vmem:[%s5363 + $0xb8] sm:$0xff]
        %v5388 = vld [vmem:[%s5363 + $0xc0] sm:$0xff]
        %v5389 = vld [vmem:[%s5363 + $0xc8] sm:$0xff]
        %v5390 = vld [vmem:[%s5363 + $0xd0] sm:$0xff]
        %v5391 = vld [vmem:[%s5363 + $0xd8] sm:$0xff]
        %v5392 = vld [vmem:[%s5363 + $0xe0] sm:$0xff]
        %v5393 = vld [vmem:[%s5363 + $0xe8] sm:$0xff]
        %v5394 = vld [vmem:[%s5363 + $0xf0] sm:$0xff]
        %v5395 = vld [vmem:[%s5363 + $0xf8] sm:$0xff]
        %v5396 = vld [vmem:[%s5363 + $0x100] sm:$0xff]
        %v5397 = vld [vmem:[%s5363 + $0x108] sm:$0xff]
        %v5398 = vld [vmem:[%s5363 + $0x110] sm:$0xff]
        %v5399 = vld [vmem:[%s5363 + $0x118] sm:$0xff]
        %v5400 = vld [vmem:[%s5363 + $0x120] sm:$0xff]
        %v5401 = vld [vmem:[%s5363 + $0x128] sm:$0xff]
        %v5402 = vld [vmem:[%s5363 + $0x130] sm:$0xff]
        %v5403 = vld [vmem:[%s5363 + $0x138] sm:$0xff]
        %v5404 = vld [vmem:[%s5363 + $0x140] sm:$0xff]
        %v5405 = vld [vmem:[%s5363 + $0x148] sm:$0xff]
        %v5406 = vld [vmem:[%s5363 + $0x150] sm:$0xff]
        %v5407 = vld [vmem:[%s5363 + $0x158] sm:$0xff]
        %v5408 = vld [vmem:[%s5363 + $0x160] sm:$0xff]
        %v5409 = vld [vmem:[%s5363 + $0x168] sm:$0xff]
        %v5410 = vld [vmem:[%s5363 + $0x170] sm:$0xff]
        %v5411 = vld [vmem:[%s5363 + $0x178] sm:$0xff]
        %v5412 = vld [vmem:[%s5363 + $0x180] sm:$0xff]
        %v5413 = vld [vmem:[%s5363 + $0x188] sm:$0xff]
        %v5414 = vld [vmem:[%s5363 + $0x190] sm:$0xff]
        %v5415 = vld [vmem:[%s5363 + $0x198] sm:$0xff]
        %v5416 = vld [vmem:[%s5363 + $0x1a0] sm:$0xff]
        %v5417 = vld [vmem:[%s5363 + $0x1a8] sm:$0xff]
        %v5418 = vld [vmem:[%s5363 + $0x1b0] sm:$0xff]
        %v5419 = vld [vmem:[%s5363 + $0x1b8] sm:$0xff]
        %v5420 = vld [vmem:[%s5363 + $0x1c0] sm:$0xff]
        %v5421 = vld [vmem:[%s5363 + $0x1c8] sm:$0xff]
        %v5422 = vld [vmem:[%s5363 + $0x1d0] sm:$0xff]
        %v5423 = vld [vmem:[%s5363 + $0x1d8] sm:$0xff]
        %v5424 = vld [vmem:[%s5363 + $0x1e0] sm:$0xff]
        %v5425 = vld [vmem:[%s5363 + $0x1e8] sm:$0xff]
        %v5426 = vld [vmem:[%s5363 + $0x1f0] sm:$0xff]
        %v5427 = vld [vmem:[%s5363 + $0x1f8] sm:$0xff]
        %s5428 = scalar_lea.vmem %s18, 2
        %v5429 = vld [vmem:[%s5428] sm:$0x1]
        %v5431 = vlaneseq
        %v5432 = vshrl.u32 %v5431, 7
        %v5433 = vsub.s32 0, %v5432
        %v5434 = vrot.slane %v5362, %v5433
        %v5435 = vlaneseq
        %v5436 = vshrl.u32 %v5435, 7
        %v5437 = vsub.s32 1, %v5436
        %v5438 = vrot.slane %v5362, %v5437
        %v5439 = vlaneseq
        %v5440 = vshrl.u32 %v5439, 7
        %v5441 = vsub.s32 2, %v5440
        %v5442 = vrot.slane %v5362, %v5441
        %v5443 = vlaneseq
        %v5444 = vshrl.u32 %v5443, 7
        %v5445 = vsub.s32 3, %v5444
        %v5446 = vrot.slane %v5362, %v5445
        %5451 = vmatprep.subr.mxu0 %v5298
        %5452 = vmatpush1.msra.mxu0 %v5297
        %5453 = vmatprep.subr.mxu0 %v5302
        %5454 = vmatpush1.msra.mxu0 %v5301
        %5455 = vmatprep.subr.mxu0 %v5306
        %5456 = vmatpush1.msra.mxu0 %v5305
        %5457 = vmatprep.subr.mxu0 %v5310
        %5458 = vmatpush1.msra.mxu0 %v5309
        %5459 = vmatprep.subr.mxu0 %v5314
        %5460 = vmatpush1.msra.mxu0 %v5313
        %5461 = vmatprep.subr.mxu0 %v5318
        %5462 = vmatpush1.msra.mxu0 %v5317
        %5463 = vmatprep.subr.mxu0 %v5322
        %5464 = vmatpush1.msra.mxu0 %v5321
        %5465 = vmatprep.subr.mxu0 %v5326
        %5466 = vmatpush1.msra.mxu0 %v5325
        %5467 = vmatprep.subr.mxu0 %v5330
        %5468 = vmatpush1.msra.mxu0 %v5329
        %5469 = vmatprep.subr.mxu0 %v5334
        %5470 = vmatpush1.msra.mxu0 %v5333
        %5471 = vmatprep.subr.mxu0 %v5338
        %5472 = vmatpush1.msra.mxu0 %v5337
        %5473 = vmatprep.subr.mxu0 %v5342
        %5474 = vmatpush1.msra.mxu0 %v5341
        %5475 = vmatprep.subr.mxu0 %v5346
        %5476 = vmatpush1.msra.mxu0 %v5345
        %5477 = vmatprep.subr.mxu0 %v5350
        %5478 = vmatpush1.msra.mxu0 %v5349
        %5479 = vmatprep.subr.mxu0 %v5354
        %5480 = vmatpush1.msra.mxu0 %v5353
        %5481 = vmatprep.subr.mxu0 %v5358
        %5482 = vmatpush1.msra.mxu0 %v5357
        %5483 = vmatprep.subr.mxu0 0.0
        %5484 = vmatpush1.msra.mxu0 0.0
        %5485 = vmatprep.subr.mxu0 0.0
        %5486 = vmatpush1.msra.mxu0 0.0
        %5487 = vmatprep.subr.mxu0 0.0
        %5488 = vmatpush1.msra.mxu0 0.0
        %5489 = vmatprep.subr.mxu0 0.0
        %5490 = vmatpush1.msra.mxu0 0.0
        %5491 = vmatprep.subr.mxu0 0.0
        %5492 = vmatpush1.msra.mxu0 0.0
        %5493 = vmatprep.subr.mxu0 0.0
        %5494 = vmatpush1.msra.mxu0 0.0
        %5495 = vmatprep.subr.mxu0 0.0
        %5496 = vmatpush1.msra.mxu0 0.0
        %5497 = vmatprep.subr.mxu0 0.0
        %5498 = vmatpush1.msra.mxu0 0.0
        %5499 = vmatprep.subr.mxu0 0.0
        %5500 = vmatpush1.msra.mxu0 0.0
        %5501 = vmatprep.subr.mxu0 0.0
        %5502 = vmatpush1.msra.mxu0 0.0
        %5503 = vmatprep.subr.mxu0 0.0
        %5504 = vmatpush1.msra.mxu0 0.0
        %5505 = vmatprep.subr.mxu0 0.0
        %5506 = vmatpush1.msra.mxu0 0.0
        %5507 = vmatprep.subr.mxu0 0.0
        %5508 = vmatpush1.msra.mxu0 0.0
        %5509 = vmatprep.subr.mxu0 0.0
        %5510 = vmatpush1.msra.mxu0 0.0
        %5511 = vmatprep.subr.mxu0 0.0
        %5512 = vmatpush1.msra.mxu0 0.0
        %5513 = vmatprep.subr.mxu0 0.0
        %5514 = vmatpush1.msra.mxu0 0.0
        %5515 = vmatprep.mubr.f32.mxu0 0.0
        %5516 = vmatmul.mubr.f32.gmra.mrb[0].mxu0 %v5295
        %v5517 = vpop.f32.mrb[0].mxu0
        %v5518 = vadd.f32 %v5434, %v5517
        %v5519 = vpop.f32.mrb[0].mxu0
        %v5520 = vadd.f32 %v5438, %v5519
        %5521 = vdwg.mxu0
        %5522 = vmatprep.subr.mxu0 %v5300
        %5523 = vmatpush1.msra.mxu0 %v5299
        %5524 = vmatprep.subr.mxu0 %v5304
        %5525 = vmatpush1.msra.mxu0 %v5303
        %5526 = vmatprep.subr.mxu0 %v5308
        %5527 = vmatpush1.msra.mxu0 %v5307
        %5528 = vmatprep.subr.mxu0 %v5312
        %5529 = vmatpush1.msra.mxu0 %v5311
        %5530 = vmatprep.subr.mxu0 %v5316
        %5531 = vmatpush1.msra.mxu0 %v5315
        %5532 = vmatprep.subr.mxu0 %v5320
        %5533 = vmatpush1.msra.mxu0 %v5319
        %5534 = vmatprep.subr.mxu0 %v5324
        %5535 = vmatpush1.msra.mxu0 %v5323
        %5536 = vmatprep.subr.mxu0 %v5328
        %5537 = vmatpush1.msra.mxu0 %v5327
        %5538 = vmatprep.subr.mxu0 %v5332
        %5539 = vmatpush1.msra.mxu0 %v5331
        %5540 = vmatprep.subr.mxu0 %v5336
        %5541 = vmatpush1.msra.mxu0 %v5335
        %5542 = vmatprep.subr.mxu0 %v5340
        %5543 = vmatpush1.msra.mxu0 %v5339
        %5544 = vmatprep.subr.mxu0 %v5344
        %5545 = vmatpush1.msra.mxu0 %v5343
        %5546 = vmatprep.subr.mxu0 %v5348
        %5547 = vmatpush1.msra.mxu0 %v5347
        %5548 = vmatprep.subr.mxu0 %v5352
        %5549 = vmatpush1.msra.mxu0 %v5351
        %5550 = vmatprep.subr.mxu0 %v5356
        %5551 = vmatpush1.msra.mxu0 %v5355
        %5552 = vmatprep.subr.mxu0 %v5360
        %5553 = vmatpush1.msra.mxu0 %v5359
        %5554 = vmatprep.subr.mxu0 0.0
        %5555 = vmatpush1.msra.mxu0 0.0
        %5556 = vmatprep.subr.mxu0 0.0
        %5557 = vmatpush1.msra.mxu0 0.0
        %5558 = vmatprep.subr.mxu0 0.0
        %5559 = vmatpush1.msra.mxu0 0.0
        %5560 = vmatprep.subr.mxu0 0.0
        %5561 = vmatpush1.msra.mxu0 0.0
        %5562 = vmatprep.subr.mxu0 0.0
        %5563 = vmatpush1.msra.mxu0 0.0
        %5564 = vmatprep.subr.mxu0 0.0
        %5565 = vmatpush1.msra.mxu0 0.0
        %5566 = vmatprep.subr.mxu0 0.0
        %5567 = vmatpush1.msra.mxu0 0.0
        %5568 = vmatprep.subr.mxu0 0.0
        %5569 = vmatpush1.msra.mxu0 0.0
        %5570 = vmatprep.subr.mxu0 0.0
        %5571 = vmatpush1.msra.mxu0 0.0
        %5572 = vmatprep.subr.mxu0 0.0
        %5573 = vmatpush1.msra.mxu0 0.0
        %5574 = vmatprep.subr.mxu0 0.0
        %5575 = vmatpush1.msra.mxu0 0.0
        %5576 = vmatprep.subr.mxu0 0.0
        %5577 = vmatpush1.msra.mxu0 0.0
        %5578 = vmatprep.subr.mxu0 0.0
        %5579 = vmatpush1.msra.mxu0 0.0
        %5580 = vmatprep.subr.mxu0 0.0
        %5581 = vmatpush1.msra.mxu0 0.0
        %5582 = vmatprep.subr.mxu0 0.0
        %5583 = vmatpush1.msra.mxu0 0.0
        %5584 = vmatprep.subr.mxu0 0.0
        %5585 = vmatpush1.msra.mxu0 0.0
        %5586 = vmatprep.mubr.f32.mxu0 0.0
        %5587 = vmatmul.mubr.f32.gmra.mrb[0].mxu0 %v5295
        %v5588 = vpop.f32.mrb[0].mxu0
        %v5589 = vadd.f32 %v5442, %v5588
        %v5590 = vpop.f32.mrb[0].mxu0
        %v5591 = vadd.f32 %v5446, %v5590
        %5592 = vdwg.mxu0
        %v5593 = vmax.f32 %v5518, 0.0
        %v5594 = vmax.f32 %v5520, 0.0
        %v5595 = vmax.f32 %v5589, 0.0
        %v5596 = vmax.f32 %v5591, 0.0
        %v5598 = vlaneseq
        %v5599 = vshrl.u32 %v5598, 7
        %v5600 = vsub.s32 0, %v5599
        %v5601 = vrot.slane %v5429, %v5600
        %5603 = vmatprep.subr.mxu0 0.0
        %5604 = vmatpush1.msra.mxu0 %v5364
        %5605 = vmatprep.subr.mxu0 0.0
        %5606 = vmatpush1.msra.mxu0 %v5365
        %5607 = vmatprep.subr.mxu0 0.0
        %5608 = vmatpush1.msra.mxu0 %v5366
        %5609 = vmatprep.subr.mxu0 0.0
        %5610 = vmatpush1.msra.mxu0 %v5367
        %5611 = vmatprep.subr.mxu0 0.0
        %5612 = vmatpush1.msra.mxu0 %v5368
        %5613 = vmatprep.subr.mxu0 0.0
        %5614 = vmatpush1.msra.mxu0 %v5369
        %5615 = vmatprep.subr.mxu0 0.0
        %5616 = vmatpush1.msra.mxu0 %v5370
        %5617 = vmatprep.subr.mxu0 0.0
        %5618 = vmatpush1.msra.mxu0 %v5371
        %5619 = vmatprep.subr.mxu0 0.0
        %5620 = vmatpush1.msra.mxu0 %v5372
        %5621 = vmatprep.subr.mxu0 0.0
        %5622 = vmatpush1.msra.mxu0 %v5373
        %5623 = vmatprep.subr.mxu0 0.0
        %5624 = vmatpush1.msra.mxu0 %v5374
        %5625 = vmatprep.subr.mxu0 0.0
        %5626 = vmatpush1.msra.mxu0 %v5375
        %5627 = vmatprep.subr.mxu0 0.0
        %5628 = vmatpush1.msra.mxu0 %v5376
        %5629 = vmatprep.subr.mxu0 0.0
        %5630 = vmatpush1.msra.mxu0 %v5377
        %5631 = vmatprep.subr.mxu0 0.0
        %5632 = vmatpush1.msra.mxu0 %v5378
        %5633 = vmatprep.subr.mxu0 0.0
        %5634 = vmatpush1.msra.mxu0 %v5379
        %5635 = vmatprep.subr.mxu0 0.0
        %5636 = vmatpush1.msra.mxu0 %v5380
        %5637 = vmatprep.subr.mxu0 0.0
        %5638 = vmatpush1.msra.mxu0 %v5381
        %5639 = vmatprep.subr.mxu0 0.0
        %5640 = vmatpush1.msra.mxu0 %v5382
        %5641 = vmatprep.subr.mxu0 0.0
        %5642 = vmatpush1.msra.mxu0 %v5383
        %5643 = vmatprep.subr.mxu0 0.0
        %5644 = vmatpush1.msra.mxu0 %v5384
        %5645 = vmatprep.subr.mxu0 0.0
        %5646 = vmatpush1.msra.mxu0 %v5385
        %5647 = vmatprep.subr.mxu0 0.0
        %5648 = vmatpush1.msra.mxu0 %v5386
        %5649 = vmatprep.subr.mxu0 0.0
        %5650 = vmatpush1.msra.mxu0 %v5387
        %5651 = vmatprep.subr.mxu0 0.0
        %5652 = vmatpush1.msra.mxu0 %v5388
        %5653 = vmatprep.subr.mxu0 0.0
        %5654 = vmatpush1.msra.mxu0 %v5389
        %5655 = vmatprep.subr.mxu0 0.0
        %5656 = vmatpush1.msra.mxu0 %v5390
        %5657 = vmatprep.subr.mxu0 0.0
        %5658 = vmatpush1.msra.mxu0 %v5391
        %5659 = vmatprep.subr.mxu0 0.0
        %5660 = vmatpush1.msra.mxu0 %v5392
        %5661 = vmatprep.subr.mxu0 0.0
        %5662 = vmatpush1.msra.mxu0 %v5393
        %5663 = vmatprep.subr.mxu0 0.0
        %5664 = vmatpush1.msra.mxu0 %v5394
        %5665 = vmatprep.subr.mxu0 0.0
        %5666 = vmatpush1.msra.mxu0 %v5395
        %5667 = vmatprep.mubr.f32.mxu0 %v5594
        %5668 = vmatmul.mubr.f32.gmra.mrb[0].mxu0 %v5593
        %v5669 = vpop.f32.mrb[0].mxu0
        %v5670 = vadd.f32 %v5601, %v5669
        %v5671 = vpop.f32.mrb[0].mxu0
        %5672 = vdwg.mxu0
        %5673 = vmatprep.subr.mxu0 0.0
        %5674 = vmatpush1.msra.mxu0 %v5396
        %5675 = vmatprep.subr.mxu0 0.0
        %5676 = vmatpush1.msra.mxu0 %v5397
        %5677 = vmatprep.subr.mxu0 0.0
        %5678 = vmatpush1.msra.mxu0 %v5398
        %5679 = vmatprep.subr.mxu0 0.0
        %5680 = vmatpush1.msra.mxu0 %v5399
        %5681 = vmatprep.subr.mxu0 0.0
        %5682 = vmatpush1.msra.mxu0 %v5400
        %5683 = vmatprep.subr.mxu0 0.0
        %5684 = vmatpush1.msra.mxu0 %v5401
        %5685 = vmatprep.subr.mxu0 0.0
        %5686 = vmatpush1.msra.mxu0 %v5402
        %5687 = vmatprep.subr.mxu0 0.0
        %5688 = vmatpush1.msra.mxu0 %v5403
        %5689 = vmatprep.subr.mxu0 0.0
        %5690 = vmatpush1.msra.mxu0 %v5404
        %5691 = vmatprep.subr.mxu0 0.0
        %5692 = vmatpush1.msra.mxu0 %v5405
        %5693 = vmatprep.subr.mxu0 0.0
        %5694 = vmatpush1.msra.mxu0 %v5406
        %5695 = vmatprep.subr.mxu0 0.0
        %5696 = vmatpush1.msra.mxu0 %v5407
        %5697 = vmatprep.subr.mxu0 0.0
        %5698 = vmatpush1.msra.mxu0 %v5408
        %5699 = vmatprep.subr.mxu0 0.0
        %5700 = vmatpush1.msra.mxu0 %v5409
        %5701 = vmatprep.subr.mxu0 0.0
        %5702 = vmatpush1.msra.mxu0 %v5410
        %5703 = vmatprep.subr.mxu0 0.0
        %5704 = vmatpush1.msra.mxu0 %v5411
        %5705 = vmatprep.subr.mxu0 0.0
        %5706 = vmatpush1.msra.mxu0 %v5412
        %5707 = vmatprep.subr.mxu0 0.0
        %5708 = vmatpush1.msra.mxu0 %v5413
        %5709 = vmatprep.subr.mxu0 0.0
        %5710 = vmatpush1.msra.mxu0 %v5414
        %5711 = vmatprep.subr.mxu0 0.0
        %5712 = vmatpush1.msra.mxu0 %v5415
        %5713 = vmatprep.subr.mxu0 0.0
        %5714 = vmatpush1.msra.mxu0 %v5416
        %5715 = vmatprep.subr.mxu0 0.0
        %5716 = vmatpush1.msra.mxu0 %v5417
        %5717 = vmatprep.subr.mxu0 0.0
        %5718 = vmatpush1.msra.mxu0 %v5418
        %5719 = vmatprep.subr.mxu0 0.0
        %5720 = vmatpush1.msra.mxu0 %v5419
        %5721 = vmatprep.subr.mxu0 0.0
        %5722 = vmatpush1.msra.mxu0 %v5420
        %5723 = vmatprep.subr.mxu0 0.0
        %5724 = vmatpush1.msra.mxu0 %v5421
        %5725 = vmatprep.subr.mxu0 0.0
        %5726 = vmatpush1.msra.mxu0 %v5422
        %5727 = vmatprep.subr.mxu0 0.0
        %5728 = vmatpush1.msra.mxu0 %v5423
        %5729 = vmatprep.subr.mxu0 0.0
        %5730 = vmatpush1.msra.mxu0 %v5424
        %5731 = vmatprep.subr.mxu0 0.0
        %5732 = vmatpush1.msra.mxu0 %v5425
        %5733 = vmatprep.subr.mxu0 0.0
        %5734 = vmatpush1.msra.mxu0 %v5426
        %5735 = vmatprep.subr.mxu0 0.0
        %5736 = vmatpush1.msra.mxu0 %v5427
        %5737 = vmatprep.mubr.f32.mxu0 %v5596
        %5738 = vmatmul.mubr.f32.gmra.mrb[0].mxu0 %v5595
        %v5739 = vpop.f32.mrb[0].mxu0
        %v5740 = vadd.f32 %v5670, %v5739
        %v5741 = vpop.f32.mrb[0].mxu0
        %5742 = vdwg.mxu0
        %v5743 = vadd.f32 %v5258, %v5740
        %s5744 = scalar_lea.vmem %s3, 3
        %v5745 = vld [vmem:[%s5744] sm:$0x1]
        %s5746 = scalar_lea.vmem %s4, 3
        %v5747 = vld [vmem:[%s5746] sm:$0x1]
        %v5748 = vrot.slane %v5743, 4
        %v5749 = vadd.f32 %v5743, %v5748
        %v5750 = vrot.slane %v5749, 2
        %v5751 = vadd.f32 %v5749, %v5750
        %v5752 = vrot.slane %v5751, 1
        %v5753 = vadd.f32 %v5751, %v5752
        %v5754 = vmul.f32 %v5753, %v1013
        %v5755 = vsub.f32 %v5743, %v5754
        %v5756 = vmul.f32 %v5755, %v5755
        %v5757 = vrot.slane %v5756, 4
        %v5758 = vadd.f32 %v5756, %v5757
        %v5759 = vrot.slane %v5758, 2
        %v5760 = vadd.f32 %v5758, %v5759
        %v5761 = vrot.slane %v5760, 1
        %v5762 = vadd.f32 %v5760, %v5761
        %v5763 = vmul.f32 %v5762, %v1023
        %v5764 = vadd.f32 %v5763, 1e-05
        %v5765 = vrsqrt.pop %v5764
        %v5766 = vmul.f32 %v5755, %v5765
        %v5768 = vlaneseq
        %v5769 = vshrl.u32 %v5768, 7
        %v5770 = vsub.s32 0, %v5769
        %v5771 = vrot.slane %v5745, %v5770
        %v5773 = vmul.f32 %v5771, %v5766
        %v5775 = vlaneseq
        %v5776 = vshrl.u32 %v5775, 7
        %v5777 = vsub.s32 0, %v5776
        %v5778 = vrot.slane %v5747, %v5777
        %v5780 = vadd.f32 %v5773, %v5778
        %s5781 = scalar_lea.vmem [#allocation5], 384
        %v5782 = vld [vmem:[%s5781] sm:$0xff]
        %v5783 = vld [vmem:[%s5781 + $0x8] sm:$0xff]
        %v5784 = vld [vmem:[%s5781 + $0x10] sm:$0xff]
        %v5785 = vld [vmem:[%s5781 + $0x18] sm:$0xff]
        %v5786 = vld [vmem:[%s5781 + $0x20] sm:$0xff]
        %v5787 = vld [vmem:[%s5781 + $0x28] sm:$0xff]
        %v5788 = vld [vmem:[%s5781 + $0x30] sm:$0xff]
        %v5789 = vld [vmem:[%s5781 + $0x38] sm:$0xff]
        %v5790 = vld [vmem:[%s5781 + $0x40] sm:$0xff]
        %v5791 = vld [vmem:[%s5781 + $0x48] sm:$0xff]
        %v5792 = vld [vmem:[%s5781 + $0x50] sm:$0xff]
        %v5793 = vld [vmem:[%s5781 + $0x58] sm:$0xff]
        %v5794 = vld [vmem:[%s5781 + $0x60] sm:$0xff]
        %v5795 = vld [vmem:[%s5781 + $0x68] sm:$0xff]
        %v5796 = vld [vmem:[%s5781 + $0x70] sm:$0xff]
        %v5797 = vld [vmem:[%s5781 + $0x78] sm:$0xff]
        %s5798 = scalar_lea.vmem %s6, 3
        %v5799 = vld [vmem:[%s5798] sm:$0x1]
        %v5801 = vlaneseq
        %v5802 = vshrl.u32 %v5801, 7
        %v5803 = vsub.s32 0, %v5802
        %v5804 = vrot.slane %v5799, %v5803
        %5806 = vmatprep.subr.mxu0 0.0
        %5807 = vmatpush1.msra.mxu0 %v5782
        %5808 = vmatprep.subr.mxu0 0.0
        %5809 = vmatpush1.msra.mxu0 %v5783
        %5810 = vmatprep.subr.mxu0 0.0
        %5811 = vmatpush1.msra.mxu0 %v5784
        %5812 = vmatprep.subr.mxu0 0.0
        %5813 = vmatpush1.msra.mxu0 %v5785
        %5814 = vmatprep.subr.mxu0 0.0
        %5815 = vmatpush1.msra.mxu0 %v5786
        %5816 = vmatprep.subr.mxu0 0.0
        %5817 = vmatpush1.msra.mxu0 %v5787
        %5818 = vmatprep.subr.mxu0 0.0
        %5819 = vmatpush1.msra.mxu0 %v5788
        %5820 = vmatprep.subr.mxu0 0.0
        %5821 = vmatpush1.msra.mxu0 %v5789
        %5822 = vmatprep.subr.mxu0 0.0
        %5823 = vmatpush1.msra.mxu0 %v5790
        %5824 = vmatprep.subr.mxu0 0.0
        %5825 = vmatpush1.msra.mxu0 %v5791
        %5826 = vmatprep.subr.mxu0 0.0
        %5827 = vmatpush1.msra.mxu0 %v5792
        %5828 = vmatprep.subr.mxu0 0.0
        %5829 = vmatpush1.msra.mxu0 %v5793
        %5830 = vmatprep.subr.mxu0 0.0
        %5831 = vmatpush1.msra.mxu0 %v5794
        %5832 = vmatprep.subr.mxu0 0.0
        %5833 = vmatpush1.msra.mxu0 %v5795
        %5834 = vmatprep.subr.mxu0 0.0
        %5835 = vmatpush1.msra.mxu0 %v5796
        %5836 = vmatprep.subr.mxu0 0.0
        %5837 = vmatpush1.msra.mxu0 %v5797
        %5838 = vmatprep.subr.mxu0 0.0
        %5839 = vmatpush1.msra.mxu0 0.0
        %5840 = vmatprep.subr.mxu0 0.0
        %5841 = vmatpush1.msra.mxu0 0.0
        %5842 = vmatprep.subr.mxu0 0.0
        %5843 = vmatpush1.msra.mxu0 0.0
        %5844 = vmatprep.subr.mxu0 0.0
        %5845 = vmatpush1.msra.mxu0 0.0
        %5846 = vmatprep.subr.mxu0 0.0
        %5847 = vmatpush1.msra.mxu0 0.0
        %5848 = vmatprep.subr.mxu0 0.0
        %5849 = vmatpush1.msra.mxu0 0.0
        %5850 = vmatprep.subr.mxu0 0.0
        %5851 = vmatpush1.msra.mxu0 0.0
        %5852 = vmatprep.subr.mxu0 0.0
        %5853 = vmatpush1.msra.mxu0 0.0
        %5854 = vmatprep.subr.mxu0 0.0
        %5855 = vmatpush1.msra.mxu0 0.0
        %5856 = vmatprep.subr.mxu0 0.0
        %5857 = vmatpush1.msra.mxu0 0.0
        %5858 = vmatprep.subr.mxu0 0.0
        %5859 = vmatpush1.msra.mxu0 0.0
        %5860 = vmatprep.subr.mxu0 0.0
        %5861 = vmatpush1.msra.mxu0 0.0
        %5862 = vmatprep.subr.mxu0 0.0
        %5863 = vmatpush1.msra.mxu0 0.0
        %5864 = vmatprep.subr.mxu0 0.0
        %5865 = vmatpush1.msra.mxu0 0.0
        %5866 = vmatprep.subr.mxu0 0.0
        %5867 = vmatpush1.msra.mxu0 0.0
        %5868 = vmatprep.subr.mxu0 0.0
        %5869 = vmatpush1.msra.mxu0 0.0
        %5870 = vmatprep.mubr.f32.mxu0 0.0
        %5871 = vmatmul.mubr.f32.gmra.mrb[0].mxu0 %v5780
        %v5872 = vpop.f32.mrb[0].mxu0
        %v5873 = vadd.f32 %v5804, %v5872
        %v5874 = vpop.f32.mrb[0].mxu0
        %5875 = vdwg.mxu0
        %s5876 = scalar_lea.vmem [#allocation7], 384
        %v5877 = vld [vmem:[%s5876] sm:$0xff]
        %v5878 = vld [vmem:[%s5876 + $0x8] sm:$0xff]
        %v5879 = vld [vmem:[%s5876 + $0x10] sm:$0xff]
        %v5880 = vld [vmem:[%s5876 + $0x18] sm:$0xff]
        %v5881 = vld [vmem:[%s5876 + $0x20] sm:$0xff]
        %v5882 = vld [vmem:[%s5876 + $0x28] sm:$0xff]
        %v5883 = vld [vmem:[%s5876 + $0x30] sm:$0xff]
        %v5884 = vld [vmem:[%s5876 + $0x38] sm:$0xff]
        %v5885 = vld [vmem:[%s5876 + $0x40] sm:$0xff]
        %v5886 = vld [vmem:[%s5876 + $0x48] sm:$0xff]
        %v5887 = vld [vmem:[%s5876 + $0x50] sm:$0xff]
        %v5888 = vld [vmem:[%s5876 + $0x58] sm:$0xff]
        %v5889 = vld [vmem:[%s5876 + $0x60] sm:$0xff]
        %v5890 = vld [vmem:[%s5876 + $0x68] sm:$0xff]
        %v5891 = vld [vmem:[%s5876 + $0x70] sm:$0xff]
        %v5892 = vld [vmem:[%s5876 + $0x78] sm:$0xff]
        %s5893 = scalar_lea.vmem %s8, 3
        %v5894 = vld [vmem:[%s5893] sm:$0x1]
        %v5896 = vlaneseq
        %v5897 = vshrl.u32 %v5896, 7
        %v5898 = vsub.s32 0, %v5897
        %v5899 = vrot.slane %v5894, %v5898
        %5901 = vmatprep.subr.mxu0 0.0
        %5902 = vmatpush1.msra.mxu0 %v5877
        %5903 = vmatprep.subr.mxu0 0.0
        %5904 = vmatpush1.msra.mxu0 %v5878
        %5905 = vmatprep.subr.mxu0 0.0
        %5906 = vmatpush1.msra.mxu0 %v5879
        %5907 = vmatprep.subr.mxu0 0.0
        %5908 = vmatpush1.msra.mxu0 %v5880
        %5909 = vmatprep.subr.mxu0 0.0
        %5910 = vmatpush1.msra.mxu0 %v5881
        %5911 = vmatprep.subr.mxu0 0.0
        %5912 = vmatpush1.msra.mxu0 %v5882
        %5913 = vmatprep.subr.mxu0 0.0
        %5914 = vmatpush1.msra.mxu0 %v5883
        %5915 = vmatprep.subr.mxu0 0.0
        %5916 = vmatpush1.msra.mxu0 %v5884
        %5917 = vmatprep.subr.mxu0 0.0
        %5918 = vmatpush1.msra.mxu0 %v5885
        %5919 = vmatprep.subr.mxu0 0.0
        %5920 = vmatpush1.msra.mxu0 %v5886
        %5921 = vmatprep.subr.mxu0 0.0
        %5922 = vmatpush1.msra.mxu0 %v5887
        %5923 = vmatprep.subr.mxu0 0.0
        %5924 = vmatpush1.msra.mxu0 %v5888
        %5925 = vmatprep.subr.mxu0 0.0
        %5926 = vmatpush1.msra.mxu0 %v5889
        %5927 = vmatprep.subr.mxu0 0.0
        %5928 = vmatpush1.msra.mxu0 %v5890
        %5929 = vmatprep.subr.mxu0 0.0
        %5930 = vmatpush1.msra.mxu0 %v5891
        %5931 = vmatprep.subr.mxu0 0.0
        %5932 = vmatpush1.msra.mxu0 %v5892
        %5933 = vmatprep.subr.mxu0 0.0
        %5934 = vmatpush1.msra.mxu0 0.0
        %5935 = vmatprep.subr.mxu0 0.0
        %5936 = vmatpush1.msra.mxu0 0.0
        %5937 = vmatprep.subr.mxu0 0.0
        %5938 = vmatpush1.msra.mxu0 0.0
        %5939 = vmatprep.subr.mxu0 0.0
        %5940 = vmatpush1.msra.mxu0 0.0
        %5941 = vmatprep.subr.mxu0 0.0
        %5942 = vmatpush1.msra.mxu0 0.0
        %5943 = vmatprep.subr.mxu0 0.0
        %5944 = vmatpush1.msra.mxu0 0.0
        %5945 = vmatprep.subr.mxu0 0.0
        %5946 = vmatpush1.msra.mxu0 0.0
        %5947 = vmatprep.subr.mxu0 0.0
        %5948 = vmatpush1.msra.mxu0 0.0
        %5949 = vmatprep.subr.mxu0 0.0
        %5950 = vmatpush1.msra.mxu0 0.0
        %5951 = vmatprep.subr.mxu0 0.0
        %5952 = vmatpush1.msra.mxu0 0.0
        %5953 = vmatprep.subr.mxu0 0.0
        %5954 = vmatpush1.msra.mxu0 0.0
        %5955 = vmatprep.subr.mxu0 0.0
        %5956 = vmatpush1.msra.mxu0 0.0
        %5957 = vmatprep.subr.mxu0 0.0
        %5958 = vmatpush1.msra.mxu0 0.0
        %5959 = vmatprep.subr.mxu0 0.0
        %5960 = vmatpush1.msra.mxu0 0.0
        %5961 = vmatprep.subr.mxu0 0.0
        %5962 = vmatpush1.msra.mxu0 0.0
        %5963 = vmatprep.subr.mxu0 0.0
        %5964 = vmatpush1.msra.mxu0 0.0
        %5965 = vmatprep.mubr.f32.mxu0 0.0
        %5966 = vmatmul.mubr.f32.gmra.mrb[0].mxu0 %v5780
        %v5967 = vpop.f32.mrb[0].mxu0
        %v5968 = vadd.f32 %v5899, %v5967
        %v5969 = vpop.f32.mrb[0].mxu0
        %5970 = vdwg.mxu0
        %s5971 = scalar_lea.vmem [#allocation8], 384
        %v5972 = vld [vmem:[%s5971] sm:$0xff]
        %v5973 = vld [vmem:[%s5971 + $0x8] sm:$0xff]
        %v5974 = vld [vmem:[%s5971 + $0x10] sm:$0xff]
        %v5975 = vld [vmem:[%s5971 + $0x18] sm:$0xff]
        %v5976 = vld [vmem:[%s5971 + $0x20] sm:$0xff]
        %v5977 = vld [vmem:[%s5971 + $0x28] sm:$0xff]
        %v5978 = vld [vmem:[%s5971 + $0x30] sm:$0xff]
        %v5979 = vld [vmem:[%s5971 + $0x38] sm:$0xff]
        %v5980 = vld [vmem:[%s5971 + $0x40] sm:$0xff]
        %v5981 = vld [vmem:[%s5971 + $0x48] sm:$0xff]
        %v5982 = vld [vmem:[%s5971 + $0x50] sm:$0xff]
        %v5983 = vld [vmem:[%s5971 + $0x58] sm:$0xff]
        %v5984 = vld [vmem:[%s5971 + $0x60] sm:$0xff]
        %v5985 = vld [vmem:[%s5971 + $0x68] sm:$0xff]
        %v5986 = vld [vmem:[%s5971 + $0x70] sm:$0xff]
        %v5987 = vld [vmem:[%s5971 + $0x78] sm:$0xff]
        %s5988 = scalar_lea.vmem %s10, 3
        %v5989 = vld [vmem:[%s5988] sm:$0x1]
        %v5991 = vlaneseq
        %v5992 = vshrl.u32 %v5991, 7
        %v5993 = vsub.s32 0, %v5992
        %v5994 = vrot.slane %v5989, %v5993
        %5996 = vmatprep.subr.mxu0 0.0
        %5997 = vmatpush1.msra.mxu0 %v5972
        %5998 = vmatprep.subr.mxu0 0.0
        %5999 = vmatpush1.msra.mxu0 %v5973
        %6000 = vmatprep.subr.mxu0 0.0
        %6001 = vmatpush1.msra.mxu0 %v5974
        %6002 = vmatprep.subr.mxu0 0.0
        %6003 = vmatpush1.msra.mxu0 %v5975
        %6004 = vmatprep.subr.mxu0 0.0
        %6005 = vmatpush1.msra.mxu0 %v5976
        %6006 = vmatprep.subr.mxu0 0.0
        %6007 = vmatpush1.msra.mxu0 %v5977
        %6008 = vmatprep.subr.mxu0 0.0
        %6009 = vmatpush1.msra.mxu0 %v5978
        %6010 = vmatprep.subr.mxu0 0.0
        %6011 = vmatpush1.msra.mxu0 %v5979
        %6012 = vmatprep.subr.mxu0 0.0
        %6013 = vmatpush1.msra.mxu0 %v5980
        %6014 = vmatprep.subr.mxu0 0.0
        %6015 = vmatpush1.msra.mxu0 %v5981
        %6016 = vmatprep.subr.mxu0 0.0
        %6017 = vmatpush1.msra.mxu0 %v5982
        %6018 = vmatprep.subr.mxu0 0.0
        %6019 = vmatpush1.msra.mxu0 %v5983
        %6020 = vmatprep.subr.mxu0 0.0
        %6021 = vmatpush1.msra.mxu0 %v5984
        %6022 = vmatprep.subr.mxu0 0.0
        %6023 = vmatpush1.msra.mxu0 %v5985
        %6024 = vmatprep.subr.mxu0 0.0
        %6025 = vmatpush1.msra.mxu0 %v5986
        %6026 = vmatprep.subr.mxu0 0.0
        %6027 = vmatpush1.msra.mxu0 %v5987
        %6028 = vmatprep.subr.mxu0 0.0
        %6029 = vmatpush1.msra.mxu0 0.0
        %6030 = vmatprep.subr.mxu0 0.0
        %6031 = vmatpush1.msra.mxu0 0.0
        %6032 = vmatprep.subr.mxu0 0.0
        %6033 = vmatpush1.msra.mxu0 0.0
        %6034 = vmatprep.subr.mxu0 0.0
        %6035 = vmatpush1.msra.mxu0 0.0
        %6036 = vmatprep.subr.mxu0 0.0
        %6037 = vmatpush1.msra.mxu0 0.0
        %6038 = vmatprep.subr.mxu0 0.0
        %6039 = vmatpush1.msra.mxu0 0.0
        %6040 = vmatprep.subr.mxu0 0.0
        %6041 = vmatpush1.msra.mxu0 0.0
        %6042 = vmatprep.subr.mxu0 0.0
        %6043 = vmatpush1.msra.mxu0 0.0
        %6044 = vmatprep.subr.mxu0 0.0
        %6045 = vmatpush1.msra.mxu0 0.0
        %6046 = vmatprep.subr.mxu0 0.0
        %6047 = vmatpush1.msra.mxu0 0.0
        %6048 = vmatprep.subr.mxu0 0.0
        %6049 = vmatpush1.msra.mxu0 0.0
        %6050 = vmatprep.subr.mxu0 0.0
        %6051 = vmatpush1.msra.mxu0 0.0
        %6052 = vmatprep.subr.mxu0 0.0
        %6053 = vmatpush1.msra.mxu0 0.0
        %6054 = vmatprep.subr.mxu0 0.0
        %6055 = vmatpush1.msra.mxu0 0.0
        %6056 = vmatprep.subr.mxu0 0.0
        %6057 = vmatpush1.msra.mxu0 0.0
        %6058 = vmatprep.subr.mxu0 0.0
        %6059 = vmatpush1.msra.mxu0 0.0
        %6060 = vmatprep.mubr.f32.mxu0 0.0
        %6061 = vmatmul.mubr.f32.gmra.mrb[0].mxu0 %v5780
        %v6062 = vpop.f32.mrb[0].mxu0
        %v6063 = vadd.f32 %v5994, %v6062
        %v6064 = vpop.f32.mrb[0].mxu0
        %6065 = vdwg.mxu0
        %v6067 = vsel %vm1321, %v5873, 0
        %v6070 = vsel %vm1321, %v5968, 0
        %6072 = vmatprep.subr.mxu0 0.0
        %6073 = vmatpush1.xpose.msra.mxu0 %v6070
        %6074 = vmatprep.subr.mxu0 0.0
        %6075 = vmatpush1.xpose.msra.mxu0 0.0
        %6076 = vmatprep.subr.mxu0 0.0
        %6077 = vmatpush1.xpose.msra.mxu0 0.0
        %6078 = vmatprep.subr.mxu0 0.0
        %6079 = vmatpush1.xpose.msra.mxu0 0.0
        %6080 = vmatprep.subr.mxu0 0.0
        %6081 = vmatpush1.xpose.msra.mxu0 0.0
        %6082 = vmatprep.subr.mxu0 0.0
        %6083 = vmatpush1.xpose.msra.mxu0 0.0
        %6084 = vmatprep.subr.mxu0 0.0
        %6085 = vmatpush1.xpose.msra.mxu0 0.0
        %6086 = vmatprep.subr.mxu0 0.0
        %6087 = vmatpush1.xpose.msra.mxu0 0.0
        %6088 = vmatprep.subr.mxu0 0.0
        %6089 = vmatpush1.xpose.msra.mxu0 0.0
        %6090 = vmatprep.subr.mxu0 0.0
        %6091 = vmatpush1.xpose.msra.mxu0 0.0
        %6092 = vmatprep.subr.mxu0 0.0
        %6093 = vmatpush1.xpose.msra.mxu0 0.0
        %6094 = vmatprep.subr.mxu0 0.0
        %6095 = vmatpush1.xpose.msra.mxu0 0.0
        %6096 = vmatprep.subr.mxu0 0.0
        %6097 = vmatpush1.xpose.msra.mxu0 0.0
        %6098 = vmatprep.subr.mxu0 0.0
        %6099 = vmatpush1.xpose.msra.mxu0 0.0
        %6100 = vmatprep.subr.mxu0 0.0
        %6101 = vmatpush1.xpose.msra.mxu0 0.0
        %6102 = vmatprep.subr.mxu0 0.0
        %6103 = vmatpush1.xpose.msra.mxu0 0.0
        %6104 = vmatprep.subr.mxu0 0.0
        %6105 = vmatpush1.xpose.msra.mxu0 0.0
        %6106 = vmatprep.subr.mxu0 0.0
        %6107 = vmatpush1.xpose.msra.mxu0 0.0
        %6108 = vmatprep.subr.mxu0 0.0
        %6109 = vmatpush1.xpose.msra.mxu0 0.0
        %6110 = vmatprep.subr.mxu0 0.0
        %6111 = vmatpush1.xpose.msra.mxu0 0.0
        %6112 = vmatprep.subr.mxu0 0.0
        %6113 = vmatpush1.xpose.msra.mxu0 0.0
        %6114 = vmatprep.subr.mxu0 0.0
        %6115 = vmatpush1.xpose.msra.mxu0 0.0
        %6116 = vmatprep.subr.mxu0 0.0
        %6117 = vmatpush1.xpose.msra.mxu0 0.0
        %6118 = vmatprep.subr.mxu0 0.0
        %6119 = vmatpush1.xpose.msra.mxu0 0.0
        %6120 = vmatprep.subr.mxu0 0.0
        %6121 = vmatpush1.xpose.msra.mxu0 0.0
        %6122 = vmatprep.subr.mxu0 0.0
        %6123 = vmatpush1.xpose.msra.mxu0 0.0
        %6124 = vmatprep.subr.mxu0 0.0
        %6125 = vmatpush1.xpose.msra.mxu0 0.0
        %6126 = vmatprep.subr.mxu0 0.0
        %6127 = vmatpush1.xpose.msra.mxu0 0.0
        %6128 = vmatprep.subr.mxu0 0.0
        %6129 = vmatpush1.xpose.msra.mxu0 0.0
        %6130 = vmatprep.subr.mxu0 0.0
        %6131 = vmatpush1.xpose.msra.mxu0 0.0
        %6132 = vmatprep.subr.mxu0 0.0
        %6133 = vmatpush1.xpose.msra.mxu0 0.0
        %6134 = vmatprep.subr.mxu0 0.0
        %6135 = vmatpush1.xpose.msra.mxu0 0.0
        %6136 = vmatprep.mubr.f32.mxu0 0.0
        %6137 = vmatmul.mubr.f32.gmra.mrb[0].mxu0 %v6067
        %v6138 = vpop.f32.mrb[0].mxu0
        %v6139 = vadd.f32 0.0, %v6138
        %v6140 = vpop.f32.mrb[0].mxu0
        %6141 = vdwg.mxu0
        %v6142 = vmul.f32 %v6139, 0.088388346
        %v6143 = vadd.f32 %v6142, %v1004
        %v6144 = vsel %vm1400, %v6143, -inf
        %6145 = vmax.xlane.f32.xlu0 %v6144
        %v6146 = vpop.xlane.xlu0 %6145
        %v6147 = vsub.f32 %v6143, %v6146
        %v6148 = vmul.f32 %v6147, 1.442695
        %v6149 = vpow.pop %v6148
        %v6150 = vsel %vm1400, %v6149, 0.0
        %6151 = vadd.xlane.f32.xlu0 %v6150
        %v6152 = vpop.xlane.xlu0 %6151
        %v6153 = vrcp.pop %v6152
        %v6154 = vmul.f32 %v6149, %v6153
        %v6156 = vsel %vm1400, %v6154, 0
        %6158 = vmatprep.subr.mxu0 0.0
        %6159 = vmatpush1.msra.mxu0 %v6063
        %6160 = vmatprep.subr.mxu0 0.0
        %6161 = vmatpush1.msra.mxu0 0.0
        %6162 = vmatprep.subr.mxu0 0.0
        %6163 = vmatpush1.msra.mxu0 0.0
        %6164 = vmatprep.subr.mxu0 0.0
        %6165 = vmatpush1.msra.mxu0 0.0
        %6166 = vmatprep.subr.mxu0 0.0
        %6167 = vmatpush1.msra.mxu0 0.0
        %6168 = vmatprep.subr.mxu0 0.0
        %6169 = vmatpush1.msra.mxu0 0.0
        %6170 = vmatprep.subr.mxu0 0.0
        %6171 = vmatpush1.msra.mxu0 0.0
        %6172 = vmatprep.subr.mxu0 0.0
        %6173 = vmatpush1.msra.mxu0 0.0
        %6174 = vmatprep.subr.mxu0 0.0
        %6175 = vmatpush1.msra.mxu0 0.0
        %6176 = vmatprep.subr.mxu0 0.0
        %6177 = vmatpush1.msra.mxu0 0.0
        %6178 = vmatprep.subr.mxu0 0.0
        %6179 = vmatpush1.msra.mxu0 0.0
        %6180 = vmatprep.subr.mxu0 0.0
        %6181 = vmatpush1.msra.mxu0 0.0
        %6182 = vmatprep.subr.mxu0 0.0
        %6183 = vmatpush1.msra.mxu0 0.0
        %6184 = vmatprep.subr.mxu0 0.0
        %6185 = vmatpush1.msra.mxu0 0.0
        %6186 = vmatprep.subr.mxu0 0.0
        %6187 = vmatpush1.msra.mxu0 0.0
        %6188 = vmatprep.subr.mxu0 0.0
        %6189 = vmatpush1.msra.mxu0 0.0
        %6190 = vmatprep.subr.mxu0 0.0
        %6191 = vmatpush1.msra.mxu0 0.0
        %6192 = vmatprep.subr.mxu0 0.0
        %6193 = vmatpush1.msra.mxu0 0.0
        %6194 = vmatprep.subr.mxu0 0.0
        %6195 = vmatpush1.msra.mxu0 0.0
        %6196 = vmatprep.subr.mxu0 0.0
        %6197 = vmatpush1.msra.mxu0 0.0
        %6198 = vmatprep.subr.mxu0 0.0
        %6199 = vmatpush1.msra.mxu0 0.0
        %6200 = vmatprep.subr.mxu0 0.0
        %6201 = vmatpush1.msra.mxu0 0.0
        %6202 = vmatprep.subr.mxu0 0.0
        %6203 = vmatpush1.msra.mxu0 0.0
        %6204 = vmatprep.subr.mxu0 0.0
        %6205 = vmatpush1.msra.mxu0 0.0
        %6206 = vmatprep.subr.mxu0 0.0
        %6207 = vmatpush1.msra.mxu0 0.0
        %6208 = vmatprep.subr.mxu0 0.0
        %6209 = vmatpush1.msra.mxu0 0.0
        %6210 = vmatprep.subr.mxu0 0.0
        %6211 = vmatpush1.msra.mxu0 0.0
        %6212 = vmatprep.subr.mxu0 0.0
        %6213 = vmatpush1.msra.mxu0 0.0
        %6214 = vmatprep.subr.mxu0 0.0
        %6215 = vmatpush1.msra.mxu0 0.0
        %6216 = vmatprep.subr.mxu0 0.0
        %6217 = vmatpush1.msra.mxu0 0.0
        %6218 = vmatprep.subr.mxu0 0.0
        %6219 = vmatpush1.msra.mxu0 0.0
        %6220 = vmatprep.subr.mxu0 0.0
        %6221 = vmatpush1.msra.mxu0 0.0
        %6222 = vmatprep.mubr.f32.mxu0 0.0
        %6223 = vmatmul.mubr.f32.gmra.mrb[0].mxu0 %v6156
        %v6224 = vpop.f32.mrb[0].mxu0
        %v6225 = vadd.f32 0.0, %v6224
        %v6226 = vpop.f32.mrb[0].mxu0
        %6227 = vdwg.mxu0
        %6228 = vrot.lane.b32.xlu0 %v5873, 96
        %v6229 = vpop.permute.xlu0 %6228
        %6230 = vrot.lane.b32.xlu0 %v5968, 96
        %v6231 = vpop.permute.xlu0 %6230
        %v6232 = vsel %vm1321, %v6229, 0
        %v6234 = vsel %vm1321, %v6231, 0
        %6236 = vmatprep.subr.mxu0 0.0
        %6237 = vmatpush1.xpose.msra.mxu0 %v6234
        %6238 = vmatprep.subr.mxu0 0.0
        %6239 = vmatpush1.xpose.msra.mxu0 0.0
        %6240 = vmatprep.subr.mxu0 0.0
        %6241 = vmatpush1.xpose.msra.mxu0 0.0
        %6242 = vmatprep.subr.mxu0 0.0
        %6243 = vmatpush1.xpose.msra.mxu0 0.0
        %6244 = vmatprep.subr.mxu0 0.0
        %6245 = vmatpush1.xpose.msra.mxu0 0.0
        %6246 = vmatprep.subr.mxu0 0.0
        %6247 = vmatpush1.xpose.msra.mxu0 0.0
        %6248 = vmatprep.subr.mxu0 0.0
        %6249 = vmatpush1.xpose.msra.mxu0 0.0
        %6250 = vmatprep.subr.mxu0 0.0
        %6251 = vmatpush1.xpose.msra.mxu0 0.0
        %6252 = vmatprep.subr.mxu0 0.0
        %6253 = vmatpush1.xpose.msra.mxu0 0.0
        %6254 = vmatprep.subr.mxu0 0.0
        %6255 = vmatpush1.xpose.msra.mxu0 0.0
        %6256 = vmatprep.subr.mxu0 0.0
        %6257 = vmatpush1.xpose.msra.mxu0 0.0
        %6258 = vmatprep.subr.mxu0 0.0
        %6259 = vmatpush1.xpose.msra.mxu0 0.0
        %6260 = vmatprep.subr.mxu0 0.0
        %6261 = vmatpush1.xpose.msra.mxu0 0.0
        %6262 = vmatprep.subr.mxu0 0.0
        %6263 = vmatpush1.xpose.msra.mxu0 0.0
        %6264 = vmatprep.subr.mxu0 0.0
        %6265 = vmatpush1.xpose.msra.mxu0 0.0
        %6266 = vmatprep.subr.mxu0 0.0
        %6267 = vmatpush1.xpose.msra.mxu0 0.0
        %6268 = vmatprep.subr.mxu0 0.0
        %6269 = vmatpush1.xpose.msra.mxu0 0.0
        %6270 = vmatprep.subr.mxu0 0.0
        %6271 = vmatpush1.xpose.msra.mxu0 0.0
        %6272 = vmatprep.subr.mxu0 0.0
        %6273 = vmatpush1.xpose.msra.mxu0 0.0
        %6274 = vmatprep.subr.mxu0 0.0
        %6275 = vmatpush1.xpose.msra.mxu0 0.0
        %6276 = vmatprep.subr.mxu0 0.0
        %6277 = vmatpush1.xpose.msra.mxu0 0.0
        %6278 = vmatprep.subr.mxu0 0.0
        %6279 = vmatpush1.xpose.msra.mxu0 0.0
        %6280 = vmatprep.subr.mxu0 0.0
        %6281 = vmatpush1.xpose.msra.mxu0 0.0
        %6282 = vmatprep.subr.mxu0 0.0
        %6283 = vmatpush1.xpose.msra.mxu0 0.0
        %6284 = vmatprep.subr.mxu0 0.0
        %6285 = vmatpush1.xpose.msra.mxu0 0.0
        %6286 = vmatprep.subr.mxu0 0.0
        %6287 = vmatpush1.xpose.msra.mxu0 0.0
        %6288 = vmatprep.subr.mxu0 0.0
        %6289 = vmatpush1.xpose.msra.mxu0 0.0
        %6290 = vmatprep.subr.mxu0 0.0
        %6291 = vmatpush1.xpose.msra.mxu0 0.0
        %6292 = vmatprep.subr.mxu0 0.0
        %6293 = vmatpush1.xpose.msra.mxu0 0.0
        %6294 = vmatprep.subr.mxu0 0.0
        %6295 = vmatpush1.xpose.msra.mxu0 0.0
        %6296 = vmatprep.subr.mxu0 0.0
        %6297 = vmatpush1.xpose.msra.mxu0 0.0
        %6298 = vmatprep.subr.mxu0 0.0
        %6299 = vmatpush1.xpose.msra.mxu0 0.0
        %6300 = vmatprep.mubr.f32.mxu0 0.0
        %6301 = vmatmul.mubr.f32.gmra.mrb[0].mxu0 %v6232
        %v6302 = vpop.f32.mrb[0].mxu0
        %v6303 = vadd.f32 0.0, %v6302
        %v6304 = vpop.f32.mrb[0].mxu0
        %6305 = vdwg.mxu0
        %v6306 = vmul.f32 %v6303, 0.088388346
        %v6307 = vadd.f32 %v6306, %v1004
        %v6308 = vsel %vm1400, %v6307, -inf
        %6309 = vmax.xlane.f32.xlu0 %v6308
        %v6310 = vpop.xlane.xlu0 %6309
        %v6311 = vsub.f32 %v6307, %v6310
        %v6312 = vmul.f32 %v6311, 1.442695
        %v6313 = vpow.pop %v6312
        %v6314 = vsel %vm1400, %v6313, 0.0
        %6315 = vadd.xlane.f32.xlu0 %v6314
        %v6316 = vpop.xlane.xlu0 %6315
        %v6317 = vrcp.pop %v6316
        %v6318 = vmul.f32 %v6313, %v6317
        %6320 = vrot.lane.b32.xlu0 %v6063, 96
        %v6321 = vpop.permute.xlu0 %6320
        %v6324 = vsel %vm1400, %v6318, 0
        %6326 = vmatprep.subr.mxu0 0.0
        %6327 = vmatpush1.msra.mxu0 %v6321
        %6328 = vmatprep.subr.mxu0 0.0
        %6329 = vmatpush1.msra.mxu0 0.0
        %6330 = vmatprep.subr.mxu0 0.0
        %6331 = vmatpush1.msra.mxu0 0.0
        %6332 = vmatprep.subr.mxu0 0.0
        %6333 = vmatpush1.msra.mxu0 0.0
        %6334 = vmatprep.subr.mxu0 0.0
        %6335 = vmatpush1.msra.mxu0 0.0
        %6336 = vmatprep.subr.mxu0 0.0
        %6337 = vmatpush1.msra.mxu0 0.0
        %6338 = vmatprep.subr.mxu0 0.0
        %6339 = vmatpush1.msra.mxu0 0.0
        %6340 = vmatprep.subr.mxu0 0.0
        %6341 = vmatpush1.msra.mxu0 0.0
        %6342 = vmatprep.subr.mxu0 0.0
        %6343 = vmatpush1.msra.mxu0 0.0
        %6344 = vmatprep.subr.mxu0 0.0
        %6345 = vmatpush1.msra.mxu0 0.0
        %6346 = vmatprep.subr.mxu0 0.0
        %6347 = vmatpush1.msra.mxu0 0.0
        %6348 = vmatprep.subr.mxu0 0.0
        %6349 = vmatpush1.msra.mxu0 0.0
        %6350 = vmatprep.subr.mxu0 0.0
        %6351 = vmatpush1.msra.mxu0 0.0
        %6352 = vmatprep.subr.mxu0 0.0
        %6353 = vmatpush1.msra.mxu0 0.0
        %6354 = vmatprep.subr.mxu0 0.0
        %6355 = vmatpush1.msra.mxu0 0.0
        %6356 = vmatprep.subr.mxu0 0.0
        %6357 = vmatpush1.msra.mxu0 0.0
        %6358 = vmatprep.subr.mxu0 0.0
        %6359 = vmatpush1.msra.mxu0 0.0
        %6360 = vmatprep.subr.mxu0 0.0
        %6361 = vmatpush1.msra.mxu0 0.0
        %6362 = vmatprep.subr.mxu0 0.0
        %6363 = vmatpush1.msra.mxu0 0.0
        %6364 = vmatprep.subr.mxu0 0.0
        %6365 = vmatpush1.msra.mxu0 0.0
        %6366 = vmatprep.subr.mxu0 0.0
        %6367 = vmatpush1.msra.mxu0 0.0
        %6368 = vmatprep.subr.mxu0 0.0
        %6369 = vmatpush1.msra.mxu0 0.0
        %6370 = vmatprep.subr.mxu0 0.0
        %6371 = vmatpush1.msra.mxu0 0.0
        %6372 = vmatprep.subr.mxu0 0.0
        %6373 = vmatpush1.msra.mxu0 0.0
        %6374 = vmatprep.subr.mxu0 0.0
        %6375 = vmatpush1.msra.mxu0 0.0
        %6376 = vmatprep.subr.mxu0 0.0
        %6377 = vmatpush1.msra.mxu0 0.0
        %6378 = vmatprep.subr.mxu0 0.0
        %6379 = vmatpush1.msra.mxu0 0.0
        %6380 = vmatprep.subr.mxu0 0.0
        %6381 = vmatpush1.msra.mxu0 0.0
        %6382 = vmatprep.subr.mxu0 0.0
        %6383 = vmatpush1.msra.mxu0 0.0
        %6384 = vmatprep.subr.mxu0 0.0
        %6385 = vmatpush1.msra.mxu0 0.0
        %6386 = vmatprep.subr.mxu0 0.0
        %6387 = vmatpush1.msra.mxu0 0.0
        %6388 = vmatprep.subr.mxu0 0.0
        %6389 = vmatpush1.msra.mxu0 0.0
        %6390 = vmatprep.mubr.f32.mxu0 0.0
        %6391 = vmatmul.mubr.f32.gmra.mrb[0].mxu0 %v6324
        %v6392 = vpop.f32.mrb[0].mxu0
        %v6393 = vadd.f32 0.0, %v6392
        %v6394 = vpop.f32.mrb[0].mxu0
        %6395 = vdwg.mxu0
        %6396 = vrot.lane.b32.xlu0 %v5873, 64
        %v6397 = vpop.permute.xlu0 %6396
        %6398 = vrot.lane.b32.xlu0 %v5968, 64
        %v6399 = vpop.permute.xlu0 %6398
        %v6400 = vsel %vm1321, %v6397, 0
        %v6402 = vsel %vm1321, %v6399, 0
        %6404 = vmatprep.subr.mxu0 0.0
        %6405 = vmatpush1.xpose.msra.mxu0 %v6402
        %6406 = vmatprep.subr.mxu0 0.0
        %6407 = vmatpush1.xpose.msra.mxu0 0.0
        %6408 = vmatprep.subr.mxu0 0.0
        %6409 = vmatpush1.xpose.msra.mxu0 0.0
        %6410 = vmatprep.subr.mxu0 0.0
        %6411 = vmatpush1.xpose.msra.mxu0 0.0
        %6412 = vmatprep.subr.mxu0 0.0
        %6413 = vmatpush1.xpose.msra.mxu0 0.0
        %6414 = vmatprep.subr.mxu0 0.0
        %6415 = vmatpush1.xpose.msra.mxu0 0.0
        %6416 = vmatprep.subr.mxu0 0.0
        %6417 = vmatpush1.xpose.msra.mxu0 0.0
        %6418 = vmatprep.subr.mxu0 0.0
        %6419 = vmatpush1.xpose.msra.mxu0 0.0
        %6420 = vmatprep.subr.mxu0 0.0
        %6421 = vmatpush1.xpose.msra.mxu0 0.0
        %6422 = vmatprep.subr.mxu0 0.0
        %6423 = vmatpush1.xpose.msra.mxu0 0.0
        %6424 = vmatprep.subr.mxu0 0.0
        %6425 = vmatpush1.xpose.msra.mxu0 0.0
        %6426 = vmatprep.subr.mxu0 0.0
        %6427 = vmatpush1.xpose.msra.mxu0 0.0
        %6428 = vmatprep.subr.mxu0 0.0
        %6429 = vmatpush1.xpose.msra.mxu0 0.0
        %6430 = vmatprep.subr.mxu0 0.0
        %6431 = vmatpush1.xpose.msra.mxu0 0.0
        %6432 = vmatprep.subr.mxu0 0.0
        %6433 = vmatpush1.xpose.msra.mxu0 0.0
        %6434 = vmatprep.subr.mxu0 0.0
        %6435 = vmatpush1.xpose.msra.mxu0 0.0
        %6436 = vmatprep.subr.mxu0 0.0
        %6437 = vmatpush1.xpose.msra.mxu0 0.0
        %6438 = vmatprep.subr.mxu0 0.0
        %6439 = vmatpush1.xpose.msra.mxu0 0.0
        %6440 = vmatprep.subr.mxu0 0.0
        %6441 = vmatpush1.xpose.msra.mxu0 0.0
        %6442 = vmatprep.subr.mxu0 0.0
        %6443 = vmatpush1.xpose.msra.mxu0 0.0
        %6444 = vmatprep.subr.mxu0 0.0
        %6445 = vmatpush1.xpose.msra.mxu0 0.0
        %6446 = vmatprep.subr.mxu0 0.0
        %6447 = vmatpush1.xpose.msra.mxu0 0.0
        %6448 = vmatprep.subr.mxu0 0.0
        %6449 = vmatpush1.xpose.msra.mxu0 0.0
        %6450 = vmatprep.subr.mxu0 0.0
        %6451 = vmatpush1.xpose.msra.mxu0 0.0
        %6452 = vmatprep.subr.mxu0 0.0
        %6453 = vmatpush1.xpose.msra.mxu0 0.0
        %6454 = vmatprep.subr.mxu0 0.0
        %6455 = vmatpush1.xpose.msra.mxu0 0.0
        %6456 = vmatprep.subr.mxu0 0.0
        %6457 = vmatpush1.xpose.msra.mxu0 0.0
        %6458 = vmatprep.subr.mxu0 0.0
        %6459 = vmatpush1.xpose.msra.mxu0 0.0
        %6460 = vmatprep.subr.mxu0 0.0
        %6461 = vmatpush1.xpose.msra.mxu0 0.0
        %6462 = vmatprep.subr.mxu0 0.0
        %6463 = vmatpush1.xpose.msra.mxu0 0.0
        %6464 = vmatprep.subr.mxu0 0.0
        %6465 = vmatpush1.xpose.msra.mxu0 0.0
        %6466 = vmatprep.subr.mxu0 0.0
        %6467 = vmatpush1.xpose.msra.mxu0 0.0
        %6468 = vmatprep.mubr.f32.mxu0 0.0
        %6469 = vmatmul.mubr.f32.gmra.mrb[0].mxu0 %v6400
        %v6470 = vpop.f32.mrb[0].mxu0
        %v6471 = vadd.f32 0.0, %v6470
        %v6472 = vpop.f32.mrb[0].mxu0
        %6473 = vdwg.mxu0
        %v6474 = vmul.f32 %v6471, 0.088388346
        %v6475 = vadd.f32 %v6474, %v1004
        %v6476 = vsel %vm1400, %v6475, -inf
        %6477 = vmax.xlane.f32.xlu0 %v6476
        %v6478 = vpop.xlane.xlu0 %6477
        %v6479 = vsub.f32 %v6475, %v6478
        %v6480 = vmul.f32 %v6479, 1.442695
        %v6481 = vpow.pop %v6480
        %v6482 = vsel %vm1400, %v6481, 0.0
        %6483 = vadd.xlane.f32.xlu0 %v6482
        %v6484 = vpop.xlane.xlu0 %6483
        %v6485 = vrcp.pop %v6484
        %v6486 = vmul.f32 %v6481, %v6485
        %6487 = vrot.lane.b32.xlu0 %v6063, 64
        %v6488 = vpop.permute.xlu0 %6487
        %v6491 = vsel %vm1400, %v6486, 0
        %6493 = vmatprep.subr.mxu0 0.0
        %6494 = vmatpush1.msra.mxu0 %v6488
        %6495 = vmatprep.subr.mxu0 0.0
        %6496 = vmatpush1.msra.mxu0 0.0
        %6497 = vmatprep.subr.mxu0 0.0
        %6498 = vmatpush1.msra.mxu0 0.0
        %6499 = vmatprep.subr.mxu0 0.0
        %6500 = vmatpush1.msra.mxu0 0.0
        %6501 = vmatprep.subr.mxu0 0.0
        %6502 = vmatpush1.msra.mxu0 0.0
        %6503 = vmatprep.subr.mxu0 0.0
        %6504 = vmatpush1.msra.mxu0 0.0
        %6505 = vmatprep.subr.mxu0 0.0
        %6506 = vmatpush1.msra.mxu0 0.0
        %6507 = vmatprep.subr.mxu0 0.0
        %6508 = vmatpush1.msra.mxu0 0.0
        %6509 = vmatprep.subr.mxu0 0.0
        %6510 = vmatpush1.msra.mxu0 0.0
        %6511 = vmatprep.subr.mxu0 0.0
        %6512 = vmatpush1.msra.mxu0 0.0
        %6513 = vmatprep.subr.mxu0 0.0
        %6514 = vmatpush1.msra.mxu0 0.0
        %6515 = vmatprep.subr.mxu0 0.0
        %6516 = vmatpush1.msra.mxu0 0.0
        %6517 = vmatprep.subr.mxu0 0.0
        %6518 = vmatpush1.msra.mxu0 0.0
        %6519 = vmatprep.subr.mxu0 0.0
        %6520 = vmatpush1.msra.mxu0 0.0
        %6521 = vmatprep.subr.mxu0 0.0
        %6522 = vmatpush1.msra.mxu0 0.0
        %6523 = vmatprep.subr.mxu0 0.0
        %6524 = vmatpush1.msra.mxu0 0.0
        %6525 = vmatprep.subr.mxu0 0.0
        %6526 = vmatpush1.msra.mxu0 0.0
        %6527 = vmatprep.subr.mxu0 0.0
        %6528 = vmatpush1.msra.mxu0 0.0
        %6529 = vmatprep.subr.mxu0 0.0
        %6530 = vmatpush1.msra.mxu0 0.0
        %6531 = vmatprep.subr.mxu0 0.0
        %6532 = vmatpush1.msra.mxu0 0.0
        %6533 = vmatprep.subr.mxu0 0.0
        %6534 = vmatpush1.msra.mxu0 0.0
        %6535 = vmatprep.subr.mxu0 0.0
        %6536 = vmatpush1.msra.mxu0 0.0
        %6537 = vmatprep.subr.mxu0 0.0
        %6538 = vmatpush1.msra.mxu0 0.0
        %6539 = vmatprep.subr.mxu0 0.0
        %6540 = vmatpush1.msra.mxu0 0.0
        %6541 = vmatprep.subr.mxu0 0.0
        %6542 = vmatpush1.msra.mxu0 0.0
        %6543 = vmatprep.subr.mxu0 0.0
        %6544 = vmatpush1.msra.mxu0 0.0
        %6545 = vmatprep.subr.mxu0 0.0
        %6546 = vmatpush1.msra.mxu0 0.0
        %6547 = vmatprep.subr.mxu0 0.0
        %6548 = vmatpush1.msra.mxu0 0.0
        %6549 = vmatprep.subr.mxu0 0.0
        %6550 = vmatpush1.msra.mxu0 0.0
        %6551 = vmatprep.subr.mxu0 0.0
        %6552 = vmatpush1.msra.mxu0 0.0
        %6553 = vmatprep.subr.mxu0 0.0
        %6554 = vmatpush1.msra.mxu0 0.0
        %6555 = vmatprep.subr.mxu0 0.0
        %6556 = vmatpush1.msra.mxu0 0.0
        %6557 = vmatprep.mubr.f32.mxu0 0.0
        %6558 = vmatmul.mubr.f32.gmra.mrb[0].mxu0 %v6491
        %v6559 = vpop.f32.mrb[0].mxu0
        %v6560 = vadd.f32 0.0, %v6559
        %v6561 = vpop.f32.mrb[0].mxu0
        %6562 = vdwg.mxu0
        %6563 = vrot.lane.b32.xlu0 %v5873, 32
        %v6564 = vpop.permute.xlu0 %6563
        %6565 = vrot.lane.b32.xlu0 %v5968, 32
        %v6566 = vpop.permute.xlu0 %6565
        %v6567 = vsel %vm1321, %v6564, 0
        %v6569 = vsel %vm1321, %v6566, 0
        %6571 = vmatprep.subr.mxu0 0.0
        %6572 = vmatpush1.xpose.msra.mxu0 %v6569
        %6573 = vmatprep.subr.mxu0 0.0
        %6574 = vmatpush1.xpose.msra.mxu0 0.0
        %6575 = vmatprep.subr.mxu0 0.0
        %6576 = vmatpush1.xpose.msra.mxu0 0.0
        %6577 = vmatprep.subr.mxu0 0.0
        %6578 = vmatpush1.xpose.msra.mxu0 0.0
        %6579 = vmatprep.subr.mxu0 0.0
        %6580 = vmatpush1.xpose.msra.mxu0 0.0
        %6581 = vmatprep.subr.mxu0 0.0
        %6582 = vmatpush1.xpose.msra.mxu0 0.0
        %6583 = vmatprep.subr.mxu0 0.0
        %6584 = vmatpush1.xpose.msra.mxu0 0.0
        %6585 = vmatprep.subr.mxu0 0.0
        %6586 = vmatpush1.xpose.msra.mxu0 0.0
        %6587 = vmatprep.subr.mxu0 0.0
        %6588 = vmatpush1.xpose.msra.mxu0 0.0
        %6589 = vmatprep.subr.mxu0 0.0
        %6590 = vmatpush1.xpose.msra.mxu0 0.0
        %6591 = vmatprep.subr.mxu0 0.0
        %6592 = vmatpush1.xpose.msra.mxu0 0.0
        %6593 = vmatprep.subr.mxu0 0.0
        %6594 = vmatpush1.xpose.msra.mxu0 0.0
        %6595 = vmatprep.subr.mxu0 0.0
        %6596 = vmatpush1.xpose.msra.mxu0 0.0
        %6597 = vmatprep.subr.mxu0 0.0
        %6598 = vmatpush1.xpose.msra.mxu0 0.0
        %6599 = vmatprep.subr.mxu0 0.0
        %6600 = vmatpush1.xpose.msra.mxu0 0.0
        %6601 = vmatprep.subr.mxu0 0.0
        %6602 = vmatpush1.xpose.msra.mxu0 0.0
        %6603 = vmatprep.subr.mxu0 0.0
        %6604 = vmatpush1.xpose.msra.mxu0 0.0
        %6605 = vmatprep.subr.mxu0 0.0
        %6606 = vmatpush1.xpose.msra.mxu0 0.0
        %6607 = vmatprep.subr.mxu0 0.0
        %6608 = vmatpush1.xpose.msra.mxu0 0.0
        %6609 = vmatprep.subr.mxu0 0.0
        %6610 = vmatpush1.xpose.msra.mxu0 0.0
        %6611 = vmatprep.subr.mxu0 0.0
        %6612 = vmatpush1.xpose.msra.mxu0 0.0
        %6613 = vmatprep.subr.mxu0 0.0
        %6614 = vmatpush1.xpose.msra.mxu0 0.0
        %6615 = vmatprep.subr.mxu0 0.0
        %6616 = vmatpush1.xpose.msra.mxu0 0.0
        %6617 = vmatprep.subr.mxu0 0.0
        %6618 = vmatpush1.xpose.msra.mxu0 0.0
        %6619 = vmatprep.subr.mxu0 0.0
        %6620 = vmatpush1.xpose.msra.mxu0 0.0
        %6621 = vmatprep.subr.mxu0 0.0
        %6622 = vmatpush1.xpose.msra.mxu0 0.0
        %6623 = vmatprep.subr.mxu0 0.0
        %6624 = vmatpush1.xpose.msra.mxu0 0.0
        %6625 = vmatprep.subr.mxu0 0.0
        %6626 = vmatpush1.xpose.msra.mxu0 0.0
        %6627 = vmatprep.subr.mxu0 0.0
        %6628 = vmatpush1.xpose.msra.mxu0 0.0
        %6629 = vmatprep.subr.mxu0 0.0
        %6630 = vmatpush1.xpose.msra.mxu0 0.0
        %6631 = vmatprep.subr.mxu0 0.0
        %6632 = vmatpush1.xpose.msra.mxu0 0.0
        %6633 = vmatprep.subr.mxu0 0.0
        %6634 = vmatpush1.xpose.msra.mxu0 0.0
        %6635 = vmatprep.mubr.f32.mxu0 0.0
        %6636 = vmatmul.mubr.f32.gmra.mrb[0].mxu0 %v6567
        %v6637 = vpop.f32.mrb[0].mxu0
        %v6638 = vadd.f32 0.0, %v6637
        %v6639 = vpop.f32.mrb[0].mxu0
        %6640 = vdwg.mxu0
        %v6641 = vmul.f32 %v6638, 0.088388346
        %v6642 = vadd.f32 %v6641, %v1004
        %v6643 = vsel %vm1400, %v6642, -inf
        %6644 = vmax.xlane.f32.xlu0 %v6643
        %v6645 = vpop.xlane.xlu0 %6644
        %v6646 = vsub.f32 %v6642, %v6645
        %v6647 = vmul.f32 %v6646, 1.442695
        %v6648 = vpow.pop %v6647
        %v6649 = vsel %vm1400, %v6648, 0.0
        %6650 = vadd.xlane.f32.xlu0 %v6649
        %v6651 = vpop.xlane.xlu0 %6650
        %v6652 = vrcp.pop %v6651
        %v6653 = vmul.f32 %v6648, %v6652
        %6654 = vrot.lane.b32.xlu0 %v6063, 32
        %v6655 = vpop.permute.xlu0 %6654
        %v6658 = vsel %vm1400, %v6653, 0
        %6660 = vmatprep.subr.mxu0 0.0
        %6661 = vmatpush1.msra.mxu0 %v6655
        %6662 = vmatprep.subr.mxu0 0.0
        %6663 = vmatpush1.msra.mxu0 0.0
        %6664 = vmatprep.subr.mxu0 0.0
        %6665 = vmatpush1.msra.mxu0 0.0
        %6666 = vmatprep.subr.mxu0 0.0
        %6667 = vmatpush1.msra.mxu0 0.0
        %6668 = vmatprep.subr.mxu0 0.0
        %6669 = vmatpush1.msra.mxu0 0.0
        %6670 = vmatprep.subr.mxu0 0.0
        %6671 = vmatpush1.msra.mxu0 0.0
        %6672 = vmatprep.subr.mxu0 0.0
        %6673 = vmatpush1.msra.mxu0 0.0
        %6674 = vmatprep.subr.mxu0 0.0
        %6675 = vmatpush1.msra.mxu0 0.0
        %6676 = vmatprep.subr.mxu0 0.0
        %6677 = vmatpush1.msra.mxu0 0.0
        %6678 = vmatprep.subr.mxu0 0.0
        %6679 = vmatpush1.msra.mxu0 0.0
        %6680 = vmatprep.subr.mxu0 0.0
        %6681 = vmatpush1.msra.mxu0 0.0
        %6682 = vmatprep.subr.mxu0 0.0
        %6683 = vmatpush1.msra.mxu0 0.0
        %6684 = vmatprep.subr.mxu0 0.0
        %6685 = vmatpush1.msra.mxu0 0.0
        %6686 = vmatprep.subr.mxu0 0.0
        %6687 = vmatpush1.msra.mxu0 0.0
        %6688 = vmatprep.subr.mxu0 0.0
        %6689 = vmatpush1.msra.mxu0 0.0
        %6690 = vmatprep.subr.mxu0 0.0
        %6691 = vmatpush1.msra.mxu0 0.0
        %6692 = vmatprep.subr.mxu0 0.0
        %6693 = vmatpush1.msra.mxu0 0.0
        %6694 = vmatprep.subr.mxu0 0.0
        %6695 = vmatpush1.msra.mxu0 0.0
        %6696 = vmatprep.subr.mxu0 0.0
        %6697 = vmatpush1.msra.mxu0 0.0
        %6698 = vmatprep.subr.mxu0 0.0
        %6699 = vmatpush1.msra.mxu0 0.0
        %6700 = vmatprep.subr.mxu0 0.0
        %6701 = vmatpush1.msra.mxu0 0.0
        %6702 = vmatprep.subr.mxu0 0.0
        %6703 = vmatpush1.msra.mxu0 0.0
        %6704 = vmatprep.subr.mxu0 0.0
        %6705 = vmatpush1.msra.mxu0 0.0
        %6706 = vmatprep.subr.mxu0 0.0
        %6707 = vmatpush1.msra.mxu0 0.0
        %6708 = vmatprep.subr.mxu0 0.0
        %6709 = vmatpush1.msra.mxu0 0.0
        %6710 = vmatprep.subr.mxu0 0.0
        %6711 = vmatpush1.msra.mxu0 0.0
        %6712 = vmatprep.subr.mxu0 0.0
        %6713 = vmatpush1.msra.mxu0 0.0
        %6714 = vmatprep.subr.mxu0 0.0
        %6715 = vmatpush1.msra.mxu0 0.0
        %6716 = vmatprep.subr.mxu0 0.0
        %6717 = vmatpush1.msra.mxu0 0.0
        %6718 = vmatprep.subr.mxu0 0.0
        %6719 = vmatpush1.msra.mxu0 0.0
        %6720 = vmatprep.subr.mxu0 0.0
        %6721 = vmatpush1.msra.mxu0 0.0
        %6722 = vmatprep.subr.mxu0 0.0
        %6723 = vmatpush1.msra.mxu0 0.0
        %6724 = vmatprep.mubr.f32.mxu0 0.0
        %6725 = vmatmul.mubr.f32.gmra.mrb[0].mxu0 %v6658
        %v6726 = vpop.f32.mrb[0].mxu0
        %v6727 = vadd.f32 0.0, %v6726
        %v6728 = vpop.f32.mrb[0].mxu0
        %6729 = vdwg.mxu0
        %6731 = vrot.lane.b32.xlu0 %v6393, 32
        %v6732 = vpop.permute.xlu0 %6731
        %6735 = vrot.lane.b32.xlu0 %v6560, 64
        %v6736 = vpop.permute.xlu0 %6735
        %6739 = vrot.lane.b32.xlu0 %v6727, 96
        %v6740 = vpop.permute.xlu0 %6739
        %v6742 = vsel %vm1321, %v6225, %v6732
        %v6743 = vsel %vm2000, %v6742, %v6736
        %v6744 = vsel %vm2002, %v6743, %v6740
        %s6745 = scalar_lea.vmem [#allocation10], 384
        %v6746 = vld [vmem:[%s6745] sm:$0xff]
        %v6747 = vld [vmem:[%s6745 + $0x8] sm:$0xff]
        %v6748 = vld [vmem:[%s6745 + $0x10] sm:$0xff]
        %v6749 = vld [vmem:[%s6745 + $0x18] sm:$0xff]
        %v6750 = vld [vmem:[%s6745 + $0x20] sm:$0xff]
        %v6751 = vld [vmem:[%s6745 + $0x28] sm:$0xff]
        %v6752 = vld [vmem:[%s6745 + $0x30] sm:$0xff]
        %v6753 = vld [vmem:[%s6745 + $0x38] sm:$0xff]
        %v6754 = vld [vmem:[%s6745 + $0x40] sm:$0xff]
        %v6755 = vld [vmem:[%s6745 + $0x48] sm:$0xff]
        %v6756 = vld [vmem:[%s6745 + $0x50] sm:$0xff]
        %v6757 = vld [vmem:[%s6745 + $0x58] sm:$0xff]
        %v6758 = vld [vmem:[%s6745 + $0x60] sm:$0xff]
        %v6759 = vld [vmem:[%s6745 + $0x68] sm:$0xff]
        %v6760 = vld [vmem:[%s6745 + $0x70] sm:$0xff]
        %v6761 = vld [vmem:[%s6745 + $0x78] sm:$0xff]
        %6762 = vmatprep.subr.mxu0 0.0
        %6763 = vmatpush1.msra.mxu0 %v6746
        %6764 = vmatprep.subr.mxu0 0.0
        %6765 = vmatpush1.msra.mxu0 %v6747
        %6766 = vmatprep.subr.mxu0 0.0
        %6767 = vmatpush1.msra.mxu0 %v6748
        %6768 = vmatprep.subr.mxu0 0.0
        %6769 = vmatpush1.msra.mxu0 %v6749
        %6770 = vmatprep.subr.mxu0 0.0
        %6771 = vmatpush1.msra.mxu0 %v6750
        %6772 = vmatprep.subr.mxu0 0.0
        %6773 = vmatpush1.msra.mxu0 %v6751
        %6774 = vmatprep.subr.mxu0 0.0
        %6775 = vmatpush1.msra.mxu0 %v6752
        %6776 = vmatprep.subr.mxu0 0.0
        %6777 = vmatpush1.msra.mxu0 %v6753
        %6778 = vmatprep.subr.mxu0 0.0
        %6779 = vmatpush1.msra.mxu0 %v6754
        %6780 = vmatprep.subr.mxu0 0.0
        %6781 = vmatpush1.msra.mxu0 %v6755
        %6782 = vmatprep.subr.mxu0 0.0
        %6783 = vmatpush1.msra.mxu0 %v6756
        %6784 = vmatprep.subr.mxu0 0.0
        %6785 = vmatpush1.msra.mxu0 %v6757
        %6786 = vmatprep.subr.mxu0 0.0
        %6787 = vmatpush1.msra.mxu0 %v6758
        %6788 = vmatprep.subr.mxu0 0.0
        %6789 = vmatpush1.msra.mxu0 %v6759
        %6790 = vmatprep.subr.mxu0 0.0
        %6791 = vmatpush1.msra.mxu0 %v6760
        %6792 = vmatprep.subr.mxu0 0.0
        %6793 = vmatpush1.msra.mxu0 %v6761
        %6794 = vmatprep.subr.mxu0 0.0
        %6795 = vmatpush1.msra.mxu0 0.0
        %6796 = vmatprep.subr.mxu0 0.0
        %6797 = vmatpush1.msra.mxu0 0.0
        %6798 = vmatprep.subr.mxu0 0.0
        %6799 = vmatpush1.msra.mxu0 0.0
        %6800 = vmatprep.subr.mxu0 0.0
        %6801 = vmatpush1.msra.mxu0 0.0
        %6802 = vmatprep.subr.mxu0 0.0
        %6803 = vmatpush1.msra.mxu0 0.0
        %6804 = vmatprep.subr.mxu0 0.0
        %6805 = vmatpush1.msra.mxu0 0.0
        %6806 = vmatprep.subr.mxu0 0.0
        %6807 = vmatpush1.msra.mxu0 0.0
        %6808 = vmatprep.subr.mxu0 0.0
        %6809 = vmatpush1.msra.mxu0 0.0
        %6810 = vmatprep.subr.mxu0 0.0
        %6811 = vmatpush1.msra.mxu0 0.0
        %6812 = vmatprep.subr.mxu0 0.0
        %6813 = vmatpush1.msra.mxu0 0.0
        %6814 = vmatprep.subr.mxu0 0.0
        %6815 = vmatpush1.msra.mxu0 0.0
        %6816 = vmatprep.subr.mxu0 0.0
        %6817 = vmatpush1.msra.mxu0 0.0
        %6818 = vmatprep.subr.mxu0 0.0
        %6819 = vmatpush1.msra.mxu0 0.0
        %6820 = vmatprep.subr.mxu0 0.0
        %6821 = vmatpush1.msra.mxu0 0.0
        %6822 = vmatprep.subr.mxu0 0.0
        %6823 = vmatpush1.msra.mxu0 0.0
        %6824 = vmatprep.subr.mxu0 0.0
        %6825 = vmatpush1.msra.mxu0 0.0
        %6826 = vmatprep.mubr.f32.mxu0 0.0
        %6827 = vmatmul.mubr.f32.gmra.mrb[0].mxu0 %v6744
        %v6828 = vpop.f32.mrb[0].mxu0
        %v6829 = vadd.f32 0.0, %v6828
        %v6830 = vpop.f32.mrb[0].mxu0
        %6831 = vdwg.mxu0
        %v6832 = vadd.f32 %v5743, %v6829
        %s6833 = scalar_lea.vmem %s12, 3
        %v6834 = vld [vmem:[%s6833] sm:$0x1]
        %v6836 = vlaneseq
        %v6837 = vshrl.u32 %v6836, 7
        %v6838 = vsub.s32 0, %v6837
        %v6839 = vrot.slane %v6834, %v6838
        %v6841 = vadd.f32 %v6832, %v6839
        %s6842 = scalar_lea.vmem %s13, 3
        %v6843 = vld [vmem:[%s6842] sm:$0x1]
        %s6844 = scalar_lea.vmem %s14, 3
        %v6845 = vld [vmem:[%s6844] sm:$0x1]
        %v6846 = vrot.slane %v6841, 4
        %v6847 = vadd.f32 %v6841, %v6846
        %v6848 = vrot.slane %v6847, 2
        %v6849 = vadd.f32 %v6847, %v6848
        %v6850 = vrot.slane %v6849, 1
        %v6851 = vadd.f32 %v6849, %v6850
        %v6852 = vmul.f32 %v6851, %v1013
        %v6853 = vsub.f32 %v6841, %v6852
        %v6854 = vmul.f32 %v6853, %v6853
        %v6855 = vrot.slane %v6854, 4
        %v6856 = vadd.f32 %v6854, %v6855
        %v6857 = vrot.slane %v6856, 2
        %v6858 = vadd.f32 %v6856, %v6857
        %v6859 = vrot.slane %v6858, 1
        %v6860 = vadd.f32 %v6858, %v6859
        %v6861 = vmul.f32 %v6860, %v1023
        %v6862 = vadd.f32 %v6861, 1e-05
        %v6863 = vrsqrt.pop %v6862
        %v6864 = vmul.f32 %v6853, %v6863
        %v6866 = vlaneseq
        %v6867 = vshrl.u32 %v6866, 7
        %v6868 = vsub.s32 0, %v6867
        %v6869 = vrot.slane %v6843, %v6868
        %v6871 = vmul.f32 %v6869, %v6864
        %v6873 = vlaneseq
        %v6874 = vshrl.u32 %v6873, 7
        %v6875 = vsub.s32 0, %v6874
        %v6876 = vrot.slane %v6845, %v6875
        %v6878 = vadd.f32 %v6871, %v6876
        %s6879 = scalar_lea.vmem [#allocation11], 1536
        %v6880 = vld [vmem:[%s6879] sm:$0xff]
        %v6881 = vld [vmem:[%s6879 + $0x8] sm:$0xff]
        %v6882 = vld [vmem:[%s6879 + $0x10] sm:$0xff]
        %v6883 = vld [vmem:[%s6879 + $0x18] sm:$0xff]
        %v6884 = vld [vmem:[%s6879 + $0x20] sm:$0xff]
        %v6885 = vld [vmem:[%s6879 + $0x28] sm:$0xff]
        %v6886 = vld [vmem:[%s6879 + $0x30] sm:$0xff]
        %v6887 = vld [vmem:[%s6879 + $0x38] sm:$0xff]
        %v6888 = vld [vmem:[%s6879 + $0x40] sm:$0xff]
        %v6889 = vld [vmem:[%s6879 + $0x48] sm:$0xff]
        %v6890 = vld [vmem:[%s6879 + $0x50] sm:$0xff]
        %v6891 = vld [vmem:[%s6879 + $0x58] sm:$0xff]
        %v6892 = vld [vmem:[%s6879 + $0x60] sm:$0xff]
        %v6893 = vld [vmem:[%s6879 + $0x68] sm:$0xff]
        %v6894 = vld [vmem:[%s6879 + $0x70] sm:$0xff]
        %v6895 = vld [vmem:[%s6879 + $0x78] sm:$0xff]
        %v6896 = vld [vmem:[%s6879 + $0x80] sm:$0xff]
        %v6897 = vld [vmem:[%s6879 + $0x88] sm:$0xff]
        %v6898 = vld [vmem:[%s6879 + $0x90] sm:$0xff]
        %v6899 = vld [vmem:[%s6879 + $0x98] sm:$0xff]
        %v6900 = vld [vmem:[%s6879 + $0xa0] sm:$0xff]
        %v6901 = vld [vmem:[%s6879 + $0xa8] sm:$0xff]
        %v6902 = vld [vmem:[%s6879 + $0xb0] sm:$0xff]
        %v6903 = vld [vmem:[%s6879 + $0xb8] sm:$0xff]
        %v6904 = vld [vmem:[%s6879 + $0xc0] sm:$0xff]
        %v6905 = vld [vmem:[%s6879 + $0xc8] sm:$0xff]
        %v6906 = vld [vmem:[%s6879 + $0xd0] sm:$0xff]
        %v6907 = vld [vmem:[%s6879 + $0xd8] sm:$0xff]
        %v6908 = vld [vmem:[%s6879 + $0xe0] sm:$0xff]
        %v6909 = vld [vmem:[%s6879 + $0xe8] sm:$0xff]
        %v6910 = vld [vmem:[%s6879 + $0xf0] sm:$0xff]
        %v6911 = vld [vmem:[%s6879 + $0xf8] sm:$0xff]
        %v6912 = vld [vmem:[%s6879 + $0x100] sm:$0xff]
        %v6913 = vld [vmem:[%s6879 + $0x108] sm:$0xff]
        %v6914 = vld [vmem:[%s6879 + $0x110] sm:$0xff]
        %v6915 = vld [vmem:[%s6879 + $0x118] sm:$0xff]
        %v6916 = vld [vmem:[%s6879 + $0x120] sm:$0xff]
        %v6917 = vld [vmem:[%s6879 + $0x128] sm:$0xff]
        %v6918 = vld [vmem:[%s6879 + $0x130] sm:$0xff]
        %v6919 = vld [vmem:[%s6879 + $0x138] sm:$0xff]
        %v6920 = vld [vmem:[%s6879 + $0x140] sm:$0xff]
        %v6921 = vld [vmem:[%s6879 + $0x148] sm:$0xff]
        %v6922 = vld [vmem:[%s6879 + $0x150] sm:$0xff]
        %v6923 = vld [vmem:[%s6879 + $0x158] sm:$0xff]
        %v6924 = vld [vmem:[%s6879 + $0x160] sm:$0xff]
        %v6925 = vld [vmem:[%s6879 + $0x168] sm:$0xff]
        %v6926 = vld [vmem:[%s6879 + $0x170] sm:$0xff]
        %v6927 = vld [vmem:[%s6879 + $0x178] sm:$0xff]
        %v6928 = vld [vmem:[%s6879 + $0x180] sm:$0xff]
        %v6929 = vld [vmem:[%s6879 + $0x188] sm:$0xff]
        %v6930 = vld [vmem:[%s6879 + $0x190] sm:$0xff]
        %v6931 = vld [vmem:[%s6879 + $0x198] sm:$0xff]
        %v6932 = vld [vmem:[%s6879 + $0x1a0] sm:$0xff]
        %v6933 = vld [vmem:[%s6879 + $0x1a8] sm:$0xff]
        %v6934 = vld [vmem:[%s6879 + $0x1b0] sm:$0xff]
        %v6935 = vld [vmem:[%s6879 + $0x1b8] sm:$0xff]
        %v6936 = vld [vmem:[%s6879 + $0x1c0] sm:$0xff]
        %v6937 = vld [vmem:[%s6879 + $0x1c8] sm:$0xff]
        %v6938 = vld [vmem:[%s6879 + $0x1d0] sm:$0xff]
        %v6939 = vld [vmem:[%s6879 + $0x1d8] sm:$0xff]
        %v6940 = vld [vmem:[%s6879 + $0x1e0] sm:$0xff]
        %v6941 = vld [vmem:[%s6879 + $0x1e8] sm:$0xff]
        %v6942 = vld [vmem:[%s6879 + $0x1f0] sm:$0xff]
        %v6943 = vld [vmem:[%s6879 + $0x1f8] sm:$0xff]
        %s6944 = scalar_lea.vmem %s16, 12
        %v6945 = vld [vmem:[%s6944] sm:$0xf]
        %s6946 = scalar_lea.vmem [#allocation13], 1536
        %v6947 = vld [vmem:[%s6946] sm:$0xff]
        %v6948 = vld [vmem:[%s6946 + $0x8] sm:$0xff]
        %v6949 = vld [vmem:[%s6946 + $0x10] sm:$0xff]
        %v6950 = vld [vmem:[%s6946 + $0x18] sm:$0xff]
        %v6951 = vld [vmem:[%s6946 + $0x20] sm:$0xff]
        %v6952 = vld [vmem:[%s6946 + $0x28] sm:$0xff]
        %v6953 = vld [vmem:[%s6946 + $0x30] sm:$0xff]
        %v6954 = vld [vmem:[%s6946 + $0x38] sm:$0xff]
        %v6955 = vld [vmem:[%s6946 + $0x40] sm:$0xff]
        %v6956 = vld [vmem:[%s6946 + $0x48] sm:$0xff]
        %v6957 = vld [vmem:[%s6946 + $0x50] sm:$0xff]
        %v6958 = vld [vmem:[%s6946 + $0x58] sm:$0xff]
        %v6959 = vld [vmem:[%s6946 + $0x60] sm:$0xff]
        %v6960 = vld [vmem:[%s6946 + $0x68] sm:$0xff]
        %v6961 = vld [vmem:[%s6946 + $0x70] sm:$0xff]
        %v6962 = vld [vmem:[%s6946 + $0x78] sm:$0xff]
        %v6963 = vld [vmem:[%s6946 + $0x80] sm:$0xff]
        %v6964 = vld [vmem:[%s6946 + $0x88] sm:$0xff]
        %v6965 = vld [vmem:[%s6946 + $0x90] sm:$0xff]
        %v6966 = vld [vmem:[%s6946 + $0x98] sm:$0xff]
        %v6967 = vld [vmem:[%s6946 + $0xa0] sm:$0xff]
        %v6968 = vld [vmem:[%s6946 + $0xa8] sm:$0xff]
        %v6969 = vld [vmem:[%s6946 + $0xb0] sm:$0xff]
        %v6970 = vld [vmem:[%s6946 + $0xb8] sm:$0xff]
        %v6971 = vld [vmem:[%s6946 + $0xc0] sm:$0xff]
        %v6972 = vld [vmem:[%s6946 + $0xc8] sm:$0xff]
        %v6973 = vld [vmem:[%s6946 + $0xd0] sm:$0xff]
        %v6974 = vld [vmem:[%s6946 + $0xd8] sm:$0xff]
        %v6975 = vld [vmem:[%s6946 + $0xe0] sm:$0xff]
        %v6976 = vld [vmem:[%s6946 + $0xe8] sm:$0xff]
        %v6977 = vld [vmem:[%s6946 + $0xf0] sm:$0xff]
        %v6978 = vld [vmem:[%s6946 + $0xf8] sm:$0xff]
        %v6979 = vld [vmem:[%s6946 + $0x100] sm:$0xff]
        %v6980 = vld [vmem:[%s6946 + $0x108] sm:$0xff]
        %v6981 = vld [vmem:[%s6946 + $0x110] sm:$0xff]
        %v6982 = vld [vmem:[%s6946 + $0x118] sm:$0xff]
        %v6983 = vld [vmem:[%s6946 + $0x120] sm:$0xff]
        %v6984 = vld [vmem:[%s6946 + $0x128] sm:$0xff]
        %v6985 = vld [vmem:[%s6946 + $0x130] sm:$0xff]
        %v6986 = vld [vmem:[%s6946 + $0x138] sm:$0xff]
        %v6987 = vld [vmem:[%s6946 + $0x140] sm:$0xff]
        %v6988 = vld [vmem:[%s6946 + $0x148] sm:$0xff]
        %v6989 = vld [vmem:[%s6946 + $0x150] sm:$0xff]
        %v6990 = vld [vmem:[%s6946 + $0x158] sm:$0xff]
        %v6991 = vld [vmem:[%s6946 + $0x160] sm:$0xff]
        %v6992 = vld [vmem:[%s6946 + $0x168] sm:$0xff]
        %v6993 = vld [vmem:[%s6946 + $0x170] sm:$0xff]
        %v6994 = vld [vmem:[%s6946 + $0x178] sm:$0xff]
        %v6995 = vld [vmem:[%s6946 + $0x180] sm:$0xff]
        %v6996 = vld [vmem:[%s6946 + $0x188] sm:$0xff]
        %v6997 = vld [vmem:[%s6946 + $0x190] sm:$0xff]
        %v6998 = vld [vmem:[%s6946 + $0x198] sm:$0xff]
        %v6999 = vld [vmem:[%s6946 + $0x1a0] sm:$0xff]
        %v7000 = vld [vmem:[%s6946 + $0x1a8] sm:$0xff]
        %v7001 = vld [vmem:[%s6946 + $0x1b0] sm:$0xff]
        %v7002 = vld [vmem:[%s6946 + $0x1b8] sm:$0xff]
        %v7003 = vld [vmem:[%s6946 + $0x1c0] sm:$0xff]
        %v7004 = vld [vmem:[%s6946 + $0x1c8] sm:$0xff]
        %v7005 = vld [vmem:[%s6946 + $0x1d0] sm:$0xff]
        %v7006 = vld [vmem:[%s6946 + $0x1d8] sm:$0xff]
        %v7007 = vld [vmem:[%s6946 + $0x1e0] sm:$0xff]
        %v7008 = vld [vmem:[%s6946 + $0x1e8] sm:$0xff]
        %v7009 = vld [vmem:[%s6946 + $0x1f0] sm:$0xff]
        %v7010 = vld [vmem:[%s6946 + $0x1f8] sm:$0xff]
        %s7011 = scalar_lea.vmem %s18, 3
        %v7012 = vld [vmem:[%s7011] sm:$0x1]
        %v7014 = vlaneseq
        %v7015 = vshrl.u32 %v7014, 7
        %v7016 = vsub.s32 0, %v7015
        %v7017 = vrot.slane %v6945, %v7016
        %v7018 = vlaneseq
        %v7019 = vshrl.u32 %v7018, 7
        %v7020 = vsub.s32 1, %v7019
        %v7021 = vrot.slane %v6945, %v7020
        %v7022 = vlaneseq
        %v7023 = vshrl.u32 %v7022, 7
        %v7024 = vsub.s32 2, %v7023
        %v7025 = vrot.slane %v6945, %v7024
        %v7026 = vlaneseq
        %v7027 = vshrl.u32 %v7026, 7
        %v7028 = vsub.s32 3, %v7027
        %v7029 = vrot.slane %v6945, %v7028
        %7034 = vmatprep.subr.mxu0 %v6881
        %7035 = vmatpush1.msra.mxu0 %v6880
        %7036 = vmatprep.subr.mxu0 %v6885
        %7037 = vmatpush1.msra.mxu0 %v6884
        %7038 = vmatprep.subr.mxu0 %v6889
        %7039 = vmatpush1.msra.mxu0 %v6888
        %7040 = vmatprep.subr.mxu0 %v6893
        %7041 = vmatpush1.msra.mxu0 %v6892
        %7042 = vmatprep.subr.mxu0 %v6897
        %7043 = vmatpush1.msra.mxu0 %v6896
        %7044 = vmatprep.subr.mxu0 %v6901
        %7045 = vmatpush1.msra.mxu0 %v6900
        %7046 = vmatprep.subr.mxu0 %v6905
        %7047 = vmatpush1.msra.mxu0 %v6904
        %7048 = vmatprep.subr.mxu0 %v6909
        %7049 = vmatpush1.msra.mxu0 %v6908
        %7050 = vmatprep.subr.mxu0 %v6913
        %7051 = vmatpush1.msra.mxu0 %v6912
        %7052 = vmatprep.subr.mxu0 %v6917
        %7053 = vmatpush1.msra.mxu0 %v6916
        %7054 = vmatprep.subr.mxu0 %v6921
        %7055 = vmatpush1.msra.mxu0 %v6920
        %7056 = vmatprep.subr.mxu0 %v6925
        %7057 = vmatpush1.msra.mxu0 %v6924
        %7058 = vmatprep.subr.mxu0 %v6929
        %7059 = vmatpush1.msra.mxu0 %v6928
        %7060 = vmatprep.subr.mxu0 %v6933
        %7061 = vmatpush1.msra.mxu0 %v6932
        %7062 = vmatprep.subr.mxu0 %v6937
        %7063 = vmatpush1.msra.mxu0 %v6936
        %7064 = vmatprep.subr.mxu0 %v6941
        %7065 = vmatpush1.msra.mxu0 %v6940
        %7066 = vmatprep.subr.mxu0 0.0
        %7067 = vmatpush1.msra.mxu0 0.0
        %7068 = vmatprep.subr.mxu0 0.0
        %7069 = vmatpush1.msra.mxu0 0.0
        %7070 = vmatprep.subr.mxu0 0.0
        %7071 = vmatpush1.msra.mxu0 0.0
        %7072 = vmatprep.subr.mxu0 0.0
        %7073 = vmatpush1.msra.mxu0 0.0
        %7074 = vmatprep.subr.mxu0 0.0
        %7075 = vmatpush1.msra.mxu0 0.0
        %7076 = vmatprep.subr.mxu0 0.0
        %7077 = vmatpush1.msra.mxu0 0.0
        %7078 = vmatprep.subr.mxu0 0.0
        %7079 = vmatpush1.msra.mxu0 0.0
        %7080 = vmatprep.subr.mxu0 0.0
        %7081 = vmatpush1.msra.mxu0 0.0
        %7082 = vmatprep.subr.mxu0 0.0
        %7083 = vmatpush1.msra.mxu0 0.0
        %7084 = vmatprep.subr.mxu0 0.0
        %7085 = vmatpush1.msra.mxu0 0.0
        %7086 = vmatprep.subr.mxu0 0.0
        %7087 = vmatpush1.msra.mxu0 0.0
        %7088 = vmatprep.subr.mxu0 0.0
        %7089 = vmatpush1.msra.mxu0 0.0
        %7090 = vmatprep.subr.mxu0 0.0
        %7091 = vmatpush1.msra.mxu0 0.0
        %7092 = vmatprep.subr.mxu0 0.0
        %7093 = vmatpush1.msra.mxu0 0.0
        %7094 = vmatprep.subr.mxu0 0.0
        %7095 = vmatpush1.msra.mxu0 0.0
        %7096 = vmatprep.subr.mxu0 0.0
        %7097 = vmatpush1.msra.mxu0 0.0
        %7098 = vmatprep.mubr.f32.mxu0 0.0
        %7099 = vmatmul.mubr.f32.gmra.mrb[0].mxu0 %v6878
        %v7100 = vpop.f32.mrb[0].mxu0
        %v7101 = vadd.f32 %v7017, %v7100
        %v7102 = vpop.f32.mrb[0].mxu0
        %v7103 = vadd.f32 %v7021, %v7102
        %7104 = vdwg.mxu0
        %7105 = vmatprep.subr.mxu0 %v6883
        %7106 = vmatpush1.msra.mxu0 %v6882
        %7107 = vmatprep.subr.mxu0 %v6887
        %7108 = vmatpush1.msra.mxu0 %v6886
        %7109 = vmatprep.subr.mxu0 %v6891
        %7110 = vmatpush1.msra.mxu0 %v6890
        %7111 = vmatprep.subr.mxu0 %v6895
        %7112 = vmatpush1.msra.mxu0 %v6894
        %7113 = vmatprep.subr.mxu0 %v6899
        %7114 = vmatpush1.msra.mxu0 %v6898
        %7115 = vmatprep.subr.mxu0 %v6903
        %7116 = vmatpush1.msra.mxu0 %v6902
        %7117 = vmatprep.subr.mxu0 %v6907
        %7118 = vmatpush1.msra.mxu0 %v6906
        %7119 = vmatprep.subr.mxu0 %v6911
        %7120 = vmatpush1.msra.mxu0 %v6910
        %7121 = vmatprep.subr.mxu0 %v6915
        %7122 = vmatpush1.msra.mxu0 %v6914
        %7123 = vmatprep.subr.mxu0 %v6919
        %7124 = vmatpush1.msra.mxu0 %v6918
        %7125 = vmatprep.subr.mxu0 %v6923
        %7126 = vmatpush1.msra.mxu0 %v6922
        %7127 = vmatprep.subr.mxu0 %v6927
        %7128 = vmatpush1.msra.mxu0 %v6926
        %7129 = vmatprep.subr.mxu0 %v6931
        %7130 = vmatpush1.msra.mxu0 %v6930
        %7131 = vmatprep.subr.mxu0 %v6935
        %7132 = vmatpush1.msra.mxu0 %v6934
        %7133 = vmatprep.subr.mxu0 %v6939
        %7134 = vmatpush1.msra.mxu0 %v6938
        %7135 = vmatprep.subr.mxu0 %v6943
        %7136 = vmatpush1.msra.mxu0 %v6942
        %7137 = vmatprep.subr.mxu0 0.0
        %7138 = vmatpush1.msra.mxu0 0.0
        %7139 = vmatprep.subr.mxu0 0.0
        %7140 = vmatpush1.msra.mxu0 0.0
        %7141 = vmatprep.subr.mxu0 0.0
        %7142 = vmatpush1.msra.mxu0 0.0
        %7143 = vmatprep.subr.mxu0 0.0
        %7144 = vmatpush1.msra.mxu0 0.0
        %7145 = vmatprep.subr.mxu0 0.0
        %7146 = vmatpush1.msra.mxu0 0.0
        %7147 = vmatprep.subr.mxu0 0.0
        %7148 = vmatpush1.msra.mxu0 0.0
        %7149 = vmatprep.subr.mxu0 0.0
        %7150 = vmatpush1.msra.mxu0 0.0
        %7151 = vmatprep.subr.mxu0 0.0
        %7152 = vmatpush1.msra.mxu0 0.0
        %7153 = vmatprep.subr.mxu0 0.0
        %7154 = vmatpush1.msra.mxu0 0.0
        %7155 = vmatprep.subr.mxu0 0.0
        %7156 = vmatpush1.msra.mxu0 0.0
        %7157 = vmatprep.subr.mxu0 0.0
        %7158 = vmatpush1.msra.mxu0 0.0
        %7159 = vmatprep.subr.mxu0 0.0
        %7160 = vmatpush1.msra.mxu0 0.0
        %7161 = vmatprep.subr.mxu0 0.0
        %7162 = vmatpush1.msra.mxu0 0.0
        %7163 = vmatprep.subr.mxu0 0.0
        %7164 = vmatpush1.msra.mxu0 0.0
        %7165 = vmatprep.subr.mxu0 0.0
        %7166 = vmatpush1.msra.mxu0 0.0
        %7167 = vmatprep.subr.mxu0 0.0
        %7168 = vmatpush1.msra.mxu0 0.0
        %7169 = vmatprep.mubr.f32.mxu0 0.0
        %7170 = vmatmul.mubr.f32.gmra.mrb[0].mxu0 %v6878
        %v7171 = vpop.f32.mrb[0].mxu0
        %v7172 = vadd.f32 %v7025, %v7171
        %v7173 = vpop.f32.mrb[0].mxu0
        %v7174 = vadd.f32 %v7029, %v7173
        %7175 = vdwg.mxu0
        %v7176 = vmax.f32 %v7101, 0.0
        %v7177 = vmax.f32 %v7103, 0.0
        %v7178 = vmax.f32 %v7172, 0.0
        %v7179 = vmax.f32 %v7174, 0.0
        %v7181 = vlaneseq
        %v7182 = vshrl.u32 %v7181, 7
        %v7183 = vsub.s32 0, %v7182
        %v7184 = vrot.slane %v7012, %v7183
        %7186 = vmatprep.subr.mxu0 0.0
        %7187 = vmatpush1.msra.mxu0 %v6947
        %7188 = vmatprep.subr.mxu0 0.0
        %7189 = vmatpush1.msra.mxu0 %v6948
        %7190 = vmatprep.subr.mxu0 0.0
        %7191 = vmatpush1.msra.mxu0 %v6949
        %7192 = vmatprep.subr.mxu0 0.0
        %7193 = vmatpush1.msra.mxu0 %v6950
        %7194 = vmatprep.subr.mxu0 0.0
        %7195 = vmatpush1.msra.mxu0 %v6951
        %7196 = vmatprep.subr.mxu0 0.0
        %7197 = vmatpush1.msra.mxu0 %v6952
        %7198 = vmatprep.subr.mxu0 0.0
        %7199 = vmatpush1.msra.mxu0 %v6953
        %7200 = vmatprep.subr.mxu0 0.0
        %7201 = vmatpush1.msra.mxu0 %v6954
        %7202 = vmatprep.subr.mxu0 0.0
        %7203 = vmatpush1.msra.mxu0 %v6955
        %7204 = vmatprep.subr.mxu0 0.0
        %7205 = vmatpush1.msra.mxu0 %v6956
        %7206 = vmatprep.subr.mxu0 0.0
        %7207 = vmatpush1.msra.mxu0 %v6957
        %7208 = vmatprep.subr.mxu0 0.0
        %7209 = vmatpush1.msra.mxu0 %v6958
        %7210 = vmatprep.subr.mxu0 0.0
        %7211 = vmatpush1.msra.mxu0 %v6959
        %7212 = vmatprep.subr.mxu0 0.0
        %7213 = vmatpush1.msra.mxu0 %v6960
        %7214 = vmatprep.subr.mxu0 0.0
        %7215 = vmatpush1.msra.mxu0 %v6961
        %7216 = vmatprep.subr.mxu0 0.0
        %7217 = vmatpush1.msra.mxu0 %v6962
        %7218 = vmatprep.subr.mxu0 0.0
        %7219 = vmatpush1.msra.mxu0 %v6963
        %7220 = vmatprep.subr.mxu0 0.0
        %7221 = vmatpush1.msra.mxu0 %v6964
        %7222 = vmatprep.subr.mxu0 0.0
        %7223 = vmatpush1.msra.mxu0 %v6965
        %7224 = vmatprep.subr.mxu0 0.0
        %7225 = vmatpush1.msra.mxu0 %v6966
        %7226 = vmatprep.subr.mxu0 0.0
        %7227 = vmatpush1.msra.mxu0 %v6967
        %7228 = vmatprep.subr.mxu0 0.0
        %7229 = vmatpush1.msra.mxu0 %v6968
        %7230 = vmatprep.subr.mxu0 0.0
        %7231 = vmatpush1.msra.mxu0 %v6969
        %7232 = vmatprep.subr.mxu0 0.0
        %7233 = vmatpush1.msra.mxu0 %v6970
        %7234 = vmatprep.subr.mxu0 0.0
        %7235 = vmatpush1.msra.mxu0 %v6971
        %7236 = vmatprep.subr.mxu0 0.0
        %7237 = vmatpush1.msra.mxu0 %v6972
        %7238 = vmatprep.subr.mxu0 0.0
        %7239 = vmatpush1.msra.mxu0 %v6973
        %7240 = vmatprep.subr.mxu0 0.0
        %7241 = vmatpush1.msra.mxu0 %v6974
        %7242 = vmatprep.subr.mxu0 0.0
        %7243 = vmatpush1.msra.mxu0 %v6975
        %7244 = vmatprep.subr.mxu0 0.0
        %7245 = vmatpush1.msra.mxu0 %v6976
        %7246 = vmatprep.subr.mxu0 0.0
        %7247 = vmatpush1.msra.mxu0 %v6977
        %7248 = vmatprep.subr.mxu0 0.0
        %7249 = vmatpush1.msra.mxu0 %v6978
        %7250 = vmatprep.mubr.f32.mxu0 %v7177
        %7251 = vmatmul.mubr.f32.gmra.mrb[0].mxu0 %v7176
        %v7252 = vpop.f32.mrb[0].mxu0
        %v7253 = vadd.f32 %v7184, %v7252
        %v7254 = vpop.f32.mrb[0].mxu0
        %7255 = vdwg.mxu0
        %7256 = vmatprep.subr.mxu0 0.0
        %7257 = vmatpush1.msra.mxu0 %v6979
        %7258 = vmatprep.subr.mxu0 0.0
        %7259 = vmatpush1.msra.mxu0 %v6980
        %7260 = vmatprep.subr.mxu0 0.0
        %7261 = vmatpush1.msra.mxu0 %v6981
        %7262 = vmatprep.subr.mxu0 0.0
        %7263 = vmatpush1.msra.mxu0 %v6982
        %7264 = vmatprep.subr.mxu0 0.0
        %7265 = vmatpush1.msra.mxu0 %v6983
        %7266 = vmatprep.subr.mxu0 0.0
        %7267 = vmatpush1.msra.mxu0 %v6984
        %7268 = vmatprep.subr.mxu0 0.0
        %7269 = vmatpush1.msra.mxu0 %v6985
        %7270 = vmatprep.subr.mxu0 0.0
        %7271 = vmatpush1.msra.mxu0 %v6986
        %7272 = vmatprep.subr.mxu0 0.0
        %7273 = vmatpush1.msra.mxu0 %v6987
        %7274 = vmatprep.subr.mxu0 0.0
        %7275 = vmatpush1.msra.mxu0 %v6988
        %7276 = vmatprep.subr.mxu0 0.0
        %7277 = vmatpush1.msra.mxu0 %v6989
        %7278 = vmatprep.subr.mxu0 0.0
        %7279 = vmatpush1.msra.mxu0 %v6990
        %7280 = vmatprep.subr.mxu0 0.0
        %7281 = vmatpush1.msra.mxu0 %v6991
        %7282 = vmatprep.subr.mxu0 0.0
        %7283 = vmatpush1.msra.mxu0 %v6992
        %7284 = vmatprep.subr.mxu0 0.0
        %7285 = vmatpush1.msra.mxu0 %v6993
        %7286 = vmatprep.subr.mxu0 0.0
        %7287 = vmatpush1.msra.mxu0 %v6994
        %7288 = vmatprep.subr.mxu0 0.0
        %7289 = vmatpush1.msra.mxu0 %v6995
        %7290 = vmatprep.subr.mxu0 0.0
        %7291 = vmatpush1.msra.mxu0 %v6996
        %7292 = vmatprep.subr.mxu0 0.0
        %7293 = vmatpush1.msra.mxu0 %v6997
        %7294 = vmatprep.subr.mxu0 0.0
        %7295 = vmatpush1.msra.mxu0 %v6998
        %7296 = vmatprep.subr.mxu0 0.0
        %7297 = vmatpush1.msra.mxu0 %v6999
        %7298 = vmatprep.subr.mxu0 0.0
        %7299 = vmatpush1.msra.mxu0 %v7000
        %7300 = vmatprep.subr.mxu0 0.0
        %7301 = vmatpush1.msra.mxu0 %v7001
        %7302 = vmatprep.subr.mxu0 0.0
        %7303 = vmatpush1.msra.mxu0 %v7002
        %7304 = vmatprep.subr.mxu0 0.0
        %7305 = vmatpush1.msra.mxu0 %v7003
        %7306 = vmatprep.subr.mxu0 0.0
        %7307 = vmatpush1.msra.mxu0 %v7004
        %7308 = vmatprep.subr.mxu0 0.0
        %7309 = vmatpush1.msra.mxu0 %v7005
        %7310 = vmatprep.subr.mxu0 0.0
        %7311 = vmatpush1.msra.mxu0 %v7006
        %7312 = vmatprep.subr.mxu0 0.0
        %7313 = vmatpush1.msra.mxu0 %v7007
        %7314 = vmatprep.subr.mxu0 0.0
        %7315 = vmatpush1.msra.mxu0 %v7008
        %7316 = vmatprep.subr.mxu0 0.0
        %7317 = vmatpush1.msra.mxu0 %v7009
        %7318 = vmatprep.subr.mxu0 0.0
        %7319 = vmatpush1.msra.mxu0 %v7010
        %7320 = vmatprep.mubr.f32.mxu0 %v7179
        %7321 = vmatmul.mubr.f32.gmra.mrb[0].mxu0 %v7178
        %v7322 = vpop.f32.mrb[0].mxu0
        %v7323 = vadd.f32 %v7253, %v7322
        %v7324 = vpop.f32.mrb[0].mxu0
        %7325 = vdwg.mxu0
        %v7326 = vadd.f32 %v6841, %v7323
        %v7327 = vld [vmem:[#allocation14] sm:$0xff]
        %v7328 = vld [vmem:[#allocation14 + $0x8] sm:$0xff]
        %v7329 = vld [vmem:[#allocation14 + $0x10] sm:$0xff]
        %v7330 = vld [vmem:[#allocation14 + $0x18] sm:$0xff]
        %v7331 = vld [vmem:[#allocation14 + $0x20] sm:$0xff]
        %v7332 = vld [vmem:[#allocation14 + $0x28] sm:$0xff]
        %v7333 = vld [vmem:[#allocation14 + $0x30] sm:$0xff]
        %v7334 = vld [vmem:[#allocation14 + $0x38] sm:$0xff]
        %v7335 = vld [vmem:[#allocation14 + $0x40] sm:$0xff]
        %v7336 = vld [vmem:[#allocation14 + $0x48] sm:$0xff]
        %v7337 = vld [vmem:[#allocation14 + $0x50] sm:$0xff]
        %v7338 = vld [vmem:[#allocation14 + $0x58] sm:$0xff]
        %v7339 = vld [vmem:[#allocation14 + $0x60] sm:$0xff]
        %v7340 = vld [vmem:[#allocation14 + $0x68] sm:$0xff]
        %v7341 = vld [vmem:[#allocation14 + $0x70] sm:$0xff]
        %v7342 = vld [vmem:[#allocation14 + $0x78] sm:$0xff]
        %v7343 = vld [vmem:[#allocation14 + $0x80] sm:$0xff]
        %v7344 = vld [vmem:[#allocation14 + $0x88] sm:$0xff]
        %v7345 = vld [vmem:[#allocation14 + $0x90] sm:$0xff]
        %v7346 = vld [vmem:[#allocation14 + $0x98] sm:$0xff]
        %v7347 = vld [vmem:[#allocation14 + $0xa0] sm:$0xff]
        %v7348 = vld [vmem:[#allocation14 + $0xa8] sm:$0xff]
        %v7349 = vld [vmem:[#allocation14 + $0xb0] sm:$0xff]
        %v7350 = vld [vmem:[#allocation14 + $0xb8] sm:$0xff]
        %v7351 = vld [vmem:[#allocation14 + $0xc0] sm:$0xff]
        %v7352 = vld [vmem:[#allocation14 + $0xc8] sm:$0xff]
        %v7353 = vld [vmem:[#allocation14 + $0xd0] sm:$0xff]
        %v7354 = vld [vmem:[#allocation14 + $0xd8] sm:$0xff]
        %v7355 = vld [vmem:[#allocation14 + $0xe0] sm:$0xff]
        %v7356 = vld [vmem:[#allocation14 + $0xe8] sm:$0xff]
        %v7357 = vld [vmem:[#allocation14 + $0xf0] sm:$0xff]
        %v7358 = vld [vmem:[#allocation14 + $0xf8] sm:$0xff]
        %v7359 = vld [vmem:[#allocation14 + $0x100] sm:$0xff]
        %v7360 = vld [vmem:[#allocation14 + $0x108] sm:$0xff]
        %v7361 = vld [vmem:[#allocation14 + $0x110] sm:$0xff]
        %v7362 = vld [vmem:[#allocation14 + $0x118] sm:$0xff]
        %v7363 = vld [vmem:[#allocation14 + $0x120] sm:$0xff]
        %v7364 = vld [vmem:[#allocation14 + $0x128] sm:$0xff]
        %v7365 = vld [vmem:[#allocation14 + $0x130] sm:$0xff]
        %v7366 = vld [vmem:[#allocation14 + $0x138] sm:$0xff]
        %v7367 = vld [vmem:[#allocation14 + $0x140] sm:$0xff]
        %v7368 = vld [vmem:[#allocation14 + $0x148] sm:$0xff]
        %v7369 = vld [vmem:[#allocation14 + $0x150] sm:$0xff]
        %v7370 = vld [vmem:[#allocation14 + $0x158] sm:$0xff]
        %v7371 = vld [vmem:[#allocation14 + $0x160] sm:$0xff]
        %v7372 = vld [vmem:[#allocation14 + $0x168] sm:$0xff]
        %v7373 = vld [vmem:[#allocation14 + $0x170] sm:$0xff]
        %v7374 = vld [vmem:[#allocation14 + $0x178] sm:$0xff]
        %v7375 = vld [vmem:[#allocation14 + $0x180] sm:$0xff]
        %v7376 = vld [vmem:[#allocation14 + $0x188] sm:$0xff]
        %v7377 = vld [vmem:[#allocation14 + $0x190] sm:$0xff]
        %v7378 = vld [vmem:[#allocation14 + $0x198] sm:$0xff]
        %v7379 = vld [vmem:[#allocation14 + $0x1a0] sm:$0xff]
        %v7380 = vld [vmem:[#allocation14 + $0x1a8] sm:$0xff]
        %v7381 = vld [vmem:[#allocation14 + $0x1b0] sm:$0xff]
        %v7382 = vld [vmem:[#allocation14 + $0x1b8] sm:$0xff]
        %v7383 = vld [vmem:[#allocation14 + $0x1c0] sm:$0xff]
        %v7384 = vld [vmem:[#allocation14 + $0x1c8] sm:$0xff]
        %v7385 = vld [vmem:[#allocation14 + $0x1d0] sm:$0xff]
        %v7386 = vld [vmem:[#allocation14 + $0x1d8] sm:$0xff]
        %v7387 = vld [vmem:[#allocation14 + $0x1e0] sm:$0xff]
        %v7388 = vld [vmem:[#allocation14 + $0x1e8] sm:$0xff]
        %v7389 = vld [vmem:[#allocation14 + $0x1f0] sm:$0xff]
        %v7390 = vld [vmem:[#allocation14 + $0x1f8] sm:$0xff]
        %v7391 = vld [vmem:[%s20] sm:$0xf]
        %v7392 = vld [vmem:[#allocation16] sm:$0xff]
        %v7393 = vld [vmem:[#allocation16 + $0x8] sm:$0xff]
        %v7394 = vld [vmem:[#allocation16 + $0x10] sm:$0xff]
        %v7395 = vld [vmem:[#allocation16 + $0x18] sm:$0xff]
        %v7396 = vld [vmem:[#allocation16 + $0x20] sm:$0xff]
        %v7397 = vld [vmem:[#allocation16 + $0x28] sm:$0xff]
        %v7398 = vld [vmem:[#allocation16 + $0x30] sm:$0xff]
        %v7399 = vld [vmem:[#allocation16 + $0x38] sm:$0xff]
        %v7400 = vld [vmem:[#allocation16 + $0x40] sm:$0xff]
        %v7401 = vld [vmem:[#allocation16 + $0x48] sm:$0xff]
        %v7402 = vld [vmem:[#allocation16 + $0x50] sm:$0xff]
        %v7403 = vld [vmem:[#allocation16 + $0x58] sm:$0xff]
        %v7404 = vld [vmem:[#allocation16 + $0x60] sm:$0xff]
        %v7405 = vld [vmem:[#allocation16 + $0x68] sm:$0xff]
        %v7406 = vld [vmem:[#allocation16 + $0x70] sm:$0xff]
        %v7407 = vld [vmem:[#allocation16 + $0x78] sm:$0xff]
        %v7408 = vld [vmem:[#allocation16 + $0x80] sm:$0xff]
        %v7409 = vld [vmem:[#allocation16 + $0x88] sm:$0xff]
        %v7410 = vld [vmem:[#allocation16 + $0x90] sm:$0xff]
        %v7411 = vld [vmem:[#allocation16 + $0x98] sm:$0xff]
        %v7412 = vld [vmem:[#allocation16 + $0xa0] sm:$0xff]
        %v7413 = vld [vmem:[#allocation16 + $0xa8] sm:$0xff]
        %v7414 = vld [vmem:[#allocation16 + $0xb0] sm:$0xff]
        %v7415 = vld [vmem:[#allocation16 + $0xb8] sm:$0xff]
        %v7416 = vld [vmem:[#allocation16 + $0xc0] sm:$0xff]
        %v7417 = vld [vmem:[#allocation16 + $0xc8] sm:$0xff]
        %v7418 = vld [vmem:[#allocation16 + $0xd0] sm:$0xff]
        %v7419 = vld [vmem:[#allocation16 + $0xd8] sm:$0xff]
        %v7420 = vld [vmem:[#allocation16 + $0xe0] sm:$0xff]
        %v7421 = vld [vmem:[#allocation16 + $0xe8] sm:$0xff]
        %v7422 = vld [vmem:[#allocation16 + $0xf0] sm:$0xff]
        %v7423 = vld [vmem:[#allocation16 + $0xf8] sm:$0xff]
        %v7424 = vld [vmem:[#allocation16 + $0x100] sm:$0xff]
        %v7425 = vld [vmem:[#allocation16 + $0x108] sm:$0xff]
        %v7426 = vld [vmem:[#allocation16 + $0x110] sm:$0xff]
        %v7427 = vld [vmem:[#allocation16 + $0x118] sm:$0xff]
        %v7428 = vld [vmem:[#allocation16 + $0x120] sm:$0xff]
        %v7429 = vld [vmem:[#allocation16 + $0x128] sm:$0xff]
        %v7430 = vld [vmem:[#allocation16 + $0x130] sm:$0xff]
        %v7431 = vld [vmem:[#allocation16 + $0x138] sm:$0xff]
        %v7432 = vld [vmem:[#allocation16 + $0x140] sm:$0xff]
        %v7433 = vld [vmem:[#allocation16 + $0x148] sm:$0xff]
        %v7434 = vld [vmem:[#allocation16 + $0x150] sm:$0xff]
        %v7435 = vld [vmem:[#allocation16 + $0x158] sm:$0xff]
        %v7436 = vld [vmem:[#allocation16 + $0x160] sm:$0xff]
        %v7437 = vld [vmem:[#allocation16 + $0x168] sm:$0xff]
        %v7438 = vld [vmem:[#allocation16 + $0x170] sm:$0xff]
        %v7439 = vld [vmem:[#allocation16 + $0x178] sm:$0xff]
        %v7440 = vld [vmem:[#allocation16 + $0x180] sm:$0xff]
        %v7441 = vld [vmem:[#allocation16 + $0x188] sm:$0xff]
        %v7442 = vld [vmem:[#allocation16 + $0x190] sm:$0xff]
        %v7443 = vld [vmem:[#allocation16 + $0x198] sm:$0xff]
        %v7444 = vld [vmem:[#allocation16 + $0x1a0] sm:$0xff]
        %v7445 = vld [vmem:[#allocation16 + $0x1a8] sm:$0xff]
        %v7446 = vld [vmem:[#allocation16 + $0x1b0] sm:$0xff]
        %v7447 = vld [vmem:[#allocation16 + $0x1b8] sm:$0xff]
        %v7448 = vld [vmem:[#allocation16 + $0x1c0] sm:$0xff]
        %v7449 = vld [vmem:[#allocation16 + $0x1c8] sm:$0xff]
        %v7450 = vld [vmem:[#allocation16 + $0x1d0] sm:$0xff]
        %v7451 = vld [vmem:[#allocation16 + $0x1d8] sm:$0xff]
        %v7452 = vld [vmem:[#allocation16 + $0x1e0] sm:$0xff]
        %v7453 = vld [vmem:[#allocation16 + $0x1e8] sm:$0xff]
        %v7454 = vld [vmem:[#allocation16 + $0x1f0] sm:$0xff]
        %v7455 = vld [vmem:[#allocation16 + $0x1f8] sm:$0xff]
        %v7456 = vld [vmem:[%s22] sm:$0x1]
        %v7458 = vlaneseq
        %v7459 = vshrl.u32 %v7458, 7
        %v7460 = vsub.s32 0, %v7459
        %v7461 = vrot.slane %v7391, %v7460
        %v7462 = vlaneseq
        %v7463 = vshrl.u32 %v7462, 7
        %v7464 = vsub.s32 1, %v7463
        %v7465 = vrot.slane %v7391, %v7464
        %v7466 = vlaneseq
        %v7467 = vshrl.u32 %v7466, 7
        %v7468 = vsub.s32 2, %v7467
        %v7469 = vrot.slane %v7391, %v7468
        %v7470 = vlaneseq
        %v7471 = vshrl.u32 %v7470, 7
        %v7472 = vsub.s32 3, %v7471
        %v7473 = vrot.slane %v7391, %v7472
        %7478 = vmatprep.subr.mxu0 %v7328
        %7479 = vmatpush1.msra.mxu0 %v7327
        %7480 = vmatprep.subr.mxu0 %v7332
        %7481 = vmatpush1.msra.mxu0 %v7331
        %7482 = vmatprep.subr.mxu0 %v7336
        %7483 = vmatpush1.msra.mxu0 %v7335
        %7484 = vmatprep.subr.mxu0 %v7340
        %7485 = vmatpush1.msra.mxu0 %v7339
        %7486 = vmatprep.subr.mxu0 %v7344
        %7487 = vmatpush1.msra.mxu0 %v7343
        %7488 = vmatprep.subr.mxu0 %v7348
        %7489 = vmatpush1.msra.mxu0 %v7347
        %7490 = vmatprep.subr.mxu0 %v7352
        %7491 = vmatpush1.msra.mxu0 %v7351
        %7492 = vmatprep.subr.mxu0 %v7356
        %7493 = vmatpush1.msra.mxu0 %v7355
        %7494 = vmatprep.subr.mxu0 %v7360
        %7495 = vmatpush1.msra.mxu0 %v7359
        %7496 = vmatprep.subr.mxu0 %v7364
        %7497 = vmatpush1.msra.mxu0 %v7363
        %7498 = vmatprep.subr.mxu0 %v7368
        %7499 = vmatpush1.msra.mxu0 %v7367
        %7500 = vmatprep.subr.mxu0 %v7372
        %7501 = vmatpush1.msra.mxu0 %v7371
        %7502 = vmatprep.subr.mxu0 %v7376
        %7503 = vmatpush1.msra.mxu0 %v7375
        %7504 = vmatprep.subr.mxu0 %v7380
        %7505 = vmatpush1.msra.mxu0 %v7379
        %7506 = vmatprep.subr.mxu0 %v7384
        %7507 = vmatpush1.msra.mxu0 %v7383
        %7508 = vmatprep.subr.mxu0 %v7388
        %7509 = vmatpush1.msra.mxu0 %v7387
        %7510 = vmatprep.subr.mxu0 0.0
        %7511 = vmatpush1.msra.mxu0 0.0
        %7512 = vmatprep.subr.mxu0 0.0
        %7513 = vmatpush1.msra.mxu0 0.0
        %7514 = vmatprep.subr.mxu0 0.0
        %7515 = vmatpush1.msra.mxu0 0.0
        %7516 = vmatprep.subr.mxu0 0.0
        %7517 = vmatpush1.msra.mxu0 0.0
        %7518 = vmatprep.subr.mxu0 0.0
        %7519 = vmatpush1.msra.mxu0 0.0
        %7520 = vmatprep.subr.mxu0 0.0
        %7521 = vmatpush1.msra.mxu0 0.0
        %7522 = vmatprep.subr.mxu0 0.0
        %7523 = vmatpush1.msra.mxu0 0.0
        %7524 = vmatprep.subr.mxu0 0.0
        %7525 = vmatpush1.msra.mxu0 0.0
        %7526 = vmatprep.subr.mxu0 0.0
        %7527 = vmatpush1.msra.mxu0 0.0
        %7528 = vmatprep.subr.mxu0 0.0
        %7529 = vmatpush1.msra.mxu0 0.0
        %7530 = vmatprep.subr.mxu0 0.0
        %7531 = vmatpush1.msra.mxu0 0.0
        %7532 = vmatprep.subr.mxu0 0.0
        %7533 = vmatpush1.msra.mxu0 0.0
        %7534 = vmatprep.subr.mxu0 0.0
        %7535 = vmatpush1.msra.mxu0 0.0
        %7536 = vmatprep.subr.mxu0 0.0
        %7537 = vmatpush1.msra.mxu0 0.0
        %7538 = vmatprep.subr.mxu0 0.0
        %7539 = vmatpush1.msra.mxu0 0.0
        %7540 = vmatprep.subr.mxu0 0.0
        %7541 = vmatpush1.msra.mxu0 0.0
        %7542 = vmatprep.mubr.f32.mxu0 0.0
        %7543 = vmatmul.mubr.f32.gmra.mrb[0].mxu0 %v7326
        %v7544 = vpop.f32.mrb[0].mxu0
        %v7545 = vadd.f32 %v7461, %v7544
        %v7546 = vpop.f32.mrb[0].mxu0
        %v7547 = vadd.f32 %v7465, %v7546
        %7548 = vdwg.mxu0
        %7549 = vmatprep.subr.mxu0 %v7330
        %7550 = vmatpush1.msra.mxu0 %v7329
        %7551 = vmatprep.subr.mxu0 %v7334
        %7552 = vmatpush1.msra.mxu0 %v7333
        %7553 = vmatprep.subr.mxu0 %v7338
        %7554 = vmatpush1.msra.mxu0 %v7337
        %7555 = vmatprep.subr.mxu0 %v7342
        %7556 = vmatpush1.msra.mxu0 %v7341
        %7557 = vmatprep.subr.mxu0 %v7346
        %7558 = vmatpush1.msra.mxu0 %v7345
        %7559 = vmatprep.subr.mxu0 %v7350
        %7560 = vmatpush1.msra.mxu0 %v7349
        %7561 = vmatprep.subr.mxu0 %v7354
        %7562 = vmatpush1.msra.mxu0 %v7353
        %7563 = vmatprep.subr.mxu0 %v7358
        %7564 = vmatpush1.msra.mxu0 %v7357
        %7565 = vmatprep.subr.mxu0 %v7362
        %7566 = vmatpush1.msra.mxu0 %v7361
        %7567 = vmatprep.subr.mxu0 %v7366
        %7568 = vmatpush1.msra.mxu0 %v7365
        %7569 = vmatprep.subr.mxu0 %v7370
        %7570 = vmatpush1.msra.mxu0 %v7369
        %7571 = vmatprep.subr.mxu0 %v7374
        %7572 = vmatpush1.msra.mxu0 %v7373
        %7573 = vmatprep.subr.mxu0 %v7378
        %7574 = vmatpush1.msra.mxu0 %v7377
        %7575 = vmatprep.subr.mxu0 %v7382
        %7576 = vmatpush1.msra.mxu0 %v7381
        %7577 = vmatprep.subr.mxu0 %v7386
        %7578 = vmatpush1.msra.mxu0 %v7385
        %7579 = vmatprep.subr.mxu0 %v7390
        %7580 = vmatpush1.msra.mxu0 %v7389
        %7581 = vmatprep.subr.mxu0 0.0
        %7582 = vmatpush1.msra.mxu0 0.0
        %7583 = vmatprep.subr.mxu0 0.0
        %7584 = vmatpush1.msra.mxu0 0.0
        %7585 = vmatprep.subr.mxu0 0.0
        %7586 = vmatpush1.msra.mxu0 0.0
        %7587 = vmatprep.subr.mxu0 0.0
        %7588 = vmatpush1.msra.mxu0 0.0
        %7589 = vmatprep.subr.mxu0 0.0
        %7590 = vmatpush1.msra.mxu0 0.0
        %7591 = vmatprep.subr.mxu0 0.0
        %7592 = vmatpush1.msra.mxu0 0.0
        %7593 = vmatprep.subr.mxu0 0.0
        %7594 = vmatpush1.msra.mxu0 0.0
        %7595 = vmatprep.subr.mxu0 0.0
        %7596 = vmatpush1.msra.mxu0 0.0
        %7597 = vmatprep.subr.mxu0 0.0
        %7598 = vmatpush1.msra.mxu0 0.0
        %7599 = vmatprep.subr.mxu0 0.0
        %7600 = vmatpush1.msra.mxu0 0.0
        %7601 = vmatprep.subr.mxu0 0.0
        %7602 = vmatpush1.msra.mxu0 0.0
        %7603 = vmatprep.subr.mxu0 0.0
        %7604 = vmatpush1.msra.mxu0 0.0
        %7605 = vmatprep.subr.mxu0 0.0
        %7606 = vmatpush1.msra.mxu0 0.0
        %7607 = vmatprep.subr.mxu0 0.0
        %7608 = vmatpush1.msra.mxu0 0.0
        %7609 = vmatprep.subr.mxu0 0.0
        %7610 = vmatpush1.msra.mxu0 0.0
        %7611 = vmatprep.subr.mxu0 0.0
        %7612 = vmatpush1.msra.mxu0 0.0
        %7613 = vmatprep.mubr.f32.mxu0 0.0
        %7614 = vmatmul.mubr.f32.gmra.mrb[0].mxu0 %v7326
        %v7615 = vpop.f32.mrb[0].mxu0
        %v7616 = vadd.f32 %v7469, %v7615
        %v7617 = vpop.f32.mrb[0].mxu0
        %v7618 = vadd.f32 %v7473, %v7617
        %7619 = vdwg.mxu0
        %v7620 = vmax.f32 %v7545, 0.0
        %v7621 = vmax.f32 %v7547, 0.0
        %v7622 = vmax.f32 %v7616, 0.0
        %v7623 = vmax.f32 %v7618, 0.0
        %v7625 = vlaneseq
        %v7626 = vshrl.u32 %v7625, 7
        %v7627 = vsub.s32 0, %v7626
        %v7628 = vrot.slane %v7456, %v7627
        %7630 = vmatprep.subr.mxu0 0.0
        %7631 = vmatpush1.msra.mxu0 %v7392
        %7632 = vmatprep.subr.mxu0 0.0
        %7633 = vmatpush1.msra.mxu0 %v7393
        %7634 = vmatprep.subr.mxu0 0.0
        %7635 = vmatpush1.msra.mxu0 %v7394
        %7636 = vmatprep.subr.mxu0 0.0
        %7637 = vmatpush1.msra.mxu0 %v7395
        %7638 = vmatprep.subr.mxu0 0.0
        %7639 = vmatpush1.msra.mxu0 %v7396
        %7640 = vmatprep.subr.mxu0 0.0
        %7641 = vmatpush1.msra.mxu0 %v7397
        %7642 = vmatprep.subr.mxu0 0.0
        %7643 = vmatpush1.msra.mxu0 %v7398
        %7644 = vmatprep.subr.mxu0 0.0
        %7645 = vmatpush1.msra.mxu0 %v7399
        %7646 = vmatprep.subr.mxu0 0.0
        %7647 = vmatpush1.msra.mxu0 %v7400
        %7648 = vmatprep.subr.mxu0 0.0
        %7649 = vmatpush1.msra.mxu0 %v7401
        %7650 = vmatprep.subr.mxu0 0.0
        %7651 = vmatpush1.msra.mxu0 %v7402
        %7652 = vmatprep.subr.mxu0 0.0
        %7653 = vmatpush1.msra.mxu0 %v7403
        %7654 = vmatprep.subr.mxu0 0.0
        %7655 = vmatpush1.msra.mxu0 %v7404
        %7656 = vmatprep.subr.mxu0 0.0
        %7657 = vmatpush1.msra.mxu0 %v7405
        %7658 = vmatprep.subr.mxu0 0.0
        %7659 = vmatpush1.msra.mxu0 %v7406
        %7660 = vmatprep.subr.mxu0 0.0
        %7661 = vmatpush1.msra.mxu0 %v7407
        %7662 = vmatprep.subr.mxu0 0.0
        %7663 = vmatpush1.msra.mxu0 %v7408
        %7664 = vmatprep.subr.mxu0 0.0
        %7665 = vmatpush1.msra.mxu0 %v7409
        %7666 = vmatprep.subr.mxu0 0.0
        %7667 = vmatpush1.msra.mxu0 %v7410
        %7668 = vmatprep.subr.mxu0 0.0
        %7669 = vmatpush1.msra.mxu0 %v7411
        %7670 = vmatprep.subr.mxu0 0.0
        %7671 = vmatpush1.msra.mxu0 %v7412
        %7672 = vmatprep.subr.mxu0 0.0
        %7673 = vmatpush1.msra.mxu0 %v7413
        %7674 = vmatprep.subr.mxu0 0.0
        %7675 = vmatpush1.msra.mxu0 %v7414
        %7676 = vmatprep.subr.mxu0 0.0
        %7677 = vmatpush1.msra.mxu0 %v7415
        %7678 = vmatprep.subr.mxu0 0.0
        %7679 = vmatpush1.msra.mxu0 %v7416
        %7680 = vmatprep.subr.mxu0 0.0
        %7681 = vmatpush1.msra.mxu0 %v7417
        %7682 = vmatprep.subr.mxu0 0.0
        %7683 = vmatpush1.msra.mxu0 %v7418
        %7684 = vmatprep.subr.mxu0 0.0
        %7685 = vmatpush1.msra.mxu0 %v7419
        %7686 = vmatprep.subr.mxu0 0.0
        %7687 = vmatpush1.msra.mxu0 %v7420
        %7688 = vmatprep.subr.mxu0 0.0
        %7689 = vmatpush1.msra.mxu0 %v7421
        %7690 = vmatprep.subr.mxu0 0.0
        %7691 = vmatpush1.msra.mxu0 %v7422
        %7692 = vmatprep.subr.mxu0 0.0
        %7693 = vmatpush1.msra.mxu0 %v7423
        %7694 = vmatprep.mubr.f32.mxu0 %v7621
        %7695 = vmatmul.mubr.f32.gmra.mrb[0].mxu0 %v7620
        %v7696 = vpop.f32.mrb[0].mxu0
        %v7697 = vadd.f32 %v7628, %v7696
        %v7698 = vpop.f32.mrb[0].mxu0
        %7699 = vdwg.mxu0
        %7700 = vmatprep.subr.mxu0 0.0
        %7701 = vmatpush1.msra.mxu0 %v7424
        %7702 = vmatprep.subr.mxu0 0.0
        %7703 = vmatpush1.msra.mxu0 %v7425
        %7704 = vmatprep.subr.mxu0 0.0
        %7705 = vmatpush1.msra.mxu0 %v7426
        %7706 = vmatprep.subr.mxu0 0.0
        %7707 = vmatpush1.msra.mxu0 %v7427
        %7708 = vmatprep.subr.mxu0 0.0
        %7709 = vmatpush1.msra.mxu0 %v7428
        %7710 = vmatprep.subr.mxu0 0.0
        %7711 = vmatpush1.msra.mxu0 %v7429
        %7712 = vmatprep.subr.mxu0 0.0
        %7713 = vmatpush1.msra.mxu0 %v7430
        %7714 = vmatprep.subr.mxu0 0.0
        %7715 = vmatpush1.msra.mxu0 %v7431
        %7716 = vmatprep.subr.mxu0 0.0
        %7717 = vmatpush1.msra.mxu0 %v7432
        %7718 = vmatprep.subr.mxu0 0.0
        %7719 = vmatpush1.msra.mxu0 %v7433
        %7720 = vmatprep.subr.mxu0 0.0
        %7721 = vmatpush1.msra.mxu0 %v7434
        %7722 = vmatprep.subr.mxu0 0.0
        %7723 = vmatpush1.msra.mxu0 %v7435
        %7724 = vmatprep.subr.mxu0 0.0
        %7725 = vmatpush1.msra.mxu0 %v7436
        %7726 = vmatprep.subr.mxu0 0.0
        %7727 = vmatpush1.msra.mxu0 %v7437
        %7728 = vmatprep.subr.mxu0 0.0
        %7729 = vmatpush1.msra.mxu0 %v7438
        %7730 = vmatprep.subr.mxu0 0.0
        %7731 = vmatpush1.msra.mxu0 %v7439
        %7732 = vmatprep.subr.mxu0 0.0
        %7733 = vmatpush1.msra.mxu0 %v7440
        %7734 = vmatprep.subr.mxu0 0.0
        %7735 = vmatpush1.msra.mxu0 %v7441
        %7736 = vmatprep.subr.mxu0 0.0
        %7737 = vmatpush1.msra.mxu0 %v7442
        %7738 = vmatprep.subr.mxu0 0.0
        %7739 = vmatpush1.msra.mxu0 %v7443
        %7740 = vmatprep.subr.mxu0 0.0
        %7741 = vmatpush1.msra.mxu0 %v7444
        %7742 = vmatprep.subr.mxu0 0.0
        %7743 = vmatpush1.msra.mxu0 %v7445
        %7744 = vmatprep.subr.mxu0 0.0
        %7745 = vmatpush1.msra.mxu0 %v7446
        %7746 = vmatprep.subr.mxu0 0.0
        %7747 = vmatpush1.msra.mxu0 %v7447
        %7748 = vmatprep.subr.mxu0 0.0
        %7749 = vmatpush1.msra.mxu0 %v7448
        %7750 = vmatprep.subr.mxu0 0.0
        %7751 = vmatpush1.msra.mxu0 %v7449
        %7752 = vmatprep.subr.mxu0 0.0
        %7753 = vmatpush1.msra.mxu0 %v7450
        %7754 = vmatprep.subr.mxu0 0.0
        %7755 = vmatpush1.msra.mxu0 %v7451
        %7756 = vmatprep.subr.mxu0 0.0
        %7757 = vmatpush1.msra.mxu0 %v7452
        %7758 = vmatprep.subr.mxu0 0.0
        %7759 = vmatpush1.msra.mxu0 %v7453
        %7760 = vmatprep.subr.mxu0 0.0
        %7761 = vmatpush1.msra.mxu0 %v7454
        %7762 = vmatprep.subr.mxu0 0.0
        %7763 = vmatpush1.msra.mxu0 %v7455
        %7764 = vmatprep.mubr.f32.mxu0 %v7623
        %7765 = vmatmul.mubr.f32.gmra.mrb[0].mxu0 %v7622
        %v7766 = vpop.f32.mrb[0].mxu0
        %v7767 = vadd.f32 %v7697, %v7766
        %v7768 = vpop.f32.mrb[0].mxu0
        %7769 = vdwg.mxu0
        %v7770 = vld [vmem:[#allocation17] sm:$0xff]
        %v7771 = vld [vmem:[#allocation17 + $0x8] sm:$0xff]
        %v7772 = vld [vmem:[#allocation17 + $0x10] sm:$0xff]
        %v7773 = vld [vmem:[#allocation17 + $0x18] sm:$0xff]
        %v7774 = vld [vmem:[#allocation17 + $0x20] sm:$0xff]
        %v7775 = vld [vmem:[#allocation17 + $0x28] sm:$0xff]
        %v7776 = vld [vmem:[#allocation17 + $0x30] sm:$0xff]
        %v7777 = vld [vmem:[#allocation17 + $0x38] sm:$0xff]
        %v7778 = vld [vmem:[#allocation17 + $0x40] sm:$0xff]
        %v7779 = vld [vmem:[#allocation17 + $0x48] sm:$0xff]
        %v7780 = vld [vmem:[#allocation17 + $0x50] sm:$0xff]
        %v7781 = vld [vmem:[#allocation17 + $0x58] sm:$0xff]
        %v7782 = vld [vmem:[#allocation17 + $0x60] sm:$0xff]
        %v7783 = vld [vmem:[#allocation17 + $0x68] sm:$0xff]
        %v7784 = vld [vmem:[#allocation17 + $0x70] sm:$0xff]
        %v7785 = vld [vmem:[#allocation17 + $0x78] sm:$0xff]
        %v7786 = vld [vmem:[%s24] sm:$0x1]
        %v7788 = vlaneseq
        %v7789 = vshrl.u32 %v7788, 7
        %v7790 = vsub.s32 0, %v7789
        %v7791 = vrot.slane %v7786, %v7790
        %7793 = vmatprep.subr.mxu0 0.0
        %7794 = vmatpush1.msra.mxu0 %v7770
        %7795 = vmatprep.subr.mxu0 0.0
        %7796 = vmatpush1.msra.mxu0 %v7771
        %7797 = vmatprep.subr.mxu0 0.0
        %7798 = vmatpush1.msra.mxu0 %v7772
        %7799 = vmatprep.subr.mxu0 0.0
        %7800 = vmatpush1.msra.mxu0 %v7773
        %7801 = vmatprep.subr.mxu0 0.0
        %7802 = vmatpush1.msra.mxu0 %v7774
        %7803 = vmatprep.subr.mxu0 0.0
        %7804 = vmatpush1.msra.mxu0 %v7775
        %7805 = vmatprep.subr.mxu0 0.0
        %7806 = vmatpush1.msra.mxu0 %v7776
        %7807 = vmatprep.subr.mxu0 0.0
        %7808 = vmatpush1.msra.mxu0 %v7777
        %7809 = vmatprep.subr.mxu0 0.0
        %7810 = vmatpush1.msra.mxu0 %v7778
        %7811 = vmatprep.subr.mxu0 0.0
        %7812 = vmatpush1.msra.mxu0 %v7779
        %7813 = vmatprep.subr.mxu0 0.0
        %7814 = vmatpush1.msra.mxu0 %v7780
        %7815 = vmatprep.subr.mxu0 0.0
        %7816 = vmatpush1.msra.mxu0 %v7781
        %7817 = vmatprep.subr.mxu0 0.0
        %7818 = vmatpush1.msra.mxu0 %v7782
        %7819 = vmatprep.subr.mxu0 0.0
        %7820 = vmatpush1.msra.mxu0 %v7783
        %7821 = vmatprep.subr.mxu0 0.0
        %7822 = vmatpush1.msra.mxu0 %v7784
        %7823 = vmatprep.subr.mxu0 0.0
        %7824 = vmatpush1.msra.mxu0 %v7785
        %7825 = vmatprep.subr.mxu0 0.0
        %7826 = vmatpush1.msra.mxu0 0.0
        %7827 = vmatprep.subr.mxu0 0.0
        %7828 = vmatpush1.msra.mxu0 0.0
        %7829 = vmatprep.subr.mxu0 0.0
        %7830 = vmatpush1.msra.mxu0 0.0
        %7831 = vmatprep.subr.mxu0 0.0
        %7832 = vmatpush1.msra.mxu0 0.0
        %7833 = vmatprep.subr.mxu0 0.0
        %7834 = vmatpush1.msra.mxu0 0.0
        %7835 = vmatprep.subr.mxu0 0.0
        %7836 = vmatpush1.msra.mxu0 0.0
        %7837 = vmatprep.subr.mxu0 0.0
        %7838 = vmatpush1.msra.mxu0 0.0
        %7839 = vmatprep.subr.mxu0 0.0
        %7840 = vmatpush1.msra.mxu0 0.0
        %7841 = vmatprep.subr.mxu0 0.0
        %7842 = vmatpush1.msra.mxu0 0.0
        %7843 = vmatprep.subr.mxu0 0.0
        %7844 = vmatpush1.msra.mxu0 0.0
        %7845 = vmatprep.subr.mxu0 0.0
        %7846 = vmatpush1.msra.mxu0 0.0
        %7847 = vmatprep.subr.mxu0 0.0
        %7848 = vmatpush1.msra.mxu0 0.0
        %7849 = vmatprep.subr.mxu0 0.0
        %7850 = vmatpush1.msra.mxu0 0.0
        %7851 = vmatprep.subr.mxu0 0.0
        %7852 = vmatpush1.msra.mxu0 0.0
        %7853 = vmatprep.subr.mxu0 0.0
        %7854 = vmatpush1.msra.mxu0 0.0
        %7855 = vmatprep.subr.mxu0 0.0
        %7856 = vmatpush1.msra.mxu0 0.0
        %7857 = vmatprep.mubr.f32.mxu0 0.0
        %7858 = vmatmul.mubr.f32.gmra.mrb[0].mxu0 %v7767
        %v7859 = vpop.f32.mrb[0].mxu0
        %v7860 = vadd.f32 %v7791, %v7859
        %v7861 = vpop.f32.mrb[0].mxu0
        %7862 = vdwg.mxu0
        %7863 = vst [vmem:[%s901] sm:$0xff] %v7860
        %s7864 = sand.u32 %s583, 1
        %s7865 = scalar_lea.sflag [#allocation4], %s7864
        %s7866 = sand.u32 %s583, 1
        %s7867 = smul.addr %s7866, 8
        %s7868 = scalar_lea.vmem [#allocation19], %s7867
        // Predicated region
        $region161: #{tpu_custom_call.1} parent=119 // pred_check
          %p7869 = pneg %p593
        $region162: #{tpu_custom_call.1} parent=119 // pred_check_branch
          %7871 = sbr.rel (%p7869) target = $region164
        $region163: #{tpu_custom_call.1} parent=119 // pred_region
          %s7873 = ssub.s32 128, 128
          %7874 = vsyncadd %s7865, %s7873
          %s7875 = smul.addr %s45, 128
          %s7876 = scalar_lea.hbm %s25, %s7875
          %s7878 = sshll.u32 %s7868, 4
          %s7879 = int_to_ptr.vmem [resolvable:$true] %s7878
          %7881 = dma.vmem_to_hbm [thread:$0]  %s7879, 128, %s7876, %s7865
        $region164: #{tpu_custom_call.1} parent=119 // pred_fallthru
          _
      $region120: #{tpu_custom_call.1} parent=5 // pred_fallthru
        _
      %p7882 = scmp.le.s32.totalorder 2, %s40
      // Predicated region
      $region165: #{tpu_custom_call.1} parent=5 // pred_check
        %p7883 = pneg %p7882
      $region166: #{tpu_custom_call.1} parent=5 // pred_check_branch
        %7885 = sbr.rel (%p7883) target = $region168
      $region167: #{tpu_custom_call.1} parent=5 // pred_region
        %s7886 = ssub.s32 %s40, 2
        // Predicated region
        $region169: #{tpu_custom_call.1} parent=167 // pred_check
          %p7887 = pneg %p599
        $region170: #{tpu_custom_call.1} parent=167 // pred_check_branch
          %7889 = sbr.rel (%p7887) target = $region172
        $region171: #{tpu_custom_call.1} parent=167 // pred_region
          %s7890 = sand.u32 %s584, 1
          %s7891 = scalar_lea.sflag [#allocation4], %s7890
          %s7892 = sand.u32 %s584, 1
          %s7893 = smul.addr %s7892, 8
          %s7894 = scalar_lea.vmem [#allocation19], %s7893
          %7895 = dma.done %s7891, 128
        $region172: #{tpu_custom_call.1} parent=167 // pred_fallthru
          _
      $region168: #{tpu_custom_call.1} parent=5 // pred_fallthru
        _
    $region6: #{tpu_custom_call.1} parent=1 // loop_footer
      %s44 = sadd.s32 1, %s40
    $region7: #{tpu_custom_call.1} parent=1 // loop_footer_branch
      %39 = sbr.rel target = $region3
    $region8: #{tpu_custom_call.1} parent=1 // loop_exit
      _
    %7896 = vsyncpa [#allocation3], 1
    %s7897 = scalar_lea.sflag [#allocation3], 1
    %7898 = vsyncpa %s7897, 1
    %7899 = vsyncpa [#allocation6], 1
    %7900 = vsyncpa [#allocation9], 1
    %7901 = vsyncpa [#allocation12], 1
    %7902 = vsyncpa [#allocation15], 1
    %7903 = vsyncpa [#allocation18], 1
    %7904 = vsyncpa [#allocation4], 1
    %s7905 = scalar_lea.sflag [#allocation4], 1
    %7906 = vsyncpa %s7905, 1

</llo_original>
